<compile_context>
chip_gen: v6e
topology: v6e:2x2x1
jax: 0.10.0
libtpu: 0.0.40
codegen_flags: <defaults>
</compile_context>

<pallas_src>
import jax
import jax.numpy as jnp
from jax.experimental import pallas as pl
from jax.experimental.pallas import tpu as pltpu


def _round_up(x, m):
    return (x + m - 1) // m * m


def _explainer_kernel(embed_ref, cond_ref, wc_ref, bc_ref, w1_ref, b1_ref,
                      w2_ref, b2_ref, out_ref):
    # embed_ref: (tile, embed_dims) f32     cond_ref: (tile, cond_dims) f32
    # out_ref:   (tile//128, 128) f32  -- lane-dense view of the (tile, 1) result.

    # cond_proj: Linear(cond_dims -> embed_dims) + ReLU (bf16 MXU, f32 accumulate).
    cond = cond_ref[...].astype(jnp.bfloat16)
    c = jnp.dot(cond, wc_ref[...], preferred_element_type=jnp.float32)
    c = jnp.maximum(c + bc_ref[...], 0.0)                  # (tile, embed_dims) f32

    # Elementwise gate in f32 on the VPU (v5e has no bf16 VALU).
    # TODO(synk): on v6e/v7x this could run in bf16 to halve vreg traffic.
    g = embed_ref[...] * c

    # emb_linear1: Linear(embed_dims -> hidden) + ReLU.
    h = jnp.dot(g.astype(jnp.bfloat16), w1_ref[...],
                preferred_element_type=jnp.float32)
    h = jnp.maximum(h + b1_ref[...], 0.0)                  # (tile, hidden) f32

    # emb_linear2: Linear(hidden -> 1) as a VPU multiply + lane reduce that lands
    # directly in the lane-dense (tile//128, 128) output layout.  The reshape only
    # splits the leading (row) dim, so no minor-dim relayout is needed before the
    # reduction; the reduce itself is XLU work off the critical (HBM) path.
    hw = h * w2_ref[...]                                   # (tile, hidden) f32
    rows, lanes = out_ref.shape                            # (tile//128, 128)
    o = jnp.sum(hw.reshape(rows, lanes, hw.shape[-1]), axis=-1) + b2_ref[0]
    out_ref[...] = o.astype(out_ref.dtype)


def _choose_tile(n, tile_n):
    """Pick a row-tile size (multiple of 128, capped for VMEM)."""
    tile_n = max(128, min(_round_up(tile_n, 128), 4096))
    if n <= tile_n:
        # Small-N regime: one grid step, one DMA + one compute phase.
        return _round_up(n, 128)
    # Multi-step: tile must be a multiple of 1024 so the lane-dense output block
    # (tile//128, 128) keeps a sublane-aligned (multiple-of-8) leading dim.
    tile = max(1024, (tile_n // 1024) * 1024)
    steps = -(-n // tile)
    if steps > 1 and steps % 2 == 1:
        # Best-effort even step count so v7x's two TensorCores split work evenly.
        alt = max(1024, _round_up(-(-n // (steps + 1)), 1024))
        if (-(-n // alt)) % 2 == 0:
            tile = alt
    return tile


def explainer_forward(embed, cond, params, *, tile_n=4096):
    """embed: [N, embed_dims] f32, cond: [N, cond_dims] f32 -> [N, 1] f32."""
    wc_t, bc, w1_t, b1, w2_row, b2 = params
    N, embed_dims = embed.shape
    cond_dims = cond.shape[1]
    hidden = w1_t.shape[1]

    tile = _choose_tile(N, tile_n)
    steps = pl.cdiv(N, tile)
    n_pad = steps * tile                     # output padded to whole blocks

    rows = lambda i: (i, 0)                  # row-tiled activations / output
    full = lambda i: (0, 0)                  # weights/biases: whole array, VMEM-resident

    out2d = pl.pallas_call(
        _explainer_kernel,
        out_shape=jax.ShapeDtypeStruct((n_pad // 128, 128), jnp.float32),
        grid_spec=pltpu.PrefetchScalarGridSpec(
            num_scalar_prefetch=0,
            grid=(steps,),
            in_specs=[
                pl.BlockSpec((tile, embed_dims), rows),         # embed (f32)
                pl.BlockSpec((tile, cond_dims), rows),          # cond  (f32)
                pl.BlockSpec((cond_dims, embed_dims), full),    # Wc^T  (bf16)
                pl.BlockSpec((1, embed_dims), full),            # bc    (f32)
                pl.BlockSpec((embed_dims, hidden), full),       # W1^T  (bf16)
                pl.BlockSpec((1, hidden), full),                # b1    (f32)
                pl.BlockSpec((1, hidden), full),                # W2 row (f32)
                pl.BlockSpec(memory_space=pltpu.MemorySpace.SMEM),  # b2 scalar
            ],
            out_specs=pl.BlockSpec((tile // 128, 128), rows),
        ),
        compiler_params=pltpu.CompilerParams(
            dimension_semantics=("parallel",),
            vmem_limit_bytes=32 * 1024 * 1024),
    )(embed, cond, wc_t, bc, w1_t, b1, w2_row, b2)

    # Lane-dense (n_pad//128, 128) -> (n_pad, 1); drop padded / clipped tail rows.
    return out2d.reshape(n_pad, 1)[:N]


def init_params(key, embed_dim, graph_level, hidden_dim):
    """PyTorch-Linear-style init (uniform(-1/sqrt(fan_in), +)); kernel-friendly layouts."""
    embed_dims = embed_dim * (2 if graph_level else 3)
    cond_dims = embed_dim

    def linear(key, fan_in, fan_out):
        kw, kb = jax.random.split(key)
        bound = 1.0 / jnp.sqrt(fan_in)
        w = jax.random.uniform(kw, (fan_out, fan_in), jnp.float32, -bound, bound)
        b = jax.random.uniform(kb, (fan_out,), jnp.float32, -bound, bound)
        return w, b

    k1, k2, k3 = jax.random.split(key, 3)
    wc, bc = linear(k1, cond_dims, embed_dims)     # cond_proj
    w1, b1 = linear(k2, embed_dims, hidden_dim)    # emb_linear1
    w2, b2 = linear(k3, hidden_dim, 1)             # emb_linear2

    return (wc.T.astype(jnp.bfloat16),   # (cond_dims, embed_dims)  bf16
            bc[None, :],                 # (1, embed_dims)          f32
            w1.T.astype(jnp.bfloat16),   # (embed_dims, hidden)     bf16
            b1[None, :],                 # (1, hidden)              f32
            w2,                          # (1, hidden)  f32 row, VPU-reduce form
            b2)                          # (1,)         f32 scalar (SMEM)


def explainer_reference(embed, cond, params):
    """Pure-JAX reference mirroring the kernel's cast/accumulate choices."""
    wc_t, bc, w1_t, b1, w2_row, b2 = params
    cp = jnp.maximum(
        jnp.dot(cond.astype(jnp.bfloat16), wc_t,
                preferred_element_type=jnp.float32) + bc, 0.0)
    g = embed * cp
    h = jnp.maximum(
        jnp.dot(g.astype(jnp.bfloat16), w1_t,
                preferred_element_type=jnp.float32) + b1, 0.0)
    return jnp.sum(h * w2_row, axis=-1, keepdims=True) + b2[0]


if __name__ == "__main__":
    embed_dim = 16
    graph_level = True                       # embed_dims = 2 * embed_dim = 32
    hidden_dim = 64
    embed_dims = embed_dim * (2 if graph_level else 3)
    N = 2500                                 # ragged edge count: exercises clipped tail

    key = jax.random.PRNGKey(0)
    k_emb, k_cond, k_par = jax.random.split(key, 3)
    embed = jax.random.normal(k_emb, (N, embed_dims), jnp.float32)
    cond = jax.random.normal(k_cond, (N, embed_dim), jnp.float32)
    params = init_params(k_par, embed_dim, graph_level, hidden_dim)

    ref = explainer_reference(embed, cond, params)

    # Small-N regime: single grid step (tile = round_up(N, 128)).
    out = jax.block_until_ready(explainer_forward(embed, cond, params))
    assert out.shape == (N, 1)
    assert jnp.allclose(out, ref, atol=1e-2, rtol=1e-2), \
        float(jnp.max(jnp.abs(out - ref)))

    # Multi-step regime with a clipped (ragged) trailing block.
    out_ms = jax.block_until_ready(
        explainer_forward(embed, cond, params, tile_n=1024))
    assert jnp.allclose(out_ms, ref, atol=1e-2, rtol=1e-2), \
        float(jnp.max(jnp.abs(out_ms - ref)))

    print("KERNEL_OK")
</pallas_src>

<mosaic_0001>
module attributes {stable_mosaic.version = 11 : i64} {
  func.func @_explainer_kernel(%arg0: i32, %arg1: memref<2560x32xf32, #tpu.memory_space<vmem>>, %arg2: memref<2560x16xf32, #tpu.memory_space<vmem>>, %arg3: memref<16x32xbf16, #tpu.memory_space<vmem>>, %arg4: memref<1x32xf32, #tpu.memory_space<vmem>>, %arg5: memref<32x64xbf16, #tpu.memory_space<vmem>>, %arg6: memref<1x64xf32, #tpu.memory_space<vmem>>, %arg7: memref<1x64xf32, #tpu.memory_space<vmem>>, %arg8: memref<1xf32, #tpu.memory_space<smem>>, %arg9: memref<20x128xf32, #tpu.memory_space<vmem>>) attributes {dimension_semantics = [#tpu.dimension_semantics<parallel>], iteration_bounds = array<i64: 1>, scalar_prefetch = 0 : i64, scratch_operands = 0 : i64, tpu.core_type = #tpu.core_type<tc>, window_params = [{transform_indices = @transform_0, window_bounds = array<i64: 2560, 32>}, {transform_indices = @transform_1, window_bounds = array<i64: 2560, 16>}, {pipeline_mode = #tpu.pipeline_mode<synchronous>, transform_indices = @transform_2, window_bounds = array<i64: 16, 32>}, {pipeline_mode = #tpu.pipeline_mode<synchronous>, transform_indices = @transform_3, window_bounds = array<i64: 1, 32>}, {pipeline_mode = #tpu.pipeline_mode<synchronous>, transform_indices = @transform_4, window_bounds = array<i64: 32, 64>}, {pipeline_mode = #tpu.pipeline_mode<synchronous>, transform_indices = @transform_5, window_bounds = array<i64: 1, 64>}, {pipeline_mode = #tpu.pipeline_mode<synchronous>, transform_indices = @transform_6, window_bounds = array<i64: 1, 64>}, {transform_indices = @transform_7, window_bounds = array<i64: 1>}, {transform_indices = @transform_8, window_bounds = array<i64: 20, 128>}]} {
    %c0 = arith.constant 0 : index
    %c0_0 = arith.constant 0 : index
    %0 = vector.load %arg2[%c0, %c0_0] : memref<2560x16xf32, #tpu.memory_space<vmem>>, vector<2560x16xf32>
    %1 = arith.truncf %0 : vector<2560x16xf32> to vector<2560x16xbf16>
    %c0_1 = arith.constant 0 : index
    %c0_2 = arith.constant 0 : index
    %2 = vector.load %arg3[%c0_1, %c0_2] : memref<16x32xbf16, #tpu.memory_space<vmem>>, vector<16x32xbf16>
    %cst = arith.constant dense<0.000000e+00> : vector<2560x32xf32>
    %3 = tpu.matmul %1, %2, %cst {dimension_numbers = #tpu.dot_dimension_numbers<[1], [0], [0], [1], [0, 0, 1, 1], [], []>} : vector<2560x16xbf16>, vector<16x32xbf16>, vector<2560x32xf32> -> vector<2560x32xf32>
    %c0_3 = arith.constant 0 : index
    %c0_4 = arith.constant 0 : index
    %4 = vector.load %arg4[%c0_3, %c0_4] : memref<1x32xf32, #tpu.memory_space<vmem>>, vector<1x32xf32>
    %5 = vector.broadcast %4 : vector<1x32xf32> to vector<2560x32xf32>
    %6 = arith.addf %3, %5 : vector<2560x32xf32>
    %cst_5 = arith.constant 0.000000e+00 : f32
    %7 = vector.broadcast %cst_5 : f32 to vector<2560x32xf32>
    %8 = arith.maximumf %6, %7 : vector<2560x32xf32>
    %c0_6 = arith.constant 0 : index
    %c0_7 = arith.constant 0 : index
    %9 = vector.load %arg1[%c0_6, %c0_7] : memref<2560x32xf32, #tpu.memory_space<vmem>>, vector<2560x32xf32>
    %10 = arith.mulf %9, %8 : vector<2560x32xf32>
    %11 = arith.truncf %10 : vector<2560x32xf32> to vector<2560x32xbf16>
    %c0_8 = arith.constant 0 : index
    %c0_9 = arith.constant 0 : index
    %12 = vector.load %arg5[%c0_8, %c0_9] : memref<32x64xbf16, #tpu.memory_space<vmem>>, vector<32x64xbf16>
    %cst_10 = arith.constant dense<0.000000e+00> : vector<2560x64xf32>
    %13 = tpu.matmul %11, %12, %cst_10 {dimension_numbers = #tpu.dot_dimension_numbers<[1], [0], [0], [1], [0, 0, 1, 1], [], []>} : vector<2560x32xbf16>, vector<32x64xbf16>, vector<2560x64xf32> -> vector<2560x64xf32>
    %c0_11 = arith.constant 0 : index
    %c0_12 = arith.constant 0 : index
    %14 = vector.load %arg6[%c0_11, %c0_12] : memref<1x64xf32, #tpu.memory_space<vmem>>, vector<1x64xf32>
    %15 = vector.broadcast %14 : vector<1x64xf32> to vector<2560x64xf32>
    %16 = arith.addf %13, %15 : vector<2560x64xf32>
    %cst_13 = arith.constant 0.000000e+00 : f32
    %17 = vector.broadcast %cst_13 : f32 to vector<2560x64xf32>
    %18 = arith.maximumf %16, %17 : vector<2560x64xf32>
    %c0_14 = arith.constant 0 : index
    %c0_15 = arith.constant 0 : index
    %19 = vector.load %arg7[%c0_14, %c0_15] : memref<1x64xf32, #tpu.memory_space<vmem>>, vector<1x64xf32>
    %20 = vector.broadcast %19 : vector<1x64xf32> to vector<2560x64xf32>
    %21 = arith.mulf %18, %20 : vector<2560x64xf32>
    %22 = vector.shape_cast %21 : vector<2560x64xf32> to vector<20x128x64xf32>
    %cst_16 = arith.constant dense<0.000000e+00> : vector<20x128xf32>
    %23 = vector.multi_reduction <add>, %22, %cst_16 [2] : vector<20x128x64xf32> to vector<20x128xf32>
    %c0_17 = arith.constant 0 : index
    %24 = memref.load %arg8[%c0_17] : memref<1xf32, #tpu.memory_space<smem>>
    %25 = vector.broadcast %24 : f32 to vector<20x128xf32>
    %26 = arith.addf %23, %25 : vector<20x128xf32>
    %c0_18 = arith.constant 0 : index
    %c0_19 = arith.constant 0 : index
    %27 = vector.load %arg9[%c0_18, %c0_19] : memref<20x128xf32, #tpu.memory_space<vmem>>, vector<20x128xf32>
    tpu.vector_store %arg9[%c0_18, %c0_19], %26 {strides = array<i32>} : memref<20x128xf32, #tpu.memory_space<vmem>>, vector<20x128xf32>,
    return
  }
  func.func @transform_0(%arg0: i32) -> (i32, i32) {
    %c0_i32 = arith.constant 0 : i32
    %c0_i32_0 = arith.constant 0 : i32
    return %arg0, %c0_i32 : i32, i32
  }
  func.func @transform_1(%arg0: i32) -> (i32, i32) {
    %c0_i32 = arith.constant 0 : i32
    %c0_i32_0 = arith.constant 0 : i32
    return %arg0, %c0_i32 : i32, i32
  }
  func.func @transform_2(%arg0: i32) -> (i32, i32) {
    %c0_i32 = arith.constant 0 : i32
    %c0_i32_0 = arith.constant 0 : i32
    %c0_i32_1 = arith.constant 0 : i32
    return %c0_i32, %c0_i32_0 : i32, i32
  }
  func.func @transform_3(%arg0: i32) -> (i32, i32) {
    %c0_i32 = arith.constant 0 : i32
    %c0_i32_0 = arith.constant 0 : i32
    %c0_i32_1 = arith.constant 0 : i32
    return %c0_i32, %c0_i32_0 : i32, i32
  }
  func.func @transform_4(%arg0: i32) -> (i32, i32) {
    %c0_i32 = arith.constant 0 : i32
    %c0_i32_0 = arith.constant 0 : i32
    %c0_i32_1 = arith.constant 0 : i32
    return %c0_i32, %c0_i32_0 : i32, i32
  }
  func.func @transform_5(%arg0: i32) -> (i32, i32) {
    %c0_i32 = arith.constant 0 : i32
    %c0_i32_0 = arith.constant 0 : i32
    %c0_i32_1 = arith.constant 0 : i32
    return %c0_i32, %c0_i32_0 : i32, i32
  }
  func.func @transform_6(%arg0: i32) -> (i32, i32) {
    %c0_i32 = arith.constant 0 : i32
    %c0_i32_0 = arith.constant 0 : i32
    %c0_i32_1 = arith.constant 0 : i32
    return %c0_i32, %c0_i32_0 : i32, i32
  }
  func.func @transform_7(%arg0: i32) -> i32 {
    %c0_i32 = arith.constant 0 : i32
    %c0_i32_0 = arith.constant 0 : i32
    return %c0_i32 : i32
  }
  func.func @transform_8(%arg0: i32) -> (i32, i32) {
    %c0_i32 = arith.constant 0 : i32
    %c0_i32_0 = arith.constant 0 : i32
    return %arg0, %c0_i32 : i32, i32
  }
}

</mosaic_0001>

<llo_original>
// kernel: tpu_custom_call.1
$region0: #{tpu_custom_call.1}
  #allocation0 [shape = 'u32[]', space=smem, size = 0x4, offset = 0x4, fixed_abs, tag = 'smem constant byte address 0x4 - core index']
  #allocation1 [shape = 'u32[144,128]{1,0:T(1,128)}', space=vmem, size = 0x12000, scoped, tag = 'internal scratch']
  #allocation2 [shape = 'f32[1]{0:T(128)S(6)}', space=smem, size = 0x200, scoped, tag = 'scoped memory for tpu_custom_call.1']
  %s0 = inlined_call_operand.vmem [shape: f32[2500,32], index: 0, kind: input, shape index: {}]
  %s1 = inlined_call_operand.vmem [shape: f32[2500,16], index: 1, kind: input, shape index: {}]
  %s2 = inlined_call_operand.vmem [shape: bf16[16,32], index: 2, kind: input, shape index: {}]
  %s3 = inlined_call_operand.vmem [shape: f32[1,32], index: 3, kind: input, shape index: {}]
  %s4 = inlined_call_operand.vmem [shape: bf16[32,64], index: 4, kind: input, shape index: {}]
  %s5 = inlined_call_operand.vmem [shape: f32[1,64], index: 5, kind: input, shape index: {}]
  %s6 = inlined_call_operand.vmem [shape: f32[1,64], index: 6, kind: input, shape index: {}]
  %s7 = inlined_call_operand.<no memory space> [shape: f32[1], index: 7, kind: input, shape index: {}]
  %s8 = inlined_call_operand.hbm [shape: f32[20,128], index: 8, kind: output, shape index: {}]
  %s9 = sld [smem:[#allocation0]]
  $region42: #{tpu_custom_call.1} parent=0
    _
  %s11 = ssub.s32 1, %s9
  %s12 = scalar_select 0, %s11, %s9
  %13 = sst [smem:[#allocation2]] %s7
  $region1: #{tpu_custom_call.1} parent=0
    #allocation3 [shape = 'u8[12288]{0}', space=vmem, size = 0x3000, scoped, tag = 'output window, operand 0, single buffered']
    #allocation4 [shape = 's32[1]{0}', space=sflag, size = 0x4, scoped, tag = 'scoped memory for tpu_custom_call.1']
    %14 = vsyncpa [#allocation4], 0
    // Predicated region
    $region2: #{tpu_custom_call.1} parent=1 // pred_check
      _
    $region3: #{tpu_custom_call.1} parent=1 // pred_check_branch
      %16 = sbr.rel (0) target = $region5
    $region4: #{tpu_custom_call.1} parent=1 // pred_region
      _
    $region5: #{tpu_custom_call.1} parent=1 // pred_fallthru
      _
    // Predicated region
    $region6: #{tpu_custom_call.1} parent=1 // pred_check
      _
    $region7: #{tpu_custom_call.1} parent=1 // pred_check_branch
      %18 = sbr.rel (0) target = $region9
    $region8: #{tpu_custom_call.1} parent=1 // pred_region
      _
    $region9: #{tpu_custom_call.1} parent=1 // pred_fallthru
      _
    // Predicated region
    $region10: #{tpu_custom_call.1} parent=1 // pred_check
      _
    $region11: #{tpu_custom_call.1} parent=1 // pred_check_branch
      %20 = sbr.rel (0) target = $region13
    $region12: #{tpu_custom_call.1} parent=1 // pred_region
      _
    $region13: #{tpu_custom_call.1} parent=1 // pred_fallthru
      _
    // Predicated region
    $region14: #{tpu_custom_call.1} parent=1 // pred_check
      _
    $region15: #{tpu_custom_call.1} parent=1 // pred_check_branch
      %22 = sbr.rel (0) target = $region17
    $region16: #{tpu_custom_call.1} parent=1 // pred_region
      _
    $region17: #{tpu_custom_call.1} parent=1 // pred_fallthru
      _
    // Predicated region
    $region18: #{tpu_custom_call.1} parent=1 // pred_check
      _
    $region19: #{tpu_custom_call.1} parent=1 // pred_check_branch
      %24 = sbr.rel (0) target = $region21
    $region20: #{tpu_custom_call.1} parent=1 // pred_region
      _
    $region21: #{tpu_custom_call.1} parent=1 // pred_fallthru
      _
    // Predicated region
    $region22: #{tpu_custom_call.1} parent=1 // pred_check
      _
    $region23: #{tpu_custom_call.1} parent=1 // pred_check_branch
      %26 = sbr.rel (0) target = $region25
    $region24: #{tpu_custom_call.1} parent=1 // pred_region
      _
    $region25: #{tpu_custom_call.1} parent=1 // pred_fallthru
      _
    // Predicated region
    $region26: #{tpu_custom_call.1} parent=1 // pred_check
      _
    $region27: #{tpu_custom_call.1} parent=1 // pred_check_branch
      %28 = sbr.rel (0) target = $region29
    $region28: #{tpu_custom_call.1} parent=1 // pred_region
      _
    $region29: #{tpu_custom_call.1} parent=1 // pred_fallthru
      _
    // Predicated region
    $region30: #{tpu_custom_call.1} parent=1 // pred_check
      _
    $region31: #{tpu_custom_call.1} parent=1 // pred_check_branch
      %30 = sbr.rel (0) target = $region33
    $region32: #{tpu_custom_call.1} parent=1 // pred_region
      _
    $region33: #{tpu_custom_call.1} parent=1 // pred_fallthru
      _
    %v32 = vld [vmem:[%s1] sm:$0xff]
    %v33 = vld [vmem:[%s1 + $0x8] sm:$0xff]
    %v34 = vld [vmem:[%s1 + $0x10] sm:$0xff]
    %v35 = vld [vmem:[%s1 + $0x18] sm:$0xff]
    %v36 = vld [vmem:[%s1 + $0x20] sm:$0xff]
    %v37 = vld [vmem:[%s1 + $0x28] sm:$0xff]
    %v38 = vld [vmem:[%s1 + $0x30] sm:$0xff]
    %v39 = vld [vmem:[%s1 + $0x38] sm:$0xff]
    %v40 = vld [vmem:[%s1 + $0x40] sm:$0xff]
    %v41 = vld [vmem:[%s1 + $0x48] sm:$0xff]
    %v42 = vld [vmem:[%s1 + $0x50] sm:$0xff]
    %v43 = vld [vmem:[%s1 + $0x58] sm:$0xff]
    %v44 = vld [vmem:[%s1 + $0x60] sm:$0xff]
    %v45 = vld [vmem:[%s1 + $0x68] sm:$0xff]
    %v46 = vld [vmem:[%s1 + $0x70] sm:$0xff]
    %v47 = vld [vmem:[%s1 + $0x78] sm:$0xff]
    %v48 = vld [vmem:[%s1 + $0x80] sm:$0xff]
    %v49 = vld [vmem:[%s1 + $0x88] sm:$0xff]
    %v50 = vld [vmem:[%s1 + $0x90] sm:$0xff]
    %v51 = vld [vmem:[%s1 + $0x98] sm:$0xff]
    %v52 = vld [vmem:[%s1 + $0xa0] sm:$0xff]
    %v53 = vld [vmem:[%s1 + $0xa8] sm:$0xff]
    %v54 = vld [vmem:[%s1 + $0xb0] sm:$0xff]
    %v55 = vld [vmem:[%s1 + $0xb8] sm:$0xff]
    %v56 = vld [vmem:[%s1 + $0xc0] sm:$0xff]
    %v57 = vld [vmem:[%s1 + $0xc8] sm:$0xff]
    %v58 = vld [vmem:[%s1 + $0xd0] sm:$0xff]
    %v59 = vld [vmem:[%s1 + $0xd8] sm:$0xff]
    %v60 = vld [vmem:[%s1 + $0xe0] sm:$0xff]
    %v61 = vld [vmem:[%s1 + $0xe8] sm:$0xff]
    %v62 = vld [vmem:[%s1 + $0xf0] sm:$0xff]
    %v63 = vld [vmem:[%s1 + $0xf8] sm:$0xff]
    %v64 = vld [vmem:[%s1 + $0x100] sm:$0xff]
    %v65 = vld [vmem:[%s1 + $0x108] sm:$0xff]
    %v66 = vld [vmem:[%s1 + $0x110] sm:$0xff]
    %v67 = vld [vmem:[%s1 + $0x118] sm:$0xff]
    %v68 = vld [vmem:[%s1 + $0x120] sm:$0xff]
    %v69 = vld [vmem:[%s1 + $0x128] sm:$0xff]
    %v70 = vld [vmem:[%s1 + $0x130] sm:$0xff]
    %v71 = vld [vmem:[%s1 + $0x138] sm:$0xff]
    %v72 = vld [vmem:[%s1 + $0x140] sm:$0xff]
    %v73 = vld [vmem:[%s1 + $0x148] sm:$0xff]
    %v74 = vld [vmem:[%s1 + $0x150] sm:$0xff]
    %v75 = vld [vmem:[%s1 + $0x158] sm:$0xff]
    %v76 = vld [vmem:[%s1 + $0x160] sm:$0xff]
    %v77 = vld [vmem:[%s1 + $0x168] sm:$0xff]
    %v78 = vld [vmem:[%s1 + $0x170] sm:$0xff]
    %v79 = vld [vmem:[%s1 + $0x178] sm:$0xff]
    %v80 = vld [vmem:[%s1 + $0x180] sm:$0xff]
    %v81 = vld [vmem:[%s1 + $0x188] sm:$0xff]
    %v82 = vld [vmem:[%s1 + $0x190] sm:$0xff]
    %v83 = vld [vmem:[%s1 + $0x198] sm:$0xff]
    %v84 = vld [vmem:[%s1 + $0x1a0] sm:$0xff]
    %v85 = vld [vmem:[%s1 + $0x1a8] sm:$0xff]
    %v86 = vld [vmem:[%s1 + $0x1b0] sm:$0xff]
    %v87 = vld [vmem:[%s1 + $0x1b8] sm:$0xff]
    %v88 = vld [vmem:[%s1 + $0x1c0] sm:$0xff]
    %v89 = vld [vmem:[%s1 + $0x1c8] sm:$0xff]
    %v90 = vld [vmem:[%s1 + $0x1d0] sm:$0xff]
    %v91 = vld [vmem:[%s1 + $0x1d8] sm:$0xff]
    %v92 = vld [vmem:[%s1 + $0x1e0] sm:$0xff]
    %v93 = vld [vmem:[%s1 + $0x1e8] sm:$0xff]
    %v94 = vld [vmem:[%s1 + $0x1f0] sm:$0xff]
    %v95 = vld [vmem:[%s1 + $0x1f8] sm:$0xff]
    %v96 = vld [vmem:[%s1 + $0x200] sm:$0xff]
    %v97 = vld [vmem:[%s1 + $0x208] sm:$0xff]
    %v98 = vld [vmem:[%s1 + $0x210] sm:$0xff]
    %v99 = vld [vmem:[%s1 + $0x218] sm:$0xff]
    %v100 = vld [vmem:[%s1 + $0x220] sm:$0xff]
    %v101 = vld [vmem:[%s1 + $0x228] sm:$0xff]
    %v102 = vld [vmem:[%s1 + $0x230] sm:$0xff]
    %v103 = vld [vmem:[%s1 + $0x238] sm:$0xff]
    %v104 = vld [vmem:[%s1 + $0x240] sm:$0xff]
    %v105 = vld [vmem:[%s1 + $0x248] sm:$0xff]
    %v106 = vld [vmem:[%s1 + $0x250] sm:$0xff]
    %v107 = vld [vmem:[%s1 + $0x258] sm:$0xff]
    %v108 = vld [vmem:[%s1 + $0x260] sm:$0xff]
    %v109 = vld [vmem:[%s1 + $0x268] sm:$0xff]
    %v110 = vld [vmem:[%s1 + $0x270] sm:$0xff]
    %v111 = vld [vmem:[%s1 + $0x278] sm:$0xff]
    %v112 = vld [vmem:[%s1 + $0x280] sm:$0xff]
    %v113 = vld [vmem:[%s1 + $0x288] sm:$0xff]
    %v114 = vld [vmem:[%s1 + $0x290] sm:$0xff]
    %v115 = vld [vmem:[%s1 + $0x298] sm:$0xff]
    %v116 = vld [vmem:[%s1 + $0x2a0] sm:$0xff]
    %v117 = vld [vmem:[%s1 + $0x2a8] sm:$0xff]
    %v118 = vld [vmem:[%s1 + $0x2b0] sm:$0xff]
    %v119 = vld [vmem:[%s1 + $0x2b8] sm:$0xff]
    %v120 = vld [vmem:[%s1 + $0x2c0] sm:$0xff]
    %v121 = vld [vmem:[%s1 + $0x2c8] sm:$0xff]
    %v122 = vld [vmem:[%s1 + $0x2d0] sm:$0xff]
    %v123 = vld [vmem:[%s1 + $0x2d8] sm:$0xff]
    %v124 = vld [vmem:[%s1 + $0x2e0] sm:$0xff]
    %v125 = vld [vmem:[%s1 + $0x2e8] sm:$0xff]
    %v126 = vld [vmem:[%s1 + $0x2f0] sm:$0xff]
    %v127 = vld [vmem:[%s1 + $0x2f8] sm:$0xff]
    %v128 = vld [vmem:[%s1 + $0x300] sm:$0xff]
    %v129 = vld [vmem:[%s1 + $0x308] sm:$0xff]
    %v130 = vld [vmem:[%s1 + $0x310] sm:$0xff]
    %v131 = vld [vmem:[%s1 + $0x318] sm:$0xff]
    %v132 = vld [vmem:[%s1 + $0x320] sm:$0xff]
    %v133 = vld [vmem:[%s1 + $0x328] sm:$0xff]
    %v134 = vld [vmem:[%s1 + $0x330] sm:$0xff]
    %v135 = vld [vmem:[%s1 + $0x338] sm:$0xff]
    %v136 = vld [vmem:[%s1 + $0x340] sm:$0xff]
    %v137 = vld [vmem:[%s1 + $0x348] sm:$0xff]
    %v138 = vld [vmem:[%s1 + $0x350] sm:$0xff]
    %v139 = vld [vmem:[%s1 + $0x358] sm:$0xff]
    %v140 = vld [vmem:[%s1 + $0x360] sm:$0xff]
    %v141 = vld [vmem:[%s1 + $0x368] sm:$0xff]
    %v142 = vld [vmem:[%s1 + $0x370] sm:$0xff]
    %v143 = vld [vmem:[%s1 + $0x378] sm:$0xff]
    %v144 = vld [vmem:[%s1 + $0x380] sm:$0xff]
    %v145 = vld [vmem:[%s1 + $0x388] sm:$0xff]
    %v146 = vld [vmem:[%s1 + $0x390] sm:$0xff]
    %v147 = vld [vmem:[%s1 + $0x398] sm:$0xff]
    %v148 = vld [vmem:[%s1 + $0x3a0] sm:$0xff]
    %v149 = vld [vmem:[%s1 + $0x3a8] sm:$0xff]
    %v150 = vld [vmem:[%s1 + $0x3b0] sm:$0xff]
    %v151 = vld [vmem:[%s1 + $0x3b8] sm:$0xff]
    %v152 = vld [vmem:[%s1 + $0x3c0] sm:$0xff]
    %v153 = vld [vmem:[%s1 + $0x3c8] sm:$0xff]
    %v154 = vld [vmem:[%s1 + $0x3d0] sm:$0xff]
    %v155 = vld [vmem:[%s1 + $0x3d8] sm:$0xff]
    %v156 = vld [vmem:[%s1 + $0x3e0] sm:$0xff]
    %v157 = vld [vmem:[%s1 + $0x3e8] sm:$0xff]
    %v158 = vld [vmem:[%s1 + $0x3f0] sm:$0xff]
    %v159 = vld [vmem:[%s1 + $0x3f8] sm:$0xff]
    %v160 = vld [vmem:[%s1 + $0x400] sm:$0xff]
    %v161 = vld [vmem:[%s1 + $0x408] sm:$0xff]
    %v162 = vld [vmem:[%s1 + $0x410] sm:$0xff]
    %v163 = vld [vmem:[%s1 + $0x418] sm:$0xff]
    %v164 = vld [vmem:[%s1 + $0x420] sm:$0xff]
    %v165 = vld [vmem:[%s1 + $0x428] sm:$0xff]
    %v166 = vld [vmem:[%s1 + $0x430] sm:$0xff]
    %v167 = vld [vmem:[%s1 + $0x438] sm:$0xff]
    %v168 = vld [vmem:[%s1 + $0x440] sm:$0xff]
    %v169 = vld [vmem:[%s1 + $0x448] sm:$0xff]
    %v170 = vld [vmem:[%s1 + $0x450] sm:$0xff]
    %v171 = vld [vmem:[%s1 + $0x458] sm:$0xff]
    %v172 = vld [vmem:[%s1 + $0x460] sm:$0xff]
    %v173 = vld [vmem:[%s1 + $0x468] sm:$0xff]
    %v174 = vld [vmem:[%s1 + $0x470] sm:$0xff]
    %v175 = vld [vmem:[%s1 + $0x478] sm:$0xff]
    %v176 = vld [vmem:[%s1 + $0x480] sm:$0xff]
    %v177 = vld [vmem:[%s1 + $0x488] sm:$0xff]
    %v178 = vld [vmem:[%s1 + $0x490] sm:$0xff]
    %v179 = vld [vmem:[%s1 + $0x498] sm:$0xff]
    %v180 = vld [vmem:[%s1 + $0x4a0] sm:$0xff]
    %v181 = vld [vmem:[%s1 + $0x4a8] sm:$0xff]
    %v182 = vld [vmem:[%s1 + $0x4b0] sm:$0xff]
    %v183 = vld [vmem:[%s1 + $0x4b8] sm:$0xff]
    %v184 = vld [vmem:[%s1 + $0x4c0] sm:$0xff]
    %v185 = vld [vmem:[%s1 + $0x4c8] sm:$0xff]
    %v186 = vld [vmem:[%s1 + $0x4d0] sm:$0xff]
    %v187 = vld [vmem:[%s1 + $0x4d8] sm:$0xff]
    %v188 = vld [vmem:[%s1 + $0x4e0] sm:$0xff]
    %v189 = vld [vmem:[%s1 + $0x4e8] sm:$0xff]
    %v190 = vld [vmem:[%s1 + $0x4f0] sm:$0xff]
    %v191 = vld [vmem:[%s1 + $0x4f8] sm:$0xff]
    %v192 = vld [vmem:[%s1 + $0x500] sm:$0xff]
    %v193 = vld [vmem:[%s1 + $0x508] sm:$0xff]
    %v194 = vld [vmem:[%s1 + $0x510] sm:$0xff]
    %v195 = vld [vmem:[%s1 + $0x518] sm:$0xff]
    %v196 = vld [vmem:[%s1 + $0x520] sm:$0xff]
    %v197 = vld [vmem:[%s1 + $0x528] sm:$0xff]
    %v198 = vld [vmem:[%s1 + $0x530] sm:$0xff]
    %v199 = vld [vmem:[%s1 + $0x538] sm:$0xff]
    %v200 = vld [vmem:[%s1 + $0x540] sm:$0xff]
    %v201 = vld [vmem:[%s1 + $0x548] sm:$0xff]
    %v202 = vld [vmem:[%s1 + $0x550] sm:$0xff]
    %v203 = vld [vmem:[%s1 + $0x558] sm:$0xff]
    %v204 = vld [vmem:[%s1 + $0x560] sm:$0xff]
    %v205 = vld [vmem:[%s1 + $0x568] sm:$0xff]
    %v206 = vld [vmem:[%s1 + $0x570] sm:$0xff]
    %v207 = vld [vmem:[%s1 + $0x578] sm:$0xff]
    %v208 = vld [vmem:[%s1 + $0x580] sm:$0xff]
    %v209 = vld [vmem:[%s1 + $0x588] sm:$0xff]
    %v210 = vld [vmem:[%s1 + $0x590] sm:$0xff]
    %v211 = vld [vmem:[%s1 + $0x598] sm:$0xff]
    %v212 = vld [vmem:[%s1 + $0x5a0] sm:$0xff]
    %v213 = vld [vmem:[%s1 + $0x5a8] sm:$0xff]
    %v214 = vld [vmem:[%s1 + $0x5b0] sm:$0xff]
    %v215 = vld [vmem:[%s1 + $0x5b8] sm:$0xff]
    %v216 = vld [vmem:[%s1 + $0x5c0] sm:$0xff]
    %v217 = vld [vmem:[%s1 + $0x5c8] sm:$0xff]
    %v218 = vld [vmem:[%s1 + $0x5d0] sm:$0xff]
    %v219 = vld [vmem:[%s1 + $0x5d8] sm:$0xff]
    %v220 = vld [vmem:[%s1 + $0x5e0] sm:$0xff]
    %v221 = vld [vmem:[%s1 + $0x5e8] sm:$0xff]
    %v222 = vld [vmem:[%s1 + $0x5f0] sm:$0xff]
    %v223 = vld [vmem:[%s1 + $0x5f8] sm:$0xff]
    %v224 = vld [vmem:[%s1 + $0x600] sm:$0xff]
    %v225 = vld [vmem:[%s1 + $0x608] sm:$0xff]
    %v226 = vld [vmem:[%s1 + $0x610] sm:$0xff]
    %v227 = vld [vmem:[%s1 + $0x618] sm:$0xff]
    %v228 = vld [vmem:[%s1 + $0x620] sm:$0xff]
    %v229 = vld [vmem:[%s1 + $0x628] sm:$0xff]
    %v230 = vld [vmem:[%s1 + $0x630] sm:$0xff]
    %v231 = vld [vmem:[%s1 + $0x638] sm:$0xff]
    %v232 = vld [vmem:[%s1 + $0x640] sm:$0xff]
    %v233 = vld [vmem:[%s1 + $0x648] sm:$0xff]
    %v234 = vld [vmem:[%s1 + $0x650] sm:$0xff]
    %v235 = vld [vmem:[%s1 + $0x658] sm:$0xff]
    %v236 = vld [vmem:[%s1 + $0x660] sm:$0xff]
    %v237 = vld [vmem:[%s1 + $0x668] sm:$0xff]
    %v238 = vld [vmem:[%s1 + $0x670] sm:$0xff]
    %v239 = vld [vmem:[%s1 + $0x678] sm:$0xff]
    %v240 = vld [vmem:[%s1 + $0x680] sm:$0xff]
    %v241 = vld [vmem:[%s1 + $0x688] sm:$0xff]
    %v242 = vld [vmem:[%s1 + $0x690] sm:$0xff]
    %v243 = vld [vmem:[%s1 + $0x698] sm:$0xff]
    %v244 = vld [vmem:[%s1 + $0x6a0] sm:$0xff]
    %v245 = vld [vmem:[%s1 + $0x6a8] sm:$0xff]
    %v246 = vld [vmem:[%s1 + $0x6b0] sm:$0xff]
    %v247 = vld [vmem:[%s1 + $0x6b8] sm:$0xff]
    %v248 = vld [vmem:[%s1 + $0x6c0] sm:$0xff]
    %v249 = vld [vmem:[%s1 + $0x6c8] sm:$0xff]
    %v250 = vld [vmem:[%s1 + $0x6d0] sm:$0xff]
    %v251 = vld [vmem:[%s1 + $0x6d8] sm:$0xff]
    %v252 = vld [vmem:[%s1 + $0x6e0] sm:$0xff]
    %v253 = vld [vmem:[%s1 + $0x6e8] sm:$0xff]
    %v254 = vld [vmem:[%s1 + $0x6f0] sm:$0xff]
    %v255 = vld [vmem:[%s1 + $0x6f8] sm:$0xff]
    %v256 = vld [vmem:[%s1 + $0x700] sm:$0xff]
    %v257 = vld [vmem:[%s1 + $0x708] sm:$0xff]
    %v258 = vld [vmem:[%s1 + $0x710] sm:$0xff]
    %v259 = vld [vmem:[%s1 + $0x718] sm:$0xff]
    %v260 = vld [vmem:[%s1 + $0x720] sm:$0xff]
    %v261 = vld [vmem:[%s1 + $0x728] sm:$0xff]
    %v262 = vld [vmem:[%s1 + $0x730] sm:$0xff]
    %v263 = vld [vmem:[%s1 + $0x738] sm:$0xff]
    %v264 = vld [vmem:[%s1 + $0x740] sm:$0xff]
    %v265 = vld [vmem:[%s1 + $0x748] sm:$0xff]
    %v266 = vld [vmem:[%s1 + $0x750] sm:$0xff]
    %v267 = vld [vmem:[%s1 + $0x758] sm:$0xff]
    %v268 = vld [vmem:[%s1 + $0x760] sm:$0xff]
    %v269 = vld [vmem:[%s1 + $0x768] sm:$0xff]
    %v270 = vld [vmem:[%s1 + $0x770] sm:$0xff]
    %v271 = vld [vmem:[%s1 + $0x778] sm:$0xff]
    %v272 = vld [vmem:[%s1 + $0x780] sm:$0xff]
    %v273 = vld [vmem:[%s1 + $0x788] sm:$0xff]
    %v274 = vld [vmem:[%s1 + $0x790] sm:$0xff]
    %v275 = vld [vmem:[%s1 + $0x798] sm:$0xff]
    %v276 = vld [vmem:[%s1 + $0x7a0] sm:$0xff]
    %v277 = vld [vmem:[%s1 + $0x7a8] sm:$0xff]
    %v278 = vld [vmem:[%s1 + $0x7b0] sm:$0xff]
    %v279 = vld [vmem:[%s1 + $0x7b8] sm:$0xff]
    %v280 = vld [vmem:[%s1 + $0x7c0] sm:$0xff]
    %v281 = vld [vmem:[%s1 + $0x7c8] sm:$0xff]
    %v282 = vld [vmem:[%s1 + $0x7d0] sm:$0xff]
    %v283 = vld [vmem:[%s1 + $0x7d8] sm:$0xff]
    %v284 = vld [vmem:[%s1 + $0x7e0] sm:$0xff]
    %v285 = vld [vmem:[%s1 + $0x7e8] sm:$0xff]
    %v286 = vld [vmem:[%s1 + $0x7f0] sm:$0xff]
    %v287 = vld [vmem:[%s1 + $0x7f8] sm:$0xff]
    %v288 = vld [vmem:[%s1 + $0x800] sm:$0xff]
    %v289 = vld [vmem:[%s1 + $0x808] sm:$0xff]
    %v290 = vld [vmem:[%s1 + $0x810] sm:$0xff]
    %v291 = vld [vmem:[%s1 + $0x818] sm:$0xff]
    %v292 = vld [vmem:[%s1 + $0x820] sm:$0xff]
    %v293 = vld [vmem:[%s1 + $0x828] sm:$0xff]
    %v294 = vld [vmem:[%s1 + $0x830] sm:$0xff]
    %v295 = vld [vmem:[%s1 + $0x838] sm:$0xff]
    %v296 = vld [vmem:[%s1 + $0x840] sm:$0xff]
    %v297 = vld [vmem:[%s1 + $0x848] sm:$0xff]
    %v298 = vld [vmem:[%s1 + $0x850] sm:$0xff]
    %v299 = vld [vmem:[%s1 + $0x858] sm:$0xff]
    %v300 = vld [vmem:[%s1 + $0x860] sm:$0xff]
    %v301 = vld [vmem:[%s1 + $0x868] sm:$0xff]
    %v302 = vld [vmem:[%s1 + $0x870] sm:$0xff]
    %v303 = vld [vmem:[%s1 + $0x878] sm:$0xff]
    %v304 = vld [vmem:[%s1 + $0x880] sm:$0xff]
    %v305 = vld [vmem:[%s1 + $0x888] sm:$0xff]
    %v306 = vld [vmem:[%s1 + $0x890] sm:$0xff]
    %v307 = vld [vmem:[%s1 + $0x898] sm:$0xff]
    %v308 = vld [vmem:[%s1 + $0x8a0] sm:$0xff]
    %v309 = vld [vmem:[%s1 + $0x8a8] sm:$0xff]
    %v310 = vld [vmem:[%s1 + $0x8b0] sm:$0xff]
    %v311 = vld [vmem:[%s1 + $0x8b8] sm:$0xff]
    %v312 = vld [vmem:[%s1 + $0x8c0] sm:$0xff]
    %v313 = vld [vmem:[%s1 + $0x8c8] sm:$0xff]
    %v314 = vld [vmem:[%s1 + $0x8d0] sm:$0xff]
    %v315 = vld [vmem:[%s1 + $0x8d8] sm:$0xff]
    %v316 = vld [vmem:[%s1 + $0x8e0] sm:$0xff]
    %v317 = vld [vmem:[%s1 + $0x8e8] sm:$0xff]
    %v318 = vld [vmem:[%s1 + $0x8f0] sm:$0xff]
    %v319 = vld [vmem:[%s1 + $0x8f8] sm:$0xff]
    %v320 = vld [vmem:[%s1 + $0x900] sm:$0xff]
    %v321 = vld [vmem:[%s1 + $0x908] sm:$0xff]
    %v322 = vld [vmem:[%s1 + $0x910] sm:$0xff]
    %v323 = vld [vmem:[%s1 + $0x918] sm:$0xff]
    %v324 = vld [vmem:[%s1 + $0x920] sm:$0xff]
    %v325 = vld [vmem:[%s1 + $0x928] sm:$0xff]
    %v326 = vld [vmem:[%s1 + $0x930] sm:$0xff]
    %v327 = vld [vmem:[%s1 + $0x938] sm:$0xff]
    %v328 = vld [vmem:[%s1 + $0x940] sm:$0xff]
    %v329 = vld [vmem:[%s1 + $0x948] sm:$0xff]
    %v330 = vld [vmem:[%s1 + $0x950] sm:$0xff]
    %v331 = vld [vmem:[%s1 + $0x958] sm:$0xff]
    %v332 = vld [vmem:[%s1 + $0x960] sm:$0xff]
    %v333 = vld [vmem:[%s1 + $0x968] sm:$0xff]
    %v334 = vld [vmem:[%s1 + $0x970] sm:$0xff]
    %v335 = vld [vmem:[%s1 + $0x978] sm:$0xff]
    %v336 = vld [vmem:[%s1 + $0x980] sm:$0xff]
    %v337 = vld [vmem:[%s1 + $0x988] sm:$0xff]
    %v338 = vld [vmem:[%s1 + $0x990] sm:$0xff]
    %v339 = vld [vmem:[%s1 + $0x998] sm:$0xff]
    %v340 = vld [vmem:[%s1 + $0x9a0] sm:$0xff]
    %v341 = vld [vmem:[%s1 + $0x9a8] sm:$0xff]
    %v342 = vld [vmem:[%s1 + $0x9b0] sm:$0xff]
    %v343 = vld [vmem:[%s1 + $0x9b8] sm:$0xff]
    %v344 = vld [vmem:[%s1 + $0x9c0] sm:$0xff]
    %v345 = vld [vmem:[%s1 + $0x9c8] sm:$0xff]
    %v346 = vld [vmem:[%s1 + $0x9d0] sm:$0xff]
    %v347 = vld [vmem:[%s1 + $0x9d8] sm:$0xff]
    %v348 = vld [vmem:[%s1 + $0x9e0] sm:$0xff]
    %v349 = vld [vmem:[%s1 + $0x9e8] sm:$0xff]
    %v350 = vld [vmem:[%s1 + $0x9f0] sm:$0xff]
    %v351 = vld [vmem:[%s1 + $0x9f8] sm:$0xff]
    %v352 = vpack.c.bf16 %v33, %v32
    %v353 = vpack.c.bf16 %v35, %v34
    %v354 = vpack.c.bf16 %v37, %v36
    %v355 = vpack.c.bf16 %v39, %v38
    %v356 = vpack.c.bf16 %v41, %v40
    %v357 = vpack.c.bf16 %v43, %v42
    %v358 = vpack.c.bf16 %v45, %v44
    %v359 = vpack.c.bf16 %v47, %v46
    %v360 = vpack.c.bf16 %v49, %v48
    %v361 = vpack.c.bf16 %v51, %v50
    %v362 = vpack.c.bf16 %v53, %v52
    %v363 = vpack.c.bf16 %v55, %v54
    %v364 = vpack.c.bf16 %v57, %v56
    %v365 = vpack.c.bf16 %v59, %v58
    %v366 = vpack.c.bf16 %v61, %v60
    %v367 = vpack.c.bf16 %v63, %v62
    %v368 = vpack.c.bf16 %v65, %v64
    %v369 = vpack.c.bf16 %v67, %v66
    %v370 = vpack.c.bf16 %v69, %v68
    %v371 = vpack.c.bf16 %v71, %v70
    %v372 = vpack.c.bf16 %v73, %v72
    %v373 = vpack.c.bf16 %v75, %v74
    %v374 = vpack.c.bf16 %v77, %v76
    %v375 = vpack.c.bf16 %v79, %v78
    %v376 = vpack.c.bf16 %v81, %v80
    %v377 = vpack.c.bf16 %v83, %v82
    %v378 = vpack.c.bf16 %v85, %v84
    %v379 = vpack.c.bf16 %v87, %v86
    %v380 = vpack.c.bf16 %v89, %v88
    %v381 = vpack.c.bf16 %v91, %v90
    %v382 = vpack.c.bf16 %v93, %v92
    %v383 = vpack.c.bf16 %v95, %v94
    %v384 = vpack.c.bf16 %v97, %v96
    %v385 = vpack.c.bf16 %v99, %v98
    %v386 = vpack.c.bf16 %v101, %v100
    %v387 = vpack.c.bf16 %v103, %v102
    %v388 = vpack.c.bf16 %v105, %v104
    %v389 = vpack.c.bf16 %v107, %v106
    %v390 = vpack.c.bf16 %v109, %v108
    %v391 = vpack.c.bf16 %v111, %v110
    %v392 = vpack.c.bf16 %v113, %v112
    %v393 = vpack.c.bf16 %v115, %v114
    %v394 = vpack.c.bf16 %v117, %v116
    %v395 = vpack.c.bf16 %v119, %v118
    %v396 = vpack.c.bf16 %v121, %v120
    %v397 = vpack.c.bf16 %v123, %v122
    %v398 = vpack.c.bf16 %v125, %v124
    %v399 = vpack.c.bf16 %v127, %v126
    %v400 = vpack.c.bf16 %v129, %v128
    %v401 = vpack.c.bf16 %v131, %v130
    %v402 = vpack.c.bf16 %v133, %v132
    %v403 = vpack.c.bf16 %v135, %v134
    %v404 = vpack.c.bf16 %v137, %v136
    %v405 = vpack.c.bf16 %v139, %v138
    %v406 = vpack.c.bf16 %v141, %v140
    %v407 = vpack.c.bf16 %v143, %v142
    %v408 = vpack.c.bf16 %v145, %v144
    %v409 = vpack.c.bf16 %v147, %v146
    %v410 = vpack.c.bf16 %v149, %v148
    %v411 = vpack.c.bf16 %v151, %v150
    %v412 = vpack.c.bf16 %v153, %v152
    %v413 = vpack.c.bf16 %v155, %v154
    %v414 = vpack.c.bf16 %v157, %v156
    %v415 = vpack.c.bf16 %v159, %v158
    %v416 = vpack.c.bf16 %v161, %v160
    %v417 = vpack.c.bf16 %v163, %v162
    %v418 = vpack.c.bf16 %v165, %v164
    %v419 = vpack.c.bf16 %v167, %v166
    %v420 = vpack.c.bf16 %v169, %v168
    %v421 = vpack.c.bf16 %v171, %v170
    %v422 = vpack.c.bf16 %v173, %v172
    %v423 = vpack.c.bf16 %v175, %v174
    %v424 = vpack.c.bf16 %v177, %v176
    %v425 = vpack.c.bf16 %v179, %v178
    %v426 = vpack.c.bf16 %v181, %v180
    %v427 = vpack.c.bf16 %v183, %v182
    %v428 = vpack.c.bf16 %v185, %v184
    %v429 = vpack.c.bf16 %v187, %v186
    %v430 = vpack.c.bf16 %v189, %v188
    %v431 = vpack.c.bf16 %v191, %v190
    %v432 = vpack.c.bf16 %v193, %v192
    %v433 = vpack.c.bf16 %v195, %v194
    %v434 = vpack.c.bf16 %v197, %v196
    %v435 = vpack.c.bf16 %v199, %v198
    %v436 = vpack.c.bf16 %v201, %v200
    %v437 = vpack.c.bf16 %v203, %v202
    %v438 = vpack.c.bf16 %v205, %v204
    %v439 = vpack.c.bf16 %v207, %v206
    %v440 = vpack.c.bf16 %v209, %v208
    %v441 = vpack.c.bf16 %v211, %v210
    %v442 = vpack.c.bf16 %v213, %v212
    %v443 = vpack.c.bf16 %v215, %v214
    %v444 = vpack.c.bf16 %v217, %v216
    %v445 = vpack.c.bf16 %v219, %v218
    %v446 = vpack.c.bf16 %v221, %v220
    %v447 = vpack.c.bf16 %v223, %v222
    %v448 = vpack.c.bf16 %v225, %v224
    %v449 = vpack.c.bf16 %v227, %v226
    %v450 = vpack.c.bf16 %v229, %v228
    %v451 = vpack.c.bf16 %v231, %v230
    %v452 = vpack.c.bf16 %v233, %v232
    %v453 = vpack.c.bf16 %v235, %v234
    %v454 = vpack.c.bf16 %v237, %v236
    %v455 = vpack.c.bf16 %v239, %v238
    %v456 = vpack.c.bf16 %v241, %v240
    %v457 = vpack.c.bf16 %v243, %v242
    %v458 = vpack.c.bf16 %v245, %v244
    %v459 = vpack.c.bf16 %v247, %v246
    %v460 = vpack.c.bf16 %v249, %v248
    %v461 = vpack.c.bf16 %v251, %v250
    %v462 = vpack.c.bf16 %v253, %v252
    %v463 = vpack.c.bf16 %v255, %v254
    %v464 = vpack.c.bf16 %v257, %v256
    %v465 = vpack.c.bf16 %v259, %v258
    %v466 = vpack.c.bf16 %v261, %v260
    %v467 = vpack.c.bf16 %v263, %v262
    %v468 = vpack.c.bf16 %v265, %v264
    %v469 = vpack.c.bf16 %v267, %v266
    %v470 = vpack.c.bf16 %v269, %v268
    %v471 = vpack.c.bf16 %v271, %v270
    %v472 = vpack.c.bf16 %v273, %v272
    %v473 = vpack.c.bf16 %v275, %v274
    %v474 = vpack.c.bf16 %v277, %v276
    %v475 = vpack.c.bf16 %v279, %v278
    %v476 = vpack.c.bf16 %v281, %v280
    %v477 = vpack.c.bf16 %v283, %v282
    %v478 = vpack.c.bf16 %v285, %v284
    %v479 = vpack.c.bf16 %v287, %v286
    %v480 = vpack.c.bf16 %v289, %v288
    %v481 = vpack.c.bf16 %v291, %v290
    %v482 = vpack.c.bf16 %v293, %v292
    %v483 = vpack.c.bf16 %v295, %v294
    %v484 = vpack.c.bf16 %v297, %v296
    %v485 = vpack.c.bf16 %v299, %v298
    %v486 = vpack.c.bf16 %v301, %v300
    %v487 = vpack.c.bf16 %v303, %v302
    %v488 = vpack.c.bf16 %v305, %v304
    %v489 = vpack.c.bf16 %v307, %v306
    %v490 = vpack.c.bf16 %v309, %v308
    %v491 = vpack.c.bf16 %v311, %v310
    %v492 = vpack.c.bf16 %v313, %v312
    %v493 = vpack.c.bf16 %v315, %v314
    %v494 = vpack.c.bf16 %v317, %v316
    %v495 = vpack.c.bf16 %v319, %v318
    %v496 = vpack.c.bf16 %v321, %v320
    %v497 = vpack.c.bf16 %v323, %v322
    %v498 = vpack.c.bf16 %v325, %v324
    %v499 = vpack.c.bf16 %v327, %v326
    %v500 = vpack.c.bf16 %v329, %v328
    %v501 = vpack.c.bf16 %v331, %v330
    %v502 = vpack.c.bf16 %v333, %v332
    %v503 = vpack.c.bf16 %v335, %v334
    %v504 = vpack.c.bf16 %v337, %v336
    %v505 = vpack.c.bf16 %v339, %v338
    %v506 = vpack.c.bf16 %v341, %v340
    %v507 = vpack.c.bf16 %v343, %v342
    %v508 = vpack.c.bf16 %v345, %v344
    %v509 = vpack.c.bf16 %v347, %v346
    %v510 = vpack.c.bf16 %v349, %v348
    %v511 = vpack.c.bf16 %v351, %v350
    %v512 = vld [vmem:[%s2] sm:$0xf]
    %v513 = vld [vmem:[%s2 + $0x4] sm:$0xf]
    %v514 = vld [vmem:[%s3] sm:$0x1]
    %v516 = vlaneseq
    %v517 = vshrl.u32 %v516, 7
    %v518 = vsub.s32 0, %v517
    %v519 = vrot.slane %v514, %v518
    %v523 = vunpack.c.l.b16 %v512
    %v524 = vunpack.c.l.b16 %v513
    %v525 = vpack.c.b16 %v524, %v523
    %vm527 = vcmask 130048
    %v529 = vsel %vm527, %v352, 0
    %v532 = vsel %vm527, %v353, 0
    %v535 = vsel %vm527, %v354, 0
    %v538 = vsel %vm527, %v355, 0
    %v541 = vsel %vm527, %v356, 0
    %v544 = vsel %vm527, %v357, 0
    %v547 = vsel %vm527, %v358, 0
    %v550 = vsel %vm527, %v359, 0
    %v553 = vsel %vm527, %v360, 0
    %v556 = vsel %vm527, %v361, 0
    %v559 = vsel %vm527, %v362, 0
    %v562 = vsel %vm527, %v363, 0
    %v565 = vsel %vm527, %v364, 0
    %v568 = vsel %vm527, %v365, 0
    %v571 = vsel %vm527, %v366, 0
    %v574 = vsel %vm527, %v367, 0
    %v577 = vsel %vm527, %v368, 0
    %v580 = vsel %vm527, %v369, 0
    %v583 = vsel %vm527, %v370, 0
    %v586 = vsel %vm527, %v371, 0
    %v589 = vsel %vm527, %v372, 0
    %v592 = vsel %vm527, %v373, 0
    %v595 = vsel %vm527, %v374, 0
    %v598 = vsel %vm527, %v375, 0
    %v601 = vsel %vm527, %v376, 0
    %v604 = vsel %vm527, %v377, 0
    %v607 = vsel %vm527, %v378, 0
    %v610 = vsel %vm527, %v379, 0
    %v613 = vsel %vm527, %v380, 0
    %v616 = vsel %vm527, %v381, 0
    %v619 = vsel %vm527, %v382, 0
    %v622 = vsel %vm527, %v383, 0
    %v625 = vsel %vm527, %v384, 0
    %v628 = vsel %vm527, %v385, 0
    %v631 = vsel %vm527, %v386, 0
    %v634 = vsel %vm527, %v387, 0
    %v637 = vsel %vm527, %v388, 0
    %v640 = vsel %vm527, %v389, 0
    %v643 = vsel %vm527, %v390, 0
    %v646 = vsel %vm527, %v391, 0
    %v649 = vsel %vm527, %v392, 0
    %v652 = vsel %vm527, %v393, 0
    %v655 = vsel %vm527, %v394, 0
    %v658 = vsel %vm527, %v395, 0
    %v661 = vsel %vm527, %v396, 0
    %v664 = vsel %vm527, %v397, 0
    %v667 = vsel %vm527, %v398, 0
    %v670 = vsel %vm527, %v399, 0
    %v673 = vsel %vm527, %v400, 0
    %v676 = vsel %vm527, %v401, 0
    %v679 = vsel %vm527, %v402, 0
    %v682 = vsel %vm527, %v403, 0
    %v685 = vsel %vm527, %v404, 0
    %v688 = vsel %vm527, %v405, 0
    %v691 = vsel %vm527, %v406, 0
    %v694 = vsel %vm527, %v407, 0
    %v697 = vsel %vm527, %v408, 0
    %v700 = vsel %vm527, %v409, 0
    %v703 = vsel %vm527, %v410, 0
    %v706 = vsel %vm527, %v411, 0
    %v709 = vsel %vm527, %v412, 0
    %v712 = vsel %vm527, %v413, 0
    %v715 = vsel %vm527, %v414, 0
    %v718 = vsel %vm527, %v415, 0
    %v721 = vsel %vm527, %v416, 0
    %v724 = vsel %vm527, %v417, 0
    %v727 = vsel %vm527, %v418, 0
    %v730 = vsel %vm527, %v419, 0
    %v733 = vsel %vm527, %v420, 0
    %v736 = vsel %vm527, %v421, 0
    %v739 = vsel %vm527, %v422, 0
    %v742 = vsel %vm527, %v423, 0
    %v745 = vsel %vm527, %v424, 0
    %v748 = vsel %vm527, %v425, 0
    %v751 = vsel %vm527, %v426, 0
    %v754 = vsel %vm527, %v427, 0
    %v757 = vsel %vm527, %v428, 0
    %v760 = vsel %vm527, %v429, 0
    %v763 = vsel %vm527, %v430, 0
    %v766 = vsel %vm527, %v431, 0
    %v769 = vsel %vm527, %v432, 0
    %v772 = vsel %vm527, %v433, 0
    %v775 = vsel %vm527, %v434, 0
    %v778 = vsel %vm527, %v435, 0
    %v781 = vsel %vm527, %v436, 0
    %v784 = vsel %vm527, %v437, 0
    %v787 = vsel %vm527, %v438, 0
    %v790 = vsel %vm527, %v439, 0
    %v793 = vsel %vm527, %v440, 0
    %v796 = vsel %vm527, %v441, 0
    %v799 = vsel %vm527, %v442, 0
    %v802 = vsel %vm527, %v443, 0
    %v805 = vsel %vm527, %v444, 0
    %v808 = vsel %vm527, %v445, 0
    %v811 = vsel %vm527, %v446, 0
    %v814 = vsel %vm527, %v447, 0
    %v817 = vsel %vm527, %v448, 0
    %v820 = vsel %vm527, %v449, 0
    %v823 = vsel %vm527, %v450, 0
    %v826 = vsel %vm527, %v451, 0
    %v829 = vsel %vm527, %v452, 0
    %v832 = vsel %vm527, %v453, 0
    %v835 = vsel %vm527, %v454, 0
    %v838 = vsel %vm527, %v455, 0
    %v841 = vsel %vm527, %v456, 0
    %v844 = vsel %vm527, %v457, 0
    %v847 = vsel %vm527, %v458, 0
    %v850 = vsel %vm527, %v459, 0
    %v853 = vsel %vm527, %v460, 0
    %v856 = vsel %vm527, %v461, 0
    %v859 = vsel %vm527, %v462, 0
    %v862 = vsel %vm527, %v463, 0
    %v865 = vsel %vm527, %v464, 0
    %v868 = vsel %vm527, %v465, 0
    %v871 = vsel %vm527, %v466, 0
    %v874 = vsel %vm527, %v467, 0
    %v877 = vsel %vm527, %v468, 0
    %v880 = vsel %vm527, %v469, 0
    %v883 = vsel %vm527, %v470, 0
    %v886 = vsel %vm527, %v471, 0
    %v889 = vsel %vm527, %v472, 0
    %v892 = vsel %vm527, %v473, 0
    %v895 = vsel %vm527, %v474, 0
    %v898 = vsel %vm527, %v475, 0
    %v901 = vsel %vm527, %v476, 0
    %v904 = vsel %vm527, %v477, 0
    %v907 = vsel %vm527, %v478, 0
    %v910 = vsel %vm527, %v479, 0
    %v913 = vsel %vm527, %v480, 0
    %v916 = vsel %vm527, %v481, 0
    %v919 = vsel %vm527, %v482, 0
    %v922 = vsel %vm527, %v483, 0
    %v925 = vsel %vm527, %v484, 0
    %v928 = vsel %vm527, %v485, 0
    %v931 = vsel %vm527, %v486, 0
    %v934 = vsel %vm527, %v487, 0
    %v937 = vsel %vm527, %v488, 0
    %v940 = vsel %vm527, %v489, 0
    %v943 = vsel %vm527, %v490, 0
    %v946 = vsel %vm527, %v491, 0
    %v949 = vsel %vm527, %v492, 0
    %v952 = vsel %vm527, %v493, 0
    %v955 = vsel %vm527, %v494, 0
    %v958 = vsel %vm527, %v495, 0
    %v961 = vsel %vm527, %v496, 0
    %v964 = vsel %vm527, %v497, 0
    %v967 = vsel %vm527, %v498, 0
    %v970 = vsel %vm527, %v499, 0
    %v973 = vsel %vm527, %v500, 0
    %v976 = vsel %vm527, %v501, 0
    %v979 = vsel %vm527, %v502, 0
    %v982 = vsel %vm527, %v503, 0
    %v985 = vsel %vm527, %v504, 0
    %v988 = vsel %vm527, %v505, 0
    %v991 = vsel %vm527, %v506, 0
    %v994 = vsel %vm527, %v507, 0
    %v997 = vsel %vm527, %v508, 0
    %v1000 = vsel %vm527, %v509, 0
    %v1003 = vsel %vm527, %v510, 0
    %v1006 = vsel %vm527, %v511, 0
    %1008 = vmatprep.subr.bf16.mxu0 0
    %1009 = vmatpush1.bf16.msra.mxu0 0
    %1010 = vmatprep.subr.bf16.mxu0 0
    %1011 = vmatpush1.bf16.msra.mxu0 0
    %1012 = vmatprep.subr.bf16.mxu0 0
    %1013 = vmatpush1.bf16.msra.mxu0 0
    %1014 = vmatprep.subr.bf16.mxu0 0
    %1015 = vmatpush1.bf16.msra.mxu0 0
    %1016 = vmatprep.subr.bf16.mxu0 0
    %1017 = vmatpush1.bf16.msra.mxu0 0
    %1018 = vmatprep.subr.bf16.mxu0 0
    %1019 = vmatpush1.bf16.msra.mxu0 0
    %1020 = vmatprep.subr.bf16.mxu0 0
    %1021 = vmatpush1.bf16.msra.mxu0 0
    %1022 = vmatprep.subr.bf16.mxu0 0
    %1023 = vmatpush1.bf16.msra.mxu0 %v525
    %1024 = vmatprep.subr.bf16.mxu0 0
    %1025 = vmatpush2.bf16.msra.mxu0 0
    %1026 = vmatprep.subr.bf16.mxu0 0
    %1027 = vmatpush2.bf16.msra.mxu0 0
    %1028 = vmatprep.subr.bf16.mxu0 0
    %1029 = vmatpush2.bf16.msra.mxu0 0
    %1030 = vmatprep.subr.bf16.mxu0 0
    %1031 = vmatpush2.bf16.msra.mxu0 0
    %1032 = vmatprep.subr.bf16.mxu0 0
    %1033 = vmatpush2.bf16.msra.mxu0 0
    %1034 = vmatprep.subr.bf16.mxu0 0
    %1035 = vmatpush2.bf16.msra.mxu0 0
    %1036 = vmatprep.subr.bf16.mxu0 0
    %1037 = vmatpush2.bf16.msra.mxu0 0
    %1038 = vmatprep.subr.bf16.mxu0 0
    %1039 = vmatpush2.bf16.msra.mxu0 0
    %1040 = vmatprep.mubr.bf16.mxu0 0
    %1041 = vmatmul.mubr.bf16.gmra.mxu0 %v529
    %v1042 = vpop.f32.mrf.mxu0
    %v1043 = vadd.f32 %v519, %v1042
    %v1044 = vpop.f32.mrf.mxu0
    %v1045 = vpop.f32.mrf.mxu0
    %v1046 = vadd.f32 %v519, %v1045
    %v1047 = vpop.f32.mrf.mxu0
    %1048 = vmatprep.mubr.bf16.mxu0 0
    %1049 = vmatmul.mubr.bf16.gmra.mxu0 %v532
    %v1050 = vpop.f32.mrf.mxu0
    %v1051 = vadd.f32 %v519, %v1050
    %v1052 = vpop.f32.mrf.mxu0
    %v1053 = vpop.f32.mrf.mxu0
    %v1054 = vadd.f32 %v519, %v1053
    %v1055 = vpop.f32.mrf.mxu0
    %1056 = vmatprep.mubr.bf16.mxu0 0
    %1057 = vmatmul.mubr.bf16.gmra.mxu0 %v535
    %v1058 = vpop.f32.mrf.mxu0
    %v1059 = vadd.f32 %v519, %v1058
    %v1060 = vpop.f32.mrf.mxu0
    %v1061 = vpop.f32.mrf.mxu0
    %v1062 = vadd.f32 %v519, %v1061
    %v1063 = vpop.f32.mrf.mxu0
    %1064 = vmatprep.mubr.bf16.mxu0 0
    %1065 = vmatmul.mubr.bf16.gmra.mxu0 %v538
    %v1066 = vpop.f32.mrf.mxu0
    %v1067 = vadd.f32 %v519, %v1066
    %v1068 = vpop.f32.mrf.mxu0
    %v1069 = vpop.f32.mrf.mxu0
    %v1070 = vadd.f32 %v519, %v1069
    %v1071 = vpop.f32.mrf.mxu0
    %1072 = vmatprep.mubr.bf16.mxu0 0
    %1073 = vmatmul.mubr.bf16.gmra.mxu0 %v541
    %v1074 = vpop.f32.mrf.mxu0
    %v1075 = vadd.f32 %v519, %v1074
    %v1076 = vpop.f32.mrf.mxu0
    %v1077 = vpop.f32.mrf.mxu0
    %v1078 = vadd.f32 %v519, %v1077
    %v1079 = vpop.f32.mrf.mxu0
    %1080 = vmatprep.mubr.bf16.mxu0 0
    %1081 = vmatmul.mubr.bf16.gmra.mxu0 %v544
    %v1082 = vpop.f32.mrf.mxu0
    %v1083 = vadd.f32 %v519, %v1082
    %v1084 = vpop.f32.mrf.mxu0
    %v1085 = vpop.f32.mrf.mxu0
    %v1086 = vadd.f32 %v519, %v1085
    %v1087 = vpop.f32.mrf.mxu0
    %1088 = vmatprep.mubr.bf16.mxu0 0
    %1089 = vmatmul.mubr.bf16.gmra.mxu0 %v547
    %v1090 = vpop.f32.mrf.mxu0
    %v1091 = vadd.f32 %v519, %v1090
    %v1092 = vpop.f32.mrf.mxu0
    %v1093 = vpop.f32.mrf.mxu0
    %v1094 = vadd.f32 %v519, %v1093
    %v1095 = vpop.f32.mrf.mxu0
    %1096 = vmatprep.mubr.bf16.mxu0 0
    %1097 = vmatmul.mubr.bf16.gmra.mxu0 %v550
    %v1098 = vpop.f32.mrf.mxu0
    %v1099 = vadd.f32 %v519, %v1098
    %v1100 = vpop.f32.mrf.mxu0
    %v1101 = vpop.f32.mrf.mxu0
    %v1102 = vadd.f32 %v519, %v1101
    %v1103 = vpop.f32.mrf.mxu0
    %1104 = vmatprep.mubr.bf16.mxu0 0
    %1105 = vmatmul.mubr.bf16.gmra.mxu0 %v553
    %v1106 = vpop.f32.mrf.mxu0
    %v1107 = vadd.f32 %v519, %v1106
    %v1108 = vpop.f32.mrf.mxu0
    %v1109 = vpop.f32.mrf.mxu0
    %v1110 = vadd.f32 %v519, %v1109
    %v1111 = vpop.f32.mrf.mxu0
    %1112 = vmatprep.mubr.bf16.mxu0 0
    %1113 = vmatmul.mubr.bf16.gmra.mxu0 %v556
    %v1114 = vpop.f32.mrf.mxu0
    %v1115 = vadd.f32 %v519, %v1114
    %v1116 = vpop.f32.mrf.mxu0
    %v1117 = vpop.f32.mrf.mxu0
    %v1118 = vadd.f32 %v519, %v1117
    %v1119 = vpop.f32.mrf.mxu0
    %1120 = vmatprep.mubr.bf16.mxu0 0
    %1121 = vmatmul.mubr.bf16.gmra.mxu0 %v559
    %v1122 = vpop.f32.mrf.mxu0
    %v1123 = vadd.f32 %v519, %v1122
    %v1124 = vpop.f32.mrf.mxu0
    %v1125 = vpop.f32.mrf.mxu0
    %v1126 = vadd.f32 %v519, %v1125
    %v1127 = vpop.f32.mrf.mxu0
    %1128 = vmatprep.mubr.bf16.mxu0 0
    %1129 = vmatmul.mubr.bf16.gmra.mxu0 %v562
    %v1130 = vpop.f32.mrf.mxu0
    %v1131 = vadd.f32 %v519, %v1130
    %v1132 = vpop.f32.mrf.mxu0
    %v1133 = vpop.f32.mrf.mxu0
    %v1134 = vadd.f32 %v519, %v1133
    %v1135 = vpop.f32.mrf.mxu0
    %1136 = vmatprep.mubr.bf16.mxu0 0
    %1137 = vmatmul.mubr.bf16.gmra.mxu0 %v565
    %v1138 = vpop.f32.mrf.mxu0
    %v1139 = vadd.f32 %v519, %v1138
    %v1140 = vpop.f32.mrf.mxu0
    %v1141 = vpop.f32.mrf.mxu0
    %v1142 = vadd.f32 %v519, %v1141
    %v1143 = vpop.f32.mrf.mxu0
    %1144 = vmatprep.mubr.bf16.mxu0 0
    %1145 = vmatmul.mubr.bf16.gmra.mxu0 %v568
    %v1146 = vpop.f32.mrf.mxu0
    %v1147 = vadd.f32 %v519, %v1146
    %v1148 = vpop.f32.mrf.mxu0
    %v1149 = vpop.f32.mrf.mxu0
    %v1150 = vadd.f32 %v519, %v1149
    %v1151 = vpop.f32.mrf.mxu0
    %1152 = vmatprep.mubr.bf16.mxu0 0
    %1153 = vmatmul.mubr.bf16.gmra.mxu0 %v571
    %v1154 = vpop.f32.mrf.mxu0
    %v1155 = vadd.f32 %v519, %v1154
    %v1156 = vpop.f32.mrf.mxu0
    %v1157 = vpop.f32.mrf.mxu0
    %v1158 = vadd.f32 %v519, %v1157
    %v1159 = vpop.f32.mrf.mxu0
    %1160 = vmatprep.mubr.bf16.mxu0 0
    %1161 = vmatmul.mubr.bf16.gmra.mxu0 %v574
    %v1162 = vpop.f32.mrf.mxu0
    %v1163 = vadd.f32 %v519, %v1162
    %v1164 = vpop.f32.mrf.mxu0
    %v1165 = vpop.f32.mrf.mxu0
    %v1166 = vadd.f32 %v519, %v1165
    %v1167 = vpop.f32.mrf.mxu0
    %1168 = vmatprep.mubr.bf16.mxu0 0
    %1169 = vmatmul.mubr.bf16.gmra.mxu0 %v577
    %v1170 = vpop.f32.mrf.mxu0
    %v1171 = vadd.f32 %v519, %v1170
    %v1172 = vpop.f32.mrf.mxu0
    %v1173 = vpop.f32.mrf.mxu0
    %v1174 = vadd.f32 %v519, %v1173
    %v1175 = vpop.f32.mrf.mxu0
    %1176 = vmatprep.mubr.bf16.mxu0 0
    %1177 = vmatmul.mubr.bf16.gmra.mxu0 %v580
    %v1178 = vpop.f32.mrf.mxu0
    %v1179 = vadd.f32 %v519, %v1178
    %v1180 = vpop.f32.mrf.mxu0
    %v1181 = vpop.f32.mrf.mxu0
    %v1182 = vadd.f32 %v519, %v1181
    %v1183 = vpop.f32.mrf.mxu0
    %1184 = vmatprep.mubr.bf16.mxu0 0
    %1185 = vmatmul.mubr.bf16.gmra.mxu0 %v583
    %v1186 = vpop.f32.mrf.mxu0
    %v1187 = vadd.f32 %v519, %v1186
    %v1188 = vpop.f32.mrf.mxu0
    %v1189 = vpop.f32.mrf.mxu0
    %v1190 = vadd.f32 %v519, %v1189
    %v1191 = vpop.f32.mrf.mxu0
    %1192 = vmatprep.mubr.bf16.mxu0 0
    %1193 = vmatmul.mubr.bf16.gmra.mxu0 %v586
    %v1194 = vpop.f32.mrf.mxu0
    %v1195 = vadd.f32 %v519, %v1194
    %v1196 = vpop.f32.mrf.mxu0
    %v1197 = vpop.f32.mrf.mxu0
    %v1198 = vadd.f32 %v519, %v1197
    %v1199 = vpop.f32.mrf.mxu0
    %1200 = vmatprep.mubr.bf16.mxu0 0
    %1201 = vmatmul.mubr.bf16.gmra.mxu0 %v589
    %v1202 = vpop.f32.mrf.mxu0
    %v1203 = vadd.f32 %v519, %v1202
    %v1204 = vpop.f32.mrf.mxu0
    %v1205 = vpop.f32.mrf.mxu0
    %v1206 = vadd.f32 %v519, %v1205
    %v1207 = vpop.f32.mrf.mxu0
    %1208 = vmatprep.mubr.bf16.mxu0 0
    %1209 = vmatmul.mubr.bf16.gmra.mxu0 %v592
    %v1210 = vpop.f32.mrf.mxu0
    %v1211 = vadd.f32 %v519, %v1210
    %v1212 = vpop.f32.mrf.mxu0
    %v1213 = vpop.f32.mrf.mxu0
    %v1214 = vadd.f32 %v519, %v1213
    %v1215 = vpop.f32.mrf.mxu0
    %1216 = vmatprep.mubr.bf16.mxu0 0
    %1217 = vmatmul.mubr.bf16.gmra.mxu0 %v595
    %v1218 = vpop.f32.mrf.mxu0
    %v1219 = vadd.f32 %v519, %v1218
    %v1220 = vpop.f32.mrf.mxu0
    %v1221 = vpop.f32.mrf.mxu0
    %v1222 = vadd.f32 %v519, %v1221
    %v1223 = vpop.f32.mrf.mxu0
    %1224 = vmatprep.mubr.bf16.mxu0 0
    %1225 = vmatmul.mubr.bf16.gmra.mxu0 %v598
    %v1226 = vpop.f32.mrf.mxu0
    %v1227 = vadd.f32 %v519, %v1226
    %v1228 = vpop.f32.mrf.mxu0
    %v1229 = vpop.f32.mrf.mxu0
    %v1230 = vadd.f32 %v519, %v1229
    %v1231 = vpop.f32.mrf.mxu0
    %1232 = vmatprep.mubr.bf16.mxu0 0
    %1233 = vmatmul.mubr.bf16.gmra.mxu0 %v601
    %v1234 = vpop.f32.mrf.mxu0
    %v1235 = vadd.f32 %v519, %v1234
    %v1236 = vpop.f32.mrf.mxu0
    %v1237 = vpop.f32.mrf.mxu0
    %v1238 = vadd.f32 %v519, %v1237
    %v1239 = vpop.f32.mrf.mxu0
    %1240 = vmatprep.mubr.bf16.mxu0 0
    %1241 = vmatmul.mubr.bf16.gmra.mxu0 %v604
    %v1242 = vpop.f32.mrf.mxu0
    %v1243 = vadd.f32 %v519, %v1242
    %v1244 = vpop.f32.mrf.mxu0
    %v1245 = vpop.f32.mrf.mxu0
    %v1246 = vadd.f32 %v519, %v1245
    %v1247 = vpop.f32.mrf.mxu0
    %1248 = vmatprep.mubr.bf16.mxu0 0
    %1249 = vmatmul.mubr.bf16.gmra.mxu0 %v607
    %v1250 = vpop.f32.mrf.mxu0
    %v1251 = vadd.f32 %v519, %v1250
    %v1252 = vpop.f32.mrf.mxu0
    %v1253 = vpop.f32.mrf.mxu0
    %v1254 = vadd.f32 %v519, %v1253
    %v1255 = vpop.f32.mrf.mxu0
    %1256 = vmatprep.mubr.bf16.mxu0 0
    %1257 = vmatmul.mubr.bf16.gmra.mxu0 %v610
    %v1258 = vpop.f32.mrf.mxu0
    %v1259 = vadd.f32 %v519, %v1258
    %v1260 = vpop.f32.mrf.mxu0
    %v1261 = vpop.f32.mrf.mxu0
    %v1262 = vadd.f32 %v519, %v1261
    %v1263 = vpop.f32.mrf.mxu0
    %1264 = vmatprep.mubr.bf16.mxu0 0
    %1265 = vmatmul.mubr.bf16.gmra.mxu0 %v613
    %v1266 = vpop.f32.mrf.mxu0
    %v1267 = vadd.f32 %v519, %v1266
    %v1268 = vpop.f32.mrf.mxu0
    %v1269 = vpop.f32.mrf.mxu0
    %v1270 = vadd.f32 %v519, %v1269
    %v1271 = vpop.f32.mrf.mxu0
    %1272 = vmatprep.mubr.bf16.mxu0 0
    %1273 = vmatmul.mubr.bf16.gmra.mxu0 %v616
    %v1274 = vpop.f32.mrf.mxu0
    %v1275 = vadd.f32 %v519, %v1274
    %v1276 = vpop.f32.mrf.mxu0
    %v1277 = vpop.f32.mrf.mxu0
    %v1278 = vadd.f32 %v519, %v1277
    %v1279 = vpop.f32.mrf.mxu0
    %1280 = vmatprep.mubr.bf16.mxu0 0
    %1281 = vmatmul.mubr.bf16.gmra.mxu0 %v619
    %v1282 = vpop.f32.mrf.mxu0
    %v1283 = vadd.f32 %v519, %v1282
    %v1284 = vpop.f32.mrf.mxu0
    %v1285 = vpop.f32.mrf.mxu0
    %v1286 = vadd.f32 %v519, %v1285
    %v1287 = vpop.f32.mrf.mxu0
    %1288 = vmatprep.mubr.bf16.mxu0 0
    %1289 = vmatmul.mubr.bf16.gmra.mxu0 %v622
    %v1290 = vpop.f32.mrf.mxu0
    %v1291 = vadd.f32 %v519, %v1290
    %v1292 = vpop.f32.mrf.mxu0
    %v1293 = vpop.f32.mrf.mxu0
    %v1294 = vadd.f32 %v519, %v1293
    %v1295 = vpop.f32.mrf.mxu0
    %1296 = vmatprep.mubr.bf16.mxu0 0
    %1297 = vmatmul.mubr.bf16.gmra.mxu0 %v625
    %v1298 = vpop.f32.mrf.mxu0
    %v1299 = vadd.f32 %v519, %v1298
    %v1300 = vpop.f32.mrf.mxu0
    %v1301 = vpop.f32.mrf.mxu0
    %v1302 = vadd.f32 %v519, %v1301
    %v1303 = vpop.f32.mrf.mxu0
    %1304 = vmatprep.mubr.bf16.mxu0 0
    %1305 = vmatmul.mubr.bf16.gmra.mxu0 %v628
    %v1306 = vpop.f32.mrf.mxu0
    %v1307 = vadd.f32 %v519, %v1306
    %v1308 = vpop.f32.mrf.mxu0
    %v1309 = vpop.f32.mrf.mxu0
    %v1310 = vadd.f32 %v519, %v1309
    %v1311 = vpop.f32.mrf.mxu0
    %1312 = vmatprep.mubr.bf16.mxu0 0
    %1313 = vmatmul.mubr.bf16.gmra.mxu0 %v631
    %v1314 = vpop.f32.mrf.mxu0
    %v1315 = vadd.f32 %v519, %v1314
    %v1316 = vpop.f32.mrf.mxu0
    %v1317 = vpop.f32.mrf.mxu0
    %v1318 = vadd.f32 %v519, %v1317
    %v1319 = vpop.f32.mrf.mxu0
    %1320 = vmatprep.mubr.bf16.mxu0 0
    %1321 = vmatmul.mubr.bf16.gmra.mxu0 %v634
    %v1322 = vpop.f32.mrf.mxu0
    %v1323 = vadd.f32 %v519, %v1322
    %v1324 = vpop.f32.mrf.mxu0
    %v1325 = vpop.f32.mrf.mxu0
    %v1326 = vadd.f32 %v519, %v1325
    %v1327 = vpop.f32.mrf.mxu0
    %1328 = vmatprep.mubr.bf16.mxu0 0
    %1329 = vmatmul.mubr.bf16.gmra.mxu0 %v637
    %v1330 = vpop.f32.mrf.mxu0
    %v1331 = vadd.f32 %v519, %v1330
    %v1332 = vpop.f32.mrf.mxu0
    %v1333 = vpop.f32.mrf.mxu0
    %v1334 = vadd.f32 %v519, %v1333
    %v1335 = vpop.f32.mrf.mxu0
    %1336 = vmatprep.mubr.bf16.mxu0 0
    %1337 = vmatmul.mubr.bf16.gmra.mxu0 %v640
    %v1338 = vpop.f32.mrf.mxu0
    %v1339 = vadd.f32 %v519, %v1338
    %v1340 = vpop.f32.mrf.mxu0
    %v1341 = vpop.f32.mrf.mxu0
    %v1342 = vadd.f32 %v519, %v1341
    %v1343 = vpop.f32.mrf.mxu0
    %1344 = vmatprep.mubr.bf16.mxu0 0
    %1345 = vmatmul.mubr.bf16.gmra.mxu0 %v643
    %v1346 = vpop.f32.mrf.mxu0
    %v1347 = vadd.f32 %v519, %v1346
    %v1348 = vpop.f32.mrf.mxu0
    %v1349 = vpop.f32.mrf.mxu0
    %v1350 = vadd.f32 %v519, %v1349
    %v1351 = vpop.f32.mrf.mxu0
    %1352 = vmatprep.mubr.bf16.mxu0 0
    %1353 = vmatmul.mubr.bf16.gmra.mxu0 %v646
    %v1354 = vpop.f32.mrf.mxu0
    %v1355 = vadd.f32 %v519, %v1354
    %v1356 = vpop.f32.mrf.mxu0
    %v1357 = vpop.f32.mrf.mxu0
    %v1358 = vadd.f32 %v519, %v1357
    %v1359 = vpop.f32.mrf.mxu0
    %1360 = vmatprep.mubr.bf16.mxu0 0
    %1361 = vmatmul.mubr.bf16.gmra.mxu0 %v649
    %v1362 = vpop.f32.mrf.mxu0
    %v1363 = vadd.f32 %v519, %v1362
    %v1364 = vpop.f32.mrf.mxu0
    %v1365 = vpop.f32.mrf.mxu0
    %v1366 = vadd.f32 %v519, %v1365
    %v1367 = vpop.f32.mrf.mxu0
    %1368 = vmatprep.mubr.bf16.mxu0 0
    %1369 = vmatmul.mubr.bf16.gmra.mxu0 %v652
    %v1370 = vpop.f32.mrf.mxu0
    %v1371 = vadd.f32 %v519, %v1370
    %v1372 = vpop.f32.mrf.mxu0
    %v1373 = vpop.f32.mrf.mxu0
    %v1374 = vadd.f32 %v519, %v1373
    %v1375 = vpop.f32.mrf.mxu0
    %1376 = vmatprep.mubr.bf16.mxu0 0
    %1377 = vmatmul.mubr.bf16.gmra.mxu0 %v655
    %v1378 = vpop.f32.mrf.mxu0
    %v1379 = vadd.f32 %v519, %v1378
    %v1380 = vpop.f32.mrf.mxu0
    %v1381 = vpop.f32.mrf.mxu0
    %v1382 = vadd.f32 %v519, %v1381
    %v1383 = vpop.f32.mrf.mxu0
    %1384 = vmatprep.mubr.bf16.mxu0 0
    %1385 = vmatmul.mubr.bf16.gmra.mxu0 %v658
    %v1386 = vpop.f32.mrf.mxu0
    %v1387 = vadd.f32 %v519, %v1386
    %v1388 = vpop.f32.mrf.mxu0
    %v1389 = vpop.f32.mrf.mxu0
    %v1390 = vadd.f32 %v519, %v1389
    %v1391 = vpop.f32.mrf.mxu0
    %1392 = vmatprep.mubr.bf16.mxu0 0
    %1393 = vmatmul.mubr.bf16.gmra.mxu0 %v661
    %v1394 = vpop.f32.mrf.mxu0
    %v1395 = vadd.f32 %v519, %v1394
    %v1396 = vpop.f32.mrf.mxu0
    %v1397 = vpop.f32.mrf.mxu0
    %v1398 = vadd.f32 %v519, %v1397
    %v1399 = vpop.f32.mrf.mxu0
    %1400 = vmatprep.mubr.bf16.mxu0 0
    %1401 = vmatmul.mubr.bf16.gmra.mxu0 %v664
    %v1402 = vpop.f32.mrf.mxu0
    %v1403 = vadd.f32 %v519, %v1402
    %v1404 = vpop.f32.mrf.mxu0
    %v1405 = vpop.f32.mrf.mxu0
    %v1406 = vadd.f32 %v519, %v1405
    %v1407 = vpop.f32.mrf.mxu0
    %1408 = vmatprep.mubr.bf16.mxu0 0
    %1409 = vmatmul.mubr.bf16.gmra.mxu0 %v667
    %v1410 = vpop.f32.mrf.mxu0
    %v1411 = vadd.f32 %v519, %v1410
    %v1412 = vpop.f32.mrf.mxu0
    %v1413 = vpop.f32.mrf.mxu0
    %v1414 = vadd.f32 %v519, %v1413
    %v1415 = vpop.f32.mrf.mxu0
    %1416 = vmatprep.mubr.bf16.mxu0 0
    %1417 = vmatmul.mubr.bf16.gmra.mxu0 %v670
    %v1418 = vpop.f32.mrf.mxu0
    %v1419 = vadd.f32 %v519, %v1418
    %v1420 = vpop.f32.mrf.mxu0
    %v1421 = vpop.f32.mrf.mxu0
    %v1422 = vadd.f32 %v519, %v1421
    %v1423 = vpop.f32.mrf.mxu0
    %1424 = vmatprep.mubr.bf16.mxu0 0
    %1425 = vmatmul.mubr.bf16.gmra.mxu0 %v673
    %v1426 = vpop.f32.mrf.mxu0
    %v1427 = vadd.f32 %v519, %v1426
    %v1428 = vpop.f32.mrf.mxu0
    %v1429 = vpop.f32.mrf.mxu0
    %v1430 = vadd.f32 %v519, %v1429
    %v1431 = vpop.f32.mrf.mxu0
    %1432 = vmatprep.mubr.bf16.mxu0 0
    %1433 = vmatmul.mubr.bf16.gmra.mxu0 %v676
    %v1434 = vpop.f32.mrf.mxu0
    %v1435 = vadd.f32 %v519, %v1434
    %v1436 = vpop.f32.mrf.mxu0
    %v1437 = vpop.f32.mrf.mxu0
    %v1438 = vadd.f32 %v519, %v1437
    %v1439 = vpop.f32.mrf.mxu0
    %1440 = vmatprep.mubr.bf16.mxu0 0
    %1441 = vmatmul.mubr.bf16.gmra.mxu0 %v679
    %v1442 = vpop.f32.mrf.mxu0
    %v1443 = vadd.f32 %v519, %v1442
    %v1444 = vpop.f32.mrf.mxu0
    %v1445 = vpop.f32.mrf.mxu0
    %v1446 = vadd.f32 %v519, %v1445
    %v1447 = vpop.f32.mrf.mxu0
    %1448 = vmatprep.mubr.bf16.mxu0 0
    %1449 = vmatmul.mubr.bf16.gmra.mxu0 %v682
    %v1450 = vpop.f32.mrf.mxu0
    %v1451 = vadd.f32 %v519, %v1450
    %v1452 = vpop.f32.mrf.mxu0
    %v1453 = vpop.f32.mrf.mxu0
    %v1454 = vadd.f32 %v519, %v1453
    %v1455 = vpop.f32.mrf.mxu0
    %1456 = vmatprep.mubr.bf16.mxu0 0
    %1457 = vmatmul.mubr.bf16.gmra.mxu0 %v685
    %v1458 = vpop.f32.mrf.mxu0
    %v1459 = vadd.f32 %v519, %v1458
    %v1460 = vpop.f32.mrf.mxu0
    %v1461 = vpop.f32.mrf.mxu0
    %v1462 = vadd.f32 %v519, %v1461
    %v1463 = vpop.f32.mrf.mxu0
    %1464 = vmatprep.mubr.bf16.mxu0 0
    %1465 = vmatmul.mubr.bf16.gmra.mxu0 %v688
    %v1466 = vpop.f32.mrf.mxu0
    %v1467 = vadd.f32 %v519, %v1466
    %v1468 = vpop.f32.mrf.mxu0
    %v1469 = vpop.f32.mrf.mxu0
    %v1470 = vadd.f32 %v519, %v1469
    %v1471 = vpop.f32.mrf.mxu0
    %1472 = vmatprep.mubr.bf16.mxu0 0
    %1473 = vmatmul.mubr.bf16.gmra.mxu0 %v691
    %v1474 = vpop.f32.mrf.mxu0
    %v1475 = vadd.f32 %v519, %v1474
    %v1476 = vpop.f32.mrf.mxu0
    %v1477 = vpop.f32.mrf.mxu0
    %v1478 = vadd.f32 %v519, %v1477
    %v1479 = vpop.f32.mrf.mxu0
    %1480 = vmatprep.mubr.bf16.mxu0 0
    %1481 = vmatmul.mubr.bf16.gmra.mxu0 %v694
    %v1482 = vpop.f32.mrf.mxu0
    %v1483 = vadd.f32 %v519, %v1482
    %v1484 = vpop.f32.mrf.mxu0
    %v1485 = vpop.f32.mrf.mxu0
    %v1486 = vadd.f32 %v519, %v1485
    %v1487 = vpop.f32.mrf.mxu0
    %1488 = vmatprep.mubr.bf16.mxu0 0
    %1489 = vmatmul.mubr.bf16.gmra.mxu0 %v697
    %v1490 = vpop.f32.mrf.mxu0
    %v1491 = vadd.f32 %v519, %v1490
    %v1492 = vpop.f32.mrf.mxu0
    %v1493 = vpop.f32.mrf.mxu0
    %v1494 = vadd.f32 %v519, %v1493
    %v1495 = vpop.f32.mrf.mxu0
    %1496 = vmatprep.mubr.bf16.mxu0 0
    %1497 = vmatmul.mubr.bf16.gmra.mxu0 %v700
    %v1498 = vpop.f32.mrf.mxu0
    %v1499 = vadd.f32 %v519, %v1498
    %v1500 = vpop.f32.mrf.mxu0
    %v1501 = vpop.f32.mrf.mxu0
    %v1502 = vadd.f32 %v519, %v1501
    %v1503 = vpop.f32.mrf.mxu0
    %1504 = vmatprep.mubr.bf16.mxu0 0
    %1505 = vmatmul.mubr.bf16.gmra.mxu0 %v703
    %v1506 = vpop.f32.mrf.mxu0
    %v1507 = vadd.f32 %v519, %v1506
    %v1508 = vpop.f32.mrf.mxu0
    %v1509 = vpop.f32.mrf.mxu0
    %v1510 = vadd.f32 %v519, %v1509
    %v1511 = vpop.f32.mrf.mxu0
    %1512 = vmatprep.mubr.bf16.mxu0 0
    %1513 = vmatmul.mubr.bf16.gmra.mxu0 %v706
    %v1514 = vpop.f32.mrf.mxu0
    %v1515 = vadd.f32 %v519, %v1514
    %v1516 = vpop.f32.mrf.mxu0
    %v1517 = vpop.f32.mrf.mxu0
    %v1518 = vadd.f32 %v519, %v1517
    %v1519 = vpop.f32.mrf.mxu0
    %1520 = vmatprep.mubr.bf16.mxu0 0
    %1521 = vmatmul.mubr.bf16.gmra.mxu0 %v709
    %v1522 = vpop.f32.mrf.mxu0
    %v1523 = vadd.f32 %v519, %v1522
    %v1524 = vpop.f32.mrf.mxu0
    %v1525 = vpop.f32.mrf.mxu0
    %v1526 = vadd.f32 %v519, %v1525
    %v1527 = vpop.f32.mrf.mxu0
    %1528 = vmatprep.mubr.bf16.mxu0 0
    %1529 = vmatmul.mubr.bf16.gmra.mxu0 %v712
    %v1530 = vpop.f32.mrf.mxu0
    %v1531 = vadd.f32 %v519, %v1530
    %v1532 = vpop.f32.mrf.mxu0
    %v1533 = vpop.f32.mrf.mxu0
    %v1534 = vadd.f32 %v519, %v1533
    %v1535 = vpop.f32.mrf.mxu0
    %1536 = vmatprep.mubr.bf16.mxu0 0
    %1537 = vmatmul.mubr.bf16.gmra.mxu0 %v715
    %v1538 = vpop.f32.mrf.mxu0
    %v1539 = vadd.f32 %v519, %v1538
    %v1540 = vpop.f32.mrf.mxu0
    %v1541 = vpop.f32.mrf.mxu0
    %v1542 = vadd.f32 %v519, %v1541
    %v1543 = vpop.f32.mrf.mxu0
    %1544 = vmatprep.mubr.bf16.mxu0 0
    %1545 = vmatmul.mubr.bf16.gmra.mxu0 %v718
    %v1546 = vpop.f32.mrf.mxu0
    %v1547 = vadd.f32 %v519, %v1546
    %v1548 = vpop.f32.mrf.mxu0
    %v1549 = vpop.f32.mrf.mxu0
    %v1550 = vadd.f32 %v519, %v1549
    %v1551 = vpop.f32.mrf.mxu0
    %1552 = vmatprep.mubr.bf16.mxu0 0
    %1553 = vmatmul.mubr.bf16.gmra.mxu0 %v721
    %v1554 = vpop.f32.mrf.mxu0
    %v1555 = vadd.f32 %v519, %v1554
    %v1556 = vpop.f32.mrf.mxu0
    %v1557 = vpop.f32.mrf.mxu0
    %v1558 = vadd.f32 %v519, %v1557
    %v1559 = vpop.f32.mrf.mxu0
    %1560 = vmatprep.mubr.bf16.mxu0 0
    %1561 = vmatmul.mubr.bf16.gmra.mxu0 %v724
    %v1562 = vpop.f32.mrf.mxu0
    %v1563 = vadd.f32 %v519, %v1562
    %v1564 = vpop.f32.mrf.mxu0
    %v1565 = vpop.f32.mrf.mxu0
    %v1566 = vadd.f32 %v519, %v1565
    %v1567 = vpop.f32.mrf.mxu0
    %1568 = vmatprep.mubr.bf16.mxu0 0
    %1569 = vmatmul.mubr.bf16.gmra.mxu0 %v727
    %v1570 = vpop.f32.mrf.mxu0
    %v1571 = vadd.f32 %v519, %v1570
    %v1572 = vpop.f32.mrf.mxu0
    %v1573 = vpop.f32.mrf.mxu0
    %v1574 = vadd.f32 %v519, %v1573
    %v1575 = vpop.f32.mrf.mxu0
    %1576 = vmatprep.mubr.bf16.mxu0 0
    %1577 = vmatmul.mubr.bf16.gmra.mxu0 %v730
    %v1578 = vpop.f32.mrf.mxu0
    %v1579 = vadd.f32 %v519, %v1578
    %v1580 = vpop.f32.mrf.mxu0
    %v1581 = vpop.f32.mrf.mxu0
    %v1582 = vadd.f32 %v519, %v1581
    %v1583 = vpop.f32.mrf.mxu0
    %1584 = vmatprep.mubr.bf16.mxu0 0
    %1585 = vmatmul.mubr.bf16.gmra.mxu0 %v733
    %v1586 = vpop.f32.mrf.mxu0
    %v1587 = vadd.f32 %v519, %v1586
    %v1588 = vpop.f32.mrf.mxu0
    %v1589 = vpop.f32.mrf.mxu0
    %v1590 = vadd.f32 %v519, %v1589
    %v1591 = vpop.f32.mrf.mxu0
    %1592 = vmatprep.mubr.bf16.mxu0 0
    %1593 = vmatmul.mubr.bf16.gmra.mxu0 %v736
    %v1594 = vpop.f32.mrf.mxu0
    %v1595 = vadd.f32 %v519, %v1594
    %v1596 = vpop.f32.mrf.mxu0
    %v1597 = vpop.f32.mrf.mxu0
    %v1598 = vadd.f32 %v519, %v1597
    %v1599 = vpop.f32.mrf.mxu0
    %1600 = vmatprep.mubr.bf16.mxu0 0
    %1601 = vmatmul.mubr.bf16.gmra.mxu0 %v739
    %v1602 = vpop.f32.mrf.mxu0
    %v1603 = vadd.f32 %v519, %v1602
    %v1604 = vpop.f32.mrf.mxu0
    %v1605 = vpop.f32.mrf.mxu0
    %v1606 = vadd.f32 %v519, %v1605
    %v1607 = vpop.f32.mrf.mxu0
    %1608 = vmatprep.mubr.bf16.mxu0 0
    %1609 = vmatmul.mubr.bf16.gmra.mxu0 %v742
    %v1610 = vpop.f32.mrf.mxu0
    %v1611 = vadd.f32 %v519, %v1610
    %v1612 = vpop.f32.mrf.mxu0
    %v1613 = vpop.f32.mrf.mxu0
    %v1614 = vadd.f32 %v519, %v1613
    %v1615 = vpop.f32.mrf.mxu0
    %1616 = vmatprep.mubr.bf16.mxu0 0
    %1617 = vmatmul.mubr.bf16.gmra.mxu0 %v745
    %v1618 = vpop.f32.mrf.mxu0
    %v1619 = vadd.f32 %v519, %v1618
    %v1620 = vpop.f32.mrf.mxu0
    %v1621 = vpop.f32.mrf.mxu0
    %v1622 = vadd.f32 %v519, %v1621
    %v1623 = vpop.f32.mrf.mxu0
    %1624 = vmatprep.mubr.bf16.mxu0 0
    %1625 = vmatmul.mubr.bf16.gmra.mxu0 %v748
    %v1626 = vpop.f32.mrf.mxu0
    %v1627 = vadd.f32 %v519, %v1626
    %v1628 = vpop.f32.mrf.mxu0
    %v1629 = vpop.f32.mrf.mxu0
    %v1630 = vadd.f32 %v519, %v1629
    %v1631 = vpop.f32.mrf.mxu0
    %1632 = vmatprep.mubr.bf16.mxu0 0
    %1633 = vmatmul.mubr.bf16.gmra.mxu0 %v751
    %v1634 = vpop.f32.mrf.mxu0
    %v1635 = vadd.f32 %v519, %v1634
    %v1636 = vpop.f32.mrf.mxu0
    %v1637 = vpop.f32.mrf.mxu0
    %v1638 = vadd.f32 %v519, %v1637
    %v1639 = vpop.f32.mrf.mxu0
    %1640 = vmatprep.mubr.bf16.mxu0 0
    %1641 = vmatmul.mubr.bf16.gmra.mxu0 %v754
    %v1642 = vpop.f32.mrf.mxu0
    %v1643 = vadd.f32 %v519, %v1642
    %v1644 = vpop.f32.mrf.mxu0
    %v1645 = vpop.f32.mrf.mxu0
    %v1646 = vadd.f32 %v519, %v1645
    %v1647 = vpop.f32.mrf.mxu0
    %1648 = vmatprep.mubr.bf16.mxu0 0
    %1649 = vmatmul.mubr.bf16.gmra.mxu0 %v757
    %v1650 = vpop.f32.mrf.mxu0
    %v1651 = vadd.f32 %v519, %v1650
    %v1652 = vpop.f32.mrf.mxu0
    %v1653 = vpop.f32.mrf.mxu0
    %v1654 = vadd.f32 %v519, %v1653
    %v1655 = vpop.f32.mrf.mxu0
    %1656 = vmatprep.mubr.bf16.mxu0 0
    %1657 = vmatmul.mubr.bf16.gmra.mxu0 %v760
    %v1658 = vpop.f32.mrf.mxu0
    %v1659 = vadd.f32 %v519, %v1658
    %v1660 = vpop.f32.mrf.mxu0
    %v1661 = vpop.f32.mrf.mxu0
    %v1662 = vadd.f32 %v519, %v1661
    %v1663 = vpop.f32.mrf.mxu0
    %1664 = vmatprep.mubr.bf16.mxu0 0
    %1665 = vmatmul.mubr.bf16.gmra.mxu0 %v763
    %v1666 = vpop.f32.mrf.mxu0
    %v1667 = vadd.f32 %v519, %v1666
    %v1668 = vpop.f32.mrf.mxu0
    %v1669 = vpop.f32.mrf.mxu0
    %v1670 = vadd.f32 %v519, %v1669
    %v1671 = vpop.f32.mrf.mxu0
    %1672 = vmatprep.mubr.bf16.mxu0 0
    %1673 = vmatmul.mubr.bf16.gmra.mxu0 %v766
    %v1674 = vpop.f32.mrf.mxu0
    %v1675 = vadd.f32 %v519, %v1674
    %v1676 = vpop.f32.mrf.mxu0
    %v1677 = vpop.f32.mrf.mxu0
    %v1678 = vadd.f32 %v519, %v1677
    %v1679 = vpop.f32.mrf.mxu0
    %1680 = vmatprep.mubr.bf16.mxu0 0
    %1681 = vmatmul.mubr.bf16.gmra.mxu0 %v769
    %v1682 = vpop.f32.mrf.mxu0
    %v1683 = vadd.f32 %v519, %v1682
    %v1684 = vpop.f32.mrf.mxu0
    %v1685 = vpop.f32.mrf.mxu0
    %v1686 = vadd.f32 %v519, %v1685
    %v1687 = vpop.f32.mrf.mxu0
    %1688 = vmatprep.mubr.bf16.mxu0 0
    %1689 = vmatmul.mubr.bf16.gmra.mxu0 %v772
    %v1690 = vpop.f32.mrf.mxu0
    %v1691 = vadd.f32 %v519, %v1690
    %v1692 = vpop.f32.mrf.mxu0
    %v1693 = vpop.f32.mrf.mxu0
    %v1694 = vadd.f32 %v519, %v1693
    %v1695 = vpop.f32.mrf.mxu0
    %1696 = vmatprep.mubr.bf16.mxu0 0
    %1697 = vmatmul.mubr.bf16.gmra.mxu0 %v775
    %v1698 = vpop.f32.mrf.mxu0
    %v1699 = vadd.f32 %v519, %v1698
    %v1700 = vpop.f32.mrf.mxu0
    %v1701 = vpop.f32.mrf.mxu0
    %v1702 = vadd.f32 %v519, %v1701
    %v1703 = vpop.f32.mrf.mxu0
    %1704 = vmatprep.mubr.bf16.mxu0 0
    %1705 = vmatmul.mubr.bf16.gmra.mxu0 %v778
    %v1706 = vpop.f32.mrf.mxu0
    %v1707 = vadd.f32 %v519, %v1706
    %v1708 = vpop.f32.mrf.mxu0
    %v1709 = vpop.f32.mrf.mxu0
    %v1710 = vadd.f32 %v519, %v1709
    %v1711 = vpop.f32.mrf.mxu0
    %1712 = vmatprep.mubr.bf16.mxu0 0
    %1713 = vmatmul.mubr.bf16.gmra.mxu0 %v781
    %v1714 = vpop.f32.mrf.mxu0
    %v1715 = vadd.f32 %v519, %v1714
    %v1716 = vpop.f32.mrf.mxu0
    %v1717 = vpop.f32.mrf.mxu0
    %v1718 = vadd.f32 %v519, %v1717
    %v1719 = vpop.f32.mrf.mxu0
    %1720 = vmatprep.mubr.bf16.mxu0 0
    %1721 = vmatmul.mubr.bf16.gmra.mxu0 %v784
    %v1722 = vpop.f32.mrf.mxu0
    %v1723 = vadd.f32 %v519, %v1722
    %v1724 = vpop.f32.mrf.mxu0
    %v1725 = vpop.f32.mrf.mxu0
    %v1726 = vadd.f32 %v519, %v1725
    %v1727 = vpop.f32.mrf.mxu0
    %1728 = vmatprep.mubr.bf16.mxu0 0
    %1729 = vmatmul.mubr.bf16.gmra.mxu0 %v787
    %v1730 = vpop.f32.mrf.mxu0
    %v1731 = vadd.f32 %v519, %v1730
    %v1732 = vpop.f32.mrf.mxu0
    %v1733 = vpop.f32.mrf.mxu0
    %v1734 = vadd.f32 %v519, %v1733
    %v1735 = vpop.f32.mrf.mxu0
    %1736 = vmatprep.mubr.bf16.mxu0 0
    %1737 = vmatmul.mubr.bf16.gmra.mxu0 %v790
    %v1738 = vpop.f32.mrf.mxu0
    %v1739 = vadd.f32 %v519, %v1738
    %v1740 = vpop.f32.mrf.mxu0
    %v1741 = vpop.f32.mrf.mxu0
    %v1742 = vadd.f32 %v519, %v1741
    %v1743 = vpop.f32.mrf.mxu0
    %1744 = vmatprep.mubr.bf16.mxu0 0
    %1745 = vmatmul.mubr.bf16.gmra.mxu0 %v793
    %v1746 = vpop.f32.mrf.mxu0
    %v1747 = vadd.f32 %v519, %v1746
    %v1748 = vpop.f32.mrf.mxu0
    %v1749 = vpop.f32.mrf.mxu0
    %v1750 = vadd.f32 %v519, %v1749
    %v1751 = vpop.f32.mrf.mxu0
    %1752 = vmatprep.mubr.bf16.mxu0 0
    %1753 = vmatmul.mubr.bf16.gmra.mxu0 %v796
    %v1754 = vpop.f32.mrf.mxu0
    %v1755 = vadd.f32 %v519, %v1754
    %v1756 = vpop.f32.mrf.mxu0
    %v1757 = vpop.f32.mrf.mxu0
    %v1758 = vadd.f32 %v519, %v1757
    %v1759 = vpop.f32.mrf.mxu0
    %1760 = vmatprep.mubr.bf16.mxu0 0
    %1761 = vmatmul.mubr.bf16.gmra.mxu0 %v799
    %v1762 = vpop.f32.mrf.mxu0
    %v1763 = vadd.f32 %v519, %v1762
    %v1764 = vpop.f32.mrf.mxu0
    %v1765 = vpop.f32.mrf.mxu0
    %v1766 = vadd.f32 %v519, %v1765
    %v1767 = vpop.f32.mrf.mxu0
    %1768 = vmatprep.mubr.bf16.mxu0 0
    %1769 = vmatmul.mubr.bf16.gmra.mxu0 %v802
    %v1770 = vpop.f32.mrf.mxu0
    %v1771 = vadd.f32 %v519, %v1770
    %v1772 = vpop.f32.mrf.mxu0
    %v1773 = vpop.f32.mrf.mxu0
    %v1774 = vadd.f32 %v519, %v1773
    %v1775 = vpop.f32.mrf.mxu0
    %1776 = vmatprep.mubr.bf16.mxu0 0
    %1777 = vmatmul.mubr.bf16.gmra.mxu0 %v805
    %v1778 = vpop.f32.mrf.mxu0
    %v1779 = vadd.f32 %v519, %v1778
    %v1780 = vpop.f32.mrf.mxu0
    %v1781 = vpop.f32.mrf.mxu0
    %v1782 = vadd.f32 %v519, %v1781
    %v1783 = vpop.f32.mrf.mxu0
    %1784 = vmatprep.mubr.bf16.mxu0 0
    %1785 = vmatmul.mubr.bf16.gmra.mxu0 %v808
    %v1786 = vpop.f32.mrf.mxu0
    %v1787 = vadd.f32 %v519, %v1786
    %v1788 = vpop.f32.mrf.mxu0
    %v1789 = vpop.f32.mrf.mxu0
    %v1790 = vadd.f32 %v519, %v1789
    %v1791 = vpop.f32.mrf.mxu0
    %1792 = vmatprep.mubr.bf16.mxu0 0
    %1793 = vmatmul.mubr.bf16.gmra.mxu0 %v811
    %v1794 = vpop.f32.mrf.mxu0
    %v1795 = vadd.f32 %v519, %v1794
    %v1796 = vpop.f32.mrf.mxu0
    %v1797 = vpop.f32.mrf.mxu0
    %v1798 = vadd.f32 %v519, %v1797
    %v1799 = vpop.f32.mrf.mxu0
    %1800 = vmatprep.mubr.bf16.mxu0 0
    %1801 = vmatmul.mubr.bf16.gmra.mxu0 %v814
    %v1802 = vpop.f32.mrf.mxu0
    %v1803 = vadd.f32 %v519, %v1802
    %v1804 = vpop.f32.mrf.mxu0
    %v1805 = vpop.f32.mrf.mxu0
    %v1806 = vadd.f32 %v519, %v1805
    %v1807 = vpop.f32.mrf.mxu0
    %1808 = vmatprep.mubr.bf16.mxu0 0
    %1809 = vmatmul.mubr.bf16.gmra.mxu0 %v817
    %v1810 = vpop.f32.mrf.mxu0
    %v1811 = vadd.f32 %v519, %v1810
    %v1812 = vpop.f32.mrf.mxu0
    %v1813 = vpop.f32.mrf.mxu0
    %v1814 = vadd.f32 %v519, %v1813
    %v1815 = vpop.f32.mrf.mxu0
    %1816 = vmatprep.mubr.bf16.mxu0 0
    %1817 = vmatmul.mubr.bf16.gmra.mxu0 %v820
    %v1818 = vpop.f32.mrf.mxu0
    %v1819 = vadd.f32 %v519, %v1818
    %v1820 = vpop.f32.mrf.mxu0
    %v1821 = vpop.f32.mrf.mxu0
    %v1822 = vadd.f32 %v519, %v1821
    %v1823 = vpop.f32.mrf.mxu0
    %1824 = vmatprep.mubr.bf16.mxu0 0
    %1825 = vmatmul.mubr.bf16.gmra.mxu0 %v823
    %v1826 = vpop.f32.mrf.mxu0
    %v1827 = vadd.f32 %v519, %v1826
    %v1828 = vpop.f32.mrf.mxu0
    %v1829 = vpop.f32.mrf.mxu0
    %v1830 = vadd.f32 %v519, %v1829
    %v1831 = vpop.f32.mrf.mxu0
    %1832 = vmatprep.mubr.bf16.mxu0 0
    %1833 = vmatmul.mubr.bf16.gmra.mxu0 %v826
    %v1834 = vpop.f32.mrf.mxu0
    %v1835 = vadd.f32 %v519, %v1834
    %v1836 = vpop.f32.mrf.mxu0
    %v1837 = vpop.f32.mrf.mxu0
    %v1838 = vadd.f32 %v519, %v1837
    %v1839 = vpop.f32.mrf.mxu0
    %1840 = vmatprep.mubr.bf16.mxu0 0
    %1841 = vmatmul.mubr.bf16.gmra.mxu0 %v829
    %v1842 = vpop.f32.mrf.mxu0
    %v1843 = vadd.f32 %v519, %v1842
    %v1844 = vpop.f32.mrf.mxu0
    %v1845 = vpop.f32.mrf.mxu0
    %v1846 = vadd.f32 %v519, %v1845
    %v1847 = vpop.f32.mrf.mxu0
    %1848 = vmatprep.mubr.bf16.mxu0 0
    %1849 = vmatmul.mubr.bf16.gmra.mxu0 %v832
    %v1850 = vpop.f32.mrf.mxu0
    %v1851 = vadd.f32 %v519, %v1850
    %v1852 = vpop.f32.mrf.mxu0
    %v1853 = vpop.f32.mrf.mxu0
    %v1854 = vadd.f32 %v519, %v1853
    %v1855 = vpop.f32.mrf.mxu0
    %1856 = vmatprep.mubr.bf16.mxu0 0
    %1857 = vmatmul.mubr.bf16.gmra.mxu0 %v835
    %v1858 = vpop.f32.mrf.mxu0
    %v1859 = vadd.f32 %v519, %v1858
    %v1860 = vpop.f32.mrf.mxu0
    %v1861 = vpop.f32.mrf.mxu0
    %v1862 = vadd.f32 %v519, %v1861
    %v1863 = vpop.f32.mrf.mxu0
    %1864 = vmatprep.mubr.bf16.mxu0 0
    %1865 = vmatmul.mubr.bf16.gmra.mxu0 %v838
    %v1866 = vpop.f32.mrf.mxu0
    %v1867 = vadd.f32 %v519, %v1866
    %v1868 = vpop.f32.mrf.mxu0
    %v1869 = vpop.f32.mrf.mxu0
    %v1870 = vadd.f32 %v519, %v1869
    %v1871 = vpop.f32.mrf.mxu0
    %1872 = vmatprep.mubr.bf16.mxu0 0
    %1873 = vmatmul.mubr.bf16.gmra.mxu0 %v841
    %v1874 = vpop.f32.mrf.mxu0
    %v1875 = vadd.f32 %v519, %v1874
    %v1876 = vpop.f32.mrf.mxu0
    %v1877 = vpop.f32.mrf.mxu0
    %v1878 = vadd.f32 %v519, %v1877
    %v1879 = vpop.f32.mrf.mxu0
    %1880 = vmatprep.mubr.bf16.mxu0 0
    %1881 = vmatmul.mubr.bf16.gmra.mxu0 %v844
    %v1882 = vpop.f32.mrf.mxu0
    %v1883 = vadd.f32 %v519, %v1882
    %v1884 = vpop.f32.mrf.mxu0
    %v1885 = vpop.f32.mrf.mxu0
    %v1886 = vadd.f32 %v519, %v1885
    %v1887 = vpop.f32.mrf.mxu0
    %1888 = vmatprep.mubr.bf16.mxu0 0
    %1889 = vmatmul.mubr.bf16.gmra.mxu0 %v847
    %v1890 = vpop.f32.mrf.mxu0
    %v1891 = vadd.f32 %v519, %v1890
    %v1892 = vpop.f32.mrf.mxu0
    %v1893 = vpop.f32.mrf.mxu0
    %v1894 = vadd.f32 %v519, %v1893
    %v1895 = vpop.f32.mrf.mxu0
    %1896 = vmatprep.mubr.bf16.mxu0 0
    %1897 = vmatmul.mubr.bf16.gmra.mxu0 %v850
    %v1898 = vpop.f32.mrf.mxu0
    %v1899 = vadd.f32 %v519, %v1898
    %v1900 = vpop.f32.mrf.mxu0
    %v1901 = vpop.f32.mrf.mxu0
    %v1902 = vadd.f32 %v519, %v1901
    %v1903 = vpop.f32.mrf.mxu0
    %1904 = vmatprep.mubr.bf16.mxu0 0
    %1905 = vmatmul.mubr.bf16.gmra.mxu0 %v853
    %v1906 = vpop.f32.mrf.mxu0
    %v1907 = vadd.f32 %v519, %v1906
    %v1908 = vpop.f32.mrf.mxu0
    %v1909 = vpop.f32.mrf.mxu0
    %v1910 = vadd.f32 %v519, %v1909
    %v1911 = vpop.f32.mrf.mxu0
    %1912 = vmatprep.mubr.bf16.mxu0 0
    %1913 = vmatmul.mubr.bf16.gmra.mxu0 %v856
    %v1914 = vpop.f32.mrf.mxu0
    %v1915 = vadd.f32 %v519, %v1914
    %v1916 = vpop.f32.mrf.mxu0
    %v1917 = vpop.f32.mrf.mxu0
    %v1918 = vadd.f32 %v519, %v1917
    %v1919 = vpop.f32.mrf.mxu0
    %1920 = vmatprep.mubr.bf16.mxu0 0
    %1921 = vmatmul.mubr.bf16.gmra.mxu0 %v859
    %v1922 = vpop.f32.mrf.mxu0
    %v1923 = vadd.f32 %v519, %v1922
    %v1924 = vpop.f32.mrf.mxu0
    %v1925 = vpop.f32.mrf.mxu0
    %v1926 = vadd.f32 %v519, %v1925
    %v1927 = vpop.f32.mrf.mxu0
    %1928 = vmatprep.mubr.bf16.mxu0 0
    %1929 = vmatmul.mubr.bf16.gmra.mxu0 %v862
    %v1930 = vpop.f32.mrf.mxu0
    %v1931 = vadd.f32 %v519, %v1930
    %v1932 = vpop.f32.mrf.mxu0
    %v1933 = vpop.f32.mrf.mxu0
    %v1934 = vadd.f32 %v519, %v1933
    %v1935 = vpop.f32.mrf.mxu0
    %1936 = vmatprep.mubr.bf16.mxu0 0
    %1937 = vmatmul.mubr.bf16.gmra.mxu0 %v865
    %v1938 = vpop.f32.mrf.mxu0
    %v1939 = vadd.f32 %v519, %v1938
    %v1940 = vpop.f32.mrf.mxu0
    %v1941 = vpop.f32.mrf.mxu0
    %v1942 = vadd.f32 %v519, %v1941
    %v1943 = vpop.f32.mrf.mxu0
    %1944 = vmatprep.mubr.bf16.mxu0 0
    %1945 = vmatmul.mubr.bf16.gmra.mxu0 %v868
    %v1946 = vpop.f32.mrf.mxu0
    %v1947 = vadd.f32 %v519, %v1946
    %v1948 = vpop.f32.mrf.mxu0
    %v1949 = vpop.f32.mrf.mxu0
    %v1950 = vadd.f32 %v519, %v1949
    %v1951 = vpop.f32.mrf.mxu0
    %1952 = vmatprep.mubr.bf16.mxu0 0
    %1953 = vmatmul.mubr.bf16.gmra.mxu0 %v871
    %v1954 = vpop.f32.mrf.mxu0
    %v1955 = vadd.f32 %v519, %v1954
    %v1956 = vpop.f32.mrf.mxu0
    %v1957 = vpop.f32.mrf.mxu0
    %v1958 = vadd.f32 %v519, %v1957
    %v1959 = vpop.f32.mrf.mxu0
    %1960 = vmatprep.mubr.bf16.mxu0 0
    %1961 = vmatmul.mubr.bf16.gmra.mxu0 %v874
    %v1962 = vpop.f32.mrf.mxu0
    %v1963 = vadd.f32 %v519, %v1962
    %v1964 = vpop.f32.mrf.mxu0
    %v1965 = vpop.f32.mrf.mxu0
    %v1966 = vadd.f32 %v519, %v1965
    %v1967 = vpop.f32.mrf.mxu0
    %1968 = vmatprep.mubr.bf16.mxu0 0
    %1969 = vmatmul.mubr.bf16.gmra.mxu0 %v877
    %v1970 = vpop.f32.mrf.mxu0
    %v1971 = vadd.f32 %v519, %v1970
    %v1972 = vpop.f32.mrf.mxu0
    %v1973 = vpop.f32.mrf.mxu0
    %v1974 = vadd.f32 %v519, %v1973
    %v1975 = vpop.f32.mrf.mxu0
    %1976 = vmatprep.mubr.bf16.mxu0 0
    %1977 = vmatmul.mubr.bf16.gmra.mxu0 %v880
    %v1978 = vpop.f32.mrf.mxu0
    %v1979 = vadd.f32 %v519, %v1978
    %v1980 = vpop.f32.mrf.mxu0
    %v1981 = vpop.f32.mrf.mxu0
    %v1982 = vadd.f32 %v519, %v1981
    %v1983 = vpop.f32.mrf.mxu0
    %1984 = vmatprep.mubr.bf16.mxu0 0
    %1985 = vmatmul.mubr.bf16.gmra.mxu0 %v883
    %v1986 = vpop.f32.mrf.mxu0
    %v1987 = vadd.f32 %v519, %v1986
    %v1988 = vpop.f32.mrf.mxu0
    %v1989 = vpop.f32.mrf.mxu0
    %v1990 = vadd.f32 %v519, %v1989
    %v1991 = vpop.f32.mrf.mxu0
    %1992 = vmatprep.mubr.bf16.mxu0 0
    %1993 = vmatmul.mubr.bf16.gmra.mxu0 %v886
    %v1994 = vpop.f32.mrf.mxu0
    %v1995 = vadd.f32 %v519, %v1994
    %v1996 = vpop.f32.mrf.mxu0
    %v1997 = vpop.f32.mrf.mxu0
    %v1998 = vadd.f32 %v519, %v1997
    %v1999 = vpop.f32.mrf.mxu0
    %2000 = vmatprep.mubr.bf16.mxu0 0
    %2001 = vmatmul.mubr.bf16.gmra.mxu0 %v889
    %v2002 = vpop.f32.mrf.mxu0
    %v2003 = vadd.f32 %v519, %v2002
    %v2004 = vpop.f32.mrf.mxu0
    %v2005 = vpop.f32.mrf.mxu0
    %v2006 = vadd.f32 %v519, %v2005
    %v2007 = vpop.f32.mrf.mxu0
    %2008 = vmatprep.mubr.bf16.mxu0 0
    %2009 = vmatmul.mubr.bf16.gmra.mxu0 %v892
    %v2010 = vpop.f32.mrf.mxu0
    %v2011 = vadd.f32 %v519, %v2010
    %v2012 = vpop.f32.mrf.mxu0
    %v2013 = vpop.f32.mrf.mxu0
    %v2014 = vadd.f32 %v519, %v2013
    %v2015 = vpop.f32.mrf.mxu0
    %2016 = vmatprep.mubr.bf16.mxu0 0
    %2017 = vmatmul.mubr.bf16.gmra.mxu0 %v895
    %v2018 = vpop.f32.mrf.mxu0
    %v2019 = vadd.f32 %v519, %v2018
    %v2020 = vpop.f32.mrf.mxu0
    %v2021 = vpop.f32.mrf.mxu0
    %v2022 = vadd.f32 %v519, %v2021
    %v2023 = vpop.f32.mrf.mxu0
    %2024 = vmatprep.mubr.bf16.mxu0 0
    %2025 = vmatmul.mubr.bf16.gmra.mxu0 %v898
    %v2026 = vpop.f32.mrf.mxu0
    %v2027 = vadd.f32 %v519, %v2026
    %v2028 = vpop.f32.mrf.mxu0
    %v2029 = vpop.f32.mrf.mxu0
    %v2030 = vadd.f32 %v519, %v2029
    %v2031 = vpop.f32.mrf.mxu0
    %2032 = vmatprep.mubr.bf16.mxu0 0
    %2033 = vmatmul.mubr.bf16.gmra.mxu0 %v901
    %v2034 = vpop.f32.mrf.mxu0
    %v2035 = vadd.f32 %v519, %v2034
    %v2036 = vpop.f32.mrf.mxu0
    %v2037 = vpop.f32.mrf.mxu0
    %v2038 = vadd.f32 %v519, %v2037
    %v2039 = vpop.f32.mrf.mxu0
    %2040 = vmatprep.mubr.bf16.mxu0 0
    %2041 = vmatmul.mubr.bf16.gmra.mxu0 %v904
    %v2042 = vpop.f32.mrf.mxu0
    %v2043 = vadd.f32 %v519, %v2042
    %v2044 = vpop.f32.mrf.mxu0
    %v2045 = vpop.f32.mrf.mxu0
    %v2046 = vadd.f32 %v519, %v2045
    %v2047 = vpop.f32.mrf.mxu0
    %2048 = vmatprep.mubr.bf16.mxu0 0
    %2049 = vmatmul.mubr.bf16.gmra.mxu0 %v907
    %v2050 = vpop.f32.mrf.mxu0
    %v2051 = vadd.f32 %v519, %v2050
    %v2052 = vpop.f32.mrf.mxu0
    %v2053 = vpop.f32.mrf.mxu0
    %v2054 = vadd.f32 %v519, %v2053
    %v2055 = vpop.f32.mrf.mxu0
    %2056 = vmatprep.mubr.bf16.mxu0 0
    %2057 = vmatmul.mubr.bf16.gmra.mxu0 %v910
    %v2058 = vpop.f32.mrf.mxu0
    %v2059 = vadd.f32 %v519, %v2058
    %v2060 = vpop.f32.mrf.mxu0
    %v2061 = vpop.f32.mrf.mxu0
    %v2062 = vadd.f32 %v519, %v2061
    %v2063 = vpop.f32.mrf.mxu0
    %2064 = vmatprep.mubr.bf16.mxu0 0
    %2065 = vmatmul.mubr.bf16.gmra.mxu0 %v913
    %v2066 = vpop.f32.mrf.mxu0
    %v2067 = vadd.f32 %v519, %v2066
    %v2068 = vpop.f32.mrf.mxu0
    %v2069 = vpop.f32.mrf.mxu0
    %v2070 = vadd.f32 %v519, %v2069
    %v2071 = vpop.f32.mrf.mxu0
    %2072 = vmatprep.mubr.bf16.mxu0 0
    %2073 = vmatmul.mubr.bf16.gmra.mxu0 %v916
    %v2074 = vpop.f32.mrf.mxu0
    %v2075 = vadd.f32 %v519, %v2074
    %v2076 = vpop.f32.mrf.mxu0
    %v2077 = vpop.f32.mrf.mxu0
    %v2078 = vadd.f32 %v519, %v2077
    %v2079 = vpop.f32.mrf.mxu0
    %2080 = vmatprep.mubr.bf16.mxu0 0
    %2081 = vmatmul.mubr.bf16.gmra.mxu0 %v919
    %v2082 = vpop.f32.mrf.mxu0
    %v2083 = vadd.f32 %v519, %v2082
    %v2084 = vpop.f32.mrf.mxu0
    %v2085 = vpop.f32.mrf.mxu0
    %v2086 = vadd.f32 %v519, %v2085
    %v2087 = vpop.f32.mrf.mxu0
    %2088 = vmatprep.mubr.bf16.mxu0 0
    %2089 = vmatmul.mubr.bf16.gmra.mxu0 %v922
    %v2090 = vpop.f32.mrf.mxu0
    %v2091 = vadd.f32 %v519, %v2090
    %v2092 = vpop.f32.mrf.mxu0
    %v2093 = vpop.f32.mrf.mxu0
    %v2094 = vadd.f32 %v519, %v2093
    %v2095 = vpop.f32.mrf.mxu0
    %2096 = vmatprep.mubr.bf16.mxu0 0
    %2097 = vmatmul.mubr.bf16.gmra.mxu0 %v925
    %v2098 = vpop.f32.mrf.mxu0
    %v2099 = vadd.f32 %v519, %v2098
    %v2100 = vpop.f32.mrf.mxu0
    %v2101 = vpop.f32.mrf.mxu0
    %v2102 = vadd.f32 %v519, %v2101
    %v2103 = vpop.f32.mrf.mxu0
    %2104 = vmatprep.mubr.bf16.mxu0 0
    %2105 = vmatmul.mubr.bf16.gmra.mxu0 %v928
    %v2106 = vpop.f32.mrf.mxu0
    %v2107 = vadd.f32 %v519, %v2106
    %v2108 = vpop.f32.mrf.mxu0
    %v2109 = vpop.f32.mrf.mxu0
    %v2110 = vadd.f32 %v519, %v2109
    %v2111 = vpop.f32.mrf.mxu0
    %2112 = vmatprep.mubr.bf16.mxu0 0
    %2113 = vmatmul.mubr.bf16.gmra.mxu0 %v931
    %v2114 = vpop.f32.mrf.mxu0
    %v2115 = vadd.f32 %v519, %v2114
    %v2116 = vpop.f32.mrf.mxu0
    %v2117 = vpop.f32.mrf.mxu0
    %v2118 = vadd.f32 %v519, %v2117
    %v2119 = vpop.f32.mrf.mxu0
    %2120 = vmatprep.mubr.bf16.mxu0 0
    %2121 = vmatmul.mubr.bf16.gmra.mxu0 %v934
    %v2122 = vpop.f32.mrf.mxu0
    %v2123 = vadd.f32 %v519, %v2122
    %v2124 = vpop.f32.mrf.mxu0
    %v2125 = vpop.f32.mrf.mxu0
    %v2126 = vadd.f32 %v519, %v2125
    %v2127 = vpop.f32.mrf.mxu0
    %2128 = vmatprep.mubr.bf16.mxu0 0
    %2129 = vmatmul.mubr.bf16.gmra.mxu0 %v937
    %v2130 = vpop.f32.mrf.mxu0
    %v2131 = vadd.f32 %v519, %v2130
    %v2132 = vpop.f32.mrf.mxu0
    %v2133 = vpop.f32.mrf.mxu0
    %v2134 = vadd.f32 %v519, %v2133
    %v2135 = vpop.f32.mrf.mxu0
    %2136 = vmatprep.mubr.bf16.mxu0 0
    %2137 = vmatmul.mubr.bf16.gmra.mxu0 %v940
    %v2138 = vpop.f32.mrf.mxu0
    %v2139 = vadd.f32 %v519, %v2138
    %v2140 = vpop.f32.mrf.mxu0
    %v2141 = vpop.f32.mrf.mxu0
    %v2142 = vadd.f32 %v519, %v2141
    %v2143 = vpop.f32.mrf.mxu0
    %2144 = vmatprep.mubr.bf16.mxu0 0
    %2145 = vmatmul.mubr.bf16.gmra.mxu0 %v943
    %v2146 = vpop.f32.mrf.mxu0
    %v2147 = vadd.f32 %v519, %v2146
    %v2148 = vpop.f32.mrf.mxu0
    %v2149 = vpop.f32.mrf.mxu0
    %v2150 = vadd.f32 %v519, %v2149
    %v2151 = vpop.f32.mrf.mxu0
    %2152 = vmatprep.mubr.bf16.mxu0 0
    %2153 = vmatmul.mubr.bf16.gmra.mxu0 %v946
    %v2154 = vpop.f32.mrf.mxu0
    %v2155 = vadd.f32 %v519, %v2154
    %v2156 = vpop.f32.mrf.mxu0
    %v2157 = vpop.f32.mrf.mxu0
    %v2158 = vadd.f32 %v519, %v2157
    %v2159 = vpop.f32.mrf.mxu0
    %2160 = vmatprep.mubr.bf16.mxu0 0
    %2161 = vmatmul.mubr.bf16.gmra.mxu0 %v949
    %v2162 = vpop.f32.mrf.mxu0
    %v2163 = vadd.f32 %v519, %v2162
    %v2164 = vpop.f32.mrf.mxu0
    %v2165 = vpop.f32.mrf.mxu0
    %v2166 = vadd.f32 %v519, %v2165
    %v2167 = vpop.f32.mrf.mxu0
    %2168 = vmatprep.mubr.bf16.mxu0 0
    %2169 = vmatmul.mubr.bf16.gmra.mxu0 %v952
    %v2170 = vpop.f32.mrf.mxu0
    %v2171 = vadd.f32 %v519, %v2170
    %v2172 = vpop.f32.mrf.mxu0
    %v2173 = vpop.f32.mrf.mxu0
    %v2174 = vadd.f32 %v519, %v2173
    %v2175 = vpop.f32.mrf.mxu0
    %2176 = vmatprep.mubr.bf16.mxu0 0
    %2177 = vmatmul.mubr.bf16.gmra.mxu0 %v955
    %v2178 = vpop.f32.mrf.mxu0
    %v2179 = vadd.f32 %v519, %v2178
    %v2180 = vpop.f32.mrf.mxu0
    %v2181 = vpop.f32.mrf.mxu0
    %v2182 = vadd.f32 %v519, %v2181
    %v2183 = vpop.f32.mrf.mxu0
    %2184 = vmatprep.mubr.bf16.mxu0 0
    %2185 = vmatmul.mubr.bf16.gmra.mxu0 %v958
    %v2186 = vpop.f32.mrf.mxu0
    %v2187 = vadd.f32 %v519, %v2186
    %v2188 = vpop.f32.mrf.mxu0
    %v2189 = vpop.f32.mrf.mxu0
    %v2190 = vadd.f32 %v519, %v2189
    %v2191 = vpop.f32.mrf.mxu0
    %2192 = vmatprep.mubr.bf16.mxu0 0
    %2193 = vmatmul.mubr.bf16.gmra.mxu0 %v961
    %v2194 = vpop.f32.mrf.mxu0
    %v2195 = vadd.f32 %v519, %v2194
    %v2196 = vpop.f32.mrf.mxu0
    %v2197 = vpop.f32.mrf.mxu0
    %v2198 = vadd.f32 %v519, %v2197
    %v2199 = vpop.f32.mrf.mxu0
    %2200 = vmatprep.mubr.bf16.mxu0 0
    %2201 = vmatmul.mubr.bf16.gmra.mxu0 %v964
    %v2202 = vpop.f32.mrf.mxu0
    %v2203 = vadd.f32 %v519, %v2202
    %v2204 = vpop.f32.mrf.mxu0
    %v2205 = vpop.f32.mrf.mxu0
    %v2206 = vadd.f32 %v519, %v2205
    %v2207 = vpop.f32.mrf.mxu0
    %2208 = vmatprep.mubr.bf16.mxu0 0
    %2209 = vmatmul.mubr.bf16.gmra.mxu0 %v967
    %v2210 = vpop.f32.mrf.mxu0
    %v2211 = vadd.f32 %v519, %v2210
    %v2212 = vpop.f32.mrf.mxu0
    %v2213 = vpop.f32.mrf.mxu0
    %v2214 = vadd.f32 %v519, %v2213
    %v2215 = vpop.f32.mrf.mxu0
    %2216 = vmatprep.mubr.bf16.mxu0 0
    %2217 = vmatmul.mubr.bf16.gmra.mxu0 %v970
    %v2218 = vpop.f32.mrf.mxu0
    %v2219 = vadd.f32 %v519, %v2218
    %v2220 = vpop.f32.mrf.mxu0
    %v2221 = vpop.f32.mrf.mxu0
    %v2222 = vadd.f32 %v519, %v2221
    %v2223 = vpop.f32.mrf.mxu0
    %2224 = vmatprep.mubr.bf16.mxu0 0
    %2225 = vmatmul.mubr.bf16.gmra.mxu0 %v973
    %v2226 = vpop.f32.mrf.mxu0
    %v2227 = vadd.f32 %v519, %v2226
    %v2228 = vpop.f32.mrf.mxu0
    %v2229 = vpop.f32.mrf.mxu0
    %v2230 = vadd.f32 %v519, %v2229
    %v2231 = vpop.f32.mrf.mxu0
    %2232 = vmatprep.mubr.bf16.mxu0 0
    %2233 = vmatmul.mubr.bf16.gmra.mxu0 %v976
    %v2234 = vpop.f32.mrf.mxu0
    %v2235 = vadd.f32 %v519, %v2234
    %v2236 = vpop.f32.mrf.mxu0
    %v2237 = vpop.f32.mrf.mxu0
    %v2238 = vadd.f32 %v519, %v2237
    %v2239 = vpop.f32.mrf.mxu0
    %2240 = vmatprep.mubr.bf16.mxu0 0
    %2241 = vmatmul.mubr.bf16.gmra.mxu0 %v979
    %v2242 = vpop.f32.mrf.mxu0
    %v2243 = vadd.f32 %v519, %v2242
    %v2244 = vpop.f32.mrf.mxu0
    %v2245 = vpop.f32.mrf.mxu0
    %v2246 = vadd.f32 %v519, %v2245
    %v2247 = vpop.f32.mrf.mxu0
    %2248 = vmatprep.mubr.bf16.mxu0 0
    %2249 = vmatmul.mubr.bf16.gmra.mxu0 %v982
    %v2250 = vpop.f32.mrf.mxu0
    %v2251 = vadd.f32 %v519, %v2250
    %v2252 = vpop.f32.mrf.mxu0
    %v2253 = vpop.f32.mrf.mxu0
    %v2254 = vadd.f32 %v519, %v2253
    %v2255 = vpop.f32.mrf.mxu0
    %2256 = vmatprep.mubr.bf16.mxu0 0
    %2257 = vmatmul.mubr.bf16.gmra.mxu0 %v985
    %v2258 = vpop.f32.mrf.mxu0
    %v2259 = vadd.f32 %v519, %v2258
    %v2260 = vpop.f32.mrf.mxu0
    %v2261 = vpop.f32.mrf.mxu0
    %v2262 = vadd.f32 %v519, %v2261
    %v2263 = vpop.f32.mrf.mxu0
    %2264 = vmatprep.mubr.bf16.mxu0 0
    %2265 = vmatmul.mubr.bf16.gmra.mxu0 %v988
    %v2266 = vpop.f32.mrf.mxu0
    %v2267 = vadd.f32 %v519, %v2266
    %v2268 = vpop.f32.mrf.mxu0
    %v2269 = vpop.f32.mrf.mxu0
    %v2270 = vadd.f32 %v519, %v2269
    %v2271 = vpop.f32.mrf.mxu0
    %2272 = vmatprep.mubr.bf16.mxu0 0
    %2273 = vmatmul.mubr.bf16.gmra.mxu0 %v991
    %v2274 = vpop.f32.mrf.mxu0
    %v2275 = vadd.f32 %v519, %v2274
    %v2276 = vpop.f32.mrf.mxu0
    %v2277 = vpop.f32.mrf.mxu0
    %v2278 = vadd.f32 %v519, %v2277
    %v2279 = vpop.f32.mrf.mxu0
    %2280 = vmatprep.mubr.bf16.mxu0 0
    %2281 = vmatmul.mubr.bf16.gmra.mxu0 %v994
    %v2282 = vpop.f32.mrf.mxu0
    %v2283 = vadd.f32 %v519, %v2282
    %v2284 = vpop.f32.mrf.mxu0
    %v2285 = vpop.f32.mrf.mxu0
    %v2286 = vadd.f32 %v519, %v2285
    %v2287 = vpop.f32.mrf.mxu0
    %2288 = vmatprep.mubr.bf16.mxu0 0
    %2289 = vmatmul.mubr.bf16.gmra.mxu0 %v997
    %v2290 = vpop.f32.mrf.mxu0
    %v2291 = vadd.f32 %v519, %v2290
    %v2292 = vpop.f32.mrf.mxu0
    %v2293 = vpop.f32.mrf.mxu0
    %v2294 = vadd.f32 %v519, %v2293
    %v2295 = vpop.f32.mrf.mxu0
    %2296 = vmatprep.mubr.bf16.mxu0 0
    %2297 = vmatmul.mubr.bf16.gmra.mxu0 %v1000
    %v2298 = vpop.f32.mrf.mxu0
    %v2299 = vadd.f32 %v519, %v2298
    %v2300 = vpop.f32.mrf.mxu0
    %v2301 = vpop.f32.mrf.mxu0
    %v2302 = vadd.f32 %v519, %v2301
    %v2303 = vpop.f32.mrf.mxu0
    %2304 = vmatprep.mubr.bf16.mxu0 0
    %2305 = vmatmul.mubr.bf16.gmra.mxu0 %v1003
    %v2306 = vpop.f32.mrf.mxu0
    %v2307 = vadd.f32 %v519, %v2306
    %v2308 = vpop.f32.mrf.mxu0
    %v2309 = vpop.f32.mrf.mxu0
    %v2310 = vadd.f32 %v519, %v2309
    %v2311 = vpop.f32.mrf.mxu0
    %2312 = vmatprep.mubr.bf16.mxu0 0
    %2313 = vmatmul.mubr.bf16.gmra.mxu0 %v1006
    %v2314 = vpop.f32.mrf.mxu0
    %v2315 = vadd.f32 %v519, %v2314
    %v2316 = vpop.f32.mrf.mxu0
    %v2317 = vpop.f32.mrf.mxu0
    %v2318 = vadd.f32 %v519, %v2317
    %v2319 = vpop.f32.mrf.mxu0
    %2320 = vdwg.mxu0
    %v2321 = vmax.f32 %v1043, 0.0
    %v2322 = vmax.f32 %v1046, 0.0
    %v2323 = vmax.f32 %v1051, 0.0
    %v2324 = vmax.f32 %v1054, 0.0
    %v2325 = vmax.f32 %v1059, 0.0
    %v2326 = vmax.f32 %v1062, 0.0
    %v2327 = vmax.f32 %v1067, 0.0
    %v2328 = vmax.f32 %v1070, 0.0
    %v2329 = vmax.f32 %v1075, 0.0
    %v2330 = vmax.f32 %v1078, 0.0
    %v2331 = vmax.f32 %v1083, 0.0
    %v2332 = vmax.f32 %v1086, 0.0
    %v2333 = vmax.f32 %v1091, 0.0
    %v2334 = vmax.f32 %v1094, 0.0
    %v2335 = vmax.f32 %v1099, 0.0
    %v2336 = vmax.f32 %v1102, 0.0
    %v2337 = vmax.f32 %v1107, 0.0
    %v2338 = vmax.f32 %v1110, 0.0
    %v2339 = vmax.f32 %v1115, 0.0
    %v2340 = vmax.f32 %v1118, 0.0
    %v2341 = vmax.f32 %v1123, 0.0
    %v2342 = vmax.f32 %v1126, 0.0
    %v2343 = vmax.f32 %v1131, 0.0
    %v2344 = vmax.f32 %v1134, 0.0
    %v2345 = vmax.f32 %v1139, 0.0
    %v2346 = vmax.f32 %v1142, 0.0
    %v2347 = vmax.f32 %v1147, 0.0
    %v2348 = vmax.f32 %v1150, 0.0
    %v2349 = vmax.f32 %v1155, 0.0
    %v2350 = vmax.f32 %v1158, 0.0
    %v2351 = vmax.f32 %v1163, 0.0
    %v2352 = vmax.f32 %v1166, 0.0
    %v2353 = vmax.f32 %v1171, 0.0
    %v2354 = vmax.f32 %v1174, 0.0
    %v2355 = vmax.f32 %v1179, 0.0
    %v2356 = vmax.f32 %v1182, 0.0
    %v2357 = vmax.f32 %v1187, 0.0
    %v2358 = vmax.f32 %v1190, 0.0
    %v2359 = vmax.f32 %v1195, 0.0
    %v2360 = vmax.f32 %v1198, 0.0
    %v2361 = vmax.f32 %v1203, 0.0
    %v2362 = vmax.f32 %v1206, 0.0
    %v2363 = vmax.f32 %v1211, 0.0
    %v2364 = vmax.f32 %v1214, 0.0
    %v2365 = vmax.f32 %v1219, 0.0
    %v2366 = vmax.f32 %v1222, 0.0
    %v2367 = vmax.f32 %v1227, 0.0
    %v2368 = vmax.f32 %v1230, 0.0
    %v2369 = vmax.f32 %v1235, 0.0
    %v2370 = vmax.f32 %v1238, 0.0
    %v2371 = vmax.f32 %v1243, 0.0
    %v2372 = vmax.f32 %v1246, 0.0
    %v2373 = vmax.f32 %v1251, 0.0
    %v2374 = vmax.f32 %v1254, 0.0
    %v2375 = vmax.f32 %v1259, 0.0
    %v2376 = vmax.f32 %v1262, 0.0
    %v2377 = vmax.f32 %v1267, 0.0
    %v2378 = vmax.f32 %v1270, 0.0
    %v2379 = vmax.f32 %v1275, 0.0
    %v2380 = vmax.f32 %v1278, 0.0
    %v2381 = vmax.f32 %v1283, 0.0
    %v2382 = vmax.f32 %v1286, 0.0
    %v2383 = vmax.f32 %v1291, 0.0
    %v2384 = vmax.f32 %v1294, 0.0
    %v2385 = vmax.f32 %v1299, 0.0
    %v2386 = vmax.f32 %v1302, 0.0
    %v2387 = vmax.f32 %v1307, 0.0
    %v2388 = vmax.f32 %v1310, 0.0
    %v2389 = vmax.f32 %v1315, 0.0
    %v2390 = vmax.f32 %v1318, 0.0
    %v2391 = vmax.f32 %v1323, 0.0
    %v2392 = vmax.f32 %v1326, 0.0
    %v2393 = vmax.f32 %v1331, 0.0
    %v2394 = vmax.f32 %v1334, 0.0
    %v2395 = vmax.f32 %v1339, 0.0
    %v2396 = vmax.f32 %v1342, 0.0
    %v2397 = vmax.f32 %v1347, 0.0
    %v2398 = vmax.f32 %v1350, 0.0
    %v2399 = vmax.f32 %v1355, 0.0
    %v2400 = vmax.f32 %v1358, 0.0
    %v2401 = vmax.f32 %v1363, 0.0
    %v2402 = vmax.f32 %v1366, 0.0
    %v2403 = vmax.f32 %v1371, 0.0
    %v2404 = vmax.f32 %v1374, 0.0
    %v2405 = vmax.f32 %v1379, 0.0
    %v2406 = vmax.f32 %v1382, 0.0
    %v2407 = vmax.f32 %v1387, 0.0
    %v2408 = vmax.f32 %v1390, 0.0
    %v2409 = vmax.f32 %v1395, 0.0
    %v2410 = vmax.f32 %v1398, 0.0
    %v2411 = vmax.f32 %v1403, 0.0
    %v2412 = vmax.f32 %v1406, 0.0
    %v2413 = vmax.f32 %v1411, 0.0
    %v2414 = vmax.f32 %v1414, 0.0
    %v2415 = vmax.f32 %v1419, 0.0
    %v2416 = vmax.f32 %v1422, 0.0
    %v2417 = vmax.f32 %v1427, 0.0
    %v2418 = vmax.f32 %v1430, 0.0
    %v2419 = vmax.f32 %v1435, 0.0
    %v2420 = vmax.f32 %v1438, 0.0
    %v2421 = vmax.f32 %v1443, 0.0
    %v2422 = vmax.f32 %v1446, 0.0
    %v2423 = vmax.f32 %v1451, 0.0
    %v2424 = vmax.f32 %v1454, 0.0
    %v2425 = vmax.f32 %v1459, 0.0
    %v2426 = vmax.f32 %v1462, 0.0
    %v2427 = vmax.f32 %v1467, 0.0
    %v2428 = vmax.f32 %v1470, 0.0
    %v2429 = vmax.f32 %v1475, 0.0
    %v2430 = vmax.f32 %v1478, 0.0
    %v2431 = vmax.f32 %v1483, 0.0
    %v2432 = vmax.f32 %v1486, 0.0
    %v2433 = vmax.f32 %v1491, 0.0
    %v2434 = vmax.f32 %v1494, 0.0
    %v2435 = vmax.f32 %v1499, 0.0
    %v2436 = vmax.f32 %v1502, 0.0
    %v2437 = vmax.f32 %v1507, 0.0
    %v2438 = vmax.f32 %v1510, 0.0
    %v2439 = vmax.f32 %v1515, 0.0
    %v2440 = vmax.f32 %v1518, 0.0
    %v2441 = vmax.f32 %v1523, 0.0
    %v2442 = vmax.f32 %v1526, 0.0
    %v2443 = vmax.f32 %v1531, 0.0
    %v2444 = vmax.f32 %v1534, 0.0
    %v2445 = vmax.f32 %v1539, 0.0
    %v2446 = vmax.f32 %v1542, 0.0
    %v2447 = vmax.f32 %v1547, 0.0
    %v2448 = vmax.f32 %v1550, 0.0
    %v2449 = vmax.f32 %v1555, 0.0
    %v2450 = vmax.f32 %v1558, 0.0
    %v2451 = vmax.f32 %v1563, 0.0
    %v2452 = vmax.f32 %v1566, 0.0
    %v2453 = vmax.f32 %v1571, 0.0
    %v2454 = vmax.f32 %v1574, 0.0
    %v2455 = vmax.f32 %v1579, 0.0
    %v2456 = vmax.f32 %v1582, 0.0
    %v2457 = vmax.f32 %v1587, 0.0
    %v2458 = vmax.f32 %v1590, 0.0
    %v2459 = vmax.f32 %v1595, 0.0
    %v2460 = vmax.f32 %v1598, 0.0
    %v2461 = vmax.f32 %v1603, 0.0
    %v2462 = vmax.f32 %v1606, 0.0
    %v2463 = vmax.f32 %v1611, 0.0
    %v2464 = vmax.f32 %v1614, 0.0
    %v2465 = vmax.f32 %v1619, 0.0
    %v2466 = vmax.f32 %v1622, 0.0
    %v2467 = vmax.f32 %v1627, 0.0
    %v2468 = vmax.f32 %v1630, 0.0
    %v2469 = vmax.f32 %v1635, 0.0
    %v2470 = vmax.f32 %v1638, 0.0
    %v2471 = vmax.f32 %v1643, 0.0
    %v2472 = vmax.f32 %v1646, 0.0
    %v2473 = vmax.f32 %v1651, 0.0
    %v2474 = vmax.f32 %v1654, 0.0
    %v2475 = vmax.f32 %v1659, 0.0
    %v2476 = vmax.f32 %v1662, 0.0
    %v2477 = vmax.f32 %v1667, 0.0
    %v2478 = vmax.f32 %v1670, 0.0
    %v2479 = vmax.f32 %v1675, 0.0
    %v2480 = vmax.f32 %v1678, 0.0
    %v2481 = vmax.f32 %v1683, 0.0
    %v2482 = vmax.f32 %v1686, 0.0
    %v2483 = vmax.f32 %v1691, 0.0
    %v2484 = vmax.f32 %v1694, 0.0
    %v2485 = vmax.f32 %v1699, 0.0
    %v2486 = vmax.f32 %v1702, 0.0
    %v2487 = vmax.f32 %v1707, 0.0
    %v2488 = vmax.f32 %v1710, 0.0
    %v2489 = vmax.f32 %v1715, 0.0
    %v2490 = vmax.f32 %v1718, 0.0
    %v2491 = vmax.f32 %v1723, 0.0
    %v2492 = vmax.f32 %v1726, 0.0
    %v2493 = vmax.f32 %v1731, 0.0
    %v2494 = vmax.f32 %v1734, 0.0
    %v2495 = vmax.f32 %v1739, 0.0
    %v2496 = vmax.f32 %v1742, 0.0
    %v2497 = vmax.f32 %v1747, 0.0
    %v2498 = vmax.f32 %v1750, 0.0
    %v2499 = vmax.f32 %v1755, 0.0
    %v2500 = vmax.f32 %v1758, 0.0
    %v2501 = vmax.f32 %v1763, 0.0
    %v2502 = vmax.f32 %v1766, 0.0
    %v2503 = vmax.f32 %v1771, 0.0
    %v2504 = vmax.f32 %v1774, 0.0
    %v2505 = vmax.f32 %v1779, 0.0
    %v2506 = vmax.f32 %v1782, 0.0
    %v2507 = vmax.f32 %v1787, 0.0
    %v2508 = vmax.f32 %v1790, 0.0
    %v2509 = vmax.f32 %v1795, 0.0
    %v2510 = vmax.f32 %v1798, 0.0
    %v2511 = vmax.f32 %v1803, 0.0
    %v2512 = vmax.f32 %v1806, 0.0
    %v2513 = vmax.f32 %v1811, 0.0
    %v2514 = vmax.f32 %v1814, 0.0
    %v2515 = vmax.f32 %v1819, 0.0
    %v2516 = vmax.f32 %v1822, 0.0
    %v2517 = vmax.f32 %v1827, 0.0
    %v2518 = vmax.f32 %v1830, 0.0
    %v2519 = vmax.f32 %v1835, 0.0
    %v2520 = vmax.f32 %v1838, 0.0
    %v2521 = vmax.f32 %v1843, 0.0
    %v2522 = vmax.f32 %v1846, 0.0
    %v2523 = vmax.f32 %v1851, 0.0
    %v2524 = vmax.f32 %v1854, 0.0
    %v2525 = vmax.f32 %v1859, 0.0
    %v2526 = vmax.f32 %v1862, 0.0
    %v2527 = vmax.f32 %v1867, 0.0
    %v2528 = vmax.f32 %v1870, 0.0
    %v2529 = vmax.f32 %v1875, 0.0
    %v2530 = vmax.f32 %v1878, 0.0
    %v2531 = vmax.f32 %v1883, 0.0
    %v2532 = vmax.f32 %v1886, 0.0
    %v2533 = vmax.f32 %v1891, 0.0
    %v2534 = vmax.f32 %v1894, 0.0
    %v2535 = vmax.f32 %v1899, 0.0
    %v2536 = vmax.f32 %v1902, 0.0
    %v2537 = vmax.f32 %v1907, 0.0
    %v2538 = vmax.f32 %v1910, 0.0
    %v2539 = vmax.f32 %v1915, 0.0
    %v2540 = vmax.f32 %v1918, 0.0
    %v2541 = vmax.f32 %v1923, 0.0
    %v2542 = vmax.f32 %v1926, 0.0
    %v2543 = vmax.f32 %v1931, 0.0
    %v2544 = vmax.f32 %v1934, 0.0
    %v2545 = vmax.f32 %v1939, 0.0
    %v2546 = vmax.f32 %v1942, 0.0
    %v2547 = vmax.f32 %v1947, 0.0
    %v2548 = vmax.f32 %v1950, 0.0
    %v2549 = vmax.f32 %v1955, 0.0
    %v2550 = vmax.f32 %v1958, 0.0
    %v2551 = vmax.f32 %v1963, 0.0
    %v2552 = vmax.f32 %v1966, 0.0
    %v2553 = vmax.f32 %v1971, 0.0
    %v2554 = vmax.f32 %v1974, 0.0
    %v2555 = vmax.f32 %v1979, 0.0
    %v2556 = vmax.f32 %v1982, 0.0
    %v2557 = vmax.f32 %v1987, 0.0
    %v2558 = vmax.f32 %v1990, 0.0
    %v2559 = vmax.f32 %v1995, 0.0
    %v2560 = vmax.f32 %v1998, 0.0
    %v2561 = vmax.f32 %v2003, 0.0
    %v2562 = vmax.f32 %v2006, 0.0
    %v2563 = vmax.f32 %v2011, 0.0
    %v2564 = vmax.f32 %v2014, 0.0
    %v2565 = vmax.f32 %v2019, 0.0
    %v2566 = vmax.f32 %v2022, 0.0
    %v2567 = vmax.f32 %v2027, 0.0
    %v2568 = vmax.f32 %v2030, 0.0
    %v2569 = vmax.f32 %v2035, 0.0
    %v2570 = vmax.f32 %v2038, 0.0
    %v2571 = vmax.f32 %v2043, 0.0
    %v2572 = vmax.f32 %v2046, 0.0
    %v2573 = vmax.f32 %v2051, 0.0
    %v2574 = vmax.f32 %v2054, 0.0
    %v2575 = vmax.f32 %v2059, 0.0
    %v2576 = vmax.f32 %v2062, 0.0
    %v2577 = vmax.f32 %v2067, 0.0
    %v2578 = vmax.f32 %v2070, 0.0
    %v2579 = vmax.f32 %v2075, 0.0
    %v2580 = vmax.f32 %v2078, 0.0
    %v2581 = vmax.f32 %v2083, 0.0
    %v2582 = vmax.f32 %v2086, 0.0
    %v2583 = vmax.f32 %v2091, 0.0
    %v2584 = vmax.f32 %v2094, 0.0
    %v2585 = vmax.f32 %v2099, 0.0
    %v2586 = vmax.f32 %v2102, 0.0
    %v2587 = vmax.f32 %v2107, 0.0
    %v2588 = vmax.f32 %v2110, 0.0
    %v2589 = vmax.f32 %v2115, 0.0
    %v2590 = vmax.f32 %v2118, 0.0
    %v2591 = vmax.f32 %v2123, 0.0
    %v2592 = vmax.f32 %v2126, 0.0
    %v2593 = vmax.f32 %v2131, 0.0
    %v2594 = vmax.f32 %v2134, 0.0
    %v2595 = vmax.f32 %v2139, 0.0
    %v2596 = vmax.f32 %v2142, 0.0
    %v2597 = vmax.f32 %v2147, 0.0
    %v2598 = vmax.f32 %v2150, 0.0
    %v2599 = vmax.f32 %v2155, 0.0
    %v2600 = vmax.f32 %v2158, 0.0
    %v2601 = vmax.f32 %v2163, 0.0
    %v2602 = vmax.f32 %v2166, 0.0
    %v2603 = vmax.f32 %v2171, 0.0
    %v2604 = vmax.f32 %v2174, 0.0
    %v2605 = vmax.f32 %v2179, 0.0
    %v2606 = vmax.f32 %v2182, 0.0
    %v2607 = vmax.f32 %v2187, 0.0
    %v2608 = vmax.f32 %v2190, 0.0
    %v2609 = vmax.f32 %v2195, 0.0
    %v2610 = vmax.f32 %v2198, 0.0
    %v2611 = vmax.f32 %v2203, 0.0
    %v2612 = vmax.f32 %v2206, 0.0
    %v2613 = vmax.f32 %v2211, 0.0
    %v2614 = vmax.f32 %v2214, 0.0
    %v2615 = vmax.f32 %v2219, 0.0
    %v2616 = vmax.f32 %v2222, 0.0
    %v2617 = vmax.f32 %v2227, 0.0
    %v2618 = vmax.f32 %v2230, 0.0
    %v2619 = vmax.f32 %v2235, 0.0
    %v2620 = vmax.f32 %v2238, 0.0
    %v2621 = vmax.f32 %v2243, 0.0
    %v2622 = vmax.f32 %v2246, 0.0
    %v2623 = vmax.f32 %v2251, 0.0
    %v2624 = vmax.f32 %v2254, 0.0
    %v2625 = vmax.f32 %v2259, 0.0
    %v2626 = vmax.f32 %v2262, 0.0
    %v2627 = vmax.f32 %v2267, 0.0
    %v2628 = vmax.f32 %v2270, 0.0
    %v2629 = vmax.f32 %v2275, 0.0
    %v2630 = vmax.f32 %v2278, 0.0
    %v2631 = vmax.f32 %v2283, 0.0
    %v2632 = vmax.f32 %v2286, 0.0
    %v2633 = vmax.f32 %v2291, 0.0
    %v2634 = vmax.f32 %v2294, 0.0
    %v2635 = vmax.f32 %v2299, 0.0
    %v2636 = vmax.f32 %v2302, 0.0
    %v2637 = vmax.f32 %v2307, 0.0
    %v2638 = vmax.f32 %v2310, 0.0
    %v2639 = vmax.f32 %v2315, 0.0
    %v2640 = vmax.f32 %v2318, 0.0
    %v2641 = vld [vmem:[%s0] sm:$0xff]
    %v2642 = vld [vmem:[%s0 + $0x8] sm:$0xff]
    %v2643 = vld [vmem:[%s0 + $0x10] sm:$0xff]
    %v2644 = vld [vmem:[%s0 + $0x18] sm:$0xff]
    %v2645 = vld [vmem:[%s0 + $0x20] sm:$0xff]
    %v2646 = vld [vmem:[%s0 + $0x28] sm:$0xff]
    %v2647 = vld [vmem:[%s0 + $0x30] sm:$0xff]
    %v2648 = vld [vmem:[%s0 + $0x38] sm:$0xff]
    %v2649 = vld [vmem:[%s0 + $0x40] sm:$0xff]
    %v2650 = vld [vmem:[%s0 + $0x48] sm:$0xff]
    %v2651 = vld [vmem:[%s0 + $0x50] sm:$0xff]
    %v2652 = vld [vmem:[%s0 + $0x58] sm:$0xff]
    %v2653 = vld [vmem:[%s0 + $0x60] sm:$0xff]
    %v2654 = vld [vmem:[%s0 + $0x68] sm:$0xff]
    %v2655 = vld [vmem:[%s0 + $0x70] sm:$0xff]
    %v2656 = vld [vmem:[%s0 + $0x78] sm:$0xff]
    %v2657 = vld [vmem:[%s0 + $0x80] sm:$0xff]
    %v2658 = vld [vmem:[%s0 + $0x88] sm:$0xff]
    %v2659 = vld [vmem:[%s0 + $0x90] sm:$0xff]
    %v2660 = vld [vmem:[%s0 + $0x98] sm:$0xff]
    %v2661 = vld [vmem:[%s0 + $0xa0] sm:$0xff]
    %v2662 = vld [vmem:[%s0 + $0xa8] sm:$0xff]
    %v2663 = vld [vmem:[%s0 + $0xb0] sm:$0xff]
    %v2664 = vld [vmem:[%s0 + $0xb8] sm:$0xff]
    %v2665 = vld [vmem:[%s0 + $0xc0] sm:$0xff]
    %v2666 = vld [vmem:[%s0 + $0xc8] sm:$0xff]
    %v2667 = vld [vmem:[%s0 + $0xd0] sm:$0xff]
    %v2668 = vld [vmem:[%s0 + $0xd8] sm:$0xff]
    %v2669 = vld [vmem:[%s0 + $0xe0] sm:$0xff]
    %v2670 = vld [vmem:[%s0 + $0xe8] sm:$0xff]
    %v2671 = vld [vmem:[%s0 + $0xf0] sm:$0xff]
    %v2672 = vld [vmem:[%s0 + $0xf8] sm:$0xff]
    %v2673 = vld [vmem:[%s0 + $0x100] sm:$0xff]
    %v2674 = vld [vmem:[%s0 + $0x108] sm:$0xff]
    %v2675 = vld [vmem:[%s0 + $0x110] sm:$0xff]
    %v2676 = vld [vmem:[%s0 + $0x118] sm:$0xff]
    %v2677 = vld [vmem:[%s0 + $0x120] sm:$0xff]
    %v2678 = vld [vmem:[%s0 + $0x128] sm:$0xff]
    %v2679 = vld [vmem:[%s0 + $0x130] sm:$0xff]
    %v2680 = vld [vmem:[%s0 + $0x138] sm:$0xff]
    %v2681 = vld [vmem:[%s0 + $0x140] sm:$0xff]
    %v2682 = vld [vmem:[%s0 + $0x148] sm:$0xff]
    %v2683 = vld [vmem:[%s0 + $0x150] sm:$0xff]
    %v2684 = vld [vmem:[%s0 + $0x158] sm:$0xff]
    %v2685 = vld [vmem:[%s0 + $0x160] sm:$0xff]
    %v2686 = vld [vmem:[%s0 + $0x168] sm:$0xff]
    %v2687 = vld [vmem:[%s0 + $0x170] sm:$0xff]
    %v2688 = vld [vmem:[%s0 + $0x178] sm:$0xff]
    %v2689 = vld [vmem:[%s0 + $0x180] sm:$0xff]
    %v2690 = vld [vmem:[%s0 + $0x188] sm:$0xff]
    %v2691 = vld [vmem:[%s0 + $0x190] sm:$0xff]
    %v2692 = vld [vmem:[%s0 + $0x198] sm:$0xff]
    %v2693 = vld [vmem:[%s0 + $0x1a0] sm:$0xff]
    %v2694 = vld [vmem:[%s0 + $0x1a8] sm:$0xff]
    %v2695 = vld [vmem:[%s0 + $0x1b0] sm:$0xff]
    %v2696 = vld [vmem:[%s0 + $0x1b8] sm:$0xff]
    %v2697 = vld [vmem:[%s0 + $0x1c0] sm:$0xff]
    %v2698 = vld [vmem:[%s0 + $0x1c8] sm:$0xff]
    %v2699 = vld [vmem:[%s0 + $0x1d0] sm:$0xff]
    %v2700 = vld [vmem:[%s0 + $0x1d8] sm:$0xff]
    %v2701 = vld [vmem:[%s0 + $0x1e0] sm:$0xff]
    %v2702 = vld [vmem:[%s0 + $0x1e8] sm:$0xff]
    %v2703 = vld [vmem:[%s0 + $0x1f0] sm:$0xff]
    %v2704 = vld [vmem:[%s0 + $0x1f8] sm:$0xff]
    %v2705 = vld [vmem:[%s0 + $0x200] sm:$0xff]
    %v2706 = vld [vmem:[%s0 + $0x208] sm:$0xff]
    %v2707 = vld [vmem:[%s0 + $0x210] sm:$0xff]
    %v2708 = vld [vmem:[%s0 + $0x218] sm:$0xff]
    %v2709 = vld [vmem:[%s0 + $0x220] sm:$0xff]
    %v2710 = vld [vmem:[%s0 + $0x228] sm:$0xff]
    %v2711 = vld [vmem:[%s0 + $0x230] sm:$0xff]
    %v2712 = vld [vmem:[%s0 + $0x238] sm:$0xff]
    %v2713 = vld [vmem:[%s0 + $0x240] sm:$0xff]
    %v2714 = vld [vmem:[%s0 + $0x248] sm:$0xff]
    %v2715 = vld [vmem:[%s0 + $0x250] sm:$0xff]
    %v2716 = vld [vmem:[%s0 + $0x258] sm:$0xff]
    %v2717 = vld [vmem:[%s0 + $0x260] sm:$0xff]
    %v2718 = vld [vmem:[%s0 + $0x268] sm:$0xff]
    %v2719 = vld [vmem:[%s0 + $0x270] sm:$0xff]
    %v2720 = vld [vmem:[%s0 + $0x278] sm:$0xff]
    %v2721 = vld [vmem:[%s0 + $0x280] sm:$0xff]
    %v2722 = vld [vmem:[%s0 + $0x288] sm:$0xff]
    %v2723 = vld [vmem:[%s0 + $0x290] sm:$0xff]
    %v2724 = vld [vmem:[%s0 + $0x298] sm:$0xff]
    %v2725 = vld [vmem:[%s0 + $0x2a0] sm:$0xff]
    %v2726 = vld [vmem:[%s0 + $0x2a8] sm:$0xff]
    %v2727 = vld [vmem:[%s0 + $0x2b0] sm:$0xff]
    %v2728 = vld [vmem:[%s0 + $0x2b8] sm:$0xff]
    %v2729 = vld [vmem:[%s0 + $0x2c0] sm:$0xff]
    %v2730 = vld [vmem:[%s0 + $0x2c8] sm:$0xff]
    %v2731 = vld [vmem:[%s0 + $0x2d0] sm:$0xff]
    %v2732 = vld [vmem:[%s0 + $0x2d8] sm:$0xff]
    %v2733 = vld [vmem:[%s0 + $0x2e0] sm:$0xff]
    %v2734 = vld [vmem:[%s0 + $0x2e8] sm:$0xff]
    %v2735 = vld [vmem:[%s0 + $0x2f0] sm:$0xff]
    %v2736 = vld [vmem:[%s0 + $0x2f8] sm:$0xff]
    %v2737 = vld [vmem:[%s0 + $0x300] sm:$0xff]
    %v2738 = vld [vmem:[%s0 + $0x308] sm:$0xff]
    %v2739 = vld [vmem:[%s0 + $0x310] sm:$0xff]
    %v2740 = vld [vmem:[%s0 + $0x318] sm:$0xff]
    %v2741 = vld [vmem:[%s0 + $0x320] sm:$0xff]
    %v2742 = vld [vmem:[%s0 + $0x328] sm:$0xff]
    %v2743 = vld [vmem:[%s0 + $0x330] sm:$0xff]
    %v2744 = vld [vmem:[%s0 + $0x338] sm:$0xff]
    %v2745 = vld [vmem:[%s0 + $0x340] sm:$0xff]
    %v2746 = vld [vmem:[%s0 + $0x348] sm:$0xff]
    %v2747 = vld [vmem:[%s0 + $0x350] sm:$0xff]
    %v2748 = vld [vmem:[%s0 + $0x358] sm:$0xff]
    %v2749 = vld [vmem:[%s0 + $0x360] sm:$0xff]
    %v2750 = vld [vmem:[%s0 + $0x368] sm:$0xff]
    %v2751 = vld [vmem:[%s0 + $0x370] sm:$0xff]
    %v2752 = vld [vmem:[%s0 + $0x378] sm:$0xff]
    %v2753 = vld [vmem:[%s0 + $0x380] sm:$0xff]
    %v2754 = vld [vmem:[%s0 + $0x388] sm:$0xff]
    %v2755 = vld [vmem:[%s0 + $0x390] sm:$0xff]
    %v2756 = vld [vmem:[%s0 + $0x398] sm:$0xff]
    %v2757 = vld [vmem:[%s0 + $0x3a0] sm:$0xff]
    %v2758 = vld [vmem:[%s0 + $0x3a8] sm:$0xff]
    %v2759 = vld [vmem:[%s0 + $0x3b0] sm:$0xff]
    %v2760 = vld [vmem:[%s0 + $0x3b8] sm:$0xff]
    %v2761 = vld [vmem:[%s0 + $0x3c0] sm:$0xff]
    %v2762 = vld [vmem:[%s0 + $0x3c8] sm:$0xff]
    %v2763 = vld [vmem:[%s0 + $0x3d0] sm:$0xff]
    %v2764 = vld [vmem:[%s0 + $0x3d8] sm:$0xff]
    %v2765 = vld [vmem:[%s0 + $0x3e0] sm:$0xff]
    %v2766 = vld [vmem:[%s0 + $0x3e8] sm:$0xff]
    %v2767 = vld [vmem:[%s0 + $0x3f0] sm:$0xff]
    %v2768 = vld [vmem:[%s0 + $0x3f8] sm:$0xff]
    %v2769 = vld [vmem:[%s0 + $0x400] sm:$0xff]
    %v2770 = vld [vmem:[%s0 + $0x408] sm:$0xff]
    %v2771 = vld [vmem:[%s0 + $0x410] sm:$0xff]
    %v2772 = vld [vmem:[%s0 + $0x418] sm:$0xff]
    %v2773 = vld [vmem:[%s0 + $0x420] sm:$0xff]
    %v2774 = vld [vmem:[%s0 + $0x428] sm:$0xff]
    %v2775 = vld [vmem:[%s0 + $0x430] sm:$0xff]
    %v2776 = vld [vmem:[%s0 + $0x438] sm:$0xff]
    %v2777 = vld [vmem:[%s0 + $0x440] sm:$0xff]
    %v2778 = vld [vmem:[%s0 + $0x448] sm:$0xff]
    %v2779 = vld [vmem:[%s0 + $0x450] sm:$0xff]
    %v2780 = vld [vmem:[%s0 + $0x458] sm:$0xff]
    %v2781 = vld [vmem:[%s0 + $0x460] sm:$0xff]
    %v2782 = vld [vmem:[%s0 + $0x468] sm:$0xff]
    %v2783 = vld [vmem:[%s0 + $0x470] sm:$0xff]
    %v2784 = vld [vmem:[%s0 + $0x478] sm:$0xff]
    %v2785 = vld [vmem:[%s0 + $0x480] sm:$0xff]
    %v2786 = vld [vmem:[%s0 + $0x488] sm:$0xff]
    %v2787 = vld [vmem:[%s0 + $0x490] sm:$0xff]
    %v2788 = vld [vmem:[%s0 + $0x498] sm:$0xff]
    %v2789 = vld [vmem:[%s0 + $0x4a0] sm:$0xff]
    %v2790 = vld [vmem:[%s0 + $0x4a8] sm:$0xff]
    %v2791 = vld [vmem:[%s0 + $0x4b0] sm:$0xff]
    %v2792 = vld [vmem:[%s0 + $0x4b8] sm:$0xff]
    %v2793 = vld [vmem:[%s0 + $0x4c0] sm:$0xff]
    %v2794 = vld [vmem:[%s0 + $0x4c8] sm:$0xff]
    %v2795 = vld [vmem:[%s0 + $0x4d0] sm:$0xff]
    %v2796 = vld [vmem:[%s0 + $0x4d8] sm:$0xff]
    %v2797 = vld [vmem:[%s0 + $0x4e0] sm:$0xff]
    %v2798 = vld [vmem:[%s0 + $0x4e8] sm:$0xff]
    %v2799 = vld [vmem:[%s0 + $0x4f0] sm:$0xff]
    %v2800 = vld [vmem:[%s0 + $0x4f8] sm:$0xff]
    %v2801 = vld [vmem:[%s0 + $0x500] sm:$0xff]
    %v2802 = vld [vmem:[%s0 + $0x508] sm:$0xff]
    %v2803 = vld [vmem:[%s0 + $0x510] sm:$0xff]
    %v2804 = vld [vmem:[%s0 + $0x518] sm:$0xff]
    %v2805 = vld [vmem:[%s0 + $0x520] sm:$0xff]
    %v2806 = vld [vmem:[%s0 + $0x528] sm:$0xff]
    %v2807 = vld [vmem:[%s0 + $0x530] sm:$0xff]
    %v2808 = vld [vmem:[%s0 + $0x538] sm:$0xff]
    %v2809 = vld [vmem:[%s0 + $0x540] sm:$0xff]
    %v2810 = vld [vmem:[%s0 + $0x548] sm:$0xff]
    %v2811 = vld [vmem:[%s0 + $0x550] sm:$0xff]
    %v2812 = vld [vmem:[%s0 + $0x558] sm:$0xff]
    %v2813 = vld [vmem:[%s0 + $0x560] sm:$0xff]
    %v2814 = vld [vmem:[%s0 + $0x568] sm:$0xff]
    %v2815 = vld [vmem:[%s0 + $0x570] sm:$0xff]
    %v2816 = vld [vmem:[%s0 + $0x578] sm:$0xff]
    %v2817 = vld [vmem:[%s0 + $0x580] sm:$0xff]
    %v2818 = vld [vmem:[%s0 + $0x588] sm:$0xff]
    %v2819 = vld [vmem:[%s0 + $0x590] sm:$0xff]
    %v2820 = vld [vmem:[%s0 + $0x598] sm:$0xff]
    %v2821 = vld [vmem:[%s0 + $0x5a0] sm:$0xff]
    %v2822 = vld [vmem:[%s0 + $0x5a8] sm:$0xff]
    %v2823 = vld [vmem:[%s0 + $0x5b0] sm:$0xff]
    %v2824 = vld [vmem:[%s0 + $0x5b8] sm:$0xff]
    %v2825 = vld [vmem:[%s0 + $0x5c0] sm:$0xff]
    %v2826 = vld [vmem:[%s0 + $0x5c8] sm:$0xff]
    %v2827 = vld [vmem:[%s0 + $0x5d0] sm:$0xff]
    %v2828 = vld [vmem:[%s0 + $0x5d8] sm:$0xff]
    %v2829 = vld [vmem:[%s0 + $0x5e0] sm:$0xff]
    %v2830 = vld [vmem:[%s0 + $0x5e8] sm:$0xff]
    %v2831 = vld [vmem:[%s0 + $0x5f0] sm:$0xff]
    %v2832 = vld [vmem:[%s0 + $0x5f8] sm:$0xff]
    %v2833 = vld [vmem:[%s0 + $0x600] sm:$0xff]
    %v2834 = vld [vmem:[%s0 + $0x608] sm:$0xff]
    %v2835 = vld [vmem:[%s0 + $0x610] sm:$0xff]
    %v2836 = vld [vmem:[%s0 + $0x618] sm:$0xff]
    %v2837 = vld [vmem:[%s0 + $0x620] sm:$0xff]
    %v2838 = vld [vmem:[%s0 + $0x628] sm:$0xff]
    %v2839 = vld [vmem:[%s0 + $0x630] sm:$0xff]
    %v2840 = vld [vmem:[%s0 + $0x638] sm:$0xff]
    %v2841 = vld [vmem:[%s0 + $0x640] sm:$0xff]
    %v2842 = vld [vmem:[%s0 + $0x648] sm:$0xff]
    %v2843 = vld [vmem:[%s0 + $0x650] sm:$0xff]
    %v2844 = vld [vmem:[%s0 + $0x658] sm:$0xff]
    %v2845 = vld [vmem:[%s0 + $0x660] sm:$0xff]
    %v2846 = vld [vmem:[%s0 + $0x668] sm:$0xff]
    %v2847 = vld [vmem:[%s0 + $0x670] sm:$0xff]
    %v2848 = vld [vmem:[%s0 + $0x678] sm:$0xff]
    %v2849 = vld [vmem:[%s0 + $0x680] sm:$0xff]
    %v2850 = vld [vmem:[%s0 + $0x688] sm:$0xff]
    %v2851 = vld [vmem:[%s0 + $0x690] sm:$0xff]
    %v2852 = vld [vmem:[%s0 + $0x698] sm:$0xff]
    %v2853 = vld [vmem:[%s0 + $0x6a0] sm:$0xff]
    %v2854 = vld [vmem:[%s0 + $0x6a8] sm:$0xff]
    %v2855 = vld [vmem:[%s0 + $0x6b0] sm:$0xff]
    %v2856 = vld [vmem:[%s0 + $0x6b8] sm:$0xff]
    %v2857 = vld [vmem:[%s0 + $0x6c0] sm:$0xff]
    %v2858 = vld [vmem:[%s0 + $0x6c8] sm:$0xff]
    %v2859 = vld [vmem:[%s0 + $0x6d0] sm:$0xff]
    %v2860 = vld [vmem:[%s0 + $0x6d8] sm:$0xff]
    %v2861 = vld [vmem:[%s0 + $0x6e0] sm:$0xff]
    %v2862 = vld [vmem:[%s0 + $0x6e8] sm:$0xff]
    %v2863 = vld [vmem:[%s0 + $0x6f0] sm:$0xff]
    %v2864 = vld [vmem:[%s0 + $0x6f8] sm:$0xff]
    %v2865 = vld [vmem:[%s0 + $0x700] sm:$0xff]
    %v2866 = vld [vmem:[%s0 + $0x708] sm:$0xff]
    %v2867 = vld [vmem:[%s0 + $0x710] sm:$0xff]
    %v2868 = vld [vmem:[%s0 + $0x718] sm:$0xff]
    %v2869 = vld [vmem:[%s0 + $0x720] sm:$0xff]
    %v2870 = vld [vmem:[%s0 + $0x728] sm:$0xff]
    %v2871 = vld [vmem:[%s0 + $0x730] sm:$0xff]
    %v2872 = vld [vmem:[%s0 + $0x738] sm:$0xff]
    %v2873 = vld [vmem:[%s0 + $0x740] sm:$0xff]
    %v2874 = vld [vmem:[%s0 + $0x748] sm:$0xff]
    %v2875 = vld [vmem:[%s0 + $0x750] sm:$0xff]
    %v2876 = vld [vmem:[%s0 + $0x758] sm:$0xff]
    %v2877 = vld [vmem:[%s0 + $0x760] sm:$0xff]
    %v2878 = vld [vmem:[%s0 + $0x768] sm:$0xff]
    %v2879 = vld [vmem:[%s0 + $0x770] sm:$0xff]
    %v2880 = vld [vmem:[%s0 + $0x778] sm:$0xff]
    %v2881 = vld [vmem:[%s0 + $0x780] sm:$0xff]
    %v2882 = vld [vmem:[%s0 + $0x788] sm:$0xff]
    %v2883 = vld [vmem:[%s0 + $0x790] sm:$0xff]
    %v2884 = vld [vmem:[%s0 + $0x798] sm:$0xff]
    %v2885 = vld [vmem:[%s0 + $0x7a0] sm:$0xff]
    %v2886 = vld [vmem:[%s0 + $0x7a8] sm:$0xff]
    %v2887 = vld [vmem:[%s0 + $0x7b0] sm:$0xff]
    %v2888 = vld [vmem:[%s0 + $0x7b8] sm:$0xff]
    %v2889 = vld [vmem:[%s0 + $0x7c0] sm:$0xff]
    %v2890 = vld [vmem:[%s0 + $0x7c8] sm:$0xff]
    %v2891 = vld [vmem:[%s0 + $0x7d0] sm:$0xff]
    %v2892 = vld [vmem:[%s0 + $0x7d8] sm:$0xff]
    %v2893 = vld [vmem:[%s0 + $0x7e0] sm:$0xff]
    %v2894 = vld [vmem:[%s0 + $0x7e8] sm:$0xff]
    %v2895 = vld [vmem:[%s0 + $0x7f0] sm:$0xff]
    %v2896 = vld [vmem:[%s0 + $0x7f8] sm:$0xff]
    %v2897 = vld [vmem:[%s0 + $0x800] sm:$0xff]
    %v2898 = vld [vmem:[%s0 + $0x808] sm:$0xff]
    %v2899 = vld [vmem:[%s0 + $0x810] sm:$0xff]
    %v2900 = vld [vmem:[%s0 + $0x818] sm:$0xff]
    %v2901 = vld [vmem:[%s0 + $0x820] sm:$0xff]
    %v2902 = vld [vmem:[%s0 + $0x828] sm:$0xff]
    %v2903 = vld [vmem:[%s0 + $0x830] sm:$0xff]
    %v2904 = vld [vmem:[%s0 + $0x838] sm:$0xff]
    %v2905 = vld [vmem:[%s0 + $0x840] sm:$0xff]
    %v2906 = vld [vmem:[%s0 + $0x848] sm:$0xff]
    %v2907 = vld [vmem:[%s0 + $0x850] sm:$0xff]
    %v2908 = vld [vmem:[%s0 + $0x858] sm:$0xff]
    %v2909 = vld [vmem:[%s0 + $0x860] sm:$0xff]
    %v2910 = vld [vmem:[%s0 + $0x868] sm:$0xff]
    %v2911 = vld [vmem:[%s0 + $0x870] sm:$0xff]
    %v2912 = vld [vmem:[%s0 + $0x878] sm:$0xff]
    %v2913 = vld [vmem:[%s0 + $0x880] sm:$0xff]
    %v2914 = vld [vmem:[%s0 + $0x888] sm:$0xff]
    %v2915 = vld [vmem:[%s0 + $0x890] sm:$0xff]
    %v2916 = vld [vmem:[%s0 + $0x898] sm:$0xff]
    %v2917 = vld [vmem:[%s0 + $0x8a0] sm:$0xff]
    %v2918 = vld [vmem:[%s0 + $0x8a8] sm:$0xff]
    %v2919 = vld [vmem:[%s0 + $0x8b0] sm:$0xff]
    %v2920 = vld [vmem:[%s0 + $0x8b8] sm:$0xff]
    %v2921 = vld [vmem:[%s0 + $0x8c0] sm:$0xff]
    %v2922 = vld [vmem:[%s0 + $0x8c8] sm:$0xff]
    %v2923 = vld [vmem:[%s0 + $0x8d0] sm:$0xff]
    %v2924 = vld [vmem:[%s0 + $0x8d8] sm:$0xff]
    %v2925 = vld [vmem:[%s0 + $0x8e0] sm:$0xff]
    %v2926 = vld [vmem:[%s0 + $0x8e8] sm:$0xff]
    %v2927 = vld [vmem:[%s0 + $0x8f0] sm:$0xff]
    %v2928 = vld [vmem:[%s0 + $0x8f8] sm:$0xff]
    %v2929 = vld [vmem:[%s0 + $0x900] sm:$0xff]
    %v2930 = vld [vmem:[%s0 + $0x908] sm:$0xff]
    %v2931 = vld [vmem:[%s0 + $0x910] sm:$0xff]
    %v2932 = vld [vmem:[%s0 + $0x918] sm:$0xff]
    %v2933 = vld [vmem:[%s0 + $0x920] sm:$0xff]
    %v2934 = vld [vmem:[%s0 + $0x928] sm:$0xff]
    %v2935 = vld [vmem:[%s0 + $0x930] sm:$0xff]
    %v2936 = vld [vmem:[%s0 + $0x938] sm:$0xff]
    %v2937 = vld [vmem:[%s0 + $0x940] sm:$0xff]
    %v2938 = vld [vmem:[%s0 + $0x948] sm:$0xff]
    %v2939 = vld [vmem:[%s0 + $0x950] sm:$0xff]
    %v2940 = vld [vmem:[%s0 + $0x958] sm:$0xff]
    %v2941 = vld [vmem:[%s0 + $0x960] sm:$0xff]
    %v2942 = vld [vmem:[%s0 + $0x968] sm:$0xff]
    %v2943 = vld [vmem:[%s0 + $0x970] sm:$0xff]
    %v2944 = vld [vmem:[%s0 + $0x978] sm:$0xff]
    %v2945 = vld [vmem:[%s0 + $0x980] sm:$0xff]
    %v2946 = vld [vmem:[%s0 + $0x988] sm:$0xff]
    %v2947 = vld [vmem:[%s0 + $0x990] sm:$0xff]
    %v2948 = vld [vmem:[%s0 + $0x998] sm:$0xff]
    %v2949 = vld [vmem:[%s0 + $0x9a0] sm:$0xff]
    %v2950 = vld [vmem:[%s0 + $0x9a8] sm:$0xff]
    %v2951 = vld [vmem:[%s0 + $0x9b0] sm:$0xff]
    %v2952 = vld [vmem:[%s0 + $0x9b8] sm:$0xff]
    %v2953 = vld [vmem:[%s0 + $0x9c0] sm:$0xff]
    %v2954 = vld [vmem:[%s0 + $0x9c8] sm:$0xff]
    %v2955 = vld [vmem:[%s0 + $0x9d0] sm:$0xff]
    %v2956 = vld [vmem:[%s0 + $0x9d8] sm:$0xff]
    %v2957 = vld [vmem:[%s0 + $0x9e0] sm:$0xff]
    %v2958 = vld [vmem:[%s0 + $0x9e8] sm:$0xff]
    %v2959 = vld [vmem:[%s0 + $0x9f0] sm:$0xff]
    %v2960 = vld [vmem:[%s0 + $0x9f8] sm:$0xff]
    %v2961 = vmul.f32 %v2641, %v2321
    %v2962 = vmul.f32 %v2642, %v2322
    %v2963 = vmul.f32 %v2643, %v2323
    %v2964 = vmul.f32 %v2644, %v2324
    %v2965 = vmul.f32 %v2645, %v2325
    %v2966 = vmul.f32 %v2646, %v2326
    %v2967 = vmul.f32 %v2647, %v2327
    %v2968 = vmul.f32 %v2648, %v2328
    %v2969 = vmul.f32 %v2649, %v2329
    %v2970 = vmul.f32 %v2650, %v2330
    %v2971 = vmul.f32 %v2651, %v2331
    %v2972 = vmul.f32 %v2652, %v2332
    %v2973 = vmul.f32 %v2653, %v2333
    %v2974 = vmul.f32 %v2654, %v2334
    %v2975 = vmul.f32 %v2655, %v2335
    %v2976 = vmul.f32 %v2656, %v2336
    %v2977 = vmul.f32 %v2657, %v2337
    %v2978 = vmul.f32 %v2658, %v2338
    %v2979 = vmul.f32 %v2659, %v2339
    %v2980 = vmul.f32 %v2660, %v2340
    %v2981 = vmul.f32 %v2661, %v2341
    %v2982 = vmul.f32 %v2662, %v2342
    %v2983 = vmul.f32 %v2663, %v2343
    %v2984 = vmul.f32 %v2664, %v2344
    %v2985 = vmul.f32 %v2665, %v2345
    %v2986 = vmul.f32 %v2666, %v2346
    %v2987 = vmul.f32 %v2667, %v2347
    %v2988 = vmul.f32 %v2668, %v2348
    %v2989 = vmul.f32 %v2669, %v2349
    %v2990 = vmul.f32 %v2670, %v2350
    %v2991 = vmul.f32 %v2671, %v2351
    %v2992 = vmul.f32 %v2672, %v2352
    %v2993 = vmul.f32 %v2673, %v2353
    %v2994 = vmul.f32 %v2674, %v2354
    %v2995 = vmul.f32 %v2675, %v2355
    %v2996 = vmul.f32 %v2676, %v2356
    %v2997 = vmul.f32 %v2677, %v2357
    %v2998 = vmul.f32 %v2678, %v2358
    %v2999 = vmul.f32 %v2679, %v2359
    %v3000 = vmul.f32 %v2680, %v2360
    %v3001 = vmul.f32 %v2681, %v2361
    %v3002 = vmul.f32 %v2682, %v2362
    %v3003 = vmul.f32 %v2683, %v2363
    %v3004 = vmul.f32 %v2684, %v2364
    %v3005 = vmul.f32 %v2685, %v2365
    %v3006 = vmul.f32 %v2686, %v2366
    %v3007 = vmul.f32 %v2687, %v2367
    %v3008 = vmul.f32 %v2688, %v2368
    %v3009 = vmul.f32 %v2689, %v2369
    %v3010 = vmul.f32 %v2690, %v2370
    %v3011 = vmul.f32 %v2691, %v2371
    %v3012 = vmul.f32 %v2692, %v2372
    %v3013 = vmul.f32 %v2693, %v2373
    %v3014 = vmul.f32 %v2694, %v2374
    %v3015 = vmul.f32 %v2695, %v2375
    %v3016 = vmul.f32 %v2696, %v2376
    %v3017 = vmul.f32 %v2697, %v2377
    %v3018 = vmul.f32 %v2698, %v2378
    %v3019 = vmul.f32 %v2699, %v2379
    %v3020 = vmul.f32 %v2700, %v2380
    %v3021 = vmul.f32 %v2701, %v2381
    %v3022 = vmul.f32 %v2702, %v2382
    %v3023 = vmul.f32 %v2703, %v2383
    %v3024 = vmul.f32 %v2704, %v2384
    %v3025 = vmul.f32 %v2705, %v2385
    %v3026 = vmul.f32 %v2706, %v2386
    %v3027 = vmul.f32 %v2707, %v2387
    %v3028 = vmul.f32 %v2708, %v2388
    %v3029 = vmul.f32 %v2709, %v2389
    %v3030 = vmul.f32 %v2710, %v2390
    %v3031 = vmul.f32 %v2711, %v2391
    %v3032 = vmul.f32 %v2712, %v2392
    %v3033 = vmul.f32 %v2713, %v2393
    %v3034 = vmul.f32 %v2714, %v2394
    %v3035 = vmul.f32 %v2715, %v2395
    %v3036 = vmul.f32 %v2716, %v2396
    %v3037 = vmul.f32 %v2717, %v2397
    %v3038 = vmul.f32 %v2718, %v2398
    %v3039 = vmul.f32 %v2719, %v2399
    %v3040 = vmul.f32 %v2720, %v2400
    %v3041 = vmul.f32 %v2721, %v2401
    %v3042 = vmul.f32 %v2722, %v2402
    %v3043 = vmul.f32 %v2723, %v2403
    %v3044 = vmul.f32 %v2724, %v2404
    %v3045 = vmul.f32 %v2725, %v2405
    %v3046 = vmul.f32 %v2726, %v2406
    %v3047 = vmul.f32 %v2727, %v2407
    %v3048 = vmul.f32 %v2728, %v2408
    %v3049 = vmul.f32 %v2729, %v2409
    %v3050 = vmul.f32 %v2730, %v2410
    %v3051 = vmul.f32 %v2731, %v2411
    %v3052 = vmul.f32 %v2732, %v2412
    %v3053 = vmul.f32 %v2733, %v2413
    %v3054 = vmul.f32 %v2734, %v2414
    %v3055 = vmul.f32 %v2735, %v2415
    %v3056 = vmul.f32 %v2736, %v2416
    %v3057 = vmul.f32 %v2737, %v2417
    %v3058 = vmul.f32 %v2738, %v2418
    %v3059 = vmul.f32 %v2739, %v2419
    %v3060 = vmul.f32 %v2740, %v2420
    %v3061 = vmul.f32 %v2741, %v2421
    %v3062 = vmul.f32 %v2742, %v2422
    %v3063 = vmul.f32 %v2743, %v2423
    %v3064 = vmul.f32 %v2744, %v2424
    %v3065 = vmul.f32 %v2745, %v2425
    %v3066 = vmul.f32 %v2746, %v2426
    %v3067 = vmul.f32 %v2747, %v2427
    %v3068 = vmul.f32 %v2748, %v2428
    %v3069 = vmul.f32 %v2749, %v2429
    %v3070 = vmul.f32 %v2750, %v2430
    %v3071 = vmul.f32 %v2751, %v2431
    %v3072 = vmul.f32 %v2752, %v2432
    %v3073 = vmul.f32 %v2753, %v2433
    %v3074 = vmul.f32 %v2754, %v2434
    %v3075 = vmul.f32 %v2755, %v2435
    %v3076 = vmul.f32 %v2756, %v2436
    %v3077 = vmul.f32 %v2757, %v2437
    %v3078 = vmul.f32 %v2758, %v2438
    %v3079 = vmul.f32 %v2759, %v2439
    %v3080 = vmul.f32 %v2760, %v2440
    %v3081 = vmul.f32 %v2761, %v2441
    %v3082 = vmul.f32 %v2762, %v2442
    %v3083 = vmul.f32 %v2763, %v2443
    %v3084 = vmul.f32 %v2764, %v2444
    %v3085 = vmul.f32 %v2765, %v2445
    %v3086 = vmul.f32 %v2766, %v2446
    %v3087 = vmul.f32 %v2767, %v2447
    %v3088 = vmul.f32 %v2768, %v2448
    %v3089 = vmul.f32 %v2769, %v2449
    %v3090 = vmul.f32 %v2770, %v2450
    %v3091 = vmul.f32 %v2771, %v2451
    %v3092 = vmul.f32 %v2772, %v2452
    %v3093 = vmul.f32 %v2773, %v2453
    %v3094 = vmul.f32 %v2774, %v2454
    %v3095 = vmul.f32 %v2775, %v2455
    %v3096 = vmul.f32 %v2776, %v2456
    %v3097 = vmul.f32 %v2777, %v2457
    %v3098 = vmul.f32 %v2778, %v2458
    %v3099 = vmul.f32 %v2779, %v2459
    %v3100 = vmul.f32 %v2780, %v2460
    %v3101 = vmul.f32 %v2781, %v2461
    %v3102 = vmul.f32 %v2782, %v2462
    %v3103 = vmul.f32 %v2783, %v2463
    %v3104 = vmul.f32 %v2784, %v2464
    %v3105 = vmul.f32 %v2785, %v2465
    %v3106 = vmul.f32 %v2786, %v2466
    %v3107 = vmul.f32 %v2787, %v2467
    %v3108 = vmul.f32 %v2788, %v2468
    %v3109 = vmul.f32 %v2789, %v2469
    %v3110 = vmul.f32 %v2790, %v2470
    %v3111 = vmul.f32 %v2791, %v2471
    %v3112 = vmul.f32 %v2792, %v2472
    %v3113 = vmul.f32 %v2793, %v2473
    %v3114 = vmul.f32 %v2794, %v2474
    %v3115 = vmul.f32 %v2795, %v2475
    %v3116 = vmul.f32 %v2796, %v2476
    %v3117 = vmul.f32 %v2797, %v2477
    %v3118 = vmul.f32 %v2798, %v2478
    %v3119 = vmul.f32 %v2799, %v2479
    %v3120 = vmul.f32 %v2800, %v2480
    %v3121 = vmul.f32 %v2801, %v2481
    %v3122 = vmul.f32 %v2802, %v2482
    %v3123 = vmul.f32 %v2803, %v2483
    %v3124 = vmul.f32 %v2804, %v2484
    %v3125 = vmul.f32 %v2805, %v2485
    %v3126 = vmul.f32 %v2806, %v2486
    %v3127 = vmul.f32 %v2807, %v2487
    %v3128 = vmul.f32 %v2808, %v2488
    %v3129 = vmul.f32 %v2809, %v2489
    %v3130 = vmul.f32 %v2810, %v2490
    %v3131 = vmul.f32 %v2811, %v2491
    %v3132 = vmul.f32 %v2812, %v2492
    %v3133 = vmul.f32 %v2813, %v2493
    %v3134 = vmul.f32 %v2814, %v2494
    %v3135 = vmul.f32 %v2815, %v2495
    %v3136 = vmul.f32 %v2816, %v2496
    %v3137 = vmul.f32 %v2817, %v2497
    %v3138 = vmul.f32 %v2818, %v2498
    %v3139 = vmul.f32 %v2819, %v2499
    %v3140 = vmul.f32 %v2820, %v2500
    %v3141 = vmul.f32 %v2821, %v2501
    %v3142 = vmul.f32 %v2822, %v2502
    %v3143 = vmul.f32 %v2823, %v2503
    %v3144 = vmul.f32 %v2824, %v2504
    %v3145 = vmul.f32 %v2825, %v2505
    %v3146 = vmul.f32 %v2826, %v2506
    %v3147 = vmul.f32 %v2827, %v2507
    %v3148 = vmul.f32 %v2828, %v2508
    %v3149 = vmul.f32 %v2829, %v2509
    %v3150 = vmul.f32 %v2830, %v2510
    %v3151 = vmul.f32 %v2831, %v2511
    %v3152 = vmul.f32 %v2832, %v2512
    %v3153 = vmul.f32 %v2833, %v2513
    %v3154 = vmul.f32 %v2834, %v2514
    %v3155 = vmul.f32 %v2835, %v2515
    %v3156 = vmul.f32 %v2836, %v2516
    %v3157 = vmul.f32 %v2837, %v2517
    %v3158 = vmul.f32 %v2838, %v2518
    %v3159 = vmul.f32 %v2839, %v2519
    %v3160 = vmul.f32 %v2840, %v2520
    %v3161 = vmul.f32 %v2841, %v2521
    %v3162 = vmul.f32 %v2842, %v2522
    %v3163 = vmul.f32 %v2843, %v2523
    %v3164 = vmul.f32 %v2844, %v2524
    %v3165 = vmul.f32 %v2845, %v2525
    %v3166 = vmul.f32 %v2846, %v2526
    %v3167 = vmul.f32 %v2847, %v2527
    %v3168 = vmul.f32 %v2848, %v2528
    %v3169 = vmul.f32 %v2849, %v2529
    %v3170 = vmul.f32 %v2850, %v2530
    %v3171 = vmul.f32 %v2851, %v2531
    %v3172 = vmul.f32 %v2852, %v2532
    %v3173 = vmul.f32 %v2853, %v2533
    %v3174 = vmul.f32 %v2854, %v2534
    %v3175 = vmul.f32 %v2855, %v2535
    %v3176 = vmul.f32 %v2856, %v2536
    %v3177 = vmul.f32 %v2857, %v2537
    %v3178 = vmul.f32 %v2858, %v2538
    %v3179 = vmul.f32 %v2859, %v2539
    %v3180 = vmul.f32 %v2860, %v2540
    %v3181 = vmul.f32 %v2861, %v2541
    %v3182 = vmul.f32 %v2862, %v2542
    %v3183 = vmul.f32 %v2863, %v2543
    %v3184 = vmul.f32 %v2864, %v2544
    %v3185 = vmul.f32 %v2865, %v2545
    %v3186 = vmul.f32 %v2866, %v2546
    %v3187 = vmul.f32 %v2867, %v2547
    %v3188 = vmul.f32 %v2868, %v2548
    %v3189 = vmul.f32 %v2869, %v2549
    %v3190 = vmul.f32 %v2870, %v2550
    %v3191 = vmul.f32 %v2871, %v2551
    %v3192 = vmul.f32 %v2872, %v2552
    %v3193 = vmul.f32 %v2873, %v2553
    %v3194 = vmul.f32 %v2874, %v2554
    %v3195 = vmul.f32 %v2875, %v2555
    %v3196 = vmul.f32 %v2876, %v2556
    %v3197 = vmul.f32 %v2877, %v2557
    %v3198 = vmul.f32 %v2878, %v2558
    %v3199 = vmul.f32 %v2879, %v2559
    %v3200 = vmul.f32 %v2880, %v2560
    %v3201 = vmul.f32 %v2881, %v2561
    %v3202 = vmul.f32 %v2882, %v2562
    %v3203 = vmul.f32 %v2883, %v2563
    %v3204 = vmul.f32 %v2884, %v2564
    %v3205 = vmul.f32 %v2885, %v2565
    %v3206 = vmul.f32 %v2886, %v2566
    %v3207 = vmul.f32 %v2887, %v2567
    %v3208 = vmul.f32 %v2888, %v2568
    %v3209 = vmul.f32 %v2889, %v2569
    %v3210 = vmul.f32 %v2890, %v2570
    %v3211 = vmul.f32 %v2891, %v2571
    %v3212 = vmul.f32 %v2892, %v2572
    %v3213 = vmul.f32 %v2893, %v2573
    %v3214 = vmul.f32 %v2894, %v2574
    %v3215 = vmul.f32 %v2895, %v2575
    %v3216 = vmul.f32 %v2896, %v2576
    %v3217 = vmul.f32 %v2897, %v2577
    %v3218 = vmul.f32 %v2898, %v2578
    %v3219 = vmul.f32 %v2899, %v2579
    %v3220 = vmul.f32 %v2900, %v2580
    %v3221 = vmul.f32 %v2901, %v2581
    %v3222 = vmul.f32 %v2902, %v2582
    %v3223 = vmul.f32 %v2903, %v2583
    %v3224 = vmul.f32 %v2904, %v2584
    %v3225 = vmul.f32 %v2905, %v2585
    %v3226 = vmul.f32 %v2906, %v2586
    %v3227 = vmul.f32 %v2907, %v2587
    %v3228 = vmul.f32 %v2908, %v2588
    %v3229 = vmul.f32 %v2909, %v2589
    %v3230 = vmul.f32 %v2910, %v2590
    %v3231 = vmul.f32 %v2911, %v2591
    %v3232 = vmul.f32 %v2912, %v2592
    %v3233 = vmul.f32 %v2913, %v2593
    %v3234 = vmul.f32 %v2914, %v2594
    %v3235 = vmul.f32 %v2915, %v2595
    %v3236 = vmul.f32 %v2916, %v2596
    %v3237 = vmul.f32 %v2917, %v2597
    %v3238 = vmul.f32 %v2918, %v2598
    %v3239 = vmul.f32 %v2919, %v2599
    %v3240 = vmul.f32 %v2920, %v2600
    %v3241 = vmul.f32 %v2921, %v2601
    %v3242 = vmul.f32 %v2922, %v2602
    %v3243 = vmul.f32 %v2923, %v2603
    %v3244 = vmul.f32 %v2924, %v2604
    %v3245 = vmul.f32 %v2925, %v2605
    %v3246 = vmul.f32 %v2926, %v2606
    %v3247 = vmul.f32 %v2927, %v2607
    %v3248 = vmul.f32 %v2928, %v2608
    %v3249 = vmul.f32 %v2929, %v2609
    %v3250 = vmul.f32 %v2930, %v2610
    %v3251 = vmul.f32 %v2931, %v2611
    %v3252 = vmul.f32 %v2932, %v2612
    %v3253 = vmul.f32 %v2933, %v2613
    %v3254 = vmul.f32 %v2934, %v2614
    %v3255 = vmul.f32 %v2935, %v2615
    %v3256 = vmul.f32 %v2936, %v2616
    %v3257 = vmul.f32 %v2937, %v2617
    %v3258 = vmul.f32 %v2938, %v2618
    %v3259 = vmul.f32 %v2939, %v2619
    %v3260 = vmul.f32 %v2940, %v2620
    %v3261 = vmul.f32 %v2941, %v2621
    %v3262 = vmul.f32 %v2942, %v2622
    %v3263 = vmul.f32 %v2943, %v2623
    %v3264 = vmul.f32 %v2944, %v2624
    %v3265 = vmul.f32 %v2945, %v2625
    %v3266 = vmul.f32 %v2946, %v2626
    %v3267 = vmul.f32 %v2947, %v2627
    %v3268 = vmul.f32 %v2948, %v2628
    %v3269 = vmul.f32 %v2949, %v2629
    %v3270 = vmul.f32 %v2950, %v2630
    %v3271 = vmul.f32 %v2951, %v2631
    %v3272 = vmul.f32 %v2952, %v2632
    %v3273 = vmul.f32 %v2953, %v2633
    %v3274 = vmul.f32 %v2954, %v2634
    %v3275 = vmul.f32 %v2955, %v2635
    %v3276 = vmul.f32 %v2956, %v2636
    %v3277 = vmul.f32 %v2957, %v2637
    %v3278 = vmul.f32 %v2958, %v2638
    %v3279 = vmul.f32 %v2959, %v2639
    %v3280 = vmul.f32 %v2960, %v2640
    %v3281 = vpack.c.bf16 %v2962, %v2961
    %v3282 = vpack.c.bf16 %v2964, %v2963
    %v3283 = vpack.c.bf16 %v2966, %v2965
    %v3284 = vpack.c.bf16 %v2968, %v2967
    %v3285 = vpack.c.bf16 %v2970, %v2969
    %v3286 = vpack.c.bf16 %v2972, %v2971
    %v3287 = vpack.c.bf16 %v2974, %v2973
    %v3288 = vpack.c.bf16 %v2976, %v2975
    %v3289 = vpack.c.bf16 %v2978, %v2977
    %v3290 = vpack.c.bf16 %v2980, %v2979
    %v3291 = vpack.c.bf16 %v2982, %v2981
    %v3292 = vpack.c.bf16 %v2984, %v2983
    %v3293 = vpack.c.bf16 %v2986, %v2985
    %v3294 = vpack.c.bf16 %v2988, %v2987
    %v3295 = vpack.c.bf16 %v2990, %v2989
    %v3296 = vpack.c.bf16 %v2992, %v2991
    %v3297 = vpack.c.bf16 %v2994, %v2993
    %v3298 = vpack.c.bf16 %v2996, %v2995
    %v3299 = vpack.c.bf16 %v2998, %v2997
    %v3300 = vpack.c.bf16 %v3000, %v2999
    %v3301 = vpack.c.bf16 %v3002, %v3001
    %v3302 = vpack.c.bf16 %v3004, %v3003
    %v3303 = vpack.c.bf16 %v3006, %v3005
    %v3304 = vpack.c.bf16 %v3008, %v3007
    %v3305 = vpack.c.bf16 %v3010, %v3009
    %v3306 = vpack.c.bf16 %v3012, %v3011
    %v3307 = vpack.c.bf16 %v3014, %v3013
    %v3308 = vpack.c.bf16 %v3016, %v3015
    %v3309 = vpack.c.bf16 %v3018, %v3017
    %v3310 = vpack.c.bf16 %v3020, %v3019
    %v3311 = vpack.c.bf16 %v3022, %v3021
    %v3312 = vpack.c.bf16 %v3024, %v3023
    %v3313 = vpack.c.bf16 %v3026, %v3025
    %v3314 = vpack.c.bf16 %v3028, %v3027
    %v3315 = vpack.c.bf16 %v3030, %v3029
    %v3316 = vpack.c.bf16 %v3032, %v3031
    %v3317 = vpack.c.bf16 %v3034, %v3033
    %v3318 = vpack.c.bf16 %v3036, %v3035
    %v3319 = vpack.c.bf16 %v3038, %v3037
    %v3320 = vpack.c.bf16 %v3040, %v3039
    %v3321 = vpack.c.bf16 %v3042, %v3041
    %v3322 = vpack.c.bf16 %v3044, %v3043
    %v3323 = vpack.c.bf16 %v3046, %v3045
    %v3324 = vpack.c.bf16 %v3048, %v3047
    %v3325 = vpack.c.bf16 %v3050, %v3049
    %v3326 = vpack.c.bf16 %v3052, %v3051
    %v3327 = vpack.c.bf16 %v3054, %v3053
    %v3328 = vpack.c.bf16 %v3056, %v3055
    %v3329 = vpack.c.bf16 %v3058, %v3057
    %v3330 = vpack.c.bf16 %v3060, %v3059
    %v3331 = vpack.c.bf16 %v3062, %v3061
    %v3332 = vpack.c.bf16 %v3064, %v3063
    %v3333 = vpack.c.bf16 %v3066, %v3065
    %v3334 = vpack.c.bf16 %v3068, %v3067
    %v3335 = vpack.c.bf16 %v3070, %v3069
    %v3336 = vpack.c.bf16 %v3072, %v3071
    %v3337 = vpack.c.bf16 %v3074, %v3073
    %v3338 = vpack.c.bf16 %v3076, %v3075
    %v3339 = vpack.c.bf16 %v3078, %v3077
    %v3340 = vpack.c.bf16 %v3080, %v3079
    %v3341 = vpack.c.bf16 %v3082, %v3081
    %v3342 = vpack.c.bf16 %v3084, %v3083
    %v3343 = vpack.c.bf16 %v3086, %v3085
    %v3344 = vpack.c.bf16 %v3088, %v3087
    %v3345 = vpack.c.bf16 %v3090, %v3089
    %v3346 = vpack.c.bf16 %v3092, %v3091
    %v3347 = vpack.c.bf16 %v3094, %v3093
    %v3348 = vpack.c.bf16 %v3096, %v3095
    %v3349 = vpack.c.bf16 %v3098, %v3097
    %v3350 = vpack.c.bf16 %v3100, %v3099
    %v3351 = vpack.c.bf16 %v3102, %v3101
    %v3352 = vpack.c.bf16 %v3104, %v3103
    %v3353 = vpack.c.bf16 %v3106, %v3105
    %v3354 = vpack.c.bf16 %v3108, %v3107
    %v3355 = vpack.c.bf16 %v3110, %v3109
    %v3356 = vpack.c.bf16 %v3112, %v3111
    %v3357 = vpack.c.bf16 %v3114, %v3113
    %v3358 = vpack.c.bf16 %v3116, %v3115
    %v3359 = vpack.c.bf16 %v3118, %v3117
    %v3360 = vpack.c.bf16 %v3120, %v3119
    %v3361 = vpack.c.bf16 %v3122, %v3121
    %v3362 = vpack.c.bf16 %v3124, %v3123
    %v3363 = vpack.c.bf16 %v3126, %v3125
    %v3364 = vpack.c.bf16 %v3128, %v3127
    %v3365 = vpack.c.bf16 %v3130, %v3129
    %v3366 = vpack.c.bf16 %v3132, %v3131
    %v3367 = vpack.c.bf16 %v3134, %v3133
    %v3368 = vpack.c.bf16 %v3136, %v3135
    %v3369 = vpack.c.bf16 %v3138, %v3137
    %v3370 = vpack.c.bf16 %v3140, %v3139
    %v3371 = vpack.c.bf16 %v3142, %v3141
    %v3372 = vpack.c.bf16 %v3144, %v3143
    %v3373 = vpack.c.bf16 %v3146, %v3145
    %v3374 = vpack.c.bf16 %v3148, %v3147
    %v3375 = vpack.c.bf16 %v3150, %v3149
    %v3376 = vpack.c.bf16 %v3152, %v3151
    %v3377 = vpack.c.bf16 %v3154, %v3153
    %v3378 = vpack.c.bf16 %v3156, %v3155
    %v3379 = vpack.c.bf16 %v3158, %v3157
    %v3380 = vpack.c.bf16 %v3160, %v3159
    %v3381 = vpack.c.bf16 %v3162, %v3161
    %v3382 = vpack.c.bf16 %v3164, %v3163
    %v3383 = vpack.c.bf16 %v3166, %v3165
    %v3384 = vpack.c.bf16 %v3168, %v3167
    %v3385 = vpack.c.bf16 %v3170, %v3169
    %v3386 = vpack.c.bf16 %v3172, %v3171
    %v3387 = vpack.c.bf16 %v3174, %v3173
    %v3388 = vpack.c.bf16 %v3176, %v3175
    %v3389 = vpack.c.bf16 %v3178, %v3177
    %v3390 = vpack.c.bf16 %v3180, %v3179
    %v3391 = vpack.c.bf16 %v3182, %v3181
    %v3392 = vpack.c.bf16 %v3184, %v3183
    %v3393 = vpack.c.bf16 %v3186, %v3185
    %v3394 = vpack.c.bf16 %v3188, %v3187
    %v3395 = vpack.c.bf16 %v3190, %v3189
    %v3396 = vpack.c.bf16 %v3192, %v3191
    %v3397 = vpack.c.bf16 %v3194, %v3193
    %v3398 = vpack.c.bf16 %v3196, %v3195
    %v3399 = vpack.c.bf16 %v3198, %v3197
    %v3400 = vpack.c.bf16 %v3200, %v3199
    %v3401 = vpack.c.bf16 %v3202, %v3201
    %v3402 = vpack.c.bf16 %v3204, %v3203
    %v3403 = vpack.c.bf16 %v3206, %v3205
    %v3404 = vpack.c.bf16 %v3208, %v3207
    %v3405 = vpack.c.bf16 %v3210, %v3209
    %v3406 = vpack.c.bf16 %v3212, %v3211
    %v3407 = vpack.c.bf16 %v3214, %v3213
    %v3408 = vpack.c.bf16 %v3216, %v3215
    %v3409 = vpack.c.bf16 %v3218, %v3217
    %v3410 = vpack.c.bf16 %v3220, %v3219
    %v3411 = vpack.c.bf16 %v3222, %v3221
    %v3412 = vpack.c.bf16 %v3224, %v3223
    %v3413 = vpack.c.bf16 %v3226, %v3225
    %v3414 = vpack.c.bf16 %v3228, %v3227
    %v3415 = vpack.c.bf16 %v3230, %v3229
    %v3416 = vpack.c.bf16 %v3232, %v3231
    %v3417 = vpack.c.bf16 %v3234, %v3233
    %v3418 = vpack.c.bf16 %v3236, %v3235
    %v3419 = vpack.c.bf16 %v3238, %v3237
    %v3420 = vpack.c.bf16 %v3240, %v3239
    %v3421 = vpack.c.bf16 %v3242, %v3241
    %v3422 = vpack.c.bf16 %v3244, %v3243
    %v3423 = vpack.c.bf16 %v3246, %v3245
    %v3424 = vpack.c.bf16 %v3248, %v3247
    %v3425 = vpack.c.bf16 %v3250, %v3249
    %v3426 = vpack.c.bf16 %v3252, %v3251
    %v3427 = vpack.c.bf16 %v3254, %v3253
    %v3428 = vpack.c.bf16 %v3256, %v3255
    %v3429 = vpack.c.bf16 %v3258, %v3257
    %v3430 = vpack.c.bf16 %v3260, %v3259
    %v3431 = vpack.c.bf16 %v3262, %v3261
    %v3432 = vpack.c.bf16 %v3264, %v3263
    %v3433 = vpack.c.bf16 %v3266, %v3265
    %v3434 = vpack.c.bf16 %v3268, %v3267
    %v3435 = vpack.c.bf16 %v3270, %v3269
    %v3436 = vpack.c.bf16 %v3272, %v3271
    %v3437 = vpack.c.bf16 %v3274, %v3273
    %v3438 = vpack.c.bf16 %v3276, %v3275
    %v3439 = vpack.c.bf16 %v3278, %v3277
    %v3440 = vpack.c.bf16 %v3280, %v3279
    %v3441 = vld [vmem:[%s4] sm:$0xf]
    %v3442 = vld [vmem:[%s4 + $0x4] sm:$0xf]
    %v3443 = vld [vmem:[%s4 + $0x8] sm:$0xf]
    %v3444 = vld [vmem:[%s4 + $0xc] sm:$0xf]
    %v3445 = vld [vmem:[%s5] sm:$0x1]
    %v3447 = vlaneseq
    %v3448 = vshrl.u32 %v3447, 7
    %v3449 = vsub.s32 0, %v3448
    %v3450 = vrot.slane %v3445, %v3449
    %v3456 = vunpack.c.l.b16 %v3441
    %v3457 = vunpack.c.l.b16 %v3442
    %v3458 = vunpack.c.l.b16 %v3443
    %v3459 = vunpack.c.l.b16 %v3444
    %v3460 = vpack.c.b16 %v3457, %v3456
    %v3461 = vpack.c.b16 %v3459, %v3458
    %vm3464 = vcmask 261120
    %v3466 = vsel %vm3464, %v3281, 0
    %v3469 = vsel %vm3464, %v3282, 0
    %v3472 = vsel %vm3464, %v3283, 0
    %v3475 = vsel %vm3464, %v3284, 0
    %v3478 = vsel %vm3464, %v3285, 0
    %v3481 = vsel %vm3464, %v3286, 0
    %v3484 = vsel %vm3464, %v3287, 0
    %v3487 = vsel %vm3464, %v3288, 0
    %v3490 = vsel %vm3464, %v3289, 0
    %v3493 = vsel %vm3464, %v3290, 0
    %v3496 = vsel %vm3464, %v3291, 0
    %v3499 = vsel %vm3464, %v3292, 0
    %v3502 = vsel %vm3464, %v3293, 0
    %v3505 = vsel %vm3464, %v3294, 0
    %v3508 = vsel %vm3464, %v3295, 0
    %v3511 = vsel %vm3464, %v3296, 0
    %v3514 = vsel %vm3464, %v3297, 0
    %v3517 = vsel %vm3464, %v3298, 0
    %v3520 = vsel %vm3464, %v3299, 0
    %v3523 = vsel %vm3464, %v3300, 0
    %v3526 = vsel %vm3464, %v3301, 0
    %v3529 = vsel %vm3464, %v3302, 0
    %v3532 = vsel %vm3464, %v3303, 0
    %v3535 = vsel %vm3464, %v3304, 0
    %v3538 = vsel %vm3464, %v3305, 0
    %v3541 = vsel %vm3464, %v3306, 0
    %v3544 = vsel %vm3464, %v3307, 0
    %v3547 = vsel %vm3464, %v3308, 0
    %v3550 = vsel %vm3464, %v3309, 0
    %v3553 = vsel %vm3464, %v3310, 0
    %v3556 = vsel %vm3464, %v3311, 0
    %v3559 = vsel %vm3464, %v3312, 0
    %v3562 = vsel %vm3464, %v3313, 0
    %v3565 = vsel %vm3464, %v3314, 0
    %v3568 = vsel %vm3464, %v3315, 0
    %v3571 = vsel %vm3464, %v3316, 0
    %v3574 = vsel %vm3464, %v3317, 0
    %v3577 = vsel %vm3464, %v3318, 0
    %v3580 = vsel %vm3464, %v3319, 0
    %v3583 = vsel %vm3464, %v3320, 0
    %v3586 = vsel %vm3464, %v3321, 0
    %v3589 = vsel %vm3464, %v3322, 0
    %v3592 = vsel %vm3464, %v3323, 0
    %v3595 = vsel %vm3464, %v3324, 0
    %v3598 = vsel %vm3464, %v3325, 0
    %v3601 = vsel %vm3464, %v3326, 0
    %v3604 = vsel %vm3464, %v3327, 0
    %v3607 = vsel %vm3464, %v3328, 0
    %v3610 = vsel %vm3464, %v3329, 0
    %v3613 = vsel %vm3464, %v3330, 0
    %v3616 = vsel %vm3464, %v3331, 0
    %v3619 = vsel %vm3464, %v3332, 0
    %v3622 = vsel %vm3464, %v3333, 0
    %v3625 = vsel %vm3464, %v3334, 0
    %v3628 = vsel %vm3464, %v3335, 0
    %v3631 = vsel %vm3464, %v3336, 0
    %v3634 = vsel %vm3464, %v3337, 0
    %v3637 = vsel %vm3464, %v3338, 0
    %v3640 = vsel %vm3464, %v3339, 0
    %v3643 = vsel %vm3464, %v3340, 0
    %v3646 = vsel %vm3464, %v3341, 0
    %v3649 = vsel %vm3464, %v3342, 0
    %v3652 = vsel %vm3464, %v3343, 0
    %v3655 = vsel %vm3464, %v3344, 0
    %v3658 = vsel %vm3464, %v3345, 0
    %v3661 = vsel %vm3464, %v3346, 0
    %v3664 = vsel %vm3464, %v3347, 0
    %v3667 = vsel %vm3464, %v3348, 0
    %v3670 = vsel %vm3464, %v3349, 0
    %v3673 = vsel %vm3464, %v3350, 0
    %v3676 = vsel %vm3464, %v3351, 0
    %v3679 = vsel %vm3464, %v3352, 0
    %v3682 = vsel %vm3464, %v3353, 0
    %v3685 = vsel %vm3464, %v3354, 0
    %v3688 = vsel %vm3464, %v3355, 0
    %v3691 = vsel %vm3464, %v3356, 0
    %v3694 = vsel %vm3464, %v3357, 0
    %v3697 = vsel %vm3464, %v3358, 0
    %v3700 = vsel %vm3464, %v3359, 0
    %v3703 = vsel %vm3464, %v3360, 0
    %v3706 = vsel %vm3464, %v3361, 0
    %v3709 = vsel %vm3464, %v3362, 0
    %v3712 = vsel %vm3464, %v3363, 0
    %v3715 = vsel %vm3464, %v3364, 0
    %v3718 = vsel %vm3464, %v3365, 0
    %v3721 = vsel %vm3464, %v3366, 0
    %v3724 = vsel %vm3464, %v3367, 0
    %v3727 = vsel %vm3464, %v3368, 0
    %v3730 = vsel %vm3464, %v3369, 0
    %v3733 = vsel %vm3464, %v3370, 0
    %v3736 = vsel %vm3464, %v3371, 0
    %v3739 = vsel %vm3464, %v3372, 0
    %v3742 = vsel %vm3464, %v3373, 0
    %v3745 = vsel %vm3464, %v3374, 0
    %v3748 = vsel %vm3464, %v3375, 0
    %v3751 = vsel %vm3464, %v3376, 0
    %v3754 = vsel %vm3464, %v3377, 0
    %v3757 = vsel %vm3464, %v3378, 0
    %v3760 = vsel %vm3464, %v3379, 0
    %v3763 = vsel %vm3464, %v3380, 0
    %v3766 = vsel %vm3464, %v3381, 0
    %v3769 = vsel %vm3464, %v3382, 0
    %v3772 = vsel %vm3464, %v3383, 0
    %v3775 = vsel %vm3464, %v3384, 0
    %v3778 = vsel %vm3464, %v3385, 0
    %v3781 = vsel %vm3464, %v3386, 0
    %v3784 = vsel %vm3464, %v3387, 0
    %v3787 = vsel %vm3464, %v3388, 0
    %v3790 = vsel %vm3464, %v3389, 0
    %v3793 = vsel %vm3464, %v3390, 0
    %v3796 = vsel %vm3464, %v3391, 0
    %v3799 = vsel %vm3464, %v3392, 0
    %v3802 = vsel %vm3464, %v3393, 0
    %v3805 = vsel %vm3464, %v3394, 0
    %v3808 = vsel %vm3464, %v3395, 0
    %v3811 = vsel %vm3464, %v3396, 0
    %v3814 = vsel %vm3464, %v3397, 0
    %v3817 = vsel %vm3464, %v3398, 0
    %v3820 = vsel %vm3464, %v3399, 0
    %v3823 = vsel %vm3464, %v3400, 0
    %v3826 = vsel %vm3464, %v3401, 0
    %v3829 = vsel %vm3464, %v3402, 0
    %v3832 = vsel %vm3464, %v3403, 0
    %v3835 = vsel %vm3464, %v3404, 0
    %v3838 = vsel %vm3464, %v3405, 0
    %v3841 = vsel %vm3464, %v3406, 0
    %v3844 = vsel %vm3464, %v3407, 0
    %v3847 = vsel %vm3464, %v3408, 0
    %v3850 = vsel %vm3464, %v3409, 0
    %v3853 = vsel %vm3464, %v3410, 0
    %v3856 = vsel %vm3464, %v3411, 0
    %v3859 = vsel %vm3464, %v3412, 0
    %v3862 = vsel %vm3464, %v3413, 0
    %v3865 = vsel %vm3464, %v3414, 0
    %v3868 = vsel %vm3464, %v3415, 0
    %v3871 = vsel %vm3464, %v3416, 0
    %v3874 = vsel %vm3464, %v3417, 0
    %v3877 = vsel %vm3464, %v3418, 0
    %v3880 = vsel %vm3464, %v3419, 0
    %v3883 = vsel %vm3464, %v3420, 0
    %v3886 = vsel %vm3464, %v3421, 0
    %v3889 = vsel %vm3464, %v3422, 0
    %v3892 = vsel %vm3464, %v3423, 0
    %v3895 = vsel %vm3464, %v3424, 0
    %v3898 = vsel %vm3464, %v3425, 0
    %v3901 = vsel %vm3464, %v3426, 0
    %v3904 = vsel %vm3464, %v3427, 0
    %v3907 = vsel %vm3464, %v3428, 0
    %v3910 = vsel %vm3464, %v3429, 0
    %v3913 = vsel %vm3464, %v3430, 0
    %v3916 = vsel %vm3464, %v3431, 0
    %v3919 = vsel %vm3464, %v3432, 0
    %v3922 = vsel %vm3464, %v3433, 0
    %v3925 = vsel %vm3464, %v3434, 0
    %v3928 = vsel %vm3464, %v3435, 0
    %v3931 = vsel %vm3464, %v3436, 0
    %v3934 = vsel %vm3464, %v3437, 0
    %v3937 = vsel %vm3464, %v3438, 0
    %v3940 = vsel %vm3464, %v3439, 0
    %v3943 = vsel %vm3464, %v3440, 0
    %3945 = vmatprep.subr.bf16.mxu0 0
    %3946 = vmatpush1.bf16.msra.mxu0 0
    %3947 = vmatprep.subr.bf16.mxu0 0
    %3948 = vmatpush1.bf16.msra.mxu0 0
    %3949 = vmatprep.subr.bf16.mxu0 0
    %3950 = vmatpush1.bf16.msra.mxu0 0
    %3951 = vmatprep.subr.bf16.mxu0 0
    %3952 = vmatpush1.bf16.msra.mxu0 0
    %3953 = vmatprep.subr.bf16.mxu0 0
    %3954 = vmatpush1.bf16.msra.mxu0 0
    %3955 = vmatprep.subr.bf16.mxu0 0
    %3956 = vmatpush1.bf16.msra.mxu0 0
    %3957 = vmatprep.subr.bf16.mxu0 0
    %3958 = vmatpush1.bf16.msra.mxu0 %v3461
    %3959 = vmatprep.subr.bf16.mxu0 0
    %3960 = vmatpush1.bf16.msra.mxu0 %v3460
    %3961 = vmatprep.subr.bf16.mxu0 0
    %3962 = vmatpush2.bf16.msra.mxu0 0
    %3963 = vmatprep.subr.bf16.mxu0 0
    %3964 = vmatpush2.bf16.msra.mxu0 0
    %3965 = vmatprep.subr.bf16.mxu0 0
    %3966 = vmatpush2.bf16.msra.mxu0 0
    %3967 = vmatprep.subr.bf16.mxu0 0
    %3968 = vmatpush2.bf16.msra.mxu0 0
    %3969 = vmatprep.subr.bf16.mxu0 0
    %3970 = vmatpush2.bf16.msra.mxu0 0
    %3971 = vmatprep.subr.bf16.mxu0 0
    %3972 = vmatpush2.bf16.msra.mxu0 0
    %3973 = vmatprep.subr.bf16.mxu0 0
    %3974 = vmatpush2.bf16.msra.mxu0 0
    %3975 = vmatprep.subr.bf16.mxu0 0
    %3976 = vmatpush2.bf16.msra.mxu0 0
    %3977 = vmatprep.mubr.bf16.mxu0 0
    %3978 = vmatmul.mubr.bf16.gmra.mxu0 %v3466
    %v3979 = vpop.f32.mrf.mxu0
    %v3980 = vadd.f32 %v3450, %v3979
    %v3981 = vpop.f32.mrf.mxu0
    %v3982 = vpop.f32.mrf.mxu0
    %v3983 = vadd.f32 %v3450, %v3982
    %v3984 = vpop.f32.mrf.mxu0
    %3985 = vmatprep.mubr.bf16.mxu0 0
    %3986 = vmatmul.mubr.bf16.gmra.mxu0 %v3469
    %v3987 = vpop.f32.mrf.mxu0
    %v3988 = vadd.f32 %v3450, %v3987
    %v3989 = vpop.f32.mrf.mxu0
    %v3990 = vpop.f32.mrf.mxu0
    %v3991 = vadd.f32 %v3450, %v3990
    %v3992 = vpop.f32.mrf.mxu0
    %3993 = vmatprep.mubr.bf16.mxu0 0
    %3994 = vmatmul.mubr.bf16.gmra.mxu0 %v3472
    %v3995 = vpop.f32.mrf.mxu0
    %v3996 = vadd.f32 %v3450, %v3995
    %v3997 = vpop.f32.mrf.mxu0
    %v3998 = vpop.f32.mrf.mxu0
    %v3999 = vadd.f32 %v3450, %v3998
    %v4000 = vpop.f32.mrf.mxu0
    %4001 = vmatprep.mubr.bf16.mxu0 0
    %4002 = vmatmul.mubr.bf16.gmra.mxu0 %v3475
    %v4003 = vpop.f32.mrf.mxu0
    %v4004 = vadd.f32 %v3450, %v4003
    %v4005 = vpop.f32.mrf.mxu0
    %v4006 = vpop.f32.mrf.mxu0
    %v4007 = vadd.f32 %v3450, %v4006
    %v4008 = vpop.f32.mrf.mxu0
    %4009 = vmatprep.mubr.bf16.mxu0 0
    %4010 = vmatmul.mubr.bf16.gmra.mxu0 %v3478
    %v4011 = vpop.f32.mrf.mxu0
    %v4012 = vadd.f32 %v3450, %v4011
    %v4013 = vpop.f32.mrf.mxu0
    %v4014 = vpop.f32.mrf.mxu0
    %v4015 = vadd.f32 %v3450, %v4014
    %v4016 = vpop.f32.mrf.mxu0
    %4017 = vmatprep.mubr.bf16.mxu0 0
    %4018 = vmatmul.mubr.bf16.gmra.mxu0 %v3481
    %v4019 = vpop.f32.mrf.mxu0
    %v4020 = vadd.f32 %v3450, %v4019
    %v4021 = vpop.f32.mrf.mxu0
    %v4022 = vpop.f32.mrf.mxu0
    %v4023 = vadd.f32 %v3450, %v4022
    %v4024 = vpop.f32.mrf.mxu0
    %4025 = vmatprep.mubr.bf16.mxu0 0
    %4026 = vmatmul.mubr.bf16.gmra.mxu0 %v3484
    %v4027 = vpop.f32.mrf.mxu0
    %v4028 = vadd.f32 %v3450, %v4027
    %v4029 = vpop.f32.mrf.mxu0
    %v4030 = vpop.f32.mrf.mxu0
    %v4031 = vadd.f32 %v3450, %v4030
    %v4032 = vpop.f32.mrf.mxu0
    %4033 = vmatprep.mubr.bf16.mxu0 0
    %4034 = vmatmul.mubr.bf16.gmra.mxu0 %v3487
    %v4035 = vpop.f32.mrf.mxu0
    %v4036 = vadd.f32 %v3450, %v4035
    %v4037 = vpop.f32.mrf.mxu0
    %v4038 = vpop.f32.mrf.mxu0
    %v4039 = vadd.f32 %v3450, %v4038
    %v4040 = vpop.f32.mrf.mxu0
    %4041 = vmatprep.mubr.bf16.mxu0 0
    %4042 = vmatmul.mubr.bf16.gmra.mxu0 %v3490
    %v4043 = vpop.f32.mrf.mxu0
    %v4044 = vadd.f32 %v3450, %v4043
    %v4045 = vpop.f32.mrf.mxu0
    %v4046 = vpop.f32.mrf.mxu0
    %v4047 = vadd.f32 %v3450, %v4046
    %v4048 = vpop.f32.mrf.mxu0
    %4049 = vmatprep.mubr.bf16.mxu0 0
    %4050 = vmatmul.mubr.bf16.gmra.mxu0 %v3493
    %v4051 = vpop.f32.mrf.mxu0
    %v4052 = vadd.f32 %v3450, %v4051
    %v4053 = vpop.f32.mrf.mxu0
    %v4054 = vpop.f32.mrf.mxu0
    %v4055 = vadd.f32 %v3450, %v4054
    %v4056 = vpop.f32.mrf.mxu0
    %4057 = vmatprep.mubr.bf16.mxu0 0
    %4058 = vmatmul.mubr.bf16.gmra.mxu0 %v3496
    %v4059 = vpop.f32.mrf.mxu0
    %v4060 = vadd.f32 %v3450, %v4059
    %v4061 = vpop.f32.mrf.mxu0
    %v4062 = vpop.f32.mrf.mxu0
    %v4063 = vadd.f32 %v3450, %v4062
    %v4064 = vpop.f32.mrf.mxu0
    %4065 = vmatprep.mubr.bf16.mxu0 0
    %4066 = vmatmul.mubr.bf16.gmra.mxu0 %v3499
    %v4067 = vpop.f32.mrf.mxu0
    %v4068 = vadd.f32 %v3450, %v4067
    %v4069 = vpop.f32.mrf.mxu0
    %v4070 = vpop.f32.mrf.mxu0
    %v4071 = vadd.f32 %v3450, %v4070
    %v4072 = vpop.f32.mrf.mxu0
    %4073 = vmatprep.mubr.bf16.mxu0 0
    %4074 = vmatmul.mubr.bf16.gmra.mxu0 %v3502
    %v4075 = vpop.f32.mrf.mxu0
    %v4076 = vadd.f32 %v3450, %v4075
    %v4077 = vpop.f32.mrf.mxu0
    %v4078 = vpop.f32.mrf.mxu0
    %v4079 = vadd.f32 %v3450, %v4078
    %v4080 = vpop.f32.mrf.mxu0
    %4081 = vmatprep.mubr.bf16.mxu0 0
    %4082 = vmatmul.mubr.bf16.gmra.mxu0 %v3505
    %v4083 = vpop.f32.mrf.mxu0
    %v4084 = vadd.f32 %v3450, %v4083
    %v4085 = vpop.f32.mrf.mxu0
    %v4086 = vpop.f32.mrf.mxu0
    %v4087 = vadd.f32 %v3450, %v4086
    %v4088 = vpop.f32.mrf.mxu0
    %4089 = vmatprep.mubr.bf16.mxu0 0
    %4090 = vmatmul.mubr.bf16.gmra.mxu0 %v3508
    %v4091 = vpop.f32.mrf.mxu0
    %v4092 = vadd.f32 %v3450, %v4091
    %v4093 = vpop.f32.mrf.mxu0
    %v4094 = vpop.f32.mrf.mxu0
    %v4095 = vadd.f32 %v3450, %v4094
    %v4096 = vpop.f32.mrf.mxu0
    %4097 = vmatprep.mubr.bf16.mxu0 0
    %4098 = vmatmul.mubr.bf16.gmra.mxu0 %v3511
    %v4099 = vpop.f32.mrf.mxu0
    %v4100 = vadd.f32 %v3450, %v4099
    %v4101 = vpop.f32.mrf.mxu0
    %v4102 = vpop.f32.mrf.mxu0
    %v4103 = vadd.f32 %v3450, %v4102
    %v4104 = vpop.f32.mrf.mxu0
    %4105 = vmatprep.mubr.bf16.mxu0 0
    %4106 = vmatmul.mubr.bf16.gmra.mxu0 %v3514
    %v4107 = vpop.f32.mrf.mxu0
    %v4108 = vadd.f32 %v3450, %v4107
    %v4109 = vpop.f32.mrf.mxu0
    %v4110 = vpop.f32.mrf.mxu0
    %v4111 = vadd.f32 %v3450, %v4110
    %v4112 = vpop.f32.mrf.mxu0
    %4113 = vmatprep.mubr.bf16.mxu0 0
    %4114 = vmatmul.mubr.bf16.gmra.mxu0 %v3517
    %v4115 = vpop.f32.mrf.mxu0
    %v4116 = vadd.f32 %v3450, %v4115
    %v4117 = vpop.f32.mrf.mxu0
    %v4118 = vpop.f32.mrf.mxu0
    %v4119 = vadd.f32 %v3450, %v4118
    %v4120 = vpop.f32.mrf.mxu0
    %4121 = vmatprep.mubr.bf16.mxu0 0
    %4122 = vmatmul.mubr.bf16.gmra.mxu0 %v3520
    %v4123 = vpop.f32.mrf.mxu0
    %v4124 = vadd.f32 %v3450, %v4123
    %v4125 = vpop.f32.mrf.mxu0
    %v4126 = vpop.f32.mrf.mxu0
    %v4127 = vadd.f32 %v3450, %v4126
    %v4128 = vpop.f32.mrf.mxu0
    %4129 = vmatprep.mubr.bf16.mxu0 0
    %4130 = vmatmul.mubr.bf16.gmra.mxu0 %v3523
    %v4131 = vpop.f32.mrf.mxu0
    %v4132 = vadd.f32 %v3450, %v4131
    %v4133 = vpop.f32.mrf.mxu0
    %v4134 = vpop.f32.mrf.mxu0
    %v4135 = vadd.f32 %v3450, %v4134
    %v4136 = vpop.f32.mrf.mxu0
    %4137 = vmatprep.mubr.bf16.mxu0 0
    %4138 = vmatmul.mubr.bf16.gmra.mxu0 %v3526
    %v4139 = vpop.f32.mrf.mxu0
    %v4140 = vadd.f32 %v3450, %v4139
    %v4141 = vpop.f32.mrf.mxu0
    %v4142 = vpop.f32.mrf.mxu0
    %v4143 = vadd.f32 %v3450, %v4142
    %v4144 = vpop.f32.mrf.mxu0
    %4145 = vmatprep.mubr.bf16.mxu0 0
    %4146 = vmatmul.mubr.bf16.gmra.mxu0 %v3529
    %v4147 = vpop.f32.mrf.mxu0
    %v4148 = vadd.f32 %v3450, %v4147
    %v4149 = vpop.f32.mrf.mxu0
    %v4150 = vpop.f32.mrf.mxu0
    %v4151 = vadd.f32 %v3450, %v4150
    %v4152 = vpop.f32.mrf.mxu0
    %4153 = vmatprep.mubr.bf16.mxu0 0
    %4154 = vmatmul.mubr.bf16.gmra.mxu0 %v3532
    %v4155 = vpop.f32.mrf.mxu0
    %v4156 = vadd.f32 %v3450, %v4155
    %v4157 = vpop.f32.mrf.mxu0
    %v4158 = vpop.f32.mrf.mxu0
    %v4159 = vadd.f32 %v3450, %v4158
    %v4160 = vpop.f32.mrf.mxu0
    %4161 = vmatprep.mubr.bf16.mxu0 0
    %4162 = vmatmul.mubr.bf16.gmra.mxu0 %v3535
    %v4163 = vpop.f32.mrf.mxu0
    %v4164 = vadd.f32 %v3450, %v4163
    %v4165 = vpop.f32.mrf.mxu0
    %v4166 = vpop.f32.mrf.mxu0
    %v4167 = vadd.f32 %v3450, %v4166
    %v4168 = vpop.f32.mrf.mxu0
    %4169 = vmatprep.mubr.bf16.mxu0 0
    %4170 = vmatmul.mubr.bf16.gmra.mxu0 %v3538
    %v4171 = vpop.f32.mrf.mxu0
    %v4172 = vadd.f32 %v3450, %v4171
    %v4173 = vpop.f32.mrf.mxu0
    %v4174 = vpop.f32.mrf.mxu0
    %v4175 = vadd.f32 %v3450, %v4174
    %v4176 = vpop.f32.mrf.mxu0
    %4177 = vmatprep.mubr.bf16.mxu0 0
    %4178 = vmatmul.mubr.bf16.gmra.mxu0 %v3541
    %v4179 = vpop.f32.mrf.mxu0
    %v4180 = vadd.f32 %v3450, %v4179
    %v4181 = vpop.f32.mrf.mxu0
    %v4182 = vpop.f32.mrf.mxu0
    %v4183 = vadd.f32 %v3450, %v4182
    %v4184 = vpop.f32.mrf.mxu0
    %4185 = vmatprep.mubr.bf16.mxu0 0
    %4186 = vmatmul.mubr.bf16.gmra.mxu0 %v3544
    %v4187 = vpop.f32.mrf.mxu0
    %v4188 = vadd.f32 %v3450, %v4187
    %v4189 = vpop.f32.mrf.mxu0
    %v4190 = vpop.f32.mrf.mxu0
    %v4191 = vadd.f32 %v3450, %v4190
    %v4192 = vpop.f32.mrf.mxu0
    %4193 = vmatprep.mubr.bf16.mxu0 0
    %4194 = vmatmul.mubr.bf16.gmra.mxu0 %v3547
    %v4195 = vpop.f32.mrf.mxu0
    %v4196 = vadd.f32 %v3450, %v4195
    %v4197 = vpop.f32.mrf.mxu0
    %v4198 = vpop.f32.mrf.mxu0
    %v4199 = vadd.f32 %v3450, %v4198
    %v4200 = vpop.f32.mrf.mxu0
    %4201 = vmatprep.mubr.bf16.mxu0 0
    %4202 = vmatmul.mubr.bf16.gmra.mxu0 %v3550
    %v4203 = vpop.f32.mrf.mxu0
    %v4204 = vadd.f32 %v3450, %v4203
    %v4205 = vpop.f32.mrf.mxu0
    %v4206 = vpop.f32.mrf.mxu0
    %v4207 = vadd.f32 %v3450, %v4206
    %v4208 = vpop.f32.mrf.mxu0
    %4209 = vmatprep.mubr.bf16.mxu0 0
    %4210 = vmatmul.mubr.bf16.gmra.mxu0 %v3553
    %v4211 = vpop.f32.mrf.mxu0
    %v4212 = vadd.f32 %v3450, %v4211
    %v4213 = vpop.f32.mrf.mxu0
    %v4214 = vpop.f32.mrf.mxu0
    %v4215 = vadd.f32 %v3450, %v4214
    %v4216 = vpop.f32.mrf.mxu0
    %4217 = vmatprep.mubr.bf16.mxu0 0
    %4218 = vmatmul.mubr.bf16.gmra.mxu0 %v3556
    %v4219 = vpop.f32.mrf.mxu0
    %v4220 = vadd.f32 %v3450, %v4219
    %v4221 = vpop.f32.mrf.mxu0
    %v4222 = vpop.f32.mrf.mxu0
    %v4223 = vadd.f32 %v3450, %v4222
    %v4224 = vpop.f32.mrf.mxu0
    %4225 = vmatprep.mubr.bf16.mxu0 0
    %4226 = vmatmul.mubr.bf16.gmra.mxu0 %v3559
    %v4227 = vpop.f32.mrf.mxu0
    %v4228 = vadd.f32 %v3450, %v4227
    %v4229 = vpop.f32.mrf.mxu0
    %v4230 = vpop.f32.mrf.mxu0
    %v4231 = vadd.f32 %v3450, %v4230
    %v4232 = vpop.f32.mrf.mxu0
    %4233 = vmatprep.mubr.bf16.mxu0 0
    %4234 = vmatmul.mubr.bf16.gmra.mxu0 %v3562
    %v4235 = vpop.f32.mrf.mxu0
    %v4236 = vadd.f32 %v3450, %v4235
    %v4237 = vpop.f32.mrf.mxu0
    %v4238 = vpop.f32.mrf.mxu0
    %v4239 = vadd.f32 %v3450, %v4238
    %v4240 = vpop.f32.mrf.mxu0
    %4241 = vmatprep.mubr.bf16.mxu0 0
    %4242 = vmatmul.mubr.bf16.gmra.mxu0 %v3565
    %v4243 = vpop.f32.mrf.mxu0
    %v4244 = vadd.f32 %v3450, %v4243
    %v4245 = vpop.f32.mrf.mxu0
    %v4246 = vpop.f32.mrf.mxu0
    %v4247 = vadd.f32 %v3450, %v4246
    %v4248 = vpop.f32.mrf.mxu0
    %4249 = vmatprep.mubr.bf16.mxu0 0
    %4250 = vmatmul.mubr.bf16.gmra.mxu0 %v3568
    %v4251 = vpop.f32.mrf.mxu0
    %v4252 = vadd.f32 %v3450, %v4251
    %v4253 = vpop.f32.mrf.mxu0
    %v4254 = vpop.f32.mrf.mxu0
    %v4255 = vadd.f32 %v3450, %v4254
    %v4256 = vpop.f32.mrf.mxu0
    %4257 = vmatprep.mubr.bf16.mxu0 0
    %4258 = vmatmul.mubr.bf16.gmra.mxu0 %v3571
    %v4259 = vpop.f32.mrf.mxu0
    %v4260 = vadd.f32 %v3450, %v4259
    %v4261 = vpop.f32.mrf.mxu0
    %v4262 = vpop.f32.mrf.mxu0
    %v4263 = vadd.f32 %v3450, %v4262
    %v4264 = vpop.f32.mrf.mxu0
    %4265 = vmatprep.mubr.bf16.mxu0 0
    %4266 = vmatmul.mubr.bf16.gmra.mxu0 %v3574
    %v4267 = vpop.f32.mrf.mxu0
    %v4268 = vadd.f32 %v3450, %v4267
    %v4269 = vpop.f32.mrf.mxu0
    %v4270 = vpop.f32.mrf.mxu0
    %v4271 = vadd.f32 %v3450, %v4270
    %v4272 = vpop.f32.mrf.mxu0
    %4273 = vmatprep.mubr.bf16.mxu0 0
    %4274 = vmatmul.mubr.bf16.gmra.mxu0 %v3577
    %v4275 = vpop.f32.mrf.mxu0
    %v4276 = vadd.f32 %v3450, %v4275
    %v4277 = vpop.f32.mrf.mxu0
    %v4278 = vpop.f32.mrf.mxu0
    %v4279 = vadd.f32 %v3450, %v4278
    %v4280 = vpop.f32.mrf.mxu0
    %4281 = vmatprep.mubr.bf16.mxu0 0
    %4282 = vmatmul.mubr.bf16.gmra.mxu0 %v3580
    %v4283 = vpop.f32.mrf.mxu0
    %v4284 = vadd.f32 %v3450, %v4283
    %v4285 = vpop.f32.mrf.mxu0
    %v4286 = vpop.f32.mrf.mxu0
    %v4287 = vadd.f32 %v3450, %v4286
    %v4288 = vpop.f32.mrf.mxu0
    %4289 = vmatprep.mubr.bf16.mxu0 0
    %4290 = vmatmul.mubr.bf16.gmra.mxu0 %v3583
    %v4291 = vpop.f32.mrf.mxu0
    %v4292 = vadd.f32 %v3450, %v4291
    %v4293 = vpop.f32.mrf.mxu0
    %v4294 = vpop.f32.mrf.mxu0
    %v4295 = vadd.f32 %v3450, %v4294
    %v4296 = vpop.f32.mrf.mxu0
    %4297 = vmatprep.mubr.bf16.mxu0 0
    %4298 = vmatmul.mubr.bf16.gmra.mxu0 %v3586
    %v4299 = vpop.f32.mrf.mxu0
    %v4300 = vadd.f32 %v3450, %v4299
    %v4301 = vpop.f32.mrf.mxu0
    %v4302 = vpop.f32.mrf.mxu0
    %v4303 = vadd.f32 %v3450, %v4302
    %v4304 = vpop.f32.mrf.mxu0
    %4305 = vmatprep.mubr.bf16.mxu0 0
    %4306 = vmatmul.mubr.bf16.gmra.mxu0 %v3589
    %v4307 = vpop.f32.mrf.mxu0
    %v4308 = vadd.f32 %v3450, %v4307
    %v4309 = vpop.f32.mrf.mxu0
    %v4310 = vpop.f32.mrf.mxu0
    %v4311 = vadd.f32 %v3450, %v4310
    %v4312 = vpop.f32.mrf.mxu0
    %4313 = vmatprep.mubr.bf16.mxu0 0
    %4314 = vmatmul.mubr.bf16.gmra.mxu0 %v3592
    %v4315 = vpop.f32.mrf.mxu0
    %v4316 = vadd.f32 %v3450, %v4315
    %v4317 = vpop.f32.mrf.mxu0
    %v4318 = vpop.f32.mrf.mxu0
    %v4319 = vadd.f32 %v3450, %v4318
    %v4320 = vpop.f32.mrf.mxu0
    %4321 = vmatprep.mubr.bf16.mxu0 0
    %4322 = vmatmul.mubr.bf16.gmra.mxu0 %v3595
    %v4323 = vpop.f32.mrf.mxu0
    %v4324 = vadd.f32 %v3450, %v4323
    %v4325 = vpop.f32.mrf.mxu0
    %v4326 = vpop.f32.mrf.mxu0
    %v4327 = vadd.f32 %v3450, %v4326
    %v4328 = vpop.f32.mrf.mxu0
    %4329 = vmatprep.mubr.bf16.mxu0 0
    %4330 = vmatmul.mubr.bf16.gmra.mxu0 %v3598
    %v4331 = vpop.f32.mrf.mxu0
    %v4332 = vadd.f32 %v3450, %v4331
    %v4333 = vpop.f32.mrf.mxu0
    %v4334 = vpop.f32.mrf.mxu0
    %v4335 = vadd.f32 %v3450, %v4334
    %v4336 = vpop.f32.mrf.mxu0
    %4337 = vmatprep.mubr.bf16.mxu0 0
    %4338 = vmatmul.mubr.bf16.gmra.mxu0 %v3601
    %v4339 = vpop.f32.mrf.mxu0
    %v4340 = vadd.f32 %v3450, %v4339
    %v4341 = vpop.f32.mrf.mxu0
    %v4342 = vpop.f32.mrf.mxu0
    %v4343 = vadd.f32 %v3450, %v4342
    %v4344 = vpop.f32.mrf.mxu0
    %4345 = vmatprep.mubr.bf16.mxu0 0
    %4346 = vmatmul.mubr.bf16.gmra.mxu0 %v3604
    %v4347 = vpop.f32.mrf.mxu0
    %v4348 = vadd.f32 %v3450, %v4347
    %v4349 = vpop.f32.mrf.mxu0
    %v4350 = vpop.f32.mrf.mxu0
    %v4351 = vadd.f32 %v3450, %v4350
    %v4352 = vpop.f32.mrf.mxu0
    %4353 = vmatprep.mubr.bf16.mxu0 0
    %4354 = vmatmul.mubr.bf16.gmra.mxu0 %v3607
    %v4355 = vpop.f32.mrf.mxu0
    %v4356 = vadd.f32 %v3450, %v4355
    %v4357 = vpop.f32.mrf.mxu0
    %v4358 = vpop.f32.mrf.mxu0
    %v4359 = vadd.f32 %v3450, %v4358
    %v4360 = vpop.f32.mrf.mxu0
    %4361 = vmatprep.mubr.bf16.mxu0 0
    %4362 = vmatmul.mubr.bf16.gmra.mxu0 %v3610
    %v4363 = vpop.f32.mrf.mxu0
    %v4364 = vadd.f32 %v3450, %v4363
    %v4365 = vpop.f32.mrf.mxu0
    %v4366 = vpop.f32.mrf.mxu0
    %v4367 = vadd.f32 %v3450, %v4366
    %v4368 = vpop.f32.mrf.mxu0
    %4369 = vmatprep.mubr.bf16.mxu0 0
    %4370 = vmatmul.mubr.bf16.gmra.mxu0 %v3613
    %v4371 = vpop.f32.mrf.mxu0
    %v4372 = vadd.f32 %v3450, %v4371
    %v4373 = vpop.f32.mrf.mxu0
    %v4374 = vpop.f32.mrf.mxu0
    %v4375 = vadd.f32 %v3450, %v4374
    %v4376 = vpop.f32.mrf.mxu0
    %4377 = vmatprep.mubr.bf16.mxu0 0
    %4378 = vmatmul.mubr.bf16.gmra.mxu0 %v3616
    %v4379 = vpop.f32.mrf.mxu0
    %v4380 = vadd.f32 %v3450, %v4379
    %v4381 = vpop.f32.mrf.mxu0
    %v4382 = vpop.f32.mrf.mxu0
    %v4383 = vadd.f32 %v3450, %v4382
    %v4384 = vpop.f32.mrf.mxu0
    %4385 = vmatprep.mubr.bf16.mxu0 0
    %4386 = vmatmul.mubr.bf16.gmra.mxu0 %v3619
    %v4387 = vpop.f32.mrf.mxu0
    %v4388 = vadd.f32 %v3450, %v4387
    %v4389 = vpop.f32.mrf.mxu0
    %v4390 = vpop.f32.mrf.mxu0
    %v4391 = vadd.f32 %v3450, %v4390
    %v4392 = vpop.f32.mrf.mxu0
    %4393 = vmatprep.mubr.bf16.mxu0 0
    %4394 = vmatmul.mubr.bf16.gmra.mxu0 %v3622
    %v4395 = vpop.f32.mrf.mxu0
    %v4396 = vadd.f32 %v3450, %v4395
    %v4397 = vpop.f32.mrf.mxu0
    %v4398 = vpop.f32.mrf.mxu0
    %v4399 = vadd.f32 %v3450, %v4398
    %v4400 = vpop.f32.mrf.mxu0
    %4401 = vmatprep.mubr.bf16.mxu0 0
    %4402 = vmatmul.mubr.bf16.gmra.mxu0 %v3625
    %v4403 = vpop.f32.mrf.mxu0
    %v4404 = vadd.f32 %v3450, %v4403
    %v4405 = vpop.f32.mrf.mxu0
    %v4406 = vpop.f32.mrf.mxu0
    %v4407 = vadd.f32 %v3450, %v4406
    %v4408 = vpop.f32.mrf.mxu0
    %4409 = vmatprep.mubr.bf16.mxu0 0
    %4410 = vmatmul.mubr.bf16.gmra.mxu0 %v3628
    %v4411 = vpop.f32.mrf.mxu0
    %v4412 = vadd.f32 %v3450, %v4411
    %v4413 = vpop.f32.mrf.mxu0
    %v4414 = vpop.f32.mrf.mxu0
    %v4415 = vadd.f32 %v3450, %v4414
    %v4416 = vpop.f32.mrf.mxu0
    %4417 = vmatprep.mubr.bf16.mxu0 0
    %4418 = vmatmul.mubr.bf16.gmra.mxu0 %v3631
    %v4419 = vpop.f32.mrf.mxu0
    %v4420 = vadd.f32 %v3450, %v4419
    %v4421 = vpop.f32.mrf.mxu0
    %v4422 = vpop.f32.mrf.mxu0
    %v4423 = vadd.f32 %v3450, %v4422
    %v4424 = vpop.f32.mrf.mxu0
    %4425 = vmatprep.mubr.bf16.mxu0 0
    %4426 = vmatmul.mubr.bf16.gmra.mxu0 %v3634
    %v4427 = vpop.f32.mrf.mxu0
    %v4428 = vadd.f32 %v3450, %v4427
    %v4429 = vpop.f32.mrf.mxu0
    %v4430 = vpop.f32.mrf.mxu0
    %v4431 = vadd.f32 %v3450, %v4430
    %v4432 = vpop.f32.mrf.mxu0
    %4433 = vmatprep.mubr.bf16.mxu0 0
    %4434 = vmatmul.mubr.bf16.gmra.mxu0 %v3637
    %v4435 = vpop.f32.mrf.mxu0
    %v4436 = vadd.f32 %v3450, %v4435
    %v4437 = vpop.f32.mrf.mxu0
    %v4438 = vpop.f32.mrf.mxu0
    %v4439 = vadd.f32 %v3450, %v4438
    %v4440 = vpop.f32.mrf.mxu0
    %4441 = vmatprep.mubr.bf16.mxu0 0
    %4442 = vmatmul.mubr.bf16.gmra.mxu0 %v3640
    %v4443 = vpop.f32.mrf.mxu0
    %v4444 = vadd.f32 %v3450, %v4443
    %v4445 = vpop.f32.mrf.mxu0
    %v4446 = vpop.f32.mrf.mxu0
    %v4447 = vadd.f32 %v3450, %v4446
    %v4448 = vpop.f32.mrf.mxu0
    %4449 = vmatprep.mubr.bf16.mxu0 0
    %4450 = vmatmul.mubr.bf16.gmra.mxu0 %v3643
    %v4451 = vpop.f32.mrf.mxu0
    %v4452 = vadd.f32 %v3450, %v4451
    %v4453 = vpop.f32.mrf.mxu0
    %v4454 = vpop.f32.mrf.mxu0
    %v4455 = vadd.f32 %v3450, %v4454
    %v4456 = vpop.f32.mrf.mxu0
    %4457 = vmatprep.mubr.bf16.mxu0 0
    %4458 = vmatmul.mubr.bf16.gmra.mxu0 %v3646
    %v4459 = vpop.f32.mrf.mxu0
    %v4460 = vadd.f32 %v3450, %v4459
    %v4461 = vpop.f32.mrf.mxu0
    %v4462 = vpop.f32.mrf.mxu0
    %v4463 = vadd.f32 %v3450, %v4462
    %v4464 = vpop.f32.mrf.mxu0
    %4465 = vmatprep.mubr.bf16.mxu0 0
    %4466 = vmatmul.mubr.bf16.gmra.mxu0 %v3649
    %v4467 = vpop.f32.mrf.mxu0
    %v4468 = vadd.f32 %v3450, %v4467
    %v4469 = vpop.f32.mrf.mxu0
    %v4470 = vpop.f32.mrf.mxu0
    %v4471 = vadd.f32 %v3450, %v4470
    %v4472 = vpop.f32.mrf.mxu0
    %4473 = vmatprep.mubr.bf16.mxu0 0
    %4474 = vmatmul.mubr.bf16.gmra.mxu0 %v3652
    %v4475 = vpop.f32.mrf.mxu0
    %v4476 = vadd.f32 %v3450, %v4475
    %v4477 = vpop.f32.mrf.mxu0
    %v4478 = vpop.f32.mrf.mxu0
    %v4479 = vadd.f32 %v3450, %v4478
    %v4480 = vpop.f32.mrf.mxu0
    %4481 = vmatprep.mubr.bf16.mxu0 0
    %4482 = vmatmul.mubr.bf16.gmra.mxu0 %v3655
    %v4483 = vpop.f32.mrf.mxu0
    %v4484 = vadd.f32 %v3450, %v4483
    %v4485 = vpop.f32.mrf.mxu0
    %v4486 = vpop.f32.mrf.mxu0
    %v4487 = vadd.f32 %v3450, %v4486
    %v4488 = vpop.f32.mrf.mxu0
    %4489 = vmatprep.mubr.bf16.mxu0 0
    %4490 = vmatmul.mubr.bf16.gmra.mxu0 %v3658
    %v4491 = vpop.f32.mrf.mxu0
    %v4492 = vadd.f32 %v3450, %v4491
    %v4493 = vpop.f32.mrf.mxu0
    %v4494 = vpop.f32.mrf.mxu0
    %v4495 = vadd.f32 %v3450, %v4494
    %v4496 = vpop.f32.mrf.mxu0
    %4497 = vmatprep.mubr.bf16.mxu0 0
    %4498 = vmatmul.mubr.bf16.gmra.mxu0 %v3661
    %v4499 = vpop.f32.mrf.mxu0
    %v4500 = vadd.f32 %v3450, %v4499
    %v4501 = vpop.f32.mrf.mxu0
    %v4502 = vpop.f32.mrf.mxu0
    %v4503 = vadd.f32 %v3450, %v4502
    %v4504 = vpop.f32.mrf.mxu0
    %4505 = vmatprep.mubr.bf16.mxu0 0
    %4506 = vmatmul.mubr.bf16.gmra.mxu0 %v3664
    %v4507 = vpop.f32.mrf.mxu0
    %v4508 = vadd.f32 %v3450, %v4507
    %v4509 = vpop.f32.mrf.mxu0
    %v4510 = vpop.f32.mrf.mxu0
    %v4511 = vadd.f32 %v3450, %v4510
    %v4512 = vpop.f32.mrf.mxu0
    %4513 = vmatprep.mubr.bf16.mxu0 0
    %4514 = vmatmul.mubr.bf16.gmra.mxu0 %v3667
    %v4515 = vpop.f32.mrf.mxu0
    %v4516 = vadd.f32 %v3450, %v4515
    %v4517 = vpop.f32.mrf.mxu0
    %v4518 = vpop.f32.mrf.mxu0
    %v4519 = vadd.f32 %v3450, %v4518
    %v4520 = vpop.f32.mrf.mxu0
    %4521 = vmatprep.mubr.bf16.mxu0 0
    %4522 = vmatmul.mubr.bf16.gmra.mxu0 %v3670
    %v4523 = vpop.f32.mrf.mxu0
    %v4524 = vadd.f32 %v3450, %v4523
    %v4525 = vpop.f32.mrf.mxu0
    %v4526 = vpop.f32.mrf.mxu0
    %v4527 = vadd.f32 %v3450, %v4526
    %v4528 = vpop.f32.mrf.mxu0
    %4529 = vmatprep.mubr.bf16.mxu0 0
    %4530 = vmatmul.mubr.bf16.gmra.mxu0 %v3673
    %v4531 = vpop.f32.mrf.mxu0
    %v4532 = vadd.f32 %v3450, %v4531
    %v4533 = vpop.f32.mrf.mxu0
    %v4534 = vpop.f32.mrf.mxu0
    %v4535 = vadd.f32 %v3450, %v4534
    %v4536 = vpop.f32.mrf.mxu0
    %4537 = vmatprep.mubr.bf16.mxu0 0
    %4538 = vmatmul.mubr.bf16.gmra.mxu0 %v3676
    %v4539 = vpop.f32.mrf.mxu0
    %v4540 = vadd.f32 %v3450, %v4539
    %v4541 = vpop.f32.mrf.mxu0
    %v4542 = vpop.f32.mrf.mxu0
    %v4543 = vadd.f32 %v3450, %v4542
    %v4544 = vpop.f32.mrf.mxu0
    %4545 = vmatprep.mubr.bf16.mxu0 0
    %4546 = vmatmul.mubr.bf16.gmra.mxu0 %v3679
    %v4547 = vpop.f32.mrf.mxu0
    %v4548 = vadd.f32 %v3450, %v4547
    %v4549 = vpop.f32.mrf.mxu0
    %v4550 = vpop.f32.mrf.mxu0
    %v4551 = vadd.f32 %v3450, %v4550
    %v4552 = vpop.f32.mrf.mxu0
    %4553 = vmatprep.mubr.bf16.mxu0 0
    %4554 = vmatmul.mubr.bf16.gmra.mxu0 %v3682
    %v4555 = vpop.f32.mrf.mxu0
    %v4556 = vadd.f32 %v3450, %v4555
    %v4557 = vpop.f32.mrf.mxu0
    %v4558 = vpop.f32.mrf.mxu0
    %v4559 = vadd.f32 %v3450, %v4558
    %v4560 = vpop.f32.mrf.mxu0
    %4561 = vmatprep.mubr.bf16.mxu0 0
    %4562 = vmatmul.mubr.bf16.gmra.mxu0 %v3685
    %v4563 = vpop.f32.mrf.mxu0
    %v4564 = vadd.f32 %v3450, %v4563
    %v4565 = vpop.f32.mrf.mxu0
    %v4566 = vpop.f32.mrf.mxu0
    %v4567 = vadd.f32 %v3450, %v4566
    %v4568 = vpop.f32.mrf.mxu0
    %4569 = vmatprep.mubr.bf16.mxu0 0
    %4570 = vmatmul.mubr.bf16.gmra.mxu0 %v3688
    %v4571 = vpop.f32.mrf.mxu0
    %v4572 = vadd.f32 %v3450, %v4571
    %v4573 = vpop.f32.mrf.mxu0
    %v4574 = vpop.f32.mrf.mxu0
    %v4575 = vadd.f32 %v3450, %v4574
    %v4576 = vpop.f32.mrf.mxu0
    %4577 = vmatprep.mubr.bf16.mxu0 0
    %4578 = vmatmul.mubr.bf16.gmra.mxu0 %v3691
    %v4579 = vpop.f32.mrf.mxu0
    %v4580 = vadd.f32 %v3450, %v4579
    %v4581 = vpop.f32.mrf.mxu0
    %v4582 = vpop.f32.mrf.mxu0
    %v4583 = vadd.f32 %v3450, %v4582
    %v4584 = vpop.f32.mrf.mxu0
    %4585 = vmatprep.mubr.bf16.mxu0 0
    %4586 = vmatmul.mubr.bf16.gmra.mxu0 %v3694
    %v4587 = vpop.f32.mrf.mxu0
    %v4588 = vadd.f32 %v3450, %v4587
    %v4589 = vpop.f32.mrf.mxu0
    %v4590 = vpop.f32.mrf.mxu0
    %v4591 = vadd.f32 %v3450, %v4590
    %v4592 = vpop.f32.mrf.mxu0
    %4593 = vmatprep.mubr.bf16.mxu0 0
    %4594 = vmatmul.mubr.bf16.gmra.mxu0 %v3697
    %v4595 = vpop.f32.mrf.mxu0
    %v4596 = vadd.f32 %v3450, %v4595
    %v4597 = vpop.f32.mrf.mxu0
    %v4598 = vpop.f32.mrf.mxu0
    %v4599 = vadd.f32 %v3450, %v4598
    %v4600 = vpop.f32.mrf.mxu0
    %4601 = vmatprep.mubr.bf16.mxu0 0
    %4602 = vmatmul.mubr.bf16.gmra.mxu0 %v3700
    %v4603 = vpop.f32.mrf.mxu0
    %v4604 = vadd.f32 %v3450, %v4603
    %v4605 = vpop.f32.mrf.mxu0
    %v4606 = vpop.f32.mrf.mxu0
    %v4607 = vadd.f32 %v3450, %v4606
    %v4608 = vpop.f32.mrf.mxu0
    %4609 = vmatprep.mubr.bf16.mxu0 0
    %4610 = vmatmul.mubr.bf16.gmra.mxu0 %v3703
    %v4611 = vpop.f32.mrf.mxu0
    %v4612 = vadd.f32 %v3450, %v4611
    %v4613 = vpop.f32.mrf.mxu0
    %v4614 = vpop.f32.mrf.mxu0
    %v4615 = vadd.f32 %v3450, %v4614
    %v4616 = vpop.f32.mrf.mxu0
    %4617 = vmatprep.mubr.bf16.mxu0 0
    %4618 = vmatmul.mubr.bf16.gmra.mxu0 %v3706
    %v4619 = vpop.f32.mrf.mxu0
    %v4620 = vadd.f32 %v3450, %v4619
    %v4621 = vpop.f32.mrf.mxu0
    %v4622 = vpop.f32.mrf.mxu0
    %v4623 = vadd.f32 %v3450, %v4622
    %v4624 = vpop.f32.mrf.mxu0
    %4625 = vmatprep.mubr.bf16.mxu0 0
    %4626 = vmatmul.mubr.bf16.gmra.mxu0 %v3709
    %v4627 = vpop.f32.mrf.mxu0
    %v4628 = vadd.f32 %v3450, %v4627
    %v4629 = vpop.f32.mrf.mxu0
    %v4630 = vpop.f32.mrf.mxu0
    %v4631 = vadd.f32 %v3450, %v4630
    %v4632 = vpop.f32.mrf.mxu0
    %4633 = vmatprep.mubr.bf16.mxu0 0
    %4634 = vmatmul.mubr.bf16.gmra.mxu0 %v3712
    %v4635 = vpop.f32.mrf.mxu0
    %v4636 = vadd.f32 %v3450, %v4635
    %v4637 = vpop.f32.mrf.mxu0
    %v4638 = vpop.f32.mrf.mxu0
    %v4639 = vadd.f32 %v3450, %v4638
    %v4640 = vpop.f32.mrf.mxu0
    %4641 = vmatprep.mubr.bf16.mxu0 0
    %4642 = vmatmul.mubr.bf16.gmra.mxu0 %v3715
    %v4643 = vpop.f32.mrf.mxu0
    %v4644 = vadd.f32 %v3450, %v4643
    %v4645 = vpop.f32.mrf.mxu0
    %v4646 = vpop.f32.mrf.mxu0
    %v4647 = vadd.f32 %v3450, %v4646
    %v4648 = vpop.f32.mrf.mxu0
    %4649 = vmatprep.mubr.bf16.mxu0 0
    %4650 = vmatmul.mubr.bf16.gmra.mxu0 %v3718
    %v4651 = vpop.f32.mrf.mxu0
    %v4652 = vadd.f32 %v3450, %v4651
    %v4653 = vpop.f32.mrf.mxu0
    %v4654 = vpop.f32.mrf.mxu0
    %v4655 = vadd.f32 %v3450, %v4654
    %v4656 = vpop.f32.mrf.mxu0
    %4657 = vmatprep.mubr.bf16.mxu0 0
    %4658 = vmatmul.mubr.bf16.gmra.mxu0 %v3721
    %v4659 = vpop.f32.mrf.mxu0
    %v4660 = vadd.f32 %v3450, %v4659
    %v4661 = vpop.f32.mrf.mxu0
    %v4662 = vpop.f32.mrf.mxu0
    %v4663 = vadd.f32 %v3450, %v4662
    %v4664 = vpop.f32.mrf.mxu0
    %4665 = vmatprep.mubr.bf16.mxu0 0
    %4666 = vmatmul.mubr.bf16.gmra.mxu0 %v3724
    %v4667 = vpop.f32.mrf.mxu0
    %v4668 = vadd.f32 %v3450, %v4667
    %v4669 = vpop.f32.mrf.mxu0
    %v4670 = vpop.f32.mrf.mxu0
    %v4671 = vadd.f32 %v3450, %v4670
    %v4672 = vpop.f32.mrf.mxu0
    %4673 = vmatprep.mubr.bf16.mxu0 0
    %4674 = vmatmul.mubr.bf16.gmra.mxu0 %v3727
    %v4675 = vpop.f32.mrf.mxu0
    %v4676 = vadd.f32 %v3450, %v4675
    %v4677 = vpop.f32.mrf.mxu0
    %v4678 = vpop.f32.mrf.mxu0
    %v4679 = vadd.f32 %v3450, %v4678
    %v4680 = vpop.f32.mrf.mxu0
    %4681 = vmatprep.mubr.bf16.mxu0 0
    %4682 = vmatmul.mubr.bf16.gmra.mxu0 %v3730
    %v4683 = vpop.f32.mrf.mxu0
    %v4684 = vadd.f32 %v3450, %v4683
    %v4685 = vpop.f32.mrf.mxu0
    %v4686 = vpop.f32.mrf.mxu0
    %v4687 = vadd.f32 %v3450, %v4686
    %v4688 = vpop.f32.mrf.mxu0
    %4689 = vmatprep.mubr.bf16.mxu0 0
    %4690 = vmatmul.mubr.bf16.gmra.mxu0 %v3733
    %v4691 = vpop.f32.mrf.mxu0
    %v4692 = vadd.f32 %v3450, %v4691
    %v4693 = vpop.f32.mrf.mxu0
    %v4694 = vpop.f32.mrf.mxu0
    %v4695 = vadd.f32 %v3450, %v4694
    %v4696 = vpop.f32.mrf.mxu0
    %4697 = vmatprep.mubr.bf16.mxu0 0
    %4698 = vmatmul.mubr.bf16.gmra.mxu0 %v3736
    %v4699 = vpop.f32.mrf.mxu0
    %v4700 = vadd.f32 %v3450, %v4699
    %v4701 = vpop.f32.mrf.mxu0
    %v4702 = vpop.f32.mrf.mxu0
    %v4703 = vadd.f32 %v3450, %v4702
    %v4704 = vpop.f32.mrf.mxu0
    %4705 = vmatprep.mubr.bf16.mxu0 0
    %4706 = vmatmul.mubr.bf16.gmra.mxu0 %v3739
    %v4707 = vpop.f32.mrf.mxu0
    %v4708 = vadd.f32 %v3450, %v4707
    %v4709 = vpop.f32.mrf.mxu0
    %v4710 = vpop.f32.mrf.mxu0
    %v4711 = vadd.f32 %v3450, %v4710
    %v4712 = vpop.f32.mrf.mxu0
    %4713 = vmatprep.mubr.bf16.mxu0 0
    %4714 = vmatmul.mubr.bf16.gmra.mxu0 %v3742
    %v4715 = vpop.f32.mrf.mxu0
    %v4716 = vadd.f32 %v3450, %v4715
    %v4717 = vpop.f32.mrf.mxu0
    %v4718 = vpop.f32.mrf.mxu0
    %v4719 = vadd.f32 %v3450, %v4718
    %v4720 = vpop.f32.mrf.mxu0
    %4721 = vmatprep.mubr.bf16.mxu0 0
    %4722 = vmatmul.mubr.bf16.gmra.mxu0 %v3745
    %v4723 = vpop.f32.mrf.mxu0
    %v4724 = vadd.f32 %v3450, %v4723
    %v4725 = vpop.f32.mrf.mxu0
    %v4726 = vpop.f32.mrf.mxu0
    %v4727 = vadd.f32 %v3450, %v4726
    %v4728 = vpop.f32.mrf.mxu0
    %4729 = vmatprep.mubr.bf16.mxu0 0
    %4730 = vmatmul.mubr.bf16.gmra.mxu0 %v3748
    %v4731 = vpop.f32.mrf.mxu0
    %v4732 = vadd.f32 %v3450, %v4731
    %v4733 = vpop.f32.mrf.mxu0
    %v4734 = vpop.f32.mrf.mxu0
    %v4735 = vadd.f32 %v3450, %v4734
    %v4736 = vpop.f32.mrf.mxu0
    %4737 = vmatprep.mubr.bf16.mxu0 0
    %4738 = vmatmul.mubr.bf16.gmra.mxu0 %v3751
    %v4739 = vpop.f32.mrf.mxu0
    %v4740 = vadd.f32 %v3450, %v4739
    %v4741 = vpop.f32.mrf.mxu0
    %v4742 = vpop.f32.mrf.mxu0
    %v4743 = vadd.f32 %v3450, %v4742
    %v4744 = vpop.f32.mrf.mxu0
    %4745 = vmatprep.mubr.bf16.mxu0 0
    %4746 = vmatmul.mubr.bf16.gmra.mxu0 %v3754
    %v4747 = vpop.f32.mrf.mxu0
    %v4748 = vadd.f32 %v3450, %v4747
    %v4749 = vpop.f32.mrf.mxu0
    %v4750 = vpop.f32.mrf.mxu0
    %v4751 = vadd.f32 %v3450, %v4750
    %v4752 = vpop.f32.mrf.mxu0
    %4753 = vmatprep.mubr.bf16.mxu0 0
    %4754 = vmatmul.mubr.bf16.gmra.mxu0 %v3757
    %v4755 = vpop.f32.mrf.mxu0
    %v4756 = vadd.f32 %v3450, %v4755
    %v4757 = vpop.f32.mrf.mxu0
    %v4758 = vpop.f32.mrf.mxu0
    %v4759 = vadd.f32 %v3450, %v4758
    %v4760 = vpop.f32.mrf.mxu0
    %4761 = vmatprep.mubr.bf16.mxu0 0
    %4762 = vmatmul.mubr.bf16.gmra.mxu0 %v3760
    %v4763 = vpop.f32.mrf.mxu0
    %v4764 = vadd.f32 %v3450, %v4763
    %v4765 = vpop.f32.mrf.mxu0
    %v4766 = vpop.f32.mrf.mxu0
    %v4767 = vadd.f32 %v3450, %v4766
    %v4768 = vpop.f32.mrf.mxu0
    %4769 = vmatprep.mubr.bf16.mxu0 0
    %4770 = vmatmul.mubr.bf16.gmra.mxu0 %v3763
    %v4771 = vpop.f32.mrf.mxu0
    %v4772 = vadd.f32 %v3450, %v4771
    %v4773 = vpop.f32.mrf.mxu0
    %v4774 = vpop.f32.mrf.mxu0
    %v4775 = vadd.f32 %v3450, %v4774
    %v4776 = vpop.f32.mrf.mxu0
    %4777 = vmatprep.mubr.bf16.mxu0 0
    %4778 = vmatmul.mubr.bf16.gmra.mxu0 %v3766
    %v4779 = vpop.f32.mrf.mxu0
    %v4780 = vadd.f32 %v3450, %v4779
    %v4781 = vpop.f32.mrf.mxu0
    %v4782 = vpop.f32.mrf.mxu0
    %v4783 = vadd.f32 %v3450, %v4782
    %v4784 = vpop.f32.mrf.mxu0
    %4785 = vmatprep.mubr.bf16.mxu0 0
    %4786 = vmatmul.mubr.bf16.gmra.mxu0 %v3769
    %v4787 = vpop.f32.mrf.mxu0
    %v4788 = vadd.f32 %v3450, %v4787
    %v4789 = vpop.f32.mrf.mxu0
    %v4790 = vpop.f32.mrf.mxu0
    %v4791 = vadd.f32 %v3450, %v4790
    %v4792 = vpop.f32.mrf.mxu0
    %4793 = vmatprep.mubr.bf16.mxu0 0
    %4794 = vmatmul.mubr.bf16.gmra.mxu0 %v3772
    %v4795 = vpop.f32.mrf.mxu0
    %v4796 = vadd.f32 %v3450, %v4795
    %v4797 = vpop.f32.mrf.mxu0
    %v4798 = vpop.f32.mrf.mxu0
    %v4799 = vadd.f32 %v3450, %v4798
    %v4800 = vpop.f32.mrf.mxu0
    %4801 = vmatprep.mubr.bf16.mxu0 0
    %4802 = vmatmul.mubr.bf16.gmra.mxu0 %v3775
    %v4803 = vpop.f32.mrf.mxu0
    %v4804 = vadd.f32 %v3450, %v4803
    %v4805 = vpop.f32.mrf.mxu0
    %v4806 = vpop.f32.mrf.mxu0
    %v4807 = vadd.f32 %v3450, %v4806
    %v4808 = vpop.f32.mrf.mxu0
    %4809 = vmatprep.mubr.bf16.mxu0 0
    %4810 = vmatmul.mubr.bf16.gmra.mxu0 %v3778
    %v4811 = vpop.f32.mrf.mxu0
    %v4812 = vadd.f32 %v3450, %v4811
    %v4813 = vpop.f32.mrf.mxu0
    %v4814 = vpop.f32.mrf.mxu0
    %v4815 = vadd.f32 %v3450, %v4814
    %v4816 = vpop.f32.mrf.mxu0
    %4817 = vmatprep.mubr.bf16.mxu0 0
    %4818 = vmatmul.mubr.bf16.gmra.mxu0 %v3781
    %v4819 = vpop.f32.mrf.mxu0
    %v4820 = vadd.f32 %v3450, %v4819
    %v4821 = vpop.f32.mrf.mxu0
    %v4822 = vpop.f32.mrf.mxu0
    %v4823 = vadd.f32 %v3450, %v4822
    %v4824 = vpop.f32.mrf.mxu0
    %4825 = vmatprep.mubr.bf16.mxu0 0
    %4826 = vmatmul.mubr.bf16.gmra.mxu0 %v3784
    %v4827 = vpop.f32.mrf.mxu0
    %v4828 = vadd.f32 %v3450, %v4827
    %v4829 = vpop.f32.mrf.mxu0
    %v4830 = vpop.f32.mrf.mxu0
    %v4831 = vadd.f32 %v3450, %v4830
    %v4832 = vpop.f32.mrf.mxu0
    %4833 = vmatprep.mubr.bf16.mxu0 0
    %4834 = vmatmul.mubr.bf16.gmra.mxu0 %v3787
    %v4835 = vpop.f32.mrf.mxu0
    %v4836 = vadd.f32 %v3450, %v4835
    %v4837 = vpop.f32.mrf.mxu0
    %v4838 = vpop.f32.mrf.mxu0
    %v4839 = vadd.f32 %v3450, %v4838
    %v4840 = vpop.f32.mrf.mxu0
    %4841 = vmatprep.mubr.bf16.mxu0 0
    %4842 = vmatmul.mubr.bf16.gmra.mxu0 %v3790
    %v4843 = vpop.f32.mrf.mxu0
    %v4844 = vadd.f32 %v3450, %v4843
    %v4845 = vpop.f32.mrf.mxu0
    %v4846 = vpop.f32.mrf.mxu0
    %v4847 = vadd.f32 %v3450, %v4846
    %v4848 = vpop.f32.mrf.mxu0
    %4849 = vmatprep.mubr.bf16.mxu0 0
    %4850 = vmatmul.mubr.bf16.gmra.mxu0 %v3793
    %v4851 = vpop.f32.mrf.mxu0
    %v4852 = vadd.f32 %v3450, %v4851
    %v4853 = vpop.f32.mrf.mxu0
    %v4854 = vpop.f32.mrf.mxu0
    %v4855 = vadd.f32 %v3450, %v4854
    %v4856 = vpop.f32.mrf.mxu0
    %4857 = vmatprep.mubr.bf16.mxu0 0
    %4858 = vmatmul.mubr.bf16.gmra.mxu0 %v3796
    %v4859 = vpop.f32.mrf.mxu0
    %v4860 = vadd.f32 %v3450, %v4859
    %v4861 = vpop.f32.mrf.mxu0
    %v4862 = vpop.f32.mrf.mxu0
    %v4863 = vadd.f32 %v3450, %v4862
    %v4864 = vpop.f32.mrf.mxu0
    %4865 = vmatprep.mubr.bf16.mxu0 0
    %4866 = vmatmul.mubr.bf16.gmra.mxu0 %v3799
    %v4867 = vpop.f32.mrf.mxu0
    %v4868 = vadd.f32 %v3450, %v4867
    %v4869 = vpop.f32.mrf.mxu0
    %v4870 = vpop.f32.mrf.mxu0
    %v4871 = vadd.f32 %v3450, %v4870
    %v4872 = vpop.f32.mrf.mxu0
    %4873 = vmatprep.mubr.bf16.mxu0 0
    %4874 = vmatmul.mubr.bf16.gmra.mxu0 %v3802
    %v4875 = vpop.f32.mrf.mxu0
    %v4876 = vadd.f32 %v3450, %v4875
    %v4877 = vpop.f32.mrf.mxu0
    %v4878 = vpop.f32.mrf.mxu0
    %v4879 = vadd.f32 %v3450, %v4878
    %v4880 = vpop.f32.mrf.mxu0
    %4881 = vmatprep.mubr.bf16.mxu0 0
    %4882 = vmatmul.mubr.bf16.gmra.mxu0 %v3805
    %v4883 = vpop.f32.mrf.mxu0
    %v4884 = vadd.f32 %v3450, %v4883
    %v4885 = vpop.f32.mrf.mxu0
    %v4886 = vpop.f32.mrf.mxu0
    %v4887 = vadd.f32 %v3450, %v4886
    %v4888 = vpop.f32.mrf.mxu0
    %4889 = vmatprep.mubr.bf16.mxu0 0
    %4890 = vmatmul.mubr.bf16.gmra.mxu0 %v3808
    %v4891 = vpop.f32.mrf.mxu0
    %v4892 = vadd.f32 %v3450, %v4891
    %v4893 = vpop.f32.mrf.mxu0
    %v4894 = vpop.f32.mrf.mxu0
    %v4895 = vadd.f32 %v3450, %v4894
    %v4896 = vpop.f32.mrf.mxu0
    %4897 = vmatprep.mubr.bf16.mxu0 0
    %4898 = vmatmul.mubr.bf16.gmra.mxu0 %v3811
    %v4899 = vpop.f32.mrf.mxu0
    %v4900 = vadd.f32 %v3450, %v4899
    %v4901 = vpop.f32.mrf.mxu0
    %v4902 = vpop.f32.mrf.mxu0
    %v4903 = vadd.f32 %v3450, %v4902
    %v4904 = vpop.f32.mrf.mxu0
    %4905 = vmatprep.mubr.bf16.mxu0 0
    %4906 = vmatmul.mubr.bf16.gmra.mxu0 %v3814
    %v4907 = vpop.f32.mrf.mxu0
    %v4908 = vadd.f32 %v3450, %v4907
    %v4909 = vpop.f32.mrf.mxu0
    %v4910 = vpop.f32.mrf.mxu0
    %v4911 = vadd.f32 %v3450, %v4910
    %v4912 = vpop.f32.mrf.mxu0
    %4913 = vmatprep.mubr.bf16.mxu0 0
    %4914 = vmatmul.mubr.bf16.gmra.mxu0 %v3817
    %v4915 = vpop.f32.mrf.mxu0
    %v4916 = vadd.f32 %v3450, %v4915
    %v4917 = vpop.f32.mrf.mxu0
    %v4918 = vpop.f32.mrf.mxu0
    %v4919 = vadd.f32 %v3450, %v4918
    %v4920 = vpop.f32.mrf.mxu0
    %4921 = vmatprep.mubr.bf16.mxu0 0
    %4922 = vmatmul.mubr.bf16.gmra.mxu0 %v3820
    %v4923 = vpop.f32.mrf.mxu0
    %v4924 = vadd.f32 %v3450, %v4923
    %v4925 = vpop.f32.mrf.mxu0
    %v4926 = vpop.f32.mrf.mxu0
    %v4927 = vadd.f32 %v3450, %v4926
    %v4928 = vpop.f32.mrf.mxu0
    %4929 = vmatprep.mubr.bf16.mxu0 0
    %4930 = vmatmul.mubr.bf16.gmra.mxu0 %v3823
    %v4931 = vpop.f32.mrf.mxu0
    %v4932 = vadd.f32 %v3450, %v4931
    %v4933 = vpop.f32.mrf.mxu0
    %v4934 = vpop.f32.mrf.mxu0
    %v4935 = vadd.f32 %v3450, %v4934
    %v4936 = vpop.f32.mrf.mxu0
    %4937 = vmatprep.mubr.bf16.mxu0 0
    %4938 = vmatmul.mubr.bf16.gmra.mxu0 %v3826
    %v4939 = vpop.f32.mrf.mxu0
    %v4940 = vadd.f32 %v3450, %v4939
    %v4941 = vpop.f32.mrf.mxu0
    %v4942 = vpop.f32.mrf.mxu0
    %v4943 = vadd.f32 %v3450, %v4942
    %v4944 = vpop.f32.mrf.mxu0
    %4945 = vmatprep.mubr.bf16.mxu0 0
    %4946 = vmatmul.mubr.bf16.gmra.mxu0 %v3829
    %v4947 = vpop.f32.mrf.mxu0
    %v4948 = vadd.f32 %v3450, %v4947
    %v4949 = vpop.f32.mrf.mxu0
    %v4950 = vpop.f32.mrf.mxu0
    %v4951 = vadd.f32 %v3450, %v4950
    %v4952 = vpop.f32.mrf.mxu0
    %4953 = vmatprep.mubr.bf16.mxu0 0
    %4954 = vmatmul.mubr.bf16.gmra.mxu0 %v3832
    %v4955 = vpop.f32.mrf.mxu0
    %v4956 = vadd.f32 %v3450, %v4955
    %v4957 = vpop.f32.mrf.mxu0
    %v4958 = vpop.f32.mrf.mxu0
    %v4959 = vadd.f32 %v3450, %v4958
    %v4960 = vpop.f32.mrf.mxu0
    %4961 = vmatprep.mubr.bf16.mxu0 0
    %4962 = vmatmul.mubr.bf16.gmra.mxu0 %v3835
    %v4963 = vpop.f32.mrf.mxu0
    %v4964 = vadd.f32 %v3450, %v4963
    %v4965 = vpop.f32.mrf.mxu0
    %v4966 = vpop.f32.mrf.mxu0
    %v4967 = vadd.f32 %v3450, %v4966
    %v4968 = vpop.f32.mrf.mxu0
    %4969 = vmatprep.mubr.bf16.mxu0 0
    %4970 = vmatmul.mubr.bf16.gmra.mxu0 %v3838
    %v4971 = vpop.f32.mrf.mxu0
    %v4972 = vadd.f32 %v3450, %v4971
    %v4973 = vpop.f32.mrf.mxu0
    %v4974 = vpop.f32.mrf.mxu0
    %v4975 = vadd.f32 %v3450, %v4974
    %v4976 = vpop.f32.mrf.mxu0
    %4977 = vmatprep.mubr.bf16.mxu0 0
    %4978 = vmatmul.mubr.bf16.gmra.mxu0 %v3841
    %v4979 = vpop.f32.mrf.mxu0
    %v4980 = vadd.f32 %v3450, %v4979
    %v4981 = vpop.f32.mrf.mxu0
    %v4982 = vpop.f32.mrf.mxu0
    %v4983 = vadd.f32 %v3450, %v4982
    %v4984 = vpop.f32.mrf.mxu0
    %4985 = vmatprep.mubr.bf16.mxu0 0
    %4986 = vmatmul.mubr.bf16.gmra.mxu0 %v3844
    %v4987 = vpop.f32.mrf.mxu0
    %v4988 = vadd.f32 %v3450, %v4987
    %v4989 = vpop.f32.mrf.mxu0
    %v4990 = vpop.f32.mrf.mxu0
    %v4991 = vadd.f32 %v3450, %v4990
    %v4992 = vpop.f32.mrf.mxu0
    %4993 = vmatprep.mubr.bf16.mxu0 0
    %4994 = vmatmul.mubr.bf16.gmra.mxu0 %v3847
    %v4995 = vpop.f32.mrf.mxu0
    %v4996 = vadd.f32 %v3450, %v4995
    %v4997 = vpop.f32.mrf.mxu0
    %v4998 = vpop.f32.mrf.mxu0
    %v4999 = vadd.f32 %v3450, %v4998
    %v5000 = vpop.f32.mrf.mxu0
    %5001 = vmatprep.mubr.bf16.mxu0 0
    %5002 = vmatmul.mubr.bf16.gmra.mxu0 %v3850
    %v5003 = vpop.f32.mrf.mxu0
    %v5004 = vadd.f32 %v3450, %v5003
    %v5005 = vpop.f32.mrf.mxu0
    %v5006 = vpop.f32.mrf.mxu0
    %v5007 = vadd.f32 %v3450, %v5006
    %v5008 = vpop.f32.mrf.mxu0
    %5009 = vmatprep.mubr.bf16.mxu0 0
    %5010 = vmatmul.mubr.bf16.gmra.mxu0 %v3853
    %v5011 = vpop.f32.mrf.mxu0
    %v5012 = vadd.f32 %v3450, %v5011
    %v5013 = vpop.f32.mrf.mxu0
    %v5014 = vpop.f32.mrf.mxu0
    %v5015 = vadd.f32 %v3450, %v5014
    %v5016 = vpop.f32.mrf.mxu0
    %5017 = vmatprep.mubr.bf16.mxu0 0
    %5018 = vmatmul.mubr.bf16.gmra.mxu0 %v3856
    %v5019 = vpop.f32.mrf.mxu0
    %v5020 = vadd.f32 %v3450, %v5019
    %v5021 = vpop.f32.mrf.mxu0
    %v5022 = vpop.f32.mrf.mxu0
    %v5023 = vadd.f32 %v3450, %v5022
    %v5024 = vpop.f32.mrf.mxu0
    %5025 = vmatprep.mubr.bf16.mxu0 0
    %5026 = vmatmul.mubr.bf16.gmra.mxu0 %v3859
    %v5027 = vpop.f32.mrf.mxu0
    %v5028 = vadd.f32 %v3450, %v5027
    %v5029 = vpop.f32.mrf.mxu0
    %v5030 = vpop.f32.mrf.mxu0
    %v5031 = vadd.f32 %v3450, %v5030
    %v5032 = vpop.f32.mrf.mxu0
    %5033 = vmatprep.mubr.bf16.mxu0 0
    %5034 = vmatmul.mubr.bf16.gmra.mxu0 %v3862
    %v5035 = vpop.f32.mrf.mxu0
    %v5036 = vadd.f32 %v3450, %v5035
    %v5037 = vpop.f32.mrf.mxu0
    %v5038 = vpop.f32.mrf.mxu0
    %v5039 = vadd.f32 %v3450, %v5038
    %v5040 = vpop.f32.mrf.mxu0
    %5041 = vmatprep.mubr.bf16.mxu0 0
    %5042 = vmatmul.mubr.bf16.gmra.mxu0 %v3865
    %v5043 = vpop.f32.mrf.mxu0
    %v5044 = vadd.f32 %v3450, %v5043
    %v5045 = vpop.f32.mrf.mxu0
    %v5046 = vpop.f32.mrf.mxu0
    %v5047 = vadd.f32 %v3450, %v5046
    %v5048 = vpop.f32.mrf.mxu0
    %5049 = vmatprep.mubr.bf16.mxu0 0
    %5050 = vmatmul.mubr.bf16.gmra.mxu0 %v3868
    %v5051 = vpop.f32.mrf.mxu0
    %v5052 = vadd.f32 %v3450, %v5051
    %v5053 = vpop.f32.mrf.mxu0
    %v5054 = vpop.f32.mrf.mxu0
    %v5055 = vadd.f32 %v3450, %v5054
    %v5056 = vpop.f32.mrf.mxu0
    %5057 = vmatprep.mubr.bf16.mxu0 0
    %5058 = vmatmul.mubr.bf16.gmra.mxu0 %v3871
    %v5059 = vpop.f32.mrf.mxu0
    %v5060 = vadd.f32 %v3450, %v5059
    %v5061 = vpop.f32.mrf.mxu0
    %v5062 = vpop.f32.mrf.mxu0
    %v5063 = vadd.f32 %v3450, %v5062
    %v5064 = vpop.f32.mrf.mxu0
    %5065 = vmatprep.mubr.bf16.mxu0 0
    %5066 = vmatmul.mubr.bf16.gmra.mxu0 %v3874
    %v5067 = vpop.f32.mrf.mxu0
    %v5068 = vadd.f32 %v3450, %v5067
    %v5069 = vpop.f32.mrf.mxu0
    %v5070 = vpop.f32.mrf.mxu0
    %v5071 = vadd.f32 %v3450, %v5070
    %v5072 = vpop.f32.mrf.mxu0
    %5073 = vmatprep.mubr.bf16.mxu0 0
    %5074 = vmatmul.mubr.bf16.gmra.mxu0 %v3877
    %v5075 = vpop.f32.mrf.mxu0
    %v5076 = vadd.f32 %v3450, %v5075
    %v5077 = vpop.f32.mrf.mxu0
    %v5078 = vpop.f32.mrf.mxu0
    %v5079 = vadd.f32 %v3450, %v5078
    %v5080 = vpop.f32.mrf.mxu0
    %5081 = vmatprep.mubr.bf16.mxu0 0
    %5082 = vmatmul.mubr.bf16.gmra.mxu0 %v3880
    %v5083 = vpop.f32.mrf.mxu0
    %v5084 = vadd.f32 %v3450, %v5083
    %v5085 = vpop.f32.mrf.mxu0
    %v5086 = vpop.f32.mrf.mxu0
    %v5087 = vadd.f32 %v3450, %v5086
    %v5088 = vpop.f32.mrf.mxu0
    %5089 = vmatprep.mubr.bf16.mxu0 0
    %5090 = vmatmul.mubr.bf16.gmra.mxu0 %v3883
    %v5091 = vpop.f32.mrf.mxu0
    %v5092 = vadd.f32 %v3450, %v5091
    %v5093 = vpop.f32.mrf.mxu0
    %v5094 = vpop.f32.mrf.mxu0
    %v5095 = vadd.f32 %v3450, %v5094
    %v5096 = vpop.f32.mrf.mxu0
    %5097 = vmatprep.mubr.bf16.mxu0 0
    %5098 = vmatmul.mubr.bf16.gmra.mxu0 %v3886
    %v5099 = vpop.f32.mrf.mxu0
    %v5100 = vadd.f32 %v3450, %v5099
    %v5101 = vpop.f32.mrf.mxu0
    %v5102 = vpop.f32.mrf.mxu0
    %v5103 = vadd.f32 %v3450, %v5102
    %v5104 = vpop.f32.mrf.mxu0
    %5105 = vmatprep.mubr.bf16.mxu0 0
    %5106 = vmatmul.mubr.bf16.gmra.mxu0 %v3889
    %v5107 = vpop.f32.mrf.mxu0
    %v5108 = vadd.f32 %v3450, %v5107
    %v5109 = vpop.f32.mrf.mxu0
    %v5110 = vpop.f32.mrf.mxu0
    %v5111 = vadd.f32 %v3450, %v5110
    %v5112 = vpop.f32.mrf.mxu0
    %5113 = vmatprep.mubr.bf16.mxu0 0
    %5114 = vmatmul.mubr.bf16.gmra.mxu0 %v3892
    %v5115 = vpop.f32.mrf.mxu0
    %v5116 = vadd.f32 %v3450, %v5115
    %v5117 = vpop.f32.mrf.mxu0
    %v5118 = vpop.f32.mrf.mxu0
    %v5119 = vadd.f32 %v3450, %v5118
    %v5120 = vpop.f32.mrf.mxu0
    %5121 = vmatprep.mubr.bf16.mxu0 0
    %5122 = vmatmul.mubr.bf16.gmra.mxu0 %v3895
    %v5123 = vpop.f32.mrf.mxu0
    %v5124 = vadd.f32 %v3450, %v5123
    %v5125 = vpop.f32.mrf.mxu0
    %v5126 = vpop.f32.mrf.mxu0
    %v5127 = vadd.f32 %v3450, %v5126
    %v5128 = vpop.f32.mrf.mxu0
    %5129 = vmatprep.mubr.bf16.mxu0 0
    %5130 = vmatmul.mubr.bf16.gmra.mxu0 %v3898
    %v5131 = vpop.f32.mrf.mxu0
    %v5132 = vadd.f32 %v3450, %v5131
    %v5133 = vpop.f32.mrf.mxu0
    %v5134 = vpop.f32.mrf.mxu0
    %v5135 = vadd.f32 %v3450, %v5134
    %v5136 = vpop.f32.mrf.mxu0
    %5137 = vmatprep.mubr.bf16.mxu0 0
    %5138 = vmatmul.mubr.bf16.gmra.mxu0 %v3901
    %v5139 = vpop.f32.mrf.mxu0
    %v5140 = vadd.f32 %v3450, %v5139
    %v5141 = vpop.f32.mrf.mxu0
    %v5142 = vpop.f32.mrf.mxu0
    %v5143 = vadd.f32 %v3450, %v5142
    %v5144 = vpop.f32.mrf.mxu0
    %5145 = vmatprep.mubr.bf16.mxu0 0
    %5146 = vmatmul.mubr.bf16.gmra.mxu0 %v3904
    %v5147 = vpop.f32.mrf.mxu0
    %v5148 = vadd.f32 %v3450, %v5147
    %v5149 = vpop.f32.mrf.mxu0
    %v5150 = vpop.f32.mrf.mxu0
    %v5151 = vadd.f32 %v3450, %v5150
    %v5152 = vpop.f32.mrf.mxu0
    %5153 = vmatprep.mubr.bf16.mxu0 0
    %5154 = vmatmul.mubr.bf16.gmra.mxu0 %v3907
    %v5155 = vpop.f32.mrf.mxu0
    %v5156 = vadd.f32 %v3450, %v5155
    %v5157 = vpop.f32.mrf.mxu0
    %v5158 = vpop.f32.mrf.mxu0
    %v5159 = vadd.f32 %v3450, %v5158
    %v5160 = vpop.f32.mrf.mxu0
    %5161 = vmatprep.mubr.bf16.mxu0 0
    %5162 = vmatmul.mubr.bf16.gmra.mxu0 %v3910
    %v5163 = vpop.f32.mrf.mxu0
    %v5164 = vadd.f32 %v3450, %v5163
    %v5165 = vpop.f32.mrf.mxu0
    %v5166 = vpop.f32.mrf.mxu0
    %v5167 = vadd.f32 %v3450, %v5166
    %v5168 = vpop.f32.mrf.mxu0
    %5169 = vmatprep.mubr.bf16.mxu0 0
    %5170 = vmatmul.mubr.bf16.gmra.mxu0 %v3913
    %v5171 = vpop.f32.mrf.mxu0
    %v5172 = vadd.f32 %v3450, %v5171
    %v5173 = vpop.f32.mrf.mxu0
    %v5174 = vpop.f32.mrf.mxu0
    %v5175 = vadd.f32 %v3450, %v5174
    %v5176 = vpop.f32.mrf.mxu0
    %5177 = vmatprep.mubr.bf16.mxu0 0
    %5178 = vmatmul.mubr.bf16.gmra.mxu0 %v3916
    %v5179 = vpop.f32.mrf.mxu0
    %v5180 = vadd.f32 %v3450, %v5179
    %v5181 = vpop.f32.mrf.mxu0
    %v5182 = vpop.f32.mrf.mxu0
    %v5183 = vadd.f32 %v3450, %v5182
    %v5184 = vpop.f32.mrf.mxu0
    %5185 = vmatprep.mubr.bf16.mxu0 0
    %5186 = vmatmul.mubr.bf16.gmra.mxu0 %v3919
    %v5187 = vpop.f32.mrf.mxu0
    %v5188 = vadd.f32 %v3450, %v5187
    %v5189 = vpop.f32.mrf.mxu0
    %v5190 = vpop.f32.mrf.mxu0
    %v5191 = vadd.f32 %v3450, %v5190
    %v5192 = vpop.f32.mrf.mxu0
    %5193 = vmatprep.mubr.bf16.mxu0 0
    %5194 = vmatmul.mubr.bf16.gmra.mxu0 %v3922
    %v5195 = vpop.f32.mrf.mxu0
    %v5196 = vadd.f32 %v3450, %v5195
    %v5197 = vpop.f32.mrf.mxu0
    %v5198 = vpop.f32.mrf.mxu0
    %v5199 = vadd.f32 %v3450, %v5198
    %v5200 = vpop.f32.mrf.mxu0
    %5201 = vmatprep.mubr.bf16.mxu0 0
    %5202 = vmatmul.mubr.bf16.gmra.mxu0 %v3925
    %v5203 = vpop.f32.mrf.mxu0
    %v5204 = vadd.f32 %v3450, %v5203
    %v5205 = vpop.f32.mrf.mxu0
    %v5206 = vpop.f32.mrf.mxu0
    %v5207 = vadd.f32 %v3450, %v5206
    %v5208 = vpop.f32.mrf.mxu0
    %5209 = vmatprep.mubr.bf16.mxu0 0
    %5210 = vmatmul.mubr.bf16.gmra.mxu0 %v3928
    %v5211 = vpop.f32.mrf.mxu0
    %v5212 = vadd.f32 %v3450, %v5211
    %v5213 = vpop.f32.mrf.mxu0
    %v5214 = vpop.f32.mrf.mxu0
    %v5215 = vadd.f32 %v3450, %v5214
    %v5216 = vpop.f32.mrf.mxu0
    %5217 = vmatprep.mubr.bf16.mxu0 0
    %5218 = vmatmul.mubr.bf16.gmra.mxu0 %v3931
    %v5219 = vpop.f32.mrf.mxu0
    %v5220 = vadd.f32 %v3450, %v5219
    %v5221 = vpop.f32.mrf.mxu0
    %v5222 = vpop.f32.mrf.mxu0
    %v5223 = vadd.f32 %v3450, %v5222
    %v5224 = vpop.f32.mrf.mxu0
    %5225 = vmatprep.mubr.bf16.mxu0 0
    %5226 = vmatmul.mubr.bf16.gmra.mxu0 %v3934
    %v5227 = vpop.f32.mrf.mxu0
    %v5228 = vadd.f32 %v3450, %v5227
    %v5229 = vpop.f32.mrf.mxu0
    %v5230 = vpop.f32.mrf.mxu0
    %v5231 = vadd.f32 %v3450, %v5230
    %v5232 = vpop.f32.mrf.mxu0
    %5233 = vmatprep.mubr.bf16.mxu0 0
    %5234 = vmatmul.mubr.bf16.gmra.mxu0 %v3937
    %v5235 = vpop.f32.mrf.mxu0
    %v5236 = vadd.f32 %v3450, %v5235
    %v5237 = vpop.f32.mrf.mxu0
    %v5238 = vpop.f32.mrf.mxu0
    %v5239 = vadd.f32 %v3450, %v5238
    %v5240 = vpop.f32.mrf.mxu0
    %5241 = vmatprep.mubr.bf16.mxu0 0
    %5242 = vmatmul.mubr.bf16.gmra.mxu0 %v3940
    %v5243 = vpop.f32.mrf.mxu0
    %v5244 = vadd.f32 %v3450, %v5243
    %v5245 = vpop.f32.mrf.mxu0
    %v5246 = vpop.f32.mrf.mxu0
    %v5247 = vadd.f32 %v3450, %v5246
    %v5248 = vpop.f32.mrf.mxu0
    %5249 = vmatprep.mubr.bf16.mxu0 0
    %5250 = vmatmul.mubr.bf16.gmra.mxu0 %v3943
    %v5251 = vpop.f32.mrf.mxu0
    %v5252 = vadd.f32 %v3450, %v5251
    %v5253 = vpop.f32.mrf.mxu0
    %v5254 = vpop.f32.mrf.mxu0
    %v5255 = vadd.f32 %v3450, %v5254
    %v5256 = vpop.f32.mrf.mxu0
    %5257 = vdwg.mxu0
    %v5258 = vmax.f32 %v3980, 0.0
    %v5259 = vmax.f32 %v3983, 0.0
    %v5260 = vmax.f32 %v3988, 0.0
    %v5261 = vmax.f32 %v3991, 0.0
    %v5262 = vmax.f32 %v3996, 0.0
    %v5263 = vmax.f32 %v3999, 0.0
    %v5264 = vmax.f32 %v4004, 0.0
    %v5265 = vmax.f32 %v4007, 0.0
    %v5266 = vmax.f32 %v4012, 0.0
    %v5267 = vmax.f32 %v4015, 0.0
    %v5268 = vmax.f32 %v4020, 0.0
    %v5269 = vmax.f32 %v4023, 0.0
    %v5270 = vmax.f32 %v4028, 0.0
    %v5271 = vmax.f32 %v4031, 0.0
    %v5272 = vmax.f32 %v4036, 0.0
    %v5273 = vmax.f32 %v4039, 0.0
    %v5274 = vmax.f32 %v4044, 0.0
    %v5275 = vmax.f32 %v4047, 0.0
    %v5276 = vmax.f32 %v4052, 0.0
    %v5277 = vmax.f32 %v4055, 0.0
    %v5278 = vmax.f32 %v4060, 0.0
    %v5279 = vmax.f32 %v4063, 0.0
    %v5280 = vmax.f32 %v4068, 0.0
    %v5281 = vmax.f32 %v4071, 0.0
    %v5282 = vmax.f32 %v4076, 0.0
    %v5283 = vmax.f32 %v4079, 0.0
    %v5284 = vmax.f32 %v4084, 0.0
    %v5285 = vmax.f32 %v4087, 0.0
    %v5286 = vmax.f32 %v4092, 0.0
    %v5287 = vmax.f32 %v4095, 0.0
    %v5288 = vmax.f32 %v4100, 0.0
    %v5289 = vmax.f32 %v4103, 0.0
    %v5290 = vmax.f32 %v4108, 0.0
    %v5291 = vmax.f32 %v4111, 0.0
    %v5292 = vmax.f32 %v4116, 0.0
    %v5293 = vmax.f32 %v4119, 0.0
    %v5294 = vmax.f32 %v4124, 0.0
    %v5295 = vmax.f32 %v4127, 0.0
    %v5296 = vmax.f32 %v4132, 0.0
    %v5297 = vmax.f32 %v4135, 0.0
    %v5298 = vmax.f32 %v4140, 0.0
    %v5299 = vmax.f32 %v4143, 0.0
    %v5300 = vmax.f32 %v4148, 0.0
    %v5301 = vmax.f32 %v4151, 0.0
    %v5302 = vmax.f32 %v4156, 0.0
    %v5303 = vmax.f32 %v4159, 0.0
    %v5304 = vmax.f32 %v4164, 0.0
    %v5305 = vmax.f32 %v4167, 0.0
    %v5306 = vmax.f32 %v4172, 0.0
    %v5307 = vmax.f32 %v4175, 0.0
    %v5308 = vmax.f32 %v4180, 0.0
    %v5309 = vmax.f32 %v4183, 0.0
    %v5310 = vmax.f32 %v4188, 0.0
    %v5311 = vmax.f32 %v4191, 0.0
    %v5312 = vmax.f32 %v4196, 0.0
    %v5313 = vmax.f32 %v4199, 0.0
    %v5314 = vmax.f32 %v4204, 0.0
    %v5315 = vmax.f32 %v4207, 0.0
    %v5316 = vmax.f32 %v4212, 0.0
    %v5317 = vmax.f32 %v4215, 0.0
    %v5318 = vmax.f32 %v4220, 0.0
    %v5319 = vmax.f32 %v4223, 0.0
    %v5320 = vmax.f32 %v4228, 0.0
    %v5321 = vmax.f32 %v4231, 0.0
    %v5322 = vmax.f32 %v4236, 0.0
    %v5323 = vmax.f32 %v4239, 0.0
    %v5324 = vmax.f32 %v4244, 0.0
    %v5325 = vmax.f32 %v4247, 0.0
    %v5326 = vmax.f32 %v4252, 0.0
    %v5327 = vmax.f32 %v4255, 0.0
    %v5328 = vmax.f32 %v4260, 0.0
    %v5329 = vmax.f32 %v4263, 0.0
    %v5330 = vmax.f32 %v4268, 0.0
    %v5331 = vmax.f32 %v4271, 0.0
    %v5332 = vmax.f32 %v4276, 0.0
    %v5333 = vmax.f32 %v4279, 0.0
    %v5334 = vmax.f32 %v4284, 0.0
    %v5335 = vmax.f32 %v4287, 0.0
    %v5336 = vmax.f32 %v4292, 0.0
    %v5337 = vmax.f32 %v4295, 0.0
    %v5338 = vmax.f32 %v4300, 0.0
    %v5339 = vmax.f32 %v4303, 0.0
    %v5340 = vmax.f32 %v4308, 0.0
    %v5341 = vmax.f32 %v4311, 0.0
    %v5342 = vmax.f32 %v4316, 0.0
    %v5343 = vmax.f32 %v4319, 0.0
    %v5344 = vmax.f32 %v4324, 0.0
    %v5345 = vmax.f32 %v4327, 0.0
    %v5346 = vmax.f32 %v4332, 0.0
    %v5347 = vmax.f32 %v4335, 0.0
    %v5348 = vmax.f32 %v4340, 0.0
    %v5349 = vmax.f32 %v4343, 0.0
    %v5350 = vmax.f32 %v4348, 0.0
    %v5351 = vmax.f32 %v4351, 0.0
    %v5352 = vmax.f32 %v4356, 0.0
    %v5353 = vmax.f32 %v4359, 0.0
    %v5354 = vmax.f32 %v4364, 0.0
    %v5355 = vmax.f32 %v4367, 0.0
    %v5356 = vmax.f32 %v4372, 0.0
    %v5357 = vmax.f32 %v4375, 0.0
    %v5358 = vmax.f32 %v4380, 0.0
    %v5359 = vmax.f32 %v4383, 0.0
    %v5360 = vmax.f32 %v4388, 0.0
    %v5361 = vmax.f32 %v4391, 0.0
    %v5362 = vmax.f32 %v4396, 0.0
    %v5363 = vmax.f32 %v4399, 0.0
    %v5364 = vmax.f32 %v4404, 0.0
    %v5365 = vmax.f32 %v4407, 0.0
    %v5366 = vmax.f32 %v4412, 0.0
    %v5367 = vmax.f32 %v4415, 0.0
    %v5368 = vmax.f32 %v4420, 0.0
    %v5369 = vmax.f32 %v4423, 0.0
    %v5370 = vmax.f32 %v4428, 0.0
    %v5371 = vmax.f32 %v4431, 0.0
    %v5372 = vmax.f32 %v4436, 0.0
    %v5373 = vmax.f32 %v4439, 0.0
    %v5374 = vmax.f32 %v4444, 0.0
    %v5375 = vmax.f32 %v4447, 0.0
    %v5376 = vmax.f32 %v4452, 0.0
    %v5377 = vmax.f32 %v4455, 0.0
    %v5378 = vmax.f32 %v4460, 0.0
    %v5379 = vmax.f32 %v4463, 0.0
    %v5380 = vmax.f32 %v4468, 0.0
    %v5381 = vmax.f32 %v4471, 0.0
    %v5382 = vmax.f32 %v4476, 0.0
    %v5383 = vmax.f32 %v4479, 0.0
    %v5384 = vmax.f32 %v4484, 0.0
    %v5385 = vmax.f32 %v4487, 0.0
    %v5386 = vmax.f32 %v4492, 0.0
    %v5387 = vmax.f32 %v4495, 0.0
    %v5388 = vmax.f32 %v4500, 0.0
    %v5389 = vmax.f32 %v4503, 0.0
    %v5390 = vmax.f32 %v4508, 0.0
    %v5391 = vmax.f32 %v4511, 0.0
    %v5392 = vmax.f32 %v4516, 0.0
    %v5393 = vmax.f32 %v4519, 0.0
    %v5394 = vmax.f32 %v4524, 0.0
    %v5395 = vmax.f32 %v4527, 0.0
    %v5396 = vmax.f32 %v4532, 0.0
    %v5397 = vmax.f32 %v4535, 0.0
    %v5398 = vmax.f32 %v4540, 0.0
    %v5399 = vmax.f32 %v4543, 0.0
    %v5400 = vmax.f32 %v4548, 0.0
    %v5401 = vmax.f32 %v4551, 0.0
    %v5402 = vmax.f32 %v4556, 0.0
    %v5403 = vmax.f32 %v4559, 0.0
    %v5404 = vmax.f32 %v4564, 0.0
    %v5405 = vmax.f32 %v4567, 0.0
    %v5406 = vmax.f32 %v4572, 0.0
    %v5407 = vmax.f32 %v4575, 0.0
    %v5408 = vmax.f32 %v4580, 0.0
    %v5409 = vmax.f32 %v4583, 0.0
    %v5410 = vmax.f32 %v4588, 0.0
    %v5411 = vmax.f32 %v4591, 0.0
    %v5412 = vmax.f32 %v4596, 0.0
    %v5413 = vmax.f32 %v4599, 0.0
    %v5414 = vmax.f32 %v4604, 0.0
    %v5415 = vmax.f32 %v4607, 0.0
    %v5416 = vmax.f32 %v4612, 0.0
    %v5417 = vmax.f32 %v4615, 0.0
    %v5418 = vmax.f32 %v4620, 0.0
    %v5419 = vmax.f32 %v4623, 0.0
    %v5420 = vmax.f32 %v4628, 0.0
    %v5421 = vmax.f32 %v4631, 0.0
    %v5422 = vmax.f32 %v4636, 0.0
    %v5423 = vmax.f32 %v4639, 0.0
    %v5424 = vmax.f32 %v4644, 0.0
    %v5425 = vmax.f32 %v4647, 0.0
    %v5426 = vmax.f32 %v4652, 0.0
    %v5427 = vmax.f32 %v4655, 0.0
    %v5428 = vmax.f32 %v4660, 0.0
    %v5429 = vmax.f32 %v4663, 0.0
    %v5430 = vmax.f32 %v4668, 0.0
    %v5431 = vmax.f32 %v4671, 0.0
    %v5432 = vmax.f32 %v4676, 0.0
    %v5433 = vmax.f32 %v4679, 0.0
    %v5434 = vmax.f32 %v4684, 0.0
    %v5435 = vmax.f32 %v4687, 0.0
    %v5436 = vmax.f32 %v4692, 0.0
    %v5437 = vmax.f32 %v4695, 0.0
    %v5438 = vmax.f32 %v4700, 0.0
    %v5439 = vmax.f32 %v4703, 0.0
    %v5440 = vmax.f32 %v4708, 0.0
    %v5441 = vmax.f32 %v4711, 0.0
    %v5442 = vmax.f32 %v4716, 0.0
    %v5443 = vmax.f32 %v4719, 0.0
    %v5444 = vmax.f32 %v4724, 0.0
    %v5445 = vmax.f32 %v4727, 0.0
    %v5446 = vmax.f32 %v4732, 0.0
    %v5447 = vmax.f32 %v4735, 0.0
    %v5448 = vmax.f32 %v4740, 0.0
    %v5449 = vmax.f32 %v4743, 0.0
    %v5450 = vmax.f32 %v4748, 0.0
    %v5451 = vmax.f32 %v4751, 0.0
    %v5452 = vmax.f32 %v4756, 0.0
    %v5453 = vmax.f32 %v4759, 0.0
    %v5454 = vmax.f32 %v4764, 0.0
    %v5455 = vmax.f32 %v4767, 0.0
    %v5456 = vmax.f32 %v4772, 0.0
    %v5457 = vmax.f32 %v4775, 0.0
    %v5458 = vmax.f32 %v4780, 0.0
    %v5459 = vmax.f32 %v4783, 0.0
    %v5460 = vmax.f32 %v4788, 0.0
    %v5461 = vmax.f32 %v4791, 0.0
    %v5462 = vmax.f32 %v4796, 0.0
    %v5463 = vmax.f32 %v4799, 0.0
    %v5464 = vmax.f32 %v4804, 0.0
    %v5465 = vmax.f32 %v4807, 0.0
    %v5466 = vmax.f32 %v4812, 0.0
    %v5467 = vmax.f32 %v4815, 0.0
    %v5468 = vmax.f32 %v4820, 0.0
    %v5469 = vmax.f32 %v4823, 0.0
    %v5470 = vmax.f32 %v4828, 0.0
    %v5471 = vmax.f32 %v4831, 0.0
    %v5472 = vmax.f32 %v4836, 0.0
    %v5473 = vmax.f32 %v4839, 0.0
    %v5474 = vmax.f32 %v4844, 0.0
    %v5475 = vmax.f32 %v4847, 0.0
    %v5476 = vmax.f32 %v4852, 0.0
    %v5477 = vmax.f32 %v4855, 0.0
    %v5478 = vmax.f32 %v4860, 0.0
    %v5479 = vmax.f32 %v4863, 0.0
    %v5480 = vmax.f32 %v4868, 0.0
    %v5481 = vmax.f32 %v4871, 0.0
    %v5482 = vmax.f32 %v4876, 0.0
    %v5483 = vmax.f32 %v4879, 0.0
    %v5484 = vmax.f32 %v4884, 0.0
    %v5485 = vmax.f32 %v4887, 0.0
    %v5486 = vmax.f32 %v4892, 0.0
    %v5487 = vmax.f32 %v4895, 0.0
    %v5488 = vmax.f32 %v4900, 0.0
    %v5489 = vmax.f32 %v4903, 0.0
    %v5490 = vmax.f32 %v4908, 0.0
    %v5491 = vmax.f32 %v4911, 0.0
    %v5492 = vmax.f32 %v4916, 0.0
    %v5493 = vmax.f32 %v4919, 0.0
    %v5494 = vmax.f32 %v4924, 0.0
    %v5495 = vmax.f32 %v4927, 0.0
    %v5496 = vmax.f32 %v4932, 0.0
    %v5497 = vmax.f32 %v4935, 0.0
    %v5498 = vmax.f32 %v4940, 0.0
    %v5499 = vmax.f32 %v4943, 0.0
    %v5500 = vmax.f32 %v4948, 0.0
    %v5501 = vmax.f32 %v4951, 0.0
    %v5502 = vmax.f32 %v4956, 0.0
    %v5503 = vmax.f32 %v4959, 0.0
    %v5504 = vmax.f32 %v4964, 0.0
    %v5505 = vmax.f32 %v4967, 0.0
    %v5506 = vmax.f32 %v4972, 0.0
    %v5507 = vmax.f32 %v4975, 0.0
    %v5508 = vmax.f32 %v4980, 0.0
    %v5509 = vmax.f32 %v4983, 0.0
    %v5510 = vmax.f32 %v4988, 0.0
    %v5511 = vmax.f32 %v4991, 0.0
    %v5512 = vmax.f32 %v4996, 0.0
    %v5513 = vmax.f32 %v4999, 0.0
    %v5514 = vmax.f32 %v5004, 0.0
    %v5515 = vmax.f32 %v5007, 0.0
    %v5516 = vmax.f32 %v5012, 0.0
    %v5517 = vmax.f32 %v5015, 0.0
    %v5518 = vmax.f32 %v5020, 0.0
    %v5519 = vmax.f32 %v5023, 0.0
    %v5520 = vmax.f32 %v5028, 0.0
    %v5521 = vmax.f32 %v5031, 0.0
    %v5522 = vmax.f32 %v5036, 0.0
    %v5523 = vmax.f32 %v5039, 0.0
    %v5524 = vmax.f32 %v5044, 0.0
    %v5525 = vmax.f32 %v5047, 0.0
    %v5526 = vmax.f32 %v5052, 0.0
    %v5527 = vmax.f32 %v5055, 0.0
    %v5528 = vmax.f32 %v5060, 0.0
    %v5529 = vmax.f32 %v5063, 0.0
    %v5530 = vmax.f32 %v5068, 0.0
    %v5531 = vmax.f32 %v5071, 0.0
    %v5532 = vmax.f32 %v5076, 0.0
    %v5533 = vmax.f32 %v5079, 0.0
    %v5534 = vmax.f32 %v5084, 0.0
    %v5535 = vmax.f32 %v5087, 0.0
    %v5536 = vmax.f32 %v5092, 0.0
    %v5537 = vmax.f32 %v5095, 0.0
    %v5538 = vmax.f32 %v5100, 0.0
    %v5539 = vmax.f32 %v5103, 0.0
    %v5540 = vmax.f32 %v5108, 0.0
    %v5541 = vmax.f32 %v5111, 0.0
    %v5542 = vmax.f32 %v5116, 0.0
    %v5543 = vmax.f32 %v5119, 0.0
    %v5544 = vmax.f32 %v5124, 0.0
    %v5545 = vmax.f32 %v5127, 0.0
    %v5546 = vmax.f32 %v5132, 0.0
    %v5547 = vmax.f32 %v5135, 0.0
    %v5548 = vmax.f32 %v5140, 0.0
    %v5549 = vmax.f32 %v5143, 0.0
    %v5550 = vmax.f32 %v5148, 0.0
    %v5551 = vmax.f32 %v5151, 0.0
    %v5552 = vmax.f32 %v5156, 0.0
    %v5553 = vmax.f32 %v5159, 0.0
    %v5554 = vmax.f32 %v5164, 0.0
    %v5555 = vmax.f32 %v5167, 0.0
    %v5556 = vmax.f32 %v5172, 0.0
    %v5557 = vmax.f32 %v5175, 0.0
    %v5558 = vmax.f32 %v5180, 0.0
    %v5559 = vmax.f32 %v5183, 0.0
    %v5560 = vmax.f32 %v5188, 0.0
    %v5561 = vmax.f32 %v5191, 0.0
    %v5562 = vmax.f32 %v5196, 0.0
    %v5563 = vmax.f32 %v5199, 0.0
    %v5564 = vmax.f32 %v5204, 0.0
    %v5565 = vmax.f32 %v5207, 0.0
    %v5566 = vmax.f32 %v5212, 0.0
    %v5567 = vmax.f32 %v5215, 0.0
    %v5568 = vmax.f32 %v5220, 0.0
    %v5569 = vmax.f32 %v5223, 0.0
    %v5570 = vmax.f32 %v5228, 0.0
    %v5571 = vmax.f32 %v5231, 0.0
    %v5572 = vmax.f32 %v5236, 0.0
    %v5573 = vmax.f32 %v5239, 0.0
    %v5574 = vmax.f32 %v5244, 0.0
    %v5575 = vmax.f32 %v5247, 0.0
    %v5576 = vmax.f32 %v5252, 0.0
    %v5577 = vmax.f32 %v5255, 0.0
    %v5578 = vld [vmem:[%s6] sm:$0x1]
    %v5580 = vlaneseq
    %v5581 = vshrl.u32 %v5580, 7
    %v5582 = vsub.s32 0, %v5581
    %v5583 = vrot.slane %v5578, %v5582
    %v5585 = vmul.f32 %v5258, %v5583
    %v5586 = vmul.f32 %v5259, %v5583
    %v5587 = vmul.f32 %v5260, %v5583
    %v5588 = vmul.f32 %v5261, %v5583
    %v5589 = vmul.f32 %v5262, %v5583
    %v5590 = vmul.f32 %v5263, %v5583
    %v5591 = vmul.f32 %v5264, %v5583
    %v5592 = vmul.f32 %v5265, %v5583
    %v5593 = vmul.f32 %v5266, %v5583
    %v5594 = vmul.f32 %v5267, %v5583
    %v5595 = vmul.f32 %v5268, %v5583
    %v5596 = vmul.f32 %v5269, %v5583
    %v5597 = vmul.f32 %v5270, %v5583
    %v5598 = vmul.f32 %v5271, %v5583
    %v5599 = vmul.f32 %v5272, %v5583
    %v5600 = vmul.f32 %v5273, %v5583
    %v5601 = vmul.f32 %v5274, %v5583
    %v5602 = vmul.f32 %v5275, %v5583
    %v5603 = vmul.f32 %v5276, %v5583
    %v5604 = vmul.f32 %v5277, %v5583
    %v5605 = vmul.f32 %v5278, %v5583
    %v5606 = vmul.f32 %v5279, %v5583
    %v5607 = vmul.f32 %v5280, %v5583
    %v5608 = vmul.f32 %v5281, %v5583
    %v5609 = vmul.f32 %v5282, %v5583
    %v5610 = vmul.f32 %v5283, %v5583
    %v5611 = vmul.f32 %v5284, %v5583
    %v5612 = vmul.f32 %v5285, %v5583
    %v5613 = vmul.f32 %v5286, %v5583
    %v5614 = vmul.f32 %v5287, %v5583
    %v5615 = vmul.f32 %v5288, %v5583
    %v5616 = vmul.f32 %v5289, %v5583
    %v5617 = vmul.f32 %v5290, %v5583
    %v5618 = vmul.f32 %v5291, %v5583
    %v5619 = vmul.f32 %v5292, %v5583
    %v5620 = vmul.f32 %v5293, %v5583
    %v5621 = vmul.f32 %v5294, %v5583
    %v5622 = vmul.f32 %v5295, %v5583
    %v5623 = vmul.f32 %v5296, %v5583
    %v5624 = vmul.f32 %v5297, %v5583
    %v5625 = vmul.f32 %v5298, %v5583
    %v5626 = vmul.f32 %v5299, %v5583
    %v5627 = vmul.f32 %v5300, %v5583
    %v5628 = vmul.f32 %v5301, %v5583
    %v5629 = vmul.f32 %v5302, %v5583
    %v5630 = vmul.f32 %v5303, %v5583
    %v5631 = vmul.f32 %v5304, %v5583
    %v5632 = vmul.f32 %v5305, %v5583
    %v5633 = vmul.f32 %v5306, %v5583
    %v5634 = vmul.f32 %v5307, %v5583
    %v5635 = vmul.f32 %v5308, %v5583
    %v5636 = vmul.f32 %v5309, %v5583
    %v5637 = vmul.f32 %v5310, %v5583
    %v5638 = vmul.f32 %v5311, %v5583
    %v5639 = vmul.f32 %v5312, %v5583
    %v5640 = vmul.f32 %v5313, %v5583
    %v5641 = vmul.f32 %v5314, %v5583
    %v5642 = vmul.f32 %v5315, %v5583
    %v5643 = vmul.f32 %v5316, %v5583
    %v5644 = vmul.f32 %v5317, %v5583
    %v5645 = vmul.f32 %v5318, %v5583
    %v5646 = vmul.f32 %v5319, %v5583
    %v5647 = vmul.f32 %v5320, %v5583
    %v5648 = vmul.f32 %v5321, %v5583
    %v5649 = vmul.f32 %v5322, %v5583
    %v5650 = vmul.f32 %v5323, %v5583
    %v5651 = vmul.f32 %v5324, %v5583
    %v5652 = vmul.f32 %v5325, %v5583
    %v5653 = vmul.f32 %v5326, %v5583
    %v5654 = vmul.f32 %v5327, %v5583
    %v5655 = vmul.f32 %v5328, %v5583
    %v5656 = vmul.f32 %v5329, %v5583
    %v5657 = vmul.f32 %v5330, %v5583
    %v5658 = vmul.f32 %v5331, %v5583
    %v5659 = vmul.f32 %v5332, %v5583
    %v5660 = vmul.f32 %v5333, %v5583
    %v5661 = vmul.f32 %v5334, %v5583
    %v5662 = vmul.f32 %v5335, %v5583
    %v5663 = vmul.f32 %v5336, %v5583
    %v5664 = vmul.f32 %v5337, %v5583
    %v5665 = vmul.f32 %v5338, %v5583
    %v5666 = vmul.f32 %v5339, %v5583
    %v5667 = vmul.f32 %v5340, %v5583
    %v5668 = vmul.f32 %v5341, %v5583
    %v5669 = vmul.f32 %v5342, %v5583
    %v5670 = vmul.f32 %v5343, %v5583
    %v5671 = vmul.f32 %v5344, %v5583
    %v5672 = vmul.f32 %v5345, %v5583
    %v5673 = vmul.f32 %v5346, %v5583
    %v5674 = vmul.f32 %v5347, %v5583
    %v5675 = vmul.f32 %v5348, %v5583
    %v5676 = vmul.f32 %v5349, %v5583
    %v5677 = vmul.f32 %v5350, %v5583
    %v5678 = vmul.f32 %v5351, %v5583
    %v5679 = vmul.f32 %v5352, %v5583
    %v5680 = vmul.f32 %v5353, %v5583
    %v5681 = vmul.f32 %v5354, %v5583
    %v5682 = vmul.f32 %v5355, %v5583
    %v5683 = vmul.f32 %v5356, %v5583
    %v5684 = vmul.f32 %v5357, %v5583
    %v5685 = vmul.f32 %v5358, %v5583
    %v5686 = vmul.f32 %v5359, %v5583
    %v5687 = vmul.f32 %v5360, %v5583
    %v5688 = vmul.f32 %v5361, %v5583
    %v5689 = vmul.f32 %v5362, %v5583
    %v5690 = vmul.f32 %v5363, %v5583
    %v5691 = vmul.f32 %v5364, %v5583
    %v5692 = vmul.f32 %v5365, %v5583
    %v5693 = vmul.f32 %v5366, %v5583
    %v5694 = vmul.f32 %v5367, %v5583
    %v5695 = vmul.f32 %v5368, %v5583
    %v5696 = vmul.f32 %v5369, %v5583
    %v5697 = vmul.f32 %v5370, %v5583
    %v5698 = vmul.f32 %v5371, %v5583
    %v5699 = vmul.f32 %v5372, %v5583
    %v5700 = vmul.f32 %v5373, %v5583
    %v5701 = vmul.f32 %v5374, %v5583
    %v5702 = vmul.f32 %v5375, %v5583
    %v5703 = vmul.f32 %v5376, %v5583
    %v5704 = vmul.f32 %v5377, %v5583
    %v5705 = vmul.f32 %v5378, %v5583
    %v5706 = vmul.f32 %v5379, %v5583
    %v5707 = vmul.f32 %v5380, %v5583
    %v5708 = vmul.f32 %v5381, %v5583
    %v5709 = vmul.f32 %v5382, %v5583
    %v5710 = vmul.f32 %v5383, %v5583
    %v5711 = vmul.f32 %v5384, %v5583
    %v5712 = vmul.f32 %v5385, %v5583
    %v5713 = vmul.f32 %v5386, %v5583
    %v5714 = vmul.f32 %v5387, %v5583
    %v5715 = vmul.f32 %v5388, %v5583
    %v5716 = vmul.f32 %v5389, %v5583
    %v5717 = vmul.f32 %v5390, %v5583
    %v5718 = vmul.f32 %v5391, %v5583
    %v5719 = vmul.f32 %v5392, %v5583
    %v5720 = vmul.f32 %v5393, %v5583
    %v5721 = vmul.f32 %v5394, %v5583
    %v5722 = vmul.f32 %v5395, %v5583
    %v5723 = vmul.f32 %v5396, %v5583
    %v5724 = vmul.f32 %v5397, %v5583
    %v5725 = vmul.f32 %v5398, %v5583
    %v5726 = vmul.f32 %v5399, %v5583
    %v5727 = vmul.f32 %v5400, %v5583
    %v5728 = vmul.f32 %v5401, %v5583
    %v5729 = vmul.f32 %v5402, %v5583
    %v5730 = vmul.f32 %v5403, %v5583
    %v5731 = vmul.f32 %v5404, %v5583
    %v5732 = vmul.f32 %v5405, %v5583
    %v5733 = vmul.f32 %v5406, %v5583
    %v5734 = vmul.f32 %v5407, %v5583
    %v5735 = vmul.f32 %v5408, %v5583
    %v5736 = vmul.f32 %v5409, %v5583
    %v5737 = vmul.f32 %v5410, %v5583
    %v5738 = vmul.f32 %v5411, %v5583
    %v5739 = vmul.f32 %v5412, %v5583
    %v5740 = vmul.f32 %v5413, %v5583
    %v5741 = vmul.f32 %v5414, %v5583
    %v5742 = vmul.f32 %v5415, %v5583
    %v5743 = vmul.f32 %v5416, %v5583
    %v5744 = vmul.f32 %v5417, %v5583
    %v5745 = vmul.f32 %v5418, %v5583
    %v5746 = vmul.f32 %v5419, %v5583
    %v5747 = vmul.f32 %v5420, %v5583
    %v5748 = vmul.f32 %v5421, %v5583
    %v5749 = vmul.f32 %v5422, %v5583
    %v5750 = vmul.f32 %v5423, %v5583
    %v5751 = vmul.f32 %v5424, %v5583
    %v5752 = vmul.f32 %v5425, %v5583
    %v5753 = vmul.f32 %v5426, %v5583
    %v5754 = vmul.f32 %v5427, %v5583
    %v5755 = vmul.f32 %v5428, %v5583
    %v5756 = vmul.f32 %v5429, %v5583
    %v5757 = vmul.f32 %v5430, %v5583
    %v5758 = vmul.f32 %v5431, %v5583
    %v5759 = vmul.f32 %v5432, %v5583
    %v5760 = vmul.f32 %v5433, %v5583
    %v5761 = vmul.f32 %v5434, %v5583
    %v5762 = vmul.f32 %v5435, %v5583
    %v5763 = vmul.f32 %v5436, %v5583
    %v5764 = vmul.f32 %v5437, %v5583
    %v5765 = vmul.f32 %v5438, %v5583
    %v5766 = vmul.f32 %v5439, %v5583
    %v5767 = vmul.f32 %v5440, %v5583
    %v5768 = vmul.f32 %v5441, %v5583
    %v5769 = vmul.f32 %v5442, %v5583
    %v5770 = vmul.f32 %v5443, %v5583
    %v5771 = vmul.f32 %v5444, %v5583
    %v5772 = vmul.f32 %v5445, %v5583
    %v5773 = vmul.f32 %v5446, %v5583
    %v5774 = vmul.f32 %v5447, %v5583
    %v5775 = vmul.f32 %v5448, %v5583
    %v5776 = vmul.f32 %v5449, %v5583
    %v5777 = vmul.f32 %v5450, %v5583
    %v5778 = vmul.f32 %v5451, %v5583
    %v5779 = vmul.f32 %v5452, %v5583
    %v5780 = vmul.f32 %v5453, %v5583
    %v5781 = vmul.f32 %v5454, %v5583
    %v5782 = vmul.f32 %v5455, %v5583
    %v5783 = vmul.f32 %v5456, %v5583
    %v5784 = vmul.f32 %v5457, %v5583
    %v5785 = vmul.f32 %v5458, %v5583
    %v5786 = vmul.f32 %v5459, %v5583
    %v5787 = vmul.f32 %v5460, %v5583
    %v5788 = vmul.f32 %v5461, %v5583
    %v5789 = vmul.f32 %v5462, %v5583
    %v5790 = vmul.f32 %v5463, %v5583
    %v5791 = vmul.f32 %v5464, %v5583
    %v5792 = vmul.f32 %v5465, %v5583
    %v5793 = vmul.f32 %v5466, %v5583
    %v5794 = vmul.f32 %v5467, %v5583
    %v5795 = vmul.f32 %v5468, %v5583
    %v5796 = vmul.f32 %v5469, %v5583
    %v5797 = vmul.f32 %v5470, %v5583
    %v5798 = vmul.f32 %v5471, %v5583
    %v5799 = vmul.f32 %v5472, %v5583
    %v5800 = vmul.f32 %v5473, %v5583
    %v5801 = vmul.f32 %v5474, %v5583
    %v5802 = vmul.f32 %v5475, %v5583
    %v5803 = vmul.f32 %v5476, %v5583
    %v5804 = vmul.f32 %v5477, %v5583
    %v5805 = vmul.f32 %v5478, %v5583
    %v5806 = vmul.f32 %v5479, %v5583
    %v5807 = vmul.f32 %v5480, %v5583
    %v5808 = vmul.f32 %v5481, %v5583
    %v5809 = vmul.f32 %v5482, %v5583
    %v5810 = vmul.f32 %v5483, %v5583
    %v5811 = vmul.f32 %v5484, %v5583
    %v5812 = vmul.f32 %v5485, %v5583
    %v5813 = vmul.f32 %v5486, %v5583
    %v5814 = vmul.f32 %v5487, %v5583
    %v5815 = vmul.f32 %v5488, %v5583
    %v5816 = vmul.f32 %v5489, %v5583
    %v5817 = vmul.f32 %v5490, %v5583
    %v5818 = vmul.f32 %v5491, %v5583
    %v5819 = vmul.f32 %v5492, %v5583
    %v5820 = vmul.f32 %v5493, %v5583
    %v5821 = vmul.f32 %v5494, %v5583
    %v5822 = vmul.f32 %v5495, %v5583
    %v5823 = vmul.f32 %v5496, %v5583
    %v5824 = vmul.f32 %v5497, %v5583
    %v5825 = vmul.f32 %v5498, %v5583
    %v5826 = vmul.f32 %v5499, %v5583
    %v5827 = vmul.f32 %v5500, %v5583
    %v5828 = vmul.f32 %v5501, %v5583
    %v5829 = vmul.f32 %v5502, %v5583
    %v5830 = vmul.f32 %v5503, %v5583
    %v5831 = vmul.f32 %v5504, %v5583
    %v5832 = vmul.f32 %v5505, %v5583
    %v5833 = vmul.f32 %v5506, %v5583
    %v5834 = vmul.f32 %v5507, %v5583
    %v5835 = vmul.f32 %v5508, %v5583
    %v5836 = vmul.f32 %v5509, %v5583
    %v5837 = vmul.f32 %v5510, %v5583
    %v5838 = vmul.f32 %v5511, %v5583
    %v5839 = vmul.f32 %v5512, %v5583
    %v5840 = vmul.f32 %v5513, %v5583
    %v5841 = vmul.f32 %v5514, %v5583
    %v5842 = vmul.f32 %v5515, %v5583
    %v5843 = vmul.f32 %v5516, %v5583
    %v5844 = vmul.f32 %v5517, %v5583
    %v5845 = vmul.f32 %v5518, %v5583
    %v5846 = vmul.f32 %v5519, %v5583
    %v5847 = vmul.f32 %v5520, %v5583
    %v5848 = vmul.f32 %v5521, %v5583
    %v5849 = vmul.f32 %v5522, %v5583
    %v5850 = vmul.f32 %v5523, %v5583
    %v5851 = vmul.f32 %v5524, %v5583
    %v5852 = vmul.f32 %v5525, %v5583
    %v5853 = vmul.f32 %v5526, %v5583
    %v5854 = vmul.f32 %v5527, %v5583
    %v5855 = vmul.f32 %v5528, %v5583
    %v5856 = vmul.f32 %v5529, %v5583
    %v5857 = vmul.f32 %v5530, %v5583
    %v5858 = vmul.f32 %v5531, %v5583
    %v5859 = vmul.f32 %v5532, %v5583
    %v5860 = vmul.f32 %v5533, %v5583
    %v5861 = vmul.f32 %v5534, %v5583
    %v5862 = vmul.f32 %v5535, %v5583
    %v5863 = vmul.f32 %v5536, %v5583
    %v5864 = vmul.f32 %v5537, %v5583
    %v5865 = vmul.f32 %v5538, %v5583
    %v5866 = vmul.f32 %v5539, %v5583
    %v5867 = vmul.f32 %v5540, %v5583
    %v5868 = vmul.f32 %v5541, %v5583
    %v5869 = vmul.f32 %v5542, %v5583
    %v5870 = vmul.f32 %v5543, %v5583
    %v5871 = vmul.f32 %v5544, %v5583
    %v5872 = vmul.f32 %v5545, %v5583
    %v5873 = vmul.f32 %v5546, %v5583
    %v5874 = vmul.f32 %v5547, %v5583
    %v5875 = vmul.f32 %v5548, %v5583
    %v5876 = vmul.f32 %v5549, %v5583
    %v5877 = vmul.f32 %v5550, %v5583
    %v5878 = vmul.f32 %v5551, %v5583
    %v5879 = vmul.f32 %v5552, %v5583
    %v5880 = vmul.f32 %v5553, %v5583
    %v5881 = vmul.f32 %v5554, %v5583
    %v5882 = vmul.f32 %v5555, %v5583
    %v5883 = vmul.f32 %v5556, %v5583
    %v5884 = vmul.f32 %v5557, %v5583
    %v5885 = vmul.f32 %v5558, %v5583
    %v5886 = vmul.f32 %v5559, %v5583
    %v5887 = vmul.f32 %v5560, %v5583
    %v5888 = vmul.f32 %v5561, %v5583
    %v5889 = vmul.f32 %v5562, %v5583
    %v5890 = vmul.f32 %v5563, %v5583
    %v5891 = vmul.f32 %v5564, %v5583
    %v5892 = vmul.f32 %v5565, %v5583
    %v5893 = vmul.f32 %v5566, %v5583
    %v5894 = vmul.f32 %v5567, %v5583
    %v5895 = vmul.f32 %v5568, %v5583
    %v5896 = vmul.f32 %v5569, %v5583
    %v5897 = vmul.f32 %v5570, %v5583
    %v5898 = vmul.f32 %v5571, %v5583
    %v5899 = vmul.f32 %v5572, %v5583
    %v5900 = vmul.f32 %v5573, %v5583
    %v5901 = vmul.f32 %v5574, %v5583
    %v5902 = vmul.f32 %v5575, %v5583
    %v5903 = vmul.f32 %v5576, %v5583
    %v5904 = vmul.f32 %v5577, %v5583
    %vm5905 = vcmask 523264
    %v5906 = vsel %vm5905, %v5585, 0.0
    %5907 = vadd.xlane.f32.xlu0 %v5906
    %v5908 = vpop.xlane.xlu0 %5907
    %v5909 = vsel %vm5905, %v5586, 0.0
    %5910 = vadd.xlane.f32.xlu0 %v5909
    %v5911 = vpop.xlane.xlu0 %5910
    %v5912 = vsel %vm5905, %v5587, 0.0
    %5913 = vadd.xlane.f32.xlu0 %v5912
    %v5914 = vpop.xlane.xlu0 %5913
    %v5915 = vsel %vm5905, %v5588, 0.0
    %5916 = vadd.xlane.f32.xlu0 %v5915
    %v5917 = vpop.xlane.xlu0 %5916
    %v5918 = vsel %vm5905, %v5589, 0.0
    %5919 = vadd.xlane.f32.xlu0 %v5918
    %v5920 = vpop.xlane.xlu0 %5919
    %v5921 = vsel %vm5905, %v5590, 0.0
    %5922 = vadd.xlane.f32.xlu0 %v5921
    %v5923 = vpop.xlane.xlu0 %5922
    %v5924 = vsel %vm5905, %v5591, 0.0
    %5925 = vadd.xlane.f32.xlu0 %v5924
    %v5926 = vpop.xlane.xlu0 %5925
    %v5927 = vsel %vm5905, %v5592, 0.0
    %5928 = vadd.xlane.f32.xlu0 %v5927
    %v5929 = vpop.xlane.xlu0 %5928
    %v5930 = vsel %vm5905, %v5593, 0.0
    %5931 = vadd.xlane.f32.xlu0 %v5930
    %v5932 = vpop.xlane.xlu0 %5931
    %v5933 = vsel %vm5905, %v5594, 0.0
    %5934 = vadd.xlane.f32.xlu0 %v5933
    %v5935 = vpop.xlane.xlu0 %5934
    %v5936 = vsel %vm5905, %v5595, 0.0
    %5937 = vadd.xlane.f32.xlu0 %v5936
    %v5938 = vpop.xlane.xlu0 %5937
    %v5939 = vsel %vm5905, %v5596, 0.0
    %5940 = vadd.xlane.f32.xlu0 %v5939
    %v5941 = vpop.xlane.xlu0 %5940
    %v5942 = vsel %vm5905, %v5597, 0.0
    %5943 = vadd.xlane.f32.xlu0 %v5942
    %v5944 = vpop.xlane.xlu0 %5943
    %v5945 = vsel %vm5905, %v5598, 0.0
    %5946 = vadd.xlane.f32.xlu0 %v5945
    %v5947 = vpop.xlane.xlu0 %5946
    %v5948 = vsel %vm5905, %v5599, 0.0
    %5949 = vadd.xlane.f32.xlu0 %v5948
    %v5950 = vpop.xlane.xlu0 %5949
    %v5951 = vsel %vm5905, %v5600, 0.0
    %5952 = vadd.xlane.f32.xlu0 %v5951
    %v5953 = vpop.xlane.xlu0 %5952
    %v5954 = vsel %vm5905, %v5601, 0.0
    %5955 = vadd.xlane.f32.xlu0 %v5954
    %v5956 = vpop.xlane.xlu0 %5955
    %v5957 = vsel %vm5905, %v5602, 0.0
    %5958 = vadd.xlane.f32.xlu0 %v5957
    %v5959 = vpop.xlane.xlu0 %5958
    %v5960 = vsel %vm5905, %v5603, 0.0
    %5961 = vadd.xlane.f32.xlu0 %v5960
    %v5962 = vpop.xlane.xlu0 %5961
    %v5963 = vsel %vm5905, %v5604, 0.0
    %5964 = vadd.xlane.f32.xlu0 %v5963
    %v5965 = vpop.xlane.xlu0 %5964
    %v5966 = vsel %vm5905, %v5605, 0.0
    %5967 = vadd.xlane.f32.xlu0 %v5966
    %v5968 = vpop.xlane.xlu0 %5967
    %v5969 = vsel %vm5905, %v5606, 0.0
    %5970 = vadd.xlane.f32.xlu0 %v5969
    %v5971 = vpop.xlane.xlu0 %5970
    %v5972 = vsel %vm5905, %v5607, 0.0
    %5973 = vadd.xlane.f32.xlu0 %v5972
    %v5974 = vpop.xlane.xlu0 %5973
    %v5975 = vsel %vm5905, %v5608, 0.0
    %5976 = vadd.xlane.f32.xlu0 %v5975
    %v5977 = vpop.xlane.xlu0 %5976
    %v5978 = vsel %vm5905, %v5609, 0.0
    %5979 = vadd.xlane.f32.xlu0 %v5978
    %v5980 = vpop.xlane.xlu0 %5979
    %v5981 = vsel %vm5905, %v5610, 0.0
    %5982 = vadd.xlane.f32.xlu0 %v5981
    %v5983 = vpop.xlane.xlu0 %5982
    %v5984 = vsel %vm5905, %v5611, 0.0
    %5985 = vadd.xlane.f32.xlu0 %v5984
    %v5986 = vpop.xlane.xlu0 %5985
    %v5987 = vsel %vm5905, %v5612, 0.0
    %5988 = vadd.xlane.f32.xlu0 %v5987
    %v5989 = vpop.xlane.xlu0 %5988
    %v5990 = vsel %vm5905, %v5613, 0.0
    %5991 = vadd.xlane.f32.xlu0 %v5990
    %v5992 = vpop.xlane.xlu0 %5991
    %v5993 = vsel %vm5905, %v5614, 0.0
    %5994 = vadd.xlane.f32.xlu0 %v5993
    %v5995 = vpop.xlane.xlu0 %5994
    %v5996 = vsel %vm5905, %v5615, 0.0
    %5997 = vadd.xlane.f32.xlu0 %v5996
    %v5998 = vpop.xlane.xlu0 %5997
    %v5999 = vsel %vm5905, %v5616, 0.0
    %6000 = vadd.xlane.f32.xlu0 %v5999
    %v6001 = vpop.xlane.xlu0 %6000
    %v6002 = vsel %vm5905, %v5617, 0.0
    %6003 = vadd.xlane.f32.xlu0 %v6002
    %v6004 = vpop.xlane.xlu0 %6003
    %v6005 = vsel %vm5905, %v5618, 0.0
    %6006 = vadd.xlane.f32.xlu0 %v6005
    %v6007 = vpop.xlane.xlu0 %6006
    %v6008 = vsel %vm5905, %v5619, 0.0
    %6009 = vadd.xlane.f32.xlu0 %v6008
    %v6010 = vpop.xlane.xlu0 %6009
    %v6011 = vsel %vm5905, %v5620, 0.0
    %6012 = vadd.xlane.f32.xlu0 %v6011
    %v6013 = vpop.xlane.xlu0 %6012
    %v6014 = vsel %vm5905, %v5621, 0.0
    %6015 = vadd.xlane.f32.xlu0 %v6014
    %v6016 = vpop.xlane.xlu0 %6015
    %v6017 = vsel %vm5905, %v5622, 0.0
    %6018 = vadd.xlane.f32.xlu0 %v6017
    %v6019 = vpop.xlane.xlu0 %6018
    %v6020 = vsel %vm5905, %v5623, 0.0
    %6021 = vadd.xlane.f32.xlu0 %v6020
    %v6022 = vpop.xlane.xlu0 %6021
    %v6023 = vsel %vm5905, %v5624, 0.0
    %6024 = vadd.xlane.f32.xlu0 %v6023
    %v6025 = vpop.xlane.xlu0 %6024
    %v6026 = vsel %vm5905, %v5625, 0.0
    %6027 = vadd.xlane.f32.xlu0 %v6026
    %v6028 = vpop.xlane.xlu0 %6027
    %v6029 = vsel %vm5905, %v5626, 0.0
    %6030 = vadd.xlane.f32.xlu0 %v6029
    %v6031 = vpop.xlane.xlu0 %6030
    %v6032 = vsel %vm5905, %v5627, 0.0
    %6033 = vadd.xlane.f32.xlu0 %v6032
    %v6034 = vpop.xlane.xlu0 %6033
    %v6035 = vsel %vm5905, %v5628, 0.0
    %6036 = vadd.xlane.f32.xlu0 %v6035
    %v6037 = vpop.xlane.xlu0 %6036
    %v6038 = vsel %vm5905, %v5629, 0.0
    %6039 = vadd.xlane.f32.xlu0 %v6038
    %v6040 = vpop.xlane.xlu0 %6039
    %v6041 = vsel %vm5905, %v5630, 0.0
    %6042 = vadd.xlane.f32.xlu0 %v6041
    %v6043 = vpop.xlane.xlu0 %6042
    %v6044 = vsel %vm5905, %v5631, 0.0
    %6045 = vadd.xlane.f32.xlu0 %v6044
    %v6046 = vpop.xlane.xlu0 %6045
    %v6047 = vsel %vm5905, %v5632, 0.0
    %6048 = vadd.xlane.f32.xlu0 %v6047
    %v6049 = vpop.xlane.xlu0 %6048
    %v6050 = vsel %vm5905, %v5633, 0.0
    %6051 = vadd.xlane.f32.xlu0 %v6050
    %v6052 = vpop.xlane.xlu0 %6051
    %v6053 = vsel %vm5905, %v5634, 0.0
    %6054 = vadd.xlane.f32.xlu0 %v6053
    %v6055 = vpop.xlane.xlu0 %6054
    %v6056 = vsel %vm5905, %v5635, 0.0
    %6057 = vadd.xlane.f32.xlu0 %v6056
    %v6058 = vpop.xlane.xlu0 %6057
    %v6059 = vsel %vm5905, %v5636, 0.0
    %6060 = vadd.xlane.f32.xlu0 %v6059
    %v6061 = vpop.xlane.xlu0 %6060
    %v6062 = vsel %vm5905, %v5637, 0.0
    %6063 = vadd.xlane.f32.xlu0 %v6062
    %v6064 = vpop.xlane.xlu0 %6063
    %v6065 = vsel %vm5905, %v5638, 0.0
    %6066 = vadd.xlane.f32.xlu0 %v6065
    %v6067 = vpop.xlane.xlu0 %6066
    %v6068 = vsel %vm5905, %v5639, 0.0
    %6069 = vadd.xlane.f32.xlu0 %v6068
    %v6070 = vpop.xlane.xlu0 %6069
    %v6071 = vsel %vm5905, %v5640, 0.0
    %6072 = vadd.xlane.f32.xlu0 %v6071
    %v6073 = vpop.xlane.xlu0 %6072
    %v6074 = vsel %vm5905, %v5641, 0.0
    %6075 = vadd.xlane.f32.xlu0 %v6074
    %v6076 = vpop.xlane.xlu0 %6075
    %v6077 = vsel %vm5905, %v5642, 0.0
    %6078 = vadd.xlane.f32.xlu0 %v6077
    %v6079 = vpop.xlane.xlu0 %6078
    %v6080 = vsel %vm5905, %v5643, 0.0
    %6081 = vadd.xlane.f32.xlu0 %v6080
    %v6082 = vpop.xlane.xlu0 %6081
    %v6083 = vsel %vm5905, %v5644, 0.0
    %6084 = vadd.xlane.f32.xlu0 %v6083
    %v6085 = vpop.xlane.xlu0 %6084
    %v6086 = vsel %vm5905, %v5645, 0.0
    %6087 = vadd.xlane.f32.xlu0 %v6086
    %v6088 = vpop.xlane.xlu0 %6087
    %v6089 = vsel %vm5905, %v5646, 0.0
    %6090 = vadd.xlane.f32.xlu0 %v6089
    %v6091 = vpop.xlane.xlu0 %6090
    %v6092 = vsel %vm5905, %v5647, 0.0
    %6093 = vadd.xlane.f32.xlu0 %v6092
    %v6094 = vpop.xlane.xlu0 %6093
    %v6095 = vsel %vm5905, %v5648, 0.0
    %6096 = vadd.xlane.f32.xlu0 %v6095
    %v6097 = vpop.xlane.xlu0 %6096
    %v6098 = vsel %vm5905, %v5649, 0.0
    %6099 = vadd.xlane.f32.xlu0 %v6098
    %v6100 = vpop.xlane.xlu0 %6099
    %v6101 = vsel %vm5905, %v5650, 0.0
    %6102 = vadd.xlane.f32.xlu0 %v6101
    %v6103 = vpop.xlane.xlu0 %6102
    %v6104 = vsel %vm5905, %v5651, 0.0
    %6105 = vadd.xlane.f32.xlu0 %v6104
    %v6106 = vpop.xlane.xlu0 %6105
    %v6107 = vsel %vm5905, %v5652, 0.0
    %6108 = vadd.xlane.f32.xlu0 %v6107
    %v6109 = vpop.xlane.xlu0 %6108
    %v6110 = vsel %vm5905, %v5653, 0.0
    %6111 = vadd.xlane.f32.xlu0 %v6110
    %v6112 = vpop.xlane.xlu0 %6111
    %v6113 = vsel %vm5905, %v5654, 0.0
    %6114 = vadd.xlane.f32.xlu0 %v6113
    %v6115 = vpop.xlane.xlu0 %6114
    %v6116 = vsel %vm5905, %v5655, 0.0
    %6117 = vadd.xlane.f32.xlu0 %v6116
    %v6118 = vpop.xlane.xlu0 %6117
    %v6119 = vsel %vm5905, %v5656, 0.0
    %6120 = vadd.xlane.f32.xlu0 %v6119
    %v6121 = vpop.xlane.xlu0 %6120
    %v6122 = vsel %vm5905, %v5657, 0.0
    %6123 = vadd.xlane.f32.xlu0 %v6122
    %v6124 = vpop.xlane.xlu0 %6123
    %v6125 = vsel %vm5905, %v5658, 0.0
    %6126 = vadd.xlane.f32.xlu0 %v6125
    %v6127 = vpop.xlane.xlu0 %6126
    %v6128 = vsel %vm5905, %v5659, 0.0
    %6129 = vadd.xlane.f32.xlu0 %v6128
    %v6130 = vpop.xlane.xlu0 %6129
    %v6131 = vsel %vm5905, %v5660, 0.0
    %6132 = vadd.xlane.f32.xlu0 %v6131
    %v6133 = vpop.xlane.xlu0 %6132
    %v6134 = vsel %vm5905, %v5661, 0.0
    %6135 = vadd.xlane.f32.xlu0 %v6134
    %v6136 = vpop.xlane.xlu0 %6135
    %v6137 = vsel %vm5905, %v5662, 0.0
    %6138 = vadd.xlane.f32.xlu0 %v6137
    %v6139 = vpop.xlane.xlu0 %6138
    %v6140 = vsel %vm5905, %v5663, 0.0
    %6141 = vadd.xlane.f32.xlu0 %v6140
    %v6142 = vpop.xlane.xlu0 %6141
    %v6143 = vsel %vm5905, %v5664, 0.0
    %6144 = vadd.xlane.f32.xlu0 %v6143
    %v6145 = vpop.xlane.xlu0 %6144
    %v6146 = vsel %vm5905, %v5665, 0.0
    %6147 = vadd.xlane.f32.xlu0 %v6146
    %v6148 = vpop.xlane.xlu0 %6147
    %v6149 = vsel %vm5905, %v5666, 0.0
    %6150 = vadd.xlane.f32.xlu0 %v6149
    %v6151 = vpop.xlane.xlu0 %6150
    %v6152 = vsel %vm5905, %v5667, 0.0
    %6153 = vadd.xlane.f32.xlu0 %v6152
    %v6154 = vpop.xlane.xlu0 %6153
    %v6155 = vsel %vm5905, %v5668, 0.0
    %6156 = vadd.xlane.f32.xlu0 %v6155
    %v6157 = vpop.xlane.xlu0 %6156
    %v6158 = vsel %vm5905, %v5669, 0.0
    %6159 = vadd.xlane.f32.xlu0 %v6158
    %v6160 = vpop.xlane.xlu0 %6159
    %v6161 = vsel %vm5905, %v5670, 0.0
    %6162 = vadd.xlane.f32.xlu0 %v6161
    %v6163 = vpop.xlane.xlu0 %6162
    %v6164 = vsel %vm5905, %v5671, 0.0
    %6165 = vadd.xlane.f32.xlu0 %v6164
    %v6166 = vpop.xlane.xlu0 %6165
    %v6167 = vsel %vm5905, %v5672, 0.0
    %6168 = vadd.xlane.f32.xlu0 %v6167
    %v6169 = vpop.xlane.xlu0 %6168
    %v6170 = vsel %vm5905, %v5673, 0.0
    %6171 = vadd.xlane.f32.xlu0 %v6170
    %v6172 = vpop.xlane.xlu0 %6171
    %v6173 = vsel %vm5905, %v5674, 0.0
    %6174 = vadd.xlane.f32.xlu0 %v6173
    %v6175 = vpop.xlane.xlu0 %6174
    %v6176 = vsel %vm5905, %v5675, 0.0
    %6177 = vadd.xlane.f32.xlu0 %v6176
    %v6178 = vpop.xlane.xlu0 %6177
    %v6179 = vsel %vm5905, %v5676, 0.0
    %6180 = vadd.xlane.f32.xlu0 %v6179
    %v6181 = vpop.xlane.xlu0 %6180
    %v6182 = vsel %vm5905, %v5677, 0.0
    %6183 = vadd.xlane.f32.xlu0 %v6182
    %v6184 = vpop.xlane.xlu0 %6183
    %v6185 = vsel %vm5905, %v5678, 0.0
    %6186 = vadd.xlane.f32.xlu0 %v6185
    %v6187 = vpop.xlane.xlu0 %6186
    %v6188 = vsel %vm5905, %v5679, 0.0
    %6189 = vadd.xlane.f32.xlu0 %v6188
    %v6190 = vpop.xlane.xlu0 %6189
    %v6191 = vsel %vm5905, %v5680, 0.0
    %6192 = vadd.xlane.f32.xlu0 %v6191
    %v6193 = vpop.xlane.xlu0 %6192
    %v6194 = vsel %vm5905, %v5681, 0.0
    %6195 = vadd.xlane.f32.xlu0 %v6194
    %v6196 = vpop.xlane.xlu0 %6195
    %v6197 = vsel %vm5905, %v5682, 0.0
    %6198 = vadd.xlane.f32.xlu0 %v6197
    %v6199 = vpop.xlane.xlu0 %6198
    %v6200 = vsel %vm5905, %v5683, 0.0
    %6201 = vadd.xlane.f32.xlu0 %v6200
    %v6202 = vpop.xlane.xlu0 %6201
    %v6203 = vsel %vm5905, %v5684, 0.0
    %6204 = vadd.xlane.f32.xlu0 %v6203
    %v6205 = vpop.xlane.xlu0 %6204
    %v6206 = vsel %vm5905, %v5685, 0.0
    %6207 = vadd.xlane.f32.xlu0 %v6206
    %v6208 = vpop.xlane.xlu0 %6207
    %v6209 = vsel %vm5905, %v5686, 0.0
    %6210 = vadd.xlane.f32.xlu0 %v6209
    %v6211 = vpop.xlane.xlu0 %6210
    %v6212 = vsel %vm5905, %v5687, 0.0
    %6213 = vadd.xlane.f32.xlu0 %v6212
    %v6214 = vpop.xlane.xlu0 %6213
    %v6215 = vsel %vm5905, %v5688, 0.0
    %6216 = vadd.xlane.f32.xlu0 %v6215
    %v6217 = vpop.xlane.xlu0 %6216
    %v6218 = vsel %vm5905, %v5689, 0.0
    %6219 = vadd.xlane.f32.xlu0 %v6218
    %v6220 = vpop.xlane.xlu0 %6219
    %v6221 = vsel %vm5905, %v5690, 0.0
    %6222 = vadd.xlane.f32.xlu0 %v6221
    %v6223 = vpop.xlane.xlu0 %6222
    %v6224 = vsel %vm5905, %v5691, 0.0
    %6225 = vadd.xlane.f32.xlu0 %v6224
    %v6226 = vpop.xlane.xlu0 %6225
    %v6227 = vsel %vm5905, %v5692, 0.0
    %6228 = vadd.xlane.f32.xlu0 %v6227
    %v6229 = vpop.xlane.xlu0 %6228
    %v6230 = vsel %vm5905, %v5693, 0.0
    %6231 = vadd.xlane.f32.xlu0 %v6230
    %v6232 = vpop.xlane.xlu0 %6231
    %v6233 = vsel %vm5905, %v5694, 0.0
    %6234 = vadd.xlane.f32.xlu0 %v6233
    %v6235 = vpop.xlane.xlu0 %6234
    %v6236 = vsel %vm5905, %v5695, 0.0
    %6237 = vadd.xlane.f32.xlu0 %v6236
    %v6238 = vpop.xlane.xlu0 %6237
    %v6239 = vsel %vm5905, %v5696, 0.0
    %6240 = vadd.xlane.f32.xlu0 %v6239
    %v6241 = vpop.xlane.xlu0 %6240
    %v6242 = vsel %vm5905, %v5697, 0.0
    %6243 = vadd.xlane.f32.xlu0 %v6242
    %v6244 = vpop.xlane.xlu0 %6243
    %v6245 = vsel %vm5905, %v5698, 0.0
    %6246 = vadd.xlane.f32.xlu0 %v6245
    %v6247 = vpop.xlane.xlu0 %6246
    %v6248 = vsel %vm5905, %v5699, 0.0
    %6249 = vadd.xlane.f32.xlu0 %v6248
    %v6250 = vpop.xlane.xlu0 %6249
    %v6251 = vsel %vm5905, %v5700, 0.0
    %6252 = vadd.xlane.f32.xlu0 %v6251
    %v6253 = vpop.xlane.xlu0 %6252
    %v6254 = vsel %vm5905, %v5701, 0.0
    %6255 = vadd.xlane.f32.xlu0 %v6254
    %v6256 = vpop.xlane.xlu0 %6255
    %v6257 = vsel %vm5905, %v5702, 0.0
    %6258 = vadd.xlane.f32.xlu0 %v6257
    %v6259 = vpop.xlane.xlu0 %6258
    %v6260 = vsel %vm5905, %v5703, 0.0
    %6261 = vadd.xlane.f32.xlu0 %v6260
    %v6262 = vpop.xlane.xlu0 %6261
    %v6263 = vsel %vm5905, %v5704, 0.0
    %6264 = vadd.xlane.f32.xlu0 %v6263
    %v6265 = vpop.xlane.xlu0 %6264
    %v6266 = vsel %vm5905, %v5705, 0.0
    %6267 = vadd.xlane.f32.xlu0 %v6266
    %v6268 = vpop.xlane.xlu0 %6267
    %v6269 = vsel %vm5905, %v5706, 0.0
    %6270 = vadd.xlane.f32.xlu0 %v6269
    %v6271 = vpop.xlane.xlu0 %6270
    %v6272 = vsel %vm5905, %v5707, 0.0
    %6273 = vadd.xlane.f32.xlu0 %v6272
    %v6274 = vpop.xlane.xlu0 %6273
    %v6275 = vsel %vm5905, %v5708, 0.0
    %6276 = vadd.xlane.f32.xlu0 %v6275
    %v6277 = vpop.xlane.xlu0 %6276
    %v6278 = vsel %vm5905, %v5709, 0.0
    %6279 = vadd.xlane.f32.xlu0 %v6278
    %v6280 = vpop.xlane.xlu0 %6279
    %v6281 = vsel %vm5905, %v5710, 0.0
    %6282 = vadd.xlane.f32.xlu0 %v6281
    %v6283 = vpop.xlane.xlu0 %6282
    %v6284 = vsel %vm5905, %v5711, 0.0
    %6285 = vadd.xlane.f32.xlu0 %v6284
    %v6286 = vpop.xlane.xlu0 %6285
    %v6287 = vsel %vm5905, %v5712, 0.0
    %6288 = vadd.xlane.f32.xlu0 %v6287
    %v6289 = vpop.xlane.xlu0 %6288
    %v6290 = vsel %vm5905, %v5713, 0.0
    %6291 = vadd.xlane.f32.xlu0 %v6290
    %v6292 = vpop.xlane.xlu0 %6291
    %v6293 = vsel %vm5905, %v5714, 0.0
    %6294 = vadd.xlane.f32.xlu0 %v6293
    %v6295 = vpop.xlane.xlu0 %6294
    %v6296 = vsel %vm5905, %v5715, 0.0
    %6297 = vadd.xlane.f32.xlu0 %v6296
    %v6298 = vpop.xlane.xlu0 %6297
    %v6299 = vsel %vm5905, %v5716, 0.0
    %6300 = vadd.xlane.f32.xlu0 %v6299
    %v6301 = vpop.xlane.xlu0 %6300
    %v6302 = vsel %vm5905, %v5717, 0.0
    %6303 = vadd.xlane.f32.xlu0 %v6302
    %v6304 = vpop.xlane.xlu0 %6303
    %v6305 = vsel %vm5905, %v5718, 0.0
    %6306 = vadd.xlane.f32.xlu0 %v6305
    %v6307 = vpop.xlane.xlu0 %6306
    %v6308 = vsel %vm5905, %v5719, 0.0
    %6309 = vadd.xlane.f32.xlu0 %v6308
    %v6310 = vpop.xlane.xlu0 %6309
    %v6311 = vsel %vm5905, %v5720, 0.0
    %6312 = vadd.xlane.f32.xlu0 %v6311
    %v6313 = vpop.xlane.xlu0 %6312
    %v6314 = vsel %vm5905, %v5721, 0.0
    %6315 = vadd.xlane.f32.xlu0 %v6314
    %v6316 = vpop.xlane.xlu0 %6315
    %v6317 = vsel %vm5905, %v5722, 0.0
    %6318 = vadd.xlane.f32.xlu0 %v6317
    %v6319 = vpop.xlane.xlu0 %6318
    %v6320 = vsel %vm5905, %v5723, 0.0
    %6321 = vadd.xlane.f32.xlu0 %v6320
    %v6322 = vpop.xlane.xlu0 %6321
    %v6323 = vsel %vm5905, %v5724, 0.0
    %6324 = vadd.xlane.f32.xlu0 %v6323
    %v6325 = vpop.xlane.xlu0 %6324
    %v6326 = vsel %vm5905, %v5725, 0.0
    %6327 = vadd.xlane.f32.xlu0 %v6326
    %v6328 = vpop.xlane.xlu0 %6327
    %v6329 = vsel %vm5905, %v5726, 0.0
    %6330 = vadd.xlane.f32.xlu0 %v6329
    %v6331 = vpop.xlane.xlu0 %6330
    %v6332 = vsel %vm5905, %v5727, 0.0
    %6333 = vadd.xlane.f32.xlu0 %v6332
    %v6334 = vpop.xlane.xlu0 %6333
    %v6335 = vsel %vm5905, %v5728, 0.0
    %6336 = vadd.xlane.f32.xlu0 %v6335
    %v6337 = vpop.xlane.xlu0 %6336
    %v6338 = vsel %vm5905, %v5729, 0.0
    %6339 = vadd.xlane.f32.xlu0 %v6338
    %v6340 = vpop.xlane.xlu0 %6339
    %v6341 = vsel %vm5905, %v5730, 0.0
    %6342 = vadd.xlane.f32.xlu0 %v6341
    %v6343 = vpop.xlane.xlu0 %6342
    %v6344 = vsel %vm5905, %v5731, 0.0
    %6345 = vadd.xlane.f32.xlu0 %v6344
    %v6346 = vpop.xlane.xlu0 %6345
    %v6347 = vsel %vm5905, %v5732, 0.0
    %6348 = vadd.xlane.f32.xlu0 %v6347
    %v6349 = vpop.xlane.xlu0 %6348
    %v6350 = vsel %vm5905, %v5733, 0.0
    %6351 = vadd.xlane.f32.xlu0 %v6350
    %v6352 = vpop.xlane.xlu0 %6351
    %v6353 = vsel %vm5905, %v5734, 0.0
    %6354 = vadd.xlane.f32.xlu0 %v6353
    %v6355 = vpop.xlane.xlu0 %6354
    %v6356 = vsel %vm5905, %v5735, 0.0
    %6357 = vadd.xlane.f32.xlu0 %v6356
    %v6358 = vpop.xlane.xlu0 %6357
    %v6359 = vsel %vm5905, %v5736, 0.0
    %6360 = vadd.xlane.f32.xlu0 %v6359
    %v6361 = vpop.xlane.xlu0 %6360
    %v6362 = vsel %vm5905, %v5737, 0.0
    %6363 = vadd.xlane.f32.xlu0 %v6362
    %v6364 = vpop.xlane.xlu0 %6363
    %v6365 = vsel %vm5905, %v5738, 0.0
    %6366 = vadd.xlane.f32.xlu0 %v6365
    %v6367 = vpop.xlane.xlu0 %6366
    %v6368 = vsel %vm5905, %v5739, 0.0
    %6369 = vadd.xlane.f32.xlu0 %v6368
    %v6370 = vpop.xlane.xlu0 %6369
    %v6371 = vsel %vm5905, %v5740, 0.0
    %6372 = vadd.xlane.f32.xlu0 %v6371
    %v6373 = vpop.xlane.xlu0 %6372
    %v6374 = vsel %vm5905, %v5741, 0.0
    %6375 = vadd.xlane.f32.xlu0 %v6374
    %v6376 = vpop.xlane.xlu0 %6375
    %v6377 = vsel %vm5905, %v5742, 0.0
    %6378 = vadd.xlane.f32.xlu0 %v6377
    %v6379 = vpop.xlane.xlu0 %6378
    %v6380 = vsel %vm5905, %v5743, 0.0
    %6381 = vadd.xlane.f32.xlu0 %v6380
    %v6382 = vpop.xlane.xlu0 %6381
    %v6383 = vsel %vm5905, %v5744, 0.0
    %6384 = vadd.xlane.f32.xlu0 %v6383
    %v6385 = vpop.xlane.xlu0 %6384
    %v6386 = vsel %vm5905, %v5745, 0.0
    %6387 = vadd.xlane.f32.xlu0 %v6386
    %v6388 = vpop.xlane.xlu0 %6387
    %v6389 = vsel %vm5905, %v5746, 0.0
    %6390 = vadd.xlane.f32.xlu0 %v6389
    %v6391 = vpop.xlane.xlu0 %6390
    %v6392 = vsel %vm5905, %v5747, 0.0
    %6393 = vadd.xlane.f32.xlu0 %v6392
    %v6394 = vpop.xlane.xlu0 %6393
    %v6395 = vsel %vm5905, %v5748, 0.0
    %6396 = vadd.xlane.f32.xlu0 %v6395
    %v6397 = vpop.xlane.xlu0 %6396
    %v6398 = vsel %vm5905, %v5749, 0.0
    %6399 = vadd.xlane.f32.xlu0 %v6398
    %v6400 = vpop.xlane.xlu0 %6399
    %v6401 = vsel %vm5905, %v5750, 0.0
    %6402 = vadd.xlane.f32.xlu0 %v6401
    %v6403 = vpop.xlane.xlu0 %6402
    %v6404 = vsel %vm5905, %v5751, 0.0
    %6405 = vadd.xlane.f32.xlu0 %v6404
    %v6406 = vpop.xlane.xlu0 %6405
    %v6407 = vsel %vm5905, %v5752, 0.0
    %6408 = vadd.xlane.f32.xlu0 %v6407
    %v6409 = vpop.xlane.xlu0 %6408
    %v6410 = vsel %vm5905, %v5753, 0.0
    %6411 = vadd.xlane.f32.xlu0 %v6410
    %v6412 = vpop.xlane.xlu0 %6411
    %v6413 = vsel %vm5905, %v5754, 0.0
    %6414 = vadd.xlane.f32.xlu0 %v6413
    %v6415 = vpop.xlane.xlu0 %6414
    %v6416 = vsel %vm5905, %v5755, 0.0
    %6417 = vadd.xlane.f32.xlu0 %v6416
    %v6418 = vpop.xlane.xlu0 %6417
    %v6419 = vsel %vm5905, %v5756, 0.0
    %6420 = vadd.xlane.f32.xlu0 %v6419
    %v6421 = vpop.xlane.xlu0 %6420
    %v6422 = vsel %vm5905, %v5757, 0.0
    %6423 = vadd.xlane.f32.xlu0 %v6422
    %v6424 = vpop.xlane.xlu0 %6423
    %v6425 = vsel %vm5905, %v5758, 0.0
    %6426 = vadd.xlane.f32.xlu0 %v6425
    %v6427 = vpop.xlane.xlu0 %6426
    %v6428 = vsel %vm5905, %v5759, 0.0
    %6429 = vadd.xlane.f32.xlu0 %v6428
    %v6430 = vpop.xlane.xlu0 %6429
    %v6431 = vsel %vm5905, %v5760, 0.0
    %6432 = vadd.xlane.f32.xlu0 %v6431
    %v6433 = vpop.xlane.xlu0 %6432
    %v6434 = vsel %vm5905, %v5761, 0.0
    %6435 = vadd.xlane.f32.xlu0 %v6434
    %v6436 = vpop.xlane.xlu0 %6435
    %v6437 = vsel %vm5905, %v5762, 0.0
    %6438 = vadd.xlane.f32.xlu0 %v6437
    %v6439 = vpop.xlane.xlu0 %6438
    %v6440 = vsel %vm5905, %v5763, 0.0
    %6441 = vadd.xlane.f32.xlu0 %v6440
    %v6442 = vpop.xlane.xlu0 %6441
    %v6443 = vsel %vm5905, %v5764, 0.0
    %6444 = vadd.xlane.f32.xlu0 %v6443
    %v6445 = vpop.xlane.xlu0 %6444
    %v6446 = vsel %vm5905, %v5765, 0.0
    %6447 = vadd.xlane.f32.xlu0 %v6446
    %v6448 = vpop.xlane.xlu0 %6447
    %v6449 = vsel %vm5905, %v5766, 0.0
    %6450 = vadd.xlane.f32.xlu0 %v6449
    %v6451 = vpop.xlane.xlu0 %6450
    %v6452 = vsel %vm5905, %v5767, 0.0
    %6453 = vadd.xlane.f32.xlu0 %v6452
    %v6454 = vpop.xlane.xlu0 %6453
    %v6455 = vsel %vm5905, %v5768, 0.0
    %6456 = vadd.xlane.f32.xlu0 %v6455
    %v6457 = vpop.xlane.xlu0 %6456
    %v6458 = vsel %vm5905, %v5769, 0.0
    %6459 = vadd.xlane.f32.xlu0 %v6458
    %v6460 = vpop.xlane.xlu0 %6459
    %v6461 = vsel %vm5905, %v5770, 0.0
    %6462 = vadd.xlane.f32.xlu0 %v6461
    %v6463 = vpop.xlane.xlu0 %6462
    %v6464 = vsel %vm5905, %v5771, 0.0
    %6465 = vadd.xlane.f32.xlu0 %v6464
    %v6466 = vpop.xlane.xlu0 %6465
    %v6467 = vsel %vm5905, %v5772, 0.0
    %6468 = vadd.xlane.f32.xlu0 %v6467
    %v6469 = vpop.xlane.xlu0 %6468
    %v6470 = vsel %vm5905, %v5773, 0.0
    %6471 = vadd.xlane.f32.xlu0 %v6470
    %v6472 = vpop.xlane.xlu0 %6471
    %v6473 = vsel %vm5905, %v5774, 0.0
    %6474 = vadd.xlane.f32.xlu0 %v6473
    %v6475 = vpop.xlane.xlu0 %6474
    %v6476 = vsel %vm5905, %v5775, 0.0
    %6477 = vadd.xlane.f32.xlu0 %v6476
    %v6478 = vpop.xlane.xlu0 %6477
    %v6479 = vsel %vm5905, %v5776, 0.0
    %6480 = vadd.xlane.f32.xlu0 %v6479
    %v6481 = vpop.xlane.xlu0 %6480
    %v6482 = vsel %vm5905, %v5777, 0.0
    %6483 = vadd.xlane.f32.xlu0 %v6482
    %v6484 = vpop.xlane.xlu0 %6483
    %v6485 = vsel %vm5905, %v5778, 0.0
    %6486 = vadd.xlane.f32.xlu0 %v6485
    %v6487 = vpop.xlane.xlu0 %6486
    %v6488 = vsel %vm5905, %v5779, 0.0
    %6489 = vadd.xlane.f32.xlu0 %v6488
    %v6490 = vpop.xlane.xlu0 %6489
    %v6491 = vsel %vm5905, %v5780, 0.0
    %6492 = vadd.xlane.f32.xlu0 %v6491
    %v6493 = vpop.xlane.xlu0 %6492
    %v6494 = vsel %vm5905, %v5781, 0.0
    %6495 = vadd.xlane.f32.xlu0 %v6494
    %v6496 = vpop.xlane.xlu0 %6495
    %v6497 = vsel %vm5905, %v5782, 0.0
    %6498 = vadd.xlane.f32.xlu0 %v6497
    %v6499 = vpop.xlane.xlu0 %6498
    %v6500 = vsel %vm5905, %v5783, 0.0
    %6501 = vadd.xlane.f32.xlu0 %v6500
    %v6502 = vpop.xlane.xlu0 %6501
    %v6503 = vsel %vm5905, %v5784, 0.0
    %6504 = vadd.xlane.f32.xlu0 %v6503
    %v6505 = vpop.xlane.xlu0 %6504
    %v6506 = vsel %vm5905, %v5785, 0.0
    %6507 = vadd.xlane.f32.xlu0 %v6506
    %v6508 = vpop.xlane.xlu0 %6507
    %v6509 = vsel %vm5905, %v5786, 0.0
    %6510 = vadd.xlane.f32.xlu0 %v6509
    %v6511 = vpop.xlane.xlu0 %6510
    %v6512 = vsel %vm5905, %v5787, 0.0
    %6513 = vadd.xlane.f32.xlu0 %v6512
    %v6514 = vpop.xlane.xlu0 %6513
    %v6515 = vsel %vm5905, %v5788, 0.0
    %6516 = vadd.xlane.f32.xlu0 %v6515
    %v6517 = vpop.xlane.xlu0 %6516
    %v6518 = vsel %vm5905, %v5789, 0.0
    %6519 = vadd.xlane.f32.xlu0 %v6518
    %v6520 = vpop.xlane.xlu0 %6519
    %v6521 = vsel %vm5905, %v5790, 0.0
    %6522 = vadd.xlane.f32.xlu0 %v6521
    %v6523 = vpop.xlane.xlu0 %6522
    %v6524 = vsel %vm5905, %v5791, 0.0
    %6525 = vadd.xlane.f32.xlu0 %v6524
    %v6526 = vpop.xlane.xlu0 %6525
    %v6527 = vsel %vm5905, %v5792, 0.0
    %6528 = vadd.xlane.f32.xlu0 %v6527
    %v6529 = vpop.xlane.xlu0 %6528
    %v6530 = vsel %vm5905, %v5793, 0.0
    %6531 = vadd.xlane.f32.xlu0 %v6530
    %v6532 = vpop.xlane.xlu0 %6531
    %v6533 = vsel %vm5905, %v5794, 0.0
    %6534 = vadd.xlane.f32.xlu0 %v6533
    %v6535 = vpop.xlane.xlu0 %6534
    %v6536 = vsel %vm5905, %v5795, 0.0
    %6537 = vadd.xlane.f32.xlu0 %v6536
    %v6538 = vpop.xlane.xlu0 %6537
    %v6539 = vsel %vm5905, %v5796, 0.0
    %6540 = vadd.xlane.f32.xlu0 %v6539
    %v6541 = vpop.xlane.xlu0 %6540
    %v6542 = vsel %vm5905, %v5797, 0.0
    %6543 = vadd.xlane.f32.xlu0 %v6542
    %v6544 = vpop.xlane.xlu0 %6543
    %v6545 = vsel %vm5905, %v5798, 0.0
    %6546 = vadd.xlane.f32.xlu0 %v6545
    %v6547 = vpop.xlane.xlu0 %6546
    %v6548 = vsel %vm5905, %v5799, 0.0
    %6549 = vadd.xlane.f32.xlu0 %v6548
    %v6550 = vpop.xlane.xlu0 %6549
    %v6551 = vsel %vm5905, %v5800, 0.0
    %6552 = vadd.xlane.f32.xlu0 %v6551
    %v6553 = vpop.xlane.xlu0 %6552
    %v6554 = vsel %vm5905, %v5801, 0.0
    %6555 = vadd.xlane.f32.xlu0 %v6554
    %v6556 = vpop.xlane.xlu0 %6555
    %v6557 = vsel %vm5905, %v5802, 0.0
    %6558 = vadd.xlane.f32.xlu0 %v6557
    %v6559 = vpop.xlane.xlu0 %6558
    %v6560 = vsel %vm5905, %v5803, 0.0
    %6561 = vadd.xlane.f32.xlu0 %v6560
    %v6562 = vpop.xlane.xlu0 %6561
    %v6563 = vsel %vm5905, %v5804, 0.0
    %6564 = vadd.xlane.f32.xlu0 %v6563
    %v6565 = vpop.xlane.xlu0 %6564
    %v6566 = vsel %vm5905, %v5805, 0.0
    %6567 = vadd.xlane.f32.xlu0 %v6566
    %v6568 = vpop.xlane.xlu0 %6567
    %v6569 = vsel %vm5905, %v5806, 0.0
    %6570 = vadd.xlane.f32.xlu0 %v6569
    %v6571 = vpop.xlane.xlu0 %6570
    %v6572 = vsel %vm5905, %v5807, 0.0
    %6573 = vadd.xlane.f32.xlu0 %v6572
    %v6574 = vpop.xlane.xlu0 %6573
    %v6575 = vsel %vm5905, %v5808, 0.0
    %6576 = vadd.xlane.f32.xlu0 %v6575
    %v6577 = vpop.xlane.xlu0 %6576
    %v6578 = vsel %vm5905, %v5809, 0.0
    %6579 = vadd.xlane.f32.xlu0 %v6578
    %v6580 = vpop.xlane.xlu0 %6579
    %v6581 = vsel %vm5905, %v5810, 0.0
    %6582 = vadd.xlane.f32.xlu0 %v6581
    %v6583 = vpop.xlane.xlu0 %6582
    %v6584 = vsel %vm5905, %v5811, 0.0
    %6585 = vadd.xlane.f32.xlu0 %v6584
    %v6586 = vpop.xlane.xlu0 %6585
    %v6587 = vsel %vm5905, %v5812, 0.0
    %6588 = vadd.xlane.f32.xlu0 %v6587
    %v6589 = vpop.xlane.xlu0 %6588
    %v6590 = vsel %vm5905, %v5813, 0.0
    %6591 = vadd.xlane.f32.xlu0 %v6590
    %v6592 = vpop.xlane.xlu0 %6591
    %v6593 = vsel %vm5905, %v5814, 0.0
    %6594 = vadd.xlane.f32.xlu0 %v6593
    %v6595 = vpop.xlane.xlu0 %6594
    %v6596 = vsel %vm5905, %v5815, 0.0
    %6597 = vadd.xlane.f32.xlu0 %v6596
    %v6598 = vpop.xlane.xlu0 %6597
    %v6599 = vsel %vm5905, %v5816, 0.0
    %6600 = vadd.xlane.f32.xlu0 %v6599
    %v6601 = vpop.xlane.xlu0 %6600
    %v6602 = vsel %vm5905, %v5817, 0.0
    %6603 = vadd.xlane.f32.xlu0 %v6602
    %v6604 = vpop.xlane.xlu0 %6603
    %v6605 = vsel %vm5905, %v5818, 0.0
    %6606 = vadd.xlane.f32.xlu0 %v6605
    %v6607 = vpop.xlane.xlu0 %6606
    %v6608 = vsel %vm5905, %v5819, 0.0
    %6609 = vadd.xlane.f32.xlu0 %v6608
    %v6610 = vpop.xlane.xlu0 %6609
    %v6611 = vsel %vm5905, %v5820, 0.0
    %6612 = vadd.xlane.f32.xlu0 %v6611
    %v6613 = vpop.xlane.xlu0 %6612
    %v6614 = vsel %vm5905, %v5821, 0.0
    %6615 = vadd.xlane.f32.xlu0 %v6614
    %v6616 = vpop.xlane.xlu0 %6615
    %v6617 = vsel %vm5905, %v5822, 0.0
    %6618 = vadd.xlane.f32.xlu0 %v6617
    %v6619 = vpop.xlane.xlu0 %6618
    %v6620 = vsel %vm5905, %v5823, 0.0
    %6621 = vadd.xlane.f32.xlu0 %v6620
    %v6622 = vpop.xlane.xlu0 %6621
    %v6623 = vsel %vm5905, %v5824, 0.0
    %6624 = vadd.xlane.f32.xlu0 %v6623
    %v6625 = vpop.xlane.xlu0 %6624
    %v6626 = vsel %vm5905, %v5825, 0.0
    %6627 = vadd.xlane.f32.xlu0 %v6626
    %v6628 = vpop.xlane.xlu0 %6627
    %v6629 = vsel %vm5905, %v5826, 0.0
    %6630 = vadd.xlane.f32.xlu0 %v6629
    %v6631 = vpop.xlane.xlu0 %6630
    %v6632 = vsel %vm5905, %v5827, 0.0
    %6633 = vadd.xlane.f32.xlu0 %v6632
    %v6634 = vpop.xlane.xlu0 %6633
    %v6635 = vsel %vm5905, %v5828, 0.0
    %6636 = vadd.xlane.f32.xlu0 %v6635
    %v6637 = vpop.xlane.xlu0 %6636
    %v6638 = vsel %vm5905, %v5829, 0.0
    %6639 = vadd.xlane.f32.xlu0 %v6638
    %v6640 = vpop.xlane.xlu0 %6639
    %v6641 = vsel %vm5905, %v5830, 0.0
    %6642 = vadd.xlane.f32.xlu0 %v6641
    %v6643 = vpop.xlane.xlu0 %6642
    %v6644 = vsel %vm5905, %v5831, 0.0
    %6645 = vadd.xlane.f32.xlu0 %v6644
    %v6646 = vpop.xlane.xlu0 %6645
    %v6647 = vsel %vm5905, %v5832, 0.0
    %6648 = vadd.xlane.f32.xlu0 %v6647
    %v6649 = vpop.xlane.xlu0 %6648
    %v6650 = vsel %vm5905, %v5833, 0.0
    %6651 = vadd.xlane.f32.xlu0 %v6650
    %v6652 = vpop.xlane.xlu0 %6651
    %v6653 = vsel %vm5905, %v5834, 0.0
    %6654 = vadd.xlane.f32.xlu0 %v6653
    %v6655 = vpop.xlane.xlu0 %6654
    %v6656 = vsel %vm5905, %v5835, 0.0
    %6657 = vadd.xlane.f32.xlu0 %v6656
    %v6658 = vpop.xlane.xlu0 %6657
    %v6659 = vsel %vm5905, %v5836, 0.0
    %6660 = vadd.xlane.f32.xlu0 %v6659
    %v6661 = vpop.xlane.xlu0 %6660
    %v6662 = vsel %vm5905, %v5837, 0.0
    %6663 = vadd.xlane.f32.xlu0 %v6662
    %v6664 = vpop.xlane.xlu0 %6663
    %v6665 = vsel %vm5905, %v5838, 0.0
    %6666 = vadd.xlane.f32.xlu0 %v6665
    %v6667 = vpop.xlane.xlu0 %6666
    %v6668 = vsel %vm5905, %v5839, 0.0
    %6669 = vadd.xlane.f32.xlu0 %v6668
    %v6670 = vpop.xlane.xlu0 %6669
    %v6671 = vsel %vm5905, %v5840, 0.0
    %6672 = vadd.xlane.f32.xlu0 %v6671
    %v6673 = vpop.xlane.xlu0 %6672
    %v6674 = vsel %vm5905, %v5841, 0.0
    %6675 = vadd.xlane.f32.xlu0 %v6674
    %v6676 = vpop.xlane.xlu0 %6675
    %v6677 = vsel %vm5905, %v5842, 0.0
    %6678 = vadd.xlane.f32.xlu0 %v6677
    %v6679 = vpop.xlane.xlu0 %6678
    %v6680 = vsel %vm5905, %v5843, 0.0
    %6681 = vadd.xlane.f32.xlu0 %v6680
    %v6682 = vpop.xlane.xlu0 %6681
    %v6683 = vsel %vm5905, %v5844, 0.0
    %6684 = vadd.xlane.f32.xlu0 %v6683
    %v6685 = vpop.xlane.xlu0 %6684
    %v6686 = vsel %vm5905, %v5845, 0.0
    %6687 = vadd.xlane.f32.xlu0 %v6686
    %v6688 = vpop.xlane.xlu0 %6687
    %v6689 = vsel %vm5905, %v5846, 0.0
    %6690 = vadd.xlane.f32.xlu0 %v6689
    %v6691 = vpop.xlane.xlu0 %6690
    %v6692 = vsel %vm5905, %v5847, 0.0
    %6693 = vadd.xlane.f32.xlu0 %v6692
    %v6694 = vpop.xlane.xlu0 %6693
    %v6695 = vsel %vm5905, %v5848, 0.0
    %6696 = vadd.xlane.f32.xlu0 %v6695
    %v6697 = vpop.xlane.xlu0 %6696
    %v6698 = vsel %vm5905, %v5849, 0.0
    %6699 = vadd.xlane.f32.xlu0 %v6698
    %v6700 = vpop.xlane.xlu0 %6699
    %v6701 = vsel %vm5905, %v5850, 0.0
    %6702 = vadd.xlane.f32.xlu0 %v6701
    %v6703 = vpop.xlane.xlu0 %6702
    %v6704 = vsel %vm5905, %v5851, 0.0
    %6705 = vadd.xlane.f32.xlu0 %v6704
    %v6706 = vpop.xlane.xlu0 %6705
    %v6707 = vsel %vm5905, %v5852, 0.0
    %6708 = vadd.xlane.f32.xlu0 %v6707
    %v6709 = vpop.xlane.xlu0 %6708
    %v6710 = vsel %vm5905, %v5853, 0.0
    %6711 = vadd.xlane.f32.xlu0 %v6710
    %v6712 = vpop.xlane.xlu0 %6711
    %v6713 = vsel %vm5905, %v5854, 0.0
    %6714 = vadd.xlane.f32.xlu0 %v6713
    %v6715 = vpop.xlane.xlu0 %6714
    %v6716 = vsel %vm5905, %v5855, 0.0
    %6717 = vadd.xlane.f32.xlu0 %v6716
    %v6718 = vpop.xlane.xlu0 %6717
    %v6719 = vsel %vm5905, %v5856, 0.0
    %6720 = vadd.xlane.f32.xlu0 %v6719
    %v6721 = vpop.xlane.xlu0 %6720
    %v6722 = vsel %vm5905, %v5857, 0.0
    %6723 = vadd.xlane.f32.xlu0 %v6722
    %v6724 = vpop.xlane.xlu0 %6723
    %v6725 = vsel %vm5905, %v5858, 0.0
    %6726 = vadd.xlane.f32.xlu0 %v6725
    %v6727 = vpop.xlane.xlu0 %6726
    %v6728 = vsel %vm5905, %v5859, 0.0
    %6729 = vadd.xlane.f32.xlu0 %v6728
    %v6730 = vpop.xlane.xlu0 %6729
    %v6731 = vsel %vm5905, %v5860, 0.0
    %6732 = vadd.xlane.f32.xlu0 %v6731
    %v6733 = vpop.xlane.xlu0 %6732
    %v6734 = vsel %vm5905, %v5861, 0.0
    %6735 = vadd.xlane.f32.xlu0 %v6734
    %v6736 = vpop.xlane.xlu0 %6735
    %v6737 = vsel %vm5905, %v5862, 0.0
    %6738 = vadd.xlane.f32.xlu0 %v6737
    %v6739 = vpop.xlane.xlu0 %6738
    %v6740 = vsel %vm5905, %v5863, 0.0
    %6741 = vadd.xlane.f32.xlu0 %v6740
    %v6742 = vpop.xlane.xlu0 %6741
    %v6743 = vsel %vm5905, %v5864, 0.0
    %6744 = vadd.xlane.f32.xlu0 %v6743
    %v6745 = vpop.xlane.xlu0 %6744
    %v6746 = vsel %vm5905, %v5865, 0.0
    %6747 = vadd.xlane.f32.xlu0 %v6746
    %v6748 = vpop.xlane.xlu0 %6747
    %v6749 = vsel %vm5905, %v5866, 0.0
    %6750 = vadd.xlane.f32.xlu0 %v6749
    %v6751 = vpop.xlane.xlu0 %6750
    %v6752 = vsel %vm5905, %v5867, 0.0
    %6753 = vadd.xlane.f32.xlu0 %v6752
    %v6754 = vpop.xlane.xlu0 %6753
    %v6755 = vsel %vm5905, %v5868, 0.0
    %6756 = vadd.xlane.f32.xlu0 %v6755
    %v6757 = vpop.xlane.xlu0 %6756
    %v6758 = vsel %vm5905, %v5869, 0.0
    %6759 = vadd.xlane.f32.xlu0 %v6758
    %v6760 = vpop.xlane.xlu0 %6759
    %v6761 = vsel %vm5905, %v5870, 0.0
    %6762 = vadd.xlane.f32.xlu0 %v6761
    %v6763 = vpop.xlane.xlu0 %6762
    %v6764 = vsel %vm5905, %v5871, 0.0
    %6765 = vadd.xlane.f32.xlu0 %v6764
    %v6766 = vpop.xlane.xlu0 %6765
    %v6767 = vsel %vm5905, %v5872, 0.0
    %6768 = vadd.xlane.f32.xlu0 %v6767
    %v6769 = vpop.xlane.xlu0 %6768
    %v6770 = vsel %vm5905, %v5873, 0.0
    %6771 = vadd.xlane.f32.xlu0 %v6770
    %v6772 = vpop.xlane.xlu0 %6771
    %v6773 = vsel %vm5905, %v5874, 0.0
    %6774 = vadd.xlane.f32.xlu0 %v6773
    %v6775 = vpop.xlane.xlu0 %6774
    %v6776 = vsel %vm5905, %v5875, 0.0
    %6777 = vadd.xlane.f32.xlu0 %v6776
    %v6778 = vpop.xlane.xlu0 %6777
    %v6779 = vsel %vm5905, %v5876, 0.0
    %6780 = vadd.xlane.f32.xlu0 %v6779
    %v6781 = vpop.xlane.xlu0 %6780
    %v6782 = vsel %vm5905, %v5877, 0.0
    %6783 = vadd.xlane.f32.xlu0 %v6782
    %v6784 = vpop.xlane.xlu0 %6783
    %v6785 = vsel %vm5905, %v5878, 0.0
    %6786 = vadd.xlane.f32.xlu0 %v6785
    %v6787 = vpop.xlane.xlu0 %6786
    %v6788 = vsel %vm5905, %v5879, 0.0
    %6789 = vadd.xlane.f32.xlu0 %v6788
    %v6790 = vpop.xlane.xlu0 %6789
    %v6791 = vsel %vm5905, %v5880, 0.0
    %6792 = vadd.xlane.f32.xlu0 %v6791
    %v6793 = vpop.xlane.xlu0 %6792
    %v6794 = vsel %vm5905, %v5881, 0.0
    %6795 = vadd.xlane.f32.xlu0 %v6794
    %v6796 = vpop.xlane.xlu0 %6795
    %v6797 = vsel %vm5905, %v5882, 0.0
    %6798 = vadd.xlane.f32.xlu0 %v6797
    %v6799 = vpop.xlane.xlu0 %6798
    %v6800 = vsel %vm5905, %v5883, 0.0
    %6801 = vadd.xlane.f32.xlu0 %v6800
    %v6802 = vpop.xlane.xlu0 %6801
    %v6803 = vsel %vm5905, %v5884, 0.0
    %6804 = vadd.xlane.f32.xlu0 %v6803
    %v6805 = vpop.xlane.xlu0 %6804
    %v6806 = vsel %vm5905, %v5885, 0.0
    %6807 = vadd.xlane.f32.xlu0 %v6806
    %v6808 = vpop.xlane.xlu0 %6807
    %v6809 = vsel %vm5905, %v5886, 0.0
    %6810 = vadd.xlane.f32.xlu0 %v6809
    %v6811 = vpop.xlane.xlu0 %6810
    %v6812 = vsel %vm5905, %v5887, 0.0
    %6813 = vadd.xlane.f32.xlu0 %v6812
    %v6814 = vpop.xlane.xlu0 %6813
    %v6815 = vsel %vm5905, %v5888, 0.0
    %6816 = vadd.xlane.f32.xlu0 %v6815
    %v6817 = vpop.xlane.xlu0 %6816
    %v6818 = vsel %vm5905, %v5889, 0.0
    %6819 = vadd.xlane.f32.xlu0 %v6818
    %v6820 = vpop.xlane.xlu0 %6819
    %v6821 = vsel %vm5905, %v5890, 0.0
    %6822 = vadd.xlane.f32.xlu0 %v6821
    %v6823 = vpop.xlane.xlu0 %6822
    %v6824 = vsel %vm5905, %v5891, 0.0
    %6825 = vadd.xlane.f32.xlu0 %v6824
    %v6826 = vpop.xlane.xlu0 %6825
    %v6827 = vsel %vm5905, %v5892, 0.0
    %6828 = vadd.xlane.f32.xlu0 %v6827
    %v6829 = vpop.xlane.xlu0 %6828
    %v6830 = vsel %vm5905, %v5893, 0.0
    %6831 = vadd.xlane.f32.xlu0 %v6830
    %v6832 = vpop.xlane.xlu0 %6831
    %v6833 = vsel %vm5905, %v5894, 0.0
    %6834 = vadd.xlane.f32.xlu0 %v6833
    %v6835 = vpop.xlane.xlu0 %6834
    %v6836 = vsel %vm5905, %v5895, 0.0
    %6837 = vadd.xlane.f32.xlu0 %v6836
    %v6838 = vpop.xlane.xlu0 %6837
    %v6839 = vsel %vm5905, %v5896, 0.0
    %6840 = vadd.xlane.f32.xlu0 %v6839
    %v6841 = vpop.xlane.xlu0 %6840
    %v6842 = vsel %vm5905, %v5897, 0.0
    %6843 = vadd.xlane.f32.xlu0 %v6842
    %v6844 = vpop.xlane.xlu0 %6843
    %v6845 = vsel %vm5905, %v5898, 0.0
    %6846 = vadd.xlane.f32.xlu0 %v6845
    %v6847 = vpop.xlane.xlu0 %6846
    %v6848 = vsel %vm5905, %v5899, 0.0
    %6849 = vadd.xlane.f32.xlu0 %v6848
    %v6850 = vpop.xlane.xlu0 %6849
    %v6851 = vsel %vm5905, %v5900, 0.0
    %6852 = vadd.xlane.f32.xlu0 %v6851
    %v6853 = vpop.xlane.xlu0 %6852
    %v6854 = vsel %vm5905, %v5901, 0.0
    %6855 = vadd.xlane.f32.xlu0 %v6854
    %v6856 = vpop.xlane.xlu0 %6855
    %v6857 = vsel %vm5905, %v5902, 0.0
    %6858 = vadd.xlane.f32.xlu0 %v6857
    %v6859 = vpop.xlane.xlu0 %6858
    %v6860 = vsel %vm5905, %v5903, 0.0
    %6861 = vadd.xlane.f32.xlu0 %v6860
    %v6862 = vpop.xlane.xlu0 %6861
    %v6863 = vsel %vm5905, %v5904, 0.0
    %6864 = vadd.xlane.f32.xlu0 %v6863
    %v6865 = vpop.xlane.xlu0 %6864
    %s6866 = sld [smem:[#allocation2]]
    %v6867 = vstv %s6866
    %v6868 = vadd.f32 %v5908, %v6867
    %v6869 = vadd.f32 %v5911, %v6867
    %v6870 = vadd.f32 %v5914, %v6867
    %v6871 = vadd.f32 %v5917, %v6867
    %v6872 = vadd.f32 %v5920, %v6867
    %v6873 = vadd.f32 %v5923, %v6867
    %v6874 = vadd.f32 %v5926, %v6867
    %v6875 = vadd.f32 %v5929, %v6867
    %v6876 = vadd.f32 %v5932, %v6867
    %v6877 = vadd.f32 %v5935, %v6867
    %v6878 = vadd.f32 %v5938, %v6867
    %v6879 = vadd.f32 %v5941, %v6867
    %v6880 = vadd.f32 %v5944, %v6867
    %v6881 = vadd.f32 %v5947, %v6867
    %v6882 = vadd.f32 %v5950, %v6867
    %v6883 = vadd.f32 %v5953, %v6867
    %v6884 = vadd.f32 %v5956, %v6867
    %v6885 = vadd.f32 %v5959, %v6867
    %v6886 = vadd.f32 %v5962, %v6867
    %v6887 = vadd.f32 %v5965, %v6867
    %v6888 = vadd.f32 %v5968, %v6867
    %v6889 = vadd.f32 %v5971, %v6867
    %v6890 = vadd.f32 %v5974, %v6867
    %v6891 = vadd.f32 %v5977, %v6867
    %v6892 = vadd.f32 %v5980, %v6867
    %v6893 = vadd.f32 %v5983, %v6867
    %v6894 = vadd.f32 %v5986, %v6867
    %v6895 = vadd.f32 %v5989, %v6867
    %v6896 = vadd.f32 %v5992, %v6867
    %v6897 = vadd.f32 %v5995, %v6867
    %v6898 = vadd.f32 %v5998, %v6867
    %v6899 = vadd.f32 %v6001, %v6867
    %v6900 = vadd.f32 %v6004, %v6867
    %v6901 = vadd.f32 %v6007, %v6867
    %v6902 = vadd.f32 %v6010, %v6867
    %v6903 = vadd.f32 %v6013, %v6867
    %v6904 = vadd.f32 %v6016, %v6867
    %v6905 = vadd.f32 %v6019, %v6867
    %v6906 = vadd.f32 %v6022, %v6867
    %v6907 = vadd.f32 %v6025, %v6867
    %v6908 = vadd.f32 %v6028, %v6867
    %v6909 = vadd.f32 %v6031, %v6867
    %v6910 = vadd.f32 %v6034, %v6867
    %v6911 = vadd.f32 %v6037, %v6867
    %v6912 = vadd.f32 %v6040, %v6867
    %v6913 = vadd.f32 %v6043, %v6867
    %v6914 = vadd.f32 %v6046, %v6867
    %v6915 = vadd.f32 %v6049, %v6867
    %v6916 = vadd.f32 %v6052, %v6867
    %v6917 = vadd.f32 %v6055, %v6867
    %v6918 = vadd.f32 %v6058, %v6867
    %v6919 = vadd.f32 %v6061, %v6867
    %v6920 = vadd.f32 %v6064, %v6867
    %v6921 = vadd.f32 %v6067, %v6867
    %v6922 = vadd.f32 %v6070, %v6867
    %v6923 = vadd.f32 %v6073, %v6867
    %v6924 = vadd.f32 %v6076, %v6867
    %v6925 = vadd.f32 %v6079, %v6867
    %v6926 = vadd.f32 %v6082, %v6867
    %v6927 = vadd.f32 %v6085, %v6867
    %v6928 = vadd.f32 %v6088, %v6867
    %v6929 = vadd.f32 %v6091, %v6867
    %v6930 = vadd.f32 %v6094, %v6867
    %v6931 = vadd.f32 %v6097, %v6867
    %v6932 = vadd.f32 %v6100, %v6867
    %v6933 = vadd.f32 %v6103, %v6867
    %v6934 = vadd.f32 %v6106, %v6867
    %v6935 = vadd.f32 %v6109, %v6867
    %v6936 = vadd.f32 %v6112, %v6867
    %v6937 = vadd.f32 %v6115, %v6867
    %v6938 = vadd.f32 %v6118, %v6867
    %v6939 = vadd.f32 %v6121, %v6867
    %v6940 = vadd.f32 %v6124, %v6867
    %v6941 = vadd.f32 %v6127, %v6867
    %v6942 = vadd.f32 %v6130, %v6867
    %v6943 = vadd.f32 %v6133, %v6867
    %v6944 = vadd.f32 %v6136, %v6867
    %v6945 = vadd.f32 %v6139, %v6867
    %v6946 = vadd.f32 %v6142, %v6867
    %v6947 = vadd.f32 %v6145, %v6867
    %v6948 = vadd.f32 %v6148, %v6867
    %v6949 = vadd.f32 %v6151, %v6867
    %v6950 = vadd.f32 %v6154, %v6867
    %v6951 = vadd.f32 %v6157, %v6867
    %v6952 = vadd.f32 %v6160, %v6867
    %v6953 = vadd.f32 %v6163, %v6867
    %v6954 = vadd.f32 %v6166, %v6867
    %v6955 = vadd.f32 %v6169, %v6867
    %v6956 = vadd.f32 %v6172, %v6867
    %v6957 = vadd.f32 %v6175, %v6867
    %v6958 = vadd.f32 %v6178, %v6867
    %v6959 = vadd.f32 %v6181, %v6867
    %v6960 = vadd.f32 %v6184, %v6867
    %v6961 = vadd.f32 %v6187, %v6867
    %v6962 = vadd.f32 %v6190, %v6867
    %v6963 = vadd.f32 %v6193, %v6867
    %v6964 = vadd.f32 %v6196, %v6867
    %v6965 = vadd.f32 %v6199, %v6867
    %v6966 = vadd.f32 %v6202, %v6867
    %v6967 = vadd.f32 %v6205, %v6867
    %v6968 = vadd.f32 %v6208, %v6867
    %v6969 = vadd.f32 %v6211, %v6867
    %v6970 = vadd.f32 %v6214, %v6867
    %v6971 = vadd.f32 %v6217, %v6867
    %v6972 = vadd.f32 %v6220, %v6867
    %v6973 = vadd.f32 %v6223, %v6867
    %v6974 = vadd.f32 %v6226, %v6867
    %v6975 = vadd.f32 %v6229, %v6867
    %v6976 = vadd.f32 %v6232, %v6867
    %v6977 = vadd.f32 %v6235, %v6867
    %v6978 = vadd.f32 %v6238, %v6867
    %v6979 = vadd.f32 %v6241, %v6867
    %v6980 = vadd.f32 %v6244, %v6867
    %v6981 = vadd.f32 %v6247, %v6867
    %v6982 = vadd.f32 %v6250, %v6867
    %v6983 = vadd.f32 %v6253, %v6867
    %v6984 = vadd.f32 %v6256, %v6867
    %v6985 = vadd.f32 %v6259, %v6867
    %v6986 = vadd.f32 %v6262, %v6867
    %v6987 = vadd.f32 %v6265, %v6867
    %v6988 = vadd.f32 %v6268, %v6867
    %v6989 = vadd.f32 %v6271, %v6867
    %v6990 = vadd.f32 %v6274, %v6867
    %v6991 = vadd.f32 %v6277, %v6867
    %v6992 = vadd.f32 %v6280, %v6867
    %v6993 = vadd.f32 %v6283, %v6867
    %v6994 = vadd.f32 %v6286, %v6867
    %v6995 = vadd.f32 %v6289, %v6867
    %v6996 = vadd.f32 %v6292, %v6867
    %v6997 = vadd.f32 %v6295, %v6867
    %v6998 = vadd.f32 %v6298, %v6867
    %v6999 = vadd.f32 %v6301, %v6867
    %v7000 = vadd.f32 %v6304, %v6867
    %v7001 = vadd.f32 %v6307, %v6867
    %v7002 = vadd.f32 %v6310, %v6867
    %v7003 = vadd.f32 %v6313, %v6867
    %v7004 = vadd.f32 %v6316, %v6867
    %v7005 = vadd.f32 %v6319, %v6867
    %v7006 = vadd.f32 %v6322, %v6867
    %v7007 = vadd.f32 %v6325, %v6867
    %v7008 = vadd.f32 %v6328, %v6867
    %v7009 = vadd.f32 %v6331, %v6867
    %v7010 = vadd.f32 %v6334, %v6867
    %v7011 = vadd.f32 %v6337, %v6867
    %v7012 = vadd.f32 %v6340, %v6867
    %v7013 = vadd.f32 %v6343, %v6867
    %v7014 = vadd.f32 %v6346, %v6867
    %v7015 = vadd.f32 %v6349, %v6867
    %v7016 = vadd.f32 %v6352, %v6867
    %v7017 = vadd.f32 %v6355, %v6867
    %v7018 = vadd.f32 %v6358, %v6867
    %v7019 = vadd.f32 %v6361, %v6867
    %v7020 = vadd.f32 %v6364, %v6867
    %v7021 = vadd.f32 %v6367, %v6867
    %v7022 = vadd.f32 %v6370, %v6867
    %v7023 = vadd.f32 %v6373, %v6867
    %v7024 = vadd.f32 %v6376, %v6867
    %v7025 = vadd.f32 %v6379, %v6867
    %v7026 = vadd.f32 %v6382, %v6867
    %v7027 = vadd.f32 %v6385, %v6867
    %v7028 = vadd.f32 %v6388, %v6867
    %v7029 = vadd.f32 %v6391, %v6867
    %v7030 = vadd.f32 %v6394, %v6867
    %v7031 = vadd.f32 %v6397, %v6867
    %v7032 = vadd.f32 %v6400, %v6867
    %v7033 = vadd.f32 %v6403, %v6867
    %v7034 = vadd.f32 %v6406, %v6867
    %v7035 = vadd.f32 %v6409, %v6867
    %v7036 = vadd.f32 %v6412, %v6867
    %v7037 = vadd.f32 %v6415, %v6867
    %v7038 = vadd.f32 %v6418, %v6867
    %v7039 = vadd.f32 %v6421, %v6867
    %v7040 = vadd.f32 %v6424, %v6867
    %v7041 = vadd.f32 %v6427, %v6867
    %v7042 = vadd.f32 %v6430, %v6867
    %v7043 = vadd.f32 %v6433, %v6867
    %v7044 = vadd.f32 %v6436, %v6867
    %v7045 = vadd.f32 %v6439, %v6867
    %v7046 = vadd.f32 %v6442, %v6867
    %v7047 = vadd.f32 %v6445, %v6867
    %v7048 = vadd.f32 %v6448, %v6867
    %v7049 = vadd.f32 %v6451, %v6867
    %v7050 = vadd.f32 %v6454, %v6867
    %v7051 = vadd.f32 %v6457, %v6867
    %v7052 = vadd.f32 %v6460, %v6867
    %v7053 = vadd.f32 %v6463, %v6867
    %v7054 = vadd.f32 %v6466, %v6867
    %v7055 = vadd.f32 %v6469, %v6867
    %v7056 = vadd.f32 %v6472, %v6867
    %v7057 = vadd.f32 %v6475, %v6867
    %v7058 = vadd.f32 %v6478, %v6867
    %v7059 = vadd.f32 %v6481, %v6867
    %v7060 = vadd.f32 %v6484, %v6867
    %v7061 = vadd.f32 %v6487, %v6867
    %v7062 = vadd.f32 %v6490, %v6867
    %v7063 = vadd.f32 %v6493, %v6867
    %v7064 = vadd.f32 %v6496, %v6867
    %v7065 = vadd.f32 %v6499, %v6867
    %v7066 = vadd.f32 %v6502, %v6867
    %v7067 = vadd.f32 %v6505, %v6867
    %v7068 = vadd.f32 %v6508, %v6867
    %v7069 = vadd.f32 %v6511, %v6867
    %v7070 = vadd.f32 %v6514, %v6867
    %v7071 = vadd.f32 %v6517, %v6867
    %v7072 = vadd.f32 %v6520, %v6867
    %v7073 = vadd.f32 %v6523, %v6867
    %v7074 = vadd.f32 %v6526, %v6867
    %v7075 = vadd.f32 %v6529, %v6867
    %v7076 = vadd.f32 %v6532, %v6867
    %v7077 = vadd.f32 %v6535, %v6867
    %v7078 = vadd.f32 %v6538, %v6867
    %v7079 = vadd.f32 %v6541, %v6867
    %v7080 = vadd.f32 %v6544, %v6867
    %v7081 = vadd.f32 %v6547, %v6867
    %v7082 = vadd.f32 %v6550, %v6867
    %v7083 = vadd.f32 %v6553, %v6867
    %v7084 = vadd.f32 %v6556, %v6867
    %v7085 = vadd.f32 %v6559, %v6867
    %v7086 = vadd.f32 %v6562, %v6867
    %v7087 = vadd.f32 %v6565, %v6867
    %v7088 = vadd.f32 %v6568, %v6867
    %v7089 = vadd.f32 %v6571, %v6867
    %v7090 = vadd.f32 %v6574, %v6867
    %v7091 = vadd.f32 %v6577, %v6867
    %v7092 = vadd.f32 %v6580, %v6867
    %v7093 = vadd.f32 %v6583, %v6867
    %v7094 = vadd.f32 %v6586, %v6867
    %v7095 = vadd.f32 %v6589, %v6867
    %v7096 = vadd.f32 %v6592, %v6867
    %v7097 = vadd.f32 %v6595, %v6867
    %v7098 = vadd.f32 %v6598, %v6867
    %v7099 = vadd.f32 %v6601, %v6867
    %v7100 = vadd.f32 %v6604, %v6867
    %v7101 = vadd.f32 %v6607, %v6867
    %v7102 = vadd.f32 %v6610, %v6867
    %v7103 = vadd.f32 %v6613, %v6867
    %v7104 = vadd.f32 %v6616, %v6867
    %v7105 = vadd.f32 %v6619, %v6867
    %v7106 = vadd.f32 %v6622, %v6867
    %v7107 = vadd.f32 %v6625, %v6867
    %v7108 = vadd.f32 %v6628, %v6867
    %v7109 = vadd.f32 %v6631, %v6867
    %v7110 = vadd.f32 %v6634, %v6867
    %v7111 = vadd.f32 %v6637, %v6867
    %v7112 = vadd.f32 %v6640, %v6867
    %v7113 = vadd.f32 %v6643, %v6867
    %v7114 = vadd.f32 %v6646, %v6867
    %v7115 = vadd.f32 %v6649, %v6867
    %v7116 = vadd.f32 %v6652, %v6867
    %v7117 = vadd.f32 %v6655, %v6867
    %v7118 = vadd.f32 %v6658, %v6867
    %v7119 = vadd.f32 %v6661, %v6867
    %v7120 = vadd.f32 %v6664, %v6867
    %v7121 = vadd.f32 %v6667, %v6867
    %v7122 = vadd.f32 %v6670, %v6867
    %v7123 = vadd.f32 %v6673, %v6867
    %v7124 = vadd.f32 %v6676, %v6867
    %v7125 = vadd.f32 %v6679, %v6867
    %v7126 = vadd.f32 %v6682, %v6867
    %v7127 = vadd.f32 %v6685, %v6867
    %v7128 = vadd.f32 %v6688, %v6867
    %v7129 = vadd.f32 %v6691, %v6867
    %v7130 = vadd.f32 %v6694, %v6867
    %v7131 = vadd.f32 %v6697, %v6867
    %v7132 = vadd.f32 %v6700, %v6867
    %v7133 = vadd.f32 %v6703, %v6867
    %v7134 = vadd.f32 %v6706, %v6867
    %v7135 = vadd.f32 %v6709, %v6867
    %v7136 = vadd.f32 %v6712, %v6867
    %v7137 = vadd.f32 %v6715, %v6867
    %v7138 = vadd.f32 %v6718, %v6867
    %v7139 = vadd.f32 %v6721, %v6867
    %v7140 = vadd.f32 %v6724, %v6867
    %v7141 = vadd.f32 %v6727, %v6867
    %v7142 = vadd.f32 %v6730, %v6867
    %v7143 = vadd.f32 %v6733, %v6867
    %v7144 = vadd.f32 %v6736, %v6867
    %v7145 = vadd.f32 %v6739, %v6867
    %v7146 = vadd.f32 %v6742, %v6867
    %v7147 = vadd.f32 %v6745, %v6867
    %v7148 = vadd.f32 %v6748, %v6867
    %v7149 = vadd.f32 %v6751, %v6867
    %v7150 = vadd.f32 %v6754, %v6867
    %v7151 = vadd.f32 %v6757, %v6867
    %v7152 = vadd.f32 %v6760, %v6867
    %v7153 = vadd.f32 %v6763, %v6867
    %v7154 = vadd.f32 %v6766, %v6867
    %v7155 = vadd.f32 %v6769, %v6867
    %v7156 = vadd.f32 %v6772, %v6867
    %v7157 = vadd.f32 %v6775, %v6867
    %v7158 = vadd.f32 %v6778, %v6867
    %v7159 = vadd.f32 %v6781, %v6867
    %v7160 = vadd.f32 %v6784, %v6867
    %v7161 = vadd.f32 %v6787, %v6867
    %v7162 = vadd.f32 %v6790, %v6867
    %v7163 = vadd.f32 %v6793, %v6867
    %v7164 = vadd.f32 %v6796, %v6867
    %v7165 = vadd.f32 %v6799, %v6867
    %v7166 = vadd.f32 %v6802, %v6867
    %v7167 = vadd.f32 %v6805, %v6867
    %v7168 = vadd.f32 %v6808, %v6867
    %v7169 = vadd.f32 %v6811, %v6867
    %v7170 = vadd.f32 %v6814, %v6867
    %v7171 = vadd.f32 %v6817, %v6867
    %v7172 = vadd.f32 %v6820, %v6867
    %v7173 = vadd.f32 %v6823, %v6867
    %v7174 = vadd.f32 %v6826, %v6867
    %v7175 = vadd.f32 %v6829, %v6867
    %v7176 = vadd.f32 %v6832, %v6867
    %v7177 = vadd.f32 %v6835, %v6867
    %v7178 = vadd.f32 %v6838, %v6867
    %v7179 = vadd.f32 %v6841, %v6867
    %v7180 = vadd.f32 %v6844, %v6867
    %v7181 = vadd.f32 %v6847, %v6867
    %v7182 = vadd.f32 %v6850, %v6867
    %v7183 = vadd.f32 %v6853, %v6867
    %v7184 = vadd.f32 %v6856, %v6867
    %v7185 = vadd.f32 %v6859, %v6867
    %v7186 = vadd.f32 %v6862, %v6867
    %v7187 = vadd.f32 %v6865, %v6867
    %v7508 = vlaneseq
    %v7509 = vand.u32 %v7508, 127
    %v7510 = vlaneseq
    %v7511 = vshrl.u32 %v7510, 7
    %v7512 = vsub.s32 %v7509, %v7511
    %v7513 = vrot.slane %v6868, %v7512
    %v7514 = vadd.s32 %v7509, 4294967288
    %v7515 = vlaneseq
    %v7516 = vshrl.u32 %v7515, 7
    %v7517 = vsub.s32 %v7514, %v7516
    %v7518 = vrot.slane %v6869, %v7517
    %vm7519 = vcmask 130112
    %v7520 = vsel %vm7519, %v7518, %v7513
    %v7521 = vadd.s32 %v7509, 4294967280
    %v7522 = vlaneseq
    %v7523 = vshrl.u32 %v7522, 7
    %v7524 = vsub.s32 %v7521, %v7523
    %v7525 = vrot.slane %v6870, %v7524
    %vm7526 = vcmask 195712
    %v7527 = vsel %vm7526, %v7525, %v7520
    %v7528 = vadd.s32 %v7509, 4294967272
    %v7529 = vlaneseq
    %v7530 = vshrl.u32 %v7529, 7
    %v7531 = vsub.s32 %v7528, %v7530
    %v7532 = vrot.slane %v6871, %v7531
    %vm7533 = vcmask 261312
    %v7534 = vsel %vm7533, %v7532, %v7527
    %v7535 = vadd.s32 %v7509, 4294967264
    %v7536 = vlaneseq
    %v7537 = vshrl.u32 %v7536, 7
    %v7538 = vsub.s32 %v7535, %v7537
    %v7539 = vrot.slane %v6872, %v7538
    %vm7540 = vcmask 326912
    %v7541 = vsel %vm7540, %v7539, %v7534
    %v7542 = vadd.s32 %v7509, 4294967256
    %v7543 = vlaneseq
    %v7544 = vshrl.u32 %v7543, 7
    %v7545 = vsub.s32 %v7542, %v7544
    %v7546 = vrot.slane %v6873, %v7545
    %vm7547 = vcmask 392512
    %v7548 = vsel %vm7547, %v7546, %v7541
    %v7549 = vadd.s32 %v7509, 4294967248
    %v7550 = vlaneseq
    %v7551 = vshrl.u32 %v7550, 7
    %v7552 = vsub.s32 %v7549, %v7551
    %v7553 = vrot.slane %v6874, %v7552
    %vm7554 = vcmask 458112
    %v7555 = vsel %vm7554, %v7553, %v7548
    %v7556 = vadd.s32 %v7509, 4294967240
    %v7557 = vlaneseq
    %v7558 = vshrl.u32 %v7557, 7
    %v7559 = vsub.s32 %v7556, %v7558
    %v7560 = vrot.slane %v6875, %v7559
    %vm7561 = vcmask 523712
    %v7562 = vsel %vm7561, %v7560, %v7555
    %v7563 = vadd.s32 %v7509, 4294967232
    %v7564 = vlaneseq
    %v7565 = vshrl.u32 %v7564, 7
    %v7566 = vsub.s32 %v7563, %v7565
    %v7567 = vrot.slane %v6876, %v7566
    %vm7568 = vcmask 589312
    %v7569 = vsel %vm7568, %v7567, %v7562
    %v7570 = vadd.s32 %v7509, 4294967224
    %v7571 = vlaneseq
    %v7572 = vshrl.u32 %v7571, 7
    %v7573 = vsub.s32 %v7570, %v7572
    %v7574 = vrot.slane %v6877, %v7573
    %vm7575 = vcmask 654912
    %v7576 = vsel %vm7575, %v7574, %v7569
    %v7577 = vadd.s32 %v7509, 4294967216
    %v7578 = vlaneseq
    %v7579 = vshrl.u32 %v7578, 7
    %v7580 = vsub.s32 %v7577, %v7579
    %v7581 = vrot.slane %v6878, %v7580
    %vm7582 = vcmask 720512
    %v7583 = vsel %vm7582, %v7581, %v7576
    %v7584 = vadd.s32 %v7509, 4294967208
    %v7585 = vlaneseq
    %v7586 = vshrl.u32 %v7585, 7
    %v7587 = vsub.s32 %v7584, %v7586
    %v7588 = vrot.slane %v6879, %v7587
    %vm7589 = vcmask 786112
    %v7590 = vsel %vm7589, %v7588, %v7583
    %v7591 = vadd.s32 %v7509, 4294967200
    %v7592 = vlaneseq
    %v7593 = vshrl.u32 %v7592, 7
    %v7594 = vsub.s32 %v7591, %v7593
    %v7595 = vrot.slane %v6880, %v7594
    %vm7596 = vcmask 851712
    %v7597 = vsel %vm7596, %v7595, %v7590
    %v7598 = vadd.s32 %v7509, 4294967192
    %v7599 = vlaneseq
    %v7600 = vshrl.u32 %v7599, 7
    %v7601 = vsub.s32 %v7598, %v7600
    %v7602 = vrot.slane %v6881, %v7601
    %vm7603 = vcmask 917312
    %v7604 = vsel %vm7603, %v7602, %v7597
    %v7605 = vadd.s32 %v7509, 4294967184
    %v7606 = vlaneseq
    %v7607 = vshrl.u32 %v7606, 7
    %v7608 = vsub.s32 %v7605, %v7607
    %v7609 = vrot.slane %v6882, %v7608
    %vm7610 = vcmask 982912
    %v7611 = vsel %vm7610, %v7609, %v7604
    %v7612 = vadd.s32 %v7509, 4294967176
    %v7613 = vlaneseq
    %v7614 = vshrl.u32 %v7613, 7
    %v7615 = vsub.s32 %v7612, %v7614
    %v7616 = vrot.slane %v6883, %v7615
    %vm7617 = vcmask 1048512
    %v7618 = vsel %vm7617, %v7616, %v7611
    %v7619 = vlaneseq
    %v7620 = vshrl.u32 %v7619, 7
    %v7621 = vsub.s32 %v7509, %v7620
    %v7622 = vrot.slane %v6884, %v7621
    %v7623 = vlaneseq
    %v7624 = vshrl.u32 %v7623, 7
    %v7625 = vsub.s32 %v7514, %v7624
    %v7626 = vrot.slane %v6885, %v7625
    %v7627 = vsel %vm7519, %v7626, %v7622
    %v7628 = vlaneseq
    %v7629 = vshrl.u32 %v7628, 7
    %v7630 = vsub.s32 %v7521, %v7629
    %v7631 = vrot.slane %v6886, %v7630
    %v7632 = vsel %vm7526, %v7631, %v7627
    %v7633 = vlaneseq
    %v7634 = vshrl.u32 %v7633, 7
    %v7635 = vsub.s32 %v7528, %v7634
    %v7636 = vrot.slane %v6887, %v7635
    %v7637 = vsel %vm7533, %v7636, %v7632
    %v7638 = vlaneseq
    %v7639 = vshrl.u32 %v7638, 7
    %v7640 = vsub.s32 %v7535, %v7639
    %v7641 = vrot.slane %v6888, %v7640
    %v7642 = vsel %vm7540, %v7641, %v7637
    %v7643 = vlaneseq
    %v7644 = vshrl.u32 %v7643, 7
    %v7645 = vsub.s32 %v7542, %v7644
    %v7646 = vrot.slane %v6889, %v7645
    %v7647 = vsel %vm7547, %v7646, %v7642
    %v7648 = vlaneseq
    %v7649 = vshrl.u32 %v7648, 7
    %v7650 = vsub.s32 %v7549, %v7649
    %v7651 = vrot.slane %v6890, %v7650
    %v7652 = vsel %vm7554, %v7651, %v7647
    %v7653 = vlaneseq
    %v7654 = vshrl.u32 %v7653, 7
    %v7655 = vsub.s32 %v7556, %v7654
    %v7656 = vrot.slane %v6891, %v7655
    %v7657 = vsel %vm7561, %v7656, %v7652
    %v7658 = vlaneseq
    %v7659 = vshrl.u32 %v7658, 7
    %v7660 = vsub.s32 %v7563, %v7659
    %v7661 = vrot.slane %v6892, %v7660
    %v7662 = vsel %vm7568, %v7661, %v7657
    %v7663 = vlaneseq
    %v7664 = vshrl.u32 %v7663, 7
    %v7665 = vsub.s32 %v7570, %v7664
    %v7666 = vrot.slane %v6893, %v7665
    %v7667 = vsel %vm7575, %v7666, %v7662
    %v7668 = vlaneseq
    %v7669 = vshrl.u32 %v7668, 7
    %v7670 = vsub.s32 %v7577, %v7669
    %v7671 = vrot.slane %v6894, %v7670
    %v7672 = vsel %vm7582, %v7671, %v7667
    %v7673 = vlaneseq
    %v7674 = vshrl.u32 %v7673, 7
    %v7675 = vsub.s32 %v7584, %v7674
    %v7676 = vrot.slane %v6895, %v7675
    %v7677 = vsel %vm7589, %v7676, %v7672
    %v7678 = vlaneseq
    %v7679 = vshrl.u32 %v7678, 7
    %v7680 = vsub.s32 %v7591, %v7679
    %v7681 = vrot.slane %v6896, %v7680
    %v7682 = vsel %vm7596, %v7681, %v7677
    %v7683 = vlaneseq
    %v7684 = vshrl.u32 %v7683, 7
    %v7685 = vsub.s32 %v7598, %v7684
    %v7686 = vrot.slane %v6897, %v7685
    %v7687 = vsel %vm7603, %v7686, %v7682
    %v7688 = vlaneseq
    %v7689 = vshrl.u32 %v7688, 7
    %v7690 = vsub.s32 %v7605, %v7689
    %v7691 = vrot.slane %v6898, %v7690
    %v7692 = vsel %vm7610, %v7691, %v7687
    %v7693 = vlaneseq
    %v7694 = vshrl.u32 %v7693, 7
    %v7695 = vsub.s32 %v7612, %v7694
    %v7696 = vrot.slane %v6899, %v7695
    %v7697 = vsel %vm7617, %v7696, %v7692
    %v7698 = vlaneseq
    %v7699 = vshrl.u32 %v7698, 7
    %v7700 = vsub.s32 %v7509, %v7699
    %v7701 = vrot.slane %v6900, %v7700
    %v7702 = vlaneseq
    %v7703 = vshrl.u32 %v7702, 7
    %v7704 = vsub.s32 %v7514, %v7703
    %v7705 = vrot.slane %v6901, %v7704
    %v7706 = vsel %vm7519, %v7705, %v7701
    %v7707 = vlaneseq
    %v7708 = vshrl.u32 %v7707, 7
    %v7709 = vsub.s32 %v7521, %v7708
    %v7710 = vrot.slane %v6902, %v7709
    %v7711 = vsel %vm7526, %v7710, %v7706
    %v7712 = vlaneseq
    %v7713 = vshrl.u32 %v7712, 7
    %v7714 = vsub.s32 %v7528, %v7713
    %v7715 = vrot.slane %v6903, %v7714
    %v7716 = vsel %vm7533, %v7715, %v7711
    %v7717 = vlaneseq
    %v7718 = vshrl.u32 %v7717, 7
    %v7719 = vsub.s32 %v7535, %v7718
    %v7720 = vrot.slane %v6904, %v7719
    %v7721 = vsel %vm7540, %v7720, %v7716
    %v7722 = vlaneseq
    %v7723 = vshrl.u32 %v7722, 7
    %v7724 = vsub.s32 %v7542, %v7723
    %v7725 = vrot.slane %v6905, %v7724
    %v7726 = vsel %vm7547, %v7725, %v7721
    %v7727 = vlaneseq
    %v7728 = vshrl.u32 %v7727, 7
    %v7729 = vsub.s32 %v7549, %v7728
    %v7730 = vrot.slane %v6906, %v7729
    %v7731 = vsel %vm7554, %v7730, %v7726
    %v7732 = vlaneseq
    %v7733 = vshrl.u32 %v7732, 7
    %v7734 = vsub.s32 %v7556, %v7733
    %v7735 = vrot.slane %v6907, %v7734
    %v7736 = vsel %vm7561, %v7735, %v7731
    %v7737 = vlaneseq
    %v7738 = vshrl.u32 %v7737, 7
    %v7739 = vsub.s32 %v7563, %v7738
    %v7740 = vrot.slane %v6908, %v7739
    %v7741 = vsel %vm7568, %v7740, %v7736
    %v7742 = vlaneseq
    %v7743 = vshrl.u32 %v7742, 7
    %v7744 = vsub.s32 %v7570, %v7743
    %v7745 = vrot.slane %v6909, %v7744
    %v7746 = vsel %vm7575, %v7745, %v7741
    %v7747 = vlaneseq
    %v7748 = vshrl.u32 %v7747, 7
    %v7749 = vsub.s32 %v7577, %v7748
    %v7750 = vrot.slane %v6910, %v7749
    %v7751 = vsel %vm7582, %v7750, %v7746
    %v7752 = vlaneseq
    %v7753 = vshrl.u32 %v7752, 7
    %v7754 = vsub.s32 %v7584, %v7753
    %v7755 = vrot.slane %v6911, %v7754
    %v7756 = vsel %vm7589, %v7755, %v7751
    %v7757 = vlaneseq
    %v7758 = vshrl.u32 %v7757, 7
    %v7759 = vsub.s32 %v7591, %v7758
    %v7760 = vrot.slane %v6912, %v7759
    %v7761 = vsel %vm7596, %v7760, %v7756
    %v7762 = vlaneseq
    %v7763 = vshrl.u32 %v7762, 7
    %v7764 = vsub.s32 %v7598, %v7763
    %v7765 = vrot.slane %v6913, %v7764
    %v7766 = vsel %vm7603, %v7765, %v7761
    %v7767 = vlaneseq
    %v7768 = vshrl.u32 %v7767, 7
    %v7769 = vsub.s32 %v7605, %v7768
    %v7770 = vrot.slane %v6914, %v7769
    %v7771 = vsel %vm7610, %v7770, %v7766
    %v7772 = vlaneseq
    %v7773 = vshrl.u32 %v7772, 7
    %v7774 = vsub.s32 %v7612, %v7773
    %v7775 = vrot.slane %v6915, %v7774
    %v7776 = vsel %vm7617, %v7775, %v7771
    %v7777 = vlaneseq
    %v7778 = vshrl.u32 %v7777, 7
    %v7779 = vsub.s32 %v7509, %v7778
    %v7780 = vrot.slane %v6916, %v7779
    %v7781 = vlaneseq
    %v7782 = vshrl.u32 %v7781, 7
    %v7783 = vsub.s32 %v7514, %v7782
    %v7784 = vrot.slane %v6917, %v7783
    %v7785 = vsel %vm7519, %v7784, %v7780
    %v7786 = vlaneseq
    %v7787 = vshrl.u32 %v7786, 7
    %v7788 = vsub.s32 %v7521, %v7787
    %v7789 = vrot.slane %v6918, %v7788
    %v7790 = vsel %vm7526, %v7789, %v7785
    %v7791 = vlaneseq
    %v7792 = vshrl.u32 %v7791, 7
    %v7793 = vsub.s32 %v7528, %v7792
    %v7794 = vrot.slane %v6919, %v7793
    %v7795 = vsel %vm7533, %v7794, %v7790
    %v7796 = vlaneseq
    %v7797 = vshrl.u32 %v7796, 7
    %v7798 = vsub.s32 %v7535, %v7797
    %v7799 = vrot.slane %v6920, %v7798
    %v7800 = vsel %vm7540, %v7799, %v7795
    %v7801 = vlaneseq
    %v7802 = vshrl.u32 %v7801, 7
    %v7803 = vsub.s32 %v7542, %v7802
    %v7804 = vrot.slane %v6921, %v7803
    %v7805 = vsel %vm7547, %v7804, %v7800
    %v7806 = vlaneseq
    %v7807 = vshrl.u32 %v7806, 7
    %v7808 = vsub.s32 %v7549, %v7807
    %v7809 = vrot.slane %v6922, %v7808
    %v7810 = vsel %vm7554, %v7809, %v7805
    %v7811 = vlaneseq
    %v7812 = vshrl.u32 %v7811, 7
    %v7813 = vsub.s32 %v7556, %v7812
    %v7814 = vrot.slane %v6923, %v7813
    %v7815 = vsel %vm7561, %v7814, %v7810
    %v7816 = vlaneseq
    %v7817 = vshrl.u32 %v7816, 7
    %v7818 = vsub.s32 %v7563, %v7817
    %v7819 = vrot.slane %v6924, %v7818
    %v7820 = vsel %vm7568, %v7819, %v7815
    %v7821 = vlaneseq
    %v7822 = vshrl.u32 %v7821, 7
    %v7823 = vsub.s32 %v7570, %v7822
    %v7824 = vrot.slane %v6925, %v7823
    %v7825 = vsel %vm7575, %v7824, %v7820
    %v7826 = vlaneseq
    %v7827 = vshrl.u32 %v7826, 7
    %v7828 = vsub.s32 %v7577, %v7827
    %v7829 = vrot.slane %v6926, %v7828
    %v7830 = vsel %vm7582, %v7829, %v7825
    %v7831 = vlaneseq
    %v7832 = vshrl.u32 %v7831, 7
    %v7833 = vsub.s32 %v7584, %v7832
    %v7834 = vrot.slane %v6927, %v7833
    %v7835 = vsel %vm7589, %v7834, %v7830
    %v7836 = vlaneseq
    %v7837 = vshrl.u32 %v7836, 7
    %v7838 = vsub.s32 %v7591, %v7837
    %v7839 = vrot.slane %v6928, %v7838
    %v7840 = vsel %vm7596, %v7839, %v7835
    %v7841 = vlaneseq
    %v7842 = vshrl.u32 %v7841, 7
    %v7843 = vsub.s32 %v7598, %v7842
    %v7844 = vrot.slane %v6929, %v7843
    %v7845 = vsel %vm7603, %v7844, %v7840
    %v7846 = vlaneseq
    %v7847 = vshrl.u32 %v7846, 7
    %v7848 = vsub.s32 %v7605, %v7847
    %v7849 = vrot.slane %v6930, %v7848
    %v7850 = vsel %vm7610, %v7849, %v7845
    %v7851 = vlaneseq
    %v7852 = vshrl.u32 %v7851, 7
    %v7853 = vsub.s32 %v7612, %v7852
    %v7854 = vrot.slane %v6931, %v7853
    %v7855 = vsel %vm7617, %v7854, %v7850
    %v7856 = vlaneseq
    %v7857 = vshrl.u32 %v7856, 7
    %v7858 = vsub.s32 %v7509, %v7857
    %v7859 = vrot.slane %v6932, %v7858
    %v7860 = vlaneseq
    %v7861 = vshrl.u32 %v7860, 7
    %v7862 = vsub.s32 %v7514, %v7861
    %v7863 = vrot.slane %v6933, %v7862
    %v7864 = vsel %vm7519, %v7863, %v7859
    %v7865 = vlaneseq
    %v7866 = vshrl.u32 %v7865, 7
    %v7867 = vsub.s32 %v7521, %v7866
    %v7868 = vrot.slane %v6934, %v7867
    %v7869 = vsel %vm7526, %v7868, %v7864
    %v7870 = vlaneseq
    %v7871 = vshrl.u32 %v7870, 7
    %v7872 = vsub.s32 %v7528, %v7871
    %v7873 = vrot.slane %v6935, %v7872
    %v7874 = vsel %vm7533, %v7873, %v7869
    %v7875 = vlaneseq
    %v7876 = vshrl.u32 %v7875, 7
    %v7877 = vsub.s32 %v7535, %v7876
    %v7878 = vrot.slane %v6936, %v7877
    %v7879 = vsel %vm7540, %v7878, %v7874
    %v7880 = vlaneseq
    %v7881 = vshrl.u32 %v7880, 7
    %v7882 = vsub.s32 %v7542, %v7881
    %v7883 = vrot.slane %v6937, %v7882
    %v7884 = vsel %vm7547, %v7883, %v7879
    %v7885 = vlaneseq
    %v7886 = vshrl.u32 %v7885, 7
    %v7887 = vsub.s32 %v7549, %v7886
    %v7888 = vrot.slane %v6938, %v7887
    %v7889 = vsel %vm7554, %v7888, %v7884
    %v7890 = vlaneseq
    %v7891 = vshrl.u32 %v7890, 7
    %v7892 = vsub.s32 %v7556, %v7891
    %v7893 = vrot.slane %v6939, %v7892
    %v7894 = vsel %vm7561, %v7893, %v7889
    %v7895 = vlaneseq
    %v7896 = vshrl.u32 %v7895, 7
    %v7897 = vsub.s32 %v7563, %v7896
    %v7898 = vrot.slane %v6940, %v7897
    %v7899 = vsel %vm7568, %v7898, %v7894
    %v7900 = vlaneseq
    %v7901 = vshrl.u32 %v7900, 7
    %v7902 = vsub.s32 %v7570, %v7901
    %v7903 = vrot.slane %v6941, %v7902
    %v7904 = vsel %vm7575, %v7903, %v7899
    %v7905 = vlaneseq
    %v7906 = vshrl.u32 %v7905, 7
    %v7907 = vsub.s32 %v7577, %v7906
    %v7908 = vrot.slane %v6942, %v7907
    %v7909 = vsel %vm7582, %v7908, %v7904
    %v7910 = vlaneseq
    %v7911 = vshrl.u32 %v7910, 7
    %v7912 = vsub.s32 %v7584, %v7911
    %v7913 = vrot.slane %v6943, %v7912
    %v7914 = vsel %vm7589, %v7913, %v7909
    %v7915 = vlaneseq
    %v7916 = vshrl.u32 %v7915, 7
    %v7917 = vsub.s32 %v7591, %v7916
    %v7918 = vrot.slane %v6944, %v7917
    %v7919 = vsel %vm7596, %v7918, %v7914
    %v7920 = vlaneseq
    %v7921 = vshrl.u32 %v7920, 7
    %v7922 = vsub.s32 %v7598, %v7921
    %v7923 = vrot.slane %v6945, %v7922
    %v7924 = vsel %vm7603, %v7923, %v7919
    %v7925 = vlaneseq
    %v7926 = vshrl.u32 %v7925, 7
    %v7927 = vsub.s32 %v7605, %v7926
    %v7928 = vrot.slane %v6946, %v7927
    %v7929 = vsel %vm7610, %v7928, %v7924
    %v7930 = vlaneseq
    %v7931 = vshrl.u32 %v7930, 7
    %v7932 = vsub.s32 %v7612, %v7931
    %v7933 = vrot.slane %v6947, %v7932
    %v7934 = vsel %vm7617, %v7933, %v7929
    %v7935 = vlaneseq
    %v7936 = vshrl.u32 %v7935, 7
    %v7937 = vsub.s32 %v7509, %v7936
    %v7938 = vrot.slane %v6948, %v7937
    %v7939 = vlaneseq
    %v7940 = vshrl.u32 %v7939, 7
    %v7941 = vsub.s32 %v7514, %v7940
    %v7942 = vrot.slane %v6949, %v7941
    %v7943 = vsel %vm7519, %v7942, %v7938
    %v7944 = vlaneseq
    %v7945 = vshrl.u32 %v7944, 7
    %v7946 = vsub.s32 %v7521, %v7945
    %v7947 = vrot.slane %v6950, %v7946
    %v7948 = vsel %vm7526, %v7947, %v7943
    %v7949 = vlaneseq
    %v7950 = vshrl.u32 %v7949, 7
    %v7951 = vsub.s32 %v7528, %v7950
    %v7952 = vrot.slane %v6951, %v7951
    %v7953 = vsel %vm7533, %v7952, %v7948
    %v7954 = vlaneseq
    %v7955 = vshrl.u32 %v7954, 7
    %v7956 = vsub.s32 %v7535, %v7955
    %v7957 = vrot.slane %v6952, %v7956
    %v7958 = vsel %vm7540, %v7957, %v7953
    %v7959 = vlaneseq
    %v7960 = vshrl.u32 %v7959, 7
    %v7961 = vsub.s32 %v7542, %v7960
    %v7962 = vrot.slane %v6953, %v7961
    %v7963 = vsel %vm7547, %v7962, %v7958
    %v7964 = vlaneseq
    %v7965 = vshrl.u32 %v7964, 7
    %v7966 = vsub.s32 %v7549, %v7965
    %v7967 = vrot.slane %v6954, %v7966
    %v7968 = vsel %vm7554, %v7967, %v7963
    %v7969 = vlaneseq
    %v7970 = vshrl.u32 %v7969, 7
    %v7971 = vsub.s32 %v7556, %v7970
    %v7972 = vrot.slane %v6955, %v7971
    %v7973 = vsel %vm7561, %v7972, %v7968
    %v7974 = vlaneseq
    %v7975 = vshrl.u32 %v7974, 7
    %v7976 = vsub.s32 %v7563, %v7975
    %v7977 = vrot.slane %v6956, %v7976
    %v7978 = vsel %vm7568, %v7977, %v7973
    %v7979 = vlaneseq
    %v7980 = vshrl.u32 %v7979, 7
    %v7981 = vsub.s32 %v7570, %v7980
    %v7982 = vrot.slane %v6957, %v7981
    %v7983 = vsel %vm7575, %v7982, %v7978
    %v7984 = vlaneseq
    %v7985 = vshrl.u32 %v7984, 7
    %v7986 = vsub.s32 %v7577, %v7985
    %v7987 = vrot.slane %v6958, %v7986
    %v7988 = vsel %vm7582, %v7987, %v7983
    %v7989 = vlaneseq
    %v7990 = vshrl.u32 %v7989, 7
    %v7991 = vsub.s32 %v7584, %v7990
    %v7992 = vrot.slane %v6959, %v7991
    %v7993 = vsel %vm7589, %v7992, %v7988
    %v7994 = vlaneseq
    %v7995 = vshrl.u32 %v7994, 7
    %v7996 = vsub.s32 %v7591, %v7995
    %v7997 = vrot.slane %v6960, %v7996
    %v7998 = vsel %vm7596, %v7997, %v7993
    %v7999 = vlaneseq
    %v8000 = vshrl.u32 %v7999, 7
    %v8001 = vsub.s32 %v7598, %v8000
    %v8002 = vrot.slane %v6961, %v8001
    %v8003 = vsel %vm7603, %v8002, %v7998
    %v8004 = vlaneseq
    %v8005 = vshrl.u32 %v8004, 7
    %v8006 = vsub.s32 %v7605, %v8005
    %v8007 = vrot.slane %v6962, %v8006
    %v8008 = vsel %vm7610, %v8007, %v8003
    %v8009 = vlaneseq
    %v8010 = vshrl.u32 %v8009, 7
    %v8011 = vsub.s32 %v7612, %v8010
    %v8012 = vrot.slane %v6963, %v8011
    %v8013 = vsel %vm7617, %v8012, %v8008
    %v8014 = vlaneseq
    %v8015 = vshrl.u32 %v8014, 7
    %v8016 = vsub.s32 %v7509, %v8015
    %v8017 = vrot.slane %v6964, %v8016
    %v8018 = vlaneseq
    %v8019 = vshrl.u32 %v8018, 7
    %v8020 = vsub.s32 %v7514, %v8019
    %v8021 = vrot.slane %v6965, %v8020
    %v8022 = vsel %vm7519, %v8021, %v8017
    %v8023 = vlaneseq
    %v8024 = vshrl.u32 %v8023, 7
    %v8025 = vsub.s32 %v7521, %v8024
    %v8026 = vrot.slane %v6966, %v8025
    %v8027 = vsel %vm7526, %v8026, %v8022
    %v8028 = vlaneseq
    %v8029 = vshrl.u32 %v8028, 7
    %v8030 = vsub.s32 %v7528, %v8029
    %v8031 = vrot.slane %v6967, %v8030
    %v8032 = vsel %vm7533, %v8031, %v8027
    %v8033 = vlaneseq
    %v8034 = vshrl.u32 %v8033, 7
    %v8035 = vsub.s32 %v7535, %v8034
    %v8036 = vrot.slane %v6968, %v8035
    %v8037 = vsel %vm7540, %v8036, %v8032
    %v8038 = vlaneseq
    %v8039 = vshrl.u32 %v8038, 7
    %v8040 = vsub.s32 %v7542, %v8039
    %v8041 = vrot.slane %v6969, %v8040
    %v8042 = vsel %vm7547, %v8041, %v8037
    %v8043 = vlaneseq
    %v8044 = vshrl.u32 %v8043, 7
    %v8045 = vsub.s32 %v7549, %v8044
    %v8046 = vrot.slane %v6970, %v8045
    %v8047 = vsel %vm7554, %v8046, %v8042
    %v8048 = vlaneseq
    %v8049 = vshrl.u32 %v8048, 7
    %v8050 = vsub.s32 %v7556, %v8049
    %v8051 = vrot.slane %v6971, %v8050
    %v8052 = vsel %vm7561, %v8051, %v8047
    %v8053 = vlaneseq
    %v8054 = vshrl.u32 %v8053, 7
    %v8055 = vsub.s32 %v7563, %v8054
    %v8056 = vrot.slane %v6972, %v8055
    %v8057 = vsel %vm7568, %v8056, %v8052
    %v8058 = vlaneseq
    %v8059 = vshrl.u32 %v8058, 7
    %v8060 = vsub.s32 %v7570, %v8059
    %v8061 = vrot.slane %v6973, %v8060
    %v8062 = vsel %vm7575, %v8061, %v8057
    %v8063 = vlaneseq
    %v8064 = vshrl.u32 %v8063, 7
    %v8065 = vsub.s32 %v7577, %v8064
    %v8066 = vrot.slane %v6974, %v8065
    %v8067 = vsel %vm7582, %v8066, %v8062
    %v8068 = vlaneseq
    %v8069 = vshrl.u32 %v8068, 7
    %v8070 = vsub.s32 %v7584, %v8069
    %v8071 = vrot.slane %v6975, %v8070
    %v8072 = vsel %vm7589, %v8071, %v8067
    %v8073 = vlaneseq
    %v8074 = vshrl.u32 %v8073, 7
    %v8075 = vsub.s32 %v7591, %v8074
    %v8076 = vrot.slane %v6976, %v8075
    %v8077 = vsel %vm7596, %v8076, %v8072
    %v8078 = vlaneseq
    %v8079 = vshrl.u32 %v8078, 7
    %v8080 = vsub.s32 %v7598, %v8079
    %v8081 = vrot.slane %v6977, %v8080
    %v8082 = vsel %vm7603, %v8081, %v8077
    %v8083 = vlaneseq
    %v8084 = vshrl.u32 %v8083, 7
    %v8085 = vsub.s32 %v7605, %v8084
    %v8086 = vrot.slane %v6978, %v8085
    %v8087 = vsel %vm7610, %v8086, %v8082
    %v8088 = vlaneseq
    %v8089 = vshrl.u32 %v8088, 7
    %v8090 = vsub.s32 %v7612, %v8089
    %v8091 = vrot.slane %v6979, %v8090
    %v8092 = vsel %vm7617, %v8091, %v8087
    %v8093 = vlaneseq
    %v8094 = vshrl.u32 %v8093, 7
    %v8095 = vsub.s32 %v7509, %v8094
    %v8096 = vrot.slane %v6980, %v8095
    %v8097 = vlaneseq
    %v8098 = vshrl.u32 %v8097, 7
    %v8099 = vsub.s32 %v7514, %v8098
    %v8100 = vrot.slane %v6981, %v8099
    %v8101 = vsel %vm7519, %v8100, %v8096
    %v8102 = vlaneseq
    %v8103 = vshrl.u32 %v8102, 7
    %v8104 = vsub.s32 %v7521, %v8103
    %v8105 = vrot.slane %v6982, %v8104
    %v8106 = vsel %vm7526, %v8105, %v8101
    %v8107 = vlaneseq
    %v8108 = vshrl.u32 %v8107, 7
    %v8109 = vsub.s32 %v7528, %v8108
    %v8110 = vrot.slane %v6983, %v8109
    %v8111 = vsel %vm7533, %v8110, %v8106
    %v8112 = vlaneseq
    %v8113 = vshrl.u32 %v8112, 7
    %v8114 = vsub.s32 %v7535, %v8113
    %v8115 = vrot.slane %v6984, %v8114
    %v8116 = vsel %vm7540, %v8115, %v8111
    %v8117 = vlaneseq
    %v8118 = vshrl.u32 %v8117, 7
    %v8119 = vsub.s32 %v7542, %v8118
    %v8120 = vrot.slane %v6985, %v8119
    %v8121 = vsel %vm7547, %v8120, %v8116
    %v8122 = vlaneseq
    %v8123 = vshrl.u32 %v8122, 7
    %v8124 = vsub.s32 %v7549, %v8123
    %v8125 = vrot.slane %v6986, %v8124
    %v8126 = vsel %vm7554, %v8125, %v8121
    %v8127 = vlaneseq
    %v8128 = vshrl.u32 %v8127, 7
    %v8129 = vsub.s32 %v7556, %v8128
    %v8130 = vrot.slane %v6987, %v8129
    %v8131 = vsel %vm7561, %v8130, %v8126
    %v8132 = vlaneseq
    %v8133 = vshrl.u32 %v8132, 7
    %v8134 = vsub.s32 %v7563, %v8133
    %v8135 = vrot.slane %v6988, %v8134
    %v8136 = vsel %vm7568, %v8135, %v8131
    %v8137 = vlaneseq
    %v8138 = vshrl.u32 %v8137, 7
    %v8139 = vsub.s32 %v7570, %v8138
    %v8140 = vrot.slane %v6989, %v8139
    %v8141 = vsel %vm7575, %v8140, %v8136
    %v8142 = vlaneseq
    %v8143 = vshrl.u32 %v8142, 7
    %v8144 = vsub.s32 %v7577, %v8143
    %v8145 = vrot.slane %v6990, %v8144
    %v8146 = vsel %vm7582, %v8145, %v8141
    %v8147 = vlaneseq
    %v8148 = vshrl.u32 %v8147, 7
    %v8149 = vsub.s32 %v7584, %v8148
    %v8150 = vrot.slane %v6991, %v8149
    %v8151 = vsel %vm7589, %v8150, %v8146
    %v8152 = vlaneseq
    %v8153 = vshrl.u32 %v8152, 7
    %v8154 = vsub.s32 %v7591, %v8153
    %v8155 = vrot.slane %v6992, %v8154
    %v8156 = vsel %vm7596, %v8155, %v8151
    %v8157 = vlaneseq
    %v8158 = vshrl.u32 %v8157, 7
    %v8159 = vsub.s32 %v7598, %v8158
    %v8160 = vrot.slane %v6993, %v8159
    %v8161 = vsel %vm7603, %v8160, %v8156
    %v8162 = vlaneseq
    %v8163 = vshrl.u32 %v8162, 7
    %v8164 = vsub.s32 %v7605, %v8163
    %v8165 = vrot.slane %v6994, %v8164
    %v8166 = vsel %vm7610, %v8165, %v8161
    %v8167 = vlaneseq
    %v8168 = vshrl.u32 %v8167, 7
    %v8169 = vsub.s32 %v7612, %v8168
    %v8170 = vrot.slane %v6995, %v8169
    %v8171 = vsel %vm7617, %v8170, %v8166
    %v8172 = vlaneseq
    %v8173 = vshrl.u32 %v8172, 7
    %v8174 = vsub.s32 %v7509, %v8173
    %v8175 = vrot.slane %v6996, %v8174
    %v8176 = vlaneseq
    %v8177 = vshrl.u32 %v8176, 7
    %v8178 = vsub.s32 %v7514, %v8177
    %v8179 = vrot.slane %v6997, %v8178
    %v8180 = vsel %vm7519, %v8179, %v8175
    %v8181 = vlaneseq
    %v8182 = vshrl.u32 %v8181, 7
    %v8183 = vsub.s32 %v7521, %v8182
    %v8184 = vrot.slane %v6998, %v8183
    %v8185 = vsel %vm7526, %v8184, %v8180
    %v8186 = vlaneseq
    %v8187 = vshrl.u32 %v8186, 7
    %v8188 = vsub.s32 %v7528, %v8187
    %v8189 = vrot.slane %v6999, %v8188
    %v8190 = vsel %vm7533, %v8189, %v8185
    %v8191 = vlaneseq
    %v8192 = vshrl.u32 %v8191, 7
    %v8193 = vsub.s32 %v7535, %v8192
    %v8194 = vrot.slane %v7000, %v8193
    %v8195 = vsel %vm7540, %v8194, %v8190
    %v8196 = vlaneseq
    %v8197 = vshrl.u32 %v8196, 7
    %v8198 = vsub.s32 %v7542, %v8197
    %v8199 = vrot.slane %v7001, %v8198
    %v8200 = vsel %vm7547, %v8199, %v8195
    %v8201 = vlaneseq
    %v8202 = vshrl.u32 %v8201, 7
    %v8203 = vsub.s32 %v7549, %v8202
    %v8204 = vrot.slane %v7002, %v8203
    %v8205 = vsel %vm7554, %v8204, %v8200
    %v8206 = vlaneseq
    %v8207 = vshrl.u32 %v8206, 7
    %v8208 = vsub.s32 %v7556, %v8207
    %v8209 = vrot.slane %v7003, %v8208
    %v8210 = vsel %vm7561, %v8209, %v8205
    %v8211 = vlaneseq
    %v8212 = vshrl.u32 %v8211, 7
    %v8213 = vsub.s32 %v7563, %v8212
    %v8214 = vrot.slane %v7004, %v8213
    %v8215 = vsel %vm7568, %v8214, %v8210
    %v8216 = vlaneseq
    %v8217 = vshrl.u32 %v8216, 7
    %v8218 = vsub.s32 %v7570, %v8217
    %v8219 = vrot.slane %v7005, %v8218
    %v8220 = vsel %vm7575, %v8219, %v8215
    %v8221 = vlaneseq
    %v8222 = vshrl.u32 %v8221, 7
    %v8223 = vsub.s32 %v7577, %v8222
    %v8224 = vrot.slane %v7006, %v8223
    %v8225 = vsel %vm7582, %v8224, %v8220
    %v8226 = vlaneseq
    %v8227 = vshrl.u32 %v8226, 7
    %v8228 = vsub.s32 %v7584, %v8227
    %v8229 = vrot.slane %v7007, %v8228
    %v8230 = vsel %vm7589, %v8229, %v8225
    %v8231 = vlaneseq
    %v8232 = vshrl.u32 %v8231, 7
    %v8233 = vsub.s32 %v7591, %v8232
    %v8234 = vrot.slane %v7008, %v8233
    %v8235 = vsel %vm7596, %v8234, %v8230
    %v8236 = vlaneseq
    %v8237 = vshrl.u32 %v8236, 7
    %v8238 = vsub.s32 %v7598, %v8237
    %v8239 = vrot.slane %v7009, %v8238
    %v8240 = vsel %vm7603, %v8239, %v8235
    %v8241 = vlaneseq
    %v8242 = vshrl.u32 %v8241, 7
    %v8243 = vsub.s32 %v7605, %v8242
    %v8244 = vrot.slane %v7010, %v8243
    %v8245 = vsel %vm7610, %v8244, %v8240
    %v8246 = vlaneseq
    %v8247 = vshrl.u32 %v8246, 7
    %v8248 = vsub.s32 %v7612, %v8247
    %v8249 = vrot.slane %v7011, %v8248
    %v8250 = vsel %vm7617, %v8249, %v8245
    %v8251 = vlaneseq
    %v8252 = vshrl.u32 %v8251, 7
    %v8253 = vsub.s32 %v7509, %v8252
    %v8254 = vrot.slane %v7012, %v8253
    %v8255 = vlaneseq
    %v8256 = vshrl.u32 %v8255, 7
    %v8257 = vsub.s32 %v7514, %v8256
    %v8258 = vrot.slane %v7013, %v8257
    %v8259 = vsel %vm7519, %v8258, %v8254
    %v8260 = vlaneseq
    %v8261 = vshrl.u32 %v8260, 7
    %v8262 = vsub.s32 %v7521, %v8261
    %v8263 = vrot.slane %v7014, %v8262
    %v8264 = vsel %vm7526, %v8263, %v8259
    %v8265 = vlaneseq
    %v8266 = vshrl.u32 %v8265, 7
    %v8267 = vsub.s32 %v7528, %v8266
    %v8268 = vrot.slane %v7015, %v8267
    %v8269 = vsel %vm7533, %v8268, %v8264
    %v8270 = vlaneseq
    %v8271 = vshrl.u32 %v8270, 7
    %v8272 = vsub.s32 %v7535, %v8271
    %v8273 = vrot.slane %v7016, %v8272
    %v8274 = vsel %vm7540, %v8273, %v8269
    %v8275 = vlaneseq
    %v8276 = vshrl.u32 %v8275, 7
    %v8277 = vsub.s32 %v7542, %v8276
    %v8278 = vrot.slane %v7017, %v8277
    %v8279 = vsel %vm7547, %v8278, %v8274
    %v8280 = vlaneseq
    %v8281 = vshrl.u32 %v8280, 7
    %v8282 = vsub.s32 %v7549, %v8281
    %v8283 = vrot.slane %v7018, %v8282
    %v8284 = vsel %vm7554, %v8283, %v8279
    %v8285 = vlaneseq
    %v8286 = vshrl.u32 %v8285, 7
    %v8287 = vsub.s32 %v7556, %v8286
    %v8288 = vrot.slane %v7019, %v8287
    %v8289 = vsel %vm7561, %v8288, %v8284
    %v8290 = vlaneseq
    %v8291 = vshrl.u32 %v8290, 7
    %v8292 = vsub.s32 %v7563, %v8291
    %v8293 = vrot.slane %v7020, %v8292
    %v8294 = vsel %vm7568, %v8293, %v8289
    %v8295 = vlaneseq
    %v8296 = vshrl.u32 %v8295, 7
    %v8297 = vsub.s32 %v7570, %v8296
    %v8298 = vrot.slane %v7021, %v8297
    %v8299 = vsel %vm7575, %v8298, %v8294
    %v8300 = vlaneseq
    %v8301 = vshrl.u32 %v8300, 7
    %v8302 = vsub.s32 %v7577, %v8301
    %v8303 = vrot.slane %v7022, %v8302
    %v8304 = vsel %vm7582, %v8303, %v8299
    %v8305 = vlaneseq
    %v8306 = vshrl.u32 %v8305, 7
    %v8307 = vsub.s32 %v7584, %v8306
    %v8308 = vrot.slane %v7023, %v8307
    %v8309 = vsel %vm7589, %v8308, %v8304
    %v8310 = vlaneseq
    %v8311 = vshrl.u32 %v8310, 7
    %v8312 = vsub.s32 %v7591, %v8311
    %v8313 = vrot.slane %v7024, %v8312
    %v8314 = vsel %vm7596, %v8313, %v8309
    %v8315 = vlaneseq
    %v8316 = vshrl.u32 %v8315, 7
    %v8317 = vsub.s32 %v7598, %v8316
    %v8318 = vrot.slane %v7025, %v8317
    %v8319 = vsel %vm7603, %v8318, %v8314
    %v8320 = vlaneseq
    %v8321 = vshrl.u32 %v8320, 7
    %v8322 = vsub.s32 %v7605, %v8321
    %v8323 = vrot.slane %v7026, %v8322
    %v8324 = vsel %vm7610, %v8323, %v8319
    %v8325 = vlaneseq
    %v8326 = vshrl.u32 %v8325, 7
    %v8327 = vsub.s32 %v7612, %v8326
    %v8328 = vrot.slane %v7027, %v8327
    %v8329 = vsel %vm7617, %v8328, %v8324
    %v8330 = vlaneseq
    %v8331 = vshrl.u32 %v8330, 7
    %v8332 = vsub.s32 %v7509, %v8331
    %v8333 = vrot.slane %v7028, %v8332
    %v8334 = vlaneseq
    %v8335 = vshrl.u32 %v8334, 7
    %v8336 = vsub.s32 %v7514, %v8335
    %v8337 = vrot.slane %v7029, %v8336
    %v8338 = vsel %vm7519, %v8337, %v8333
    %v8339 = vlaneseq
    %v8340 = vshrl.u32 %v8339, 7
    %v8341 = vsub.s32 %v7521, %v8340
    %v8342 = vrot.slane %v7030, %v8341
    %v8343 = vsel %vm7526, %v8342, %v8338
    %v8344 = vlaneseq
    %v8345 = vshrl.u32 %v8344, 7
    %v8346 = vsub.s32 %v7528, %v8345
    %v8347 = vrot.slane %v7031, %v8346
    %v8348 = vsel %vm7533, %v8347, %v8343
    %v8349 = vlaneseq
    %v8350 = vshrl.u32 %v8349, 7
    %v8351 = vsub.s32 %v7535, %v8350
    %v8352 = vrot.slane %v7032, %v8351
    %v8353 = vsel %vm7540, %v8352, %v8348
    %v8354 = vlaneseq
    %v8355 = vshrl.u32 %v8354, 7
    %v8356 = vsub.s32 %v7542, %v8355
    %v8357 = vrot.slane %v7033, %v8356
    %v8358 = vsel %vm7547, %v8357, %v8353
    %v8359 = vlaneseq
    %v8360 = vshrl.u32 %v8359, 7
    %v8361 = vsub.s32 %v7549, %v8360
    %v8362 = vrot.slane %v7034, %v8361
    %v8363 = vsel %vm7554, %v8362, %v8358
    %v8364 = vlaneseq
    %v8365 = vshrl.u32 %v8364, 7
    %v8366 = vsub.s32 %v7556, %v8365
    %v8367 = vrot.slane %v7035, %v8366
    %v8368 = vsel %vm7561, %v8367, %v8363
    %v8369 = vlaneseq
    %v8370 = vshrl.u32 %v8369, 7
    %v8371 = vsub.s32 %v7563, %v8370
    %v8372 = vrot.slane %v7036, %v8371
    %v8373 = vsel %vm7568, %v8372, %v8368
    %v8374 = vlaneseq
    %v8375 = vshrl.u32 %v8374, 7
    %v8376 = vsub.s32 %v7570, %v8375
    %v8377 = vrot.slane %v7037, %v8376
    %v8378 = vsel %vm7575, %v8377, %v8373
    %v8379 = vlaneseq
    %v8380 = vshrl.u32 %v8379, 7
    %v8381 = vsub.s32 %v7577, %v8380
    %v8382 = vrot.slane %v7038, %v8381
    %v8383 = vsel %vm7582, %v8382, %v8378
    %v8384 = vlaneseq
    %v8385 = vshrl.u32 %v8384, 7
    %v8386 = vsub.s32 %v7584, %v8385
    %v8387 = vrot.slane %v7039, %v8386
    %v8388 = vsel %vm7589, %v8387, %v8383
    %v8389 = vlaneseq
    %v8390 = vshrl.u32 %v8389, 7
    %v8391 = vsub.s32 %v7591, %v8390
    %v8392 = vrot.slane %v7040, %v8391
    %v8393 = vsel %vm7596, %v8392, %v8388
    %v8394 = vlaneseq
    %v8395 = vshrl.u32 %v8394, 7
    %v8396 = vsub.s32 %v7598, %v8395
    %v8397 = vrot.slane %v7041, %v8396
    %v8398 = vsel %vm7603, %v8397, %v8393
    %v8399 = vlaneseq
    %v8400 = vshrl.u32 %v8399, 7
    %v8401 = vsub.s32 %v7605, %v8400
    %v8402 = vrot.slane %v7042, %v8401
    %v8403 = vsel %vm7610, %v8402, %v8398
    %v8404 = vlaneseq
    %v8405 = vshrl.u32 %v8404, 7
    %v8406 = vsub.s32 %v7612, %v8405
    %v8407 = vrot.slane %v7043, %v8406
    %v8408 = vsel %vm7617, %v8407, %v8403
    %v8409 = vlaneseq
    %v8410 = vshrl.u32 %v8409, 7
    %v8411 = vsub.s32 %v7509, %v8410
    %v8412 = vrot.slane %v7044, %v8411
    %v8413 = vlaneseq
    %v8414 = vshrl.u32 %v8413, 7
    %v8415 = vsub.s32 %v7514, %v8414
    %v8416 = vrot.slane %v7045, %v8415
    %v8417 = vsel %vm7519, %v8416, %v8412
    %v8418 = vlaneseq
    %v8419 = vshrl.u32 %v8418, 7
    %v8420 = vsub.s32 %v7521, %v8419
    %v8421 = vrot.slane %v7046, %v8420
    %v8422 = vsel %vm7526, %v8421, %v8417
    %v8423 = vlaneseq
    %v8424 = vshrl.u32 %v8423, 7
    %v8425 = vsub.s32 %v7528, %v8424
    %v8426 = vrot.slane %v7047, %v8425
    %v8427 = vsel %vm7533, %v8426, %v8422
    %v8428 = vlaneseq
    %v8429 = vshrl.u32 %v8428, 7
    %v8430 = vsub.s32 %v7535, %v8429
    %v8431 = vrot.slane %v7048, %v8430
    %v8432 = vsel %vm7540, %v8431, %v8427
    %v8433 = vlaneseq
    %v8434 = vshrl.u32 %v8433, 7
    %v8435 = vsub.s32 %v7542, %v8434
    %v8436 = vrot.slane %v7049, %v8435
    %v8437 = vsel %vm7547, %v8436, %v8432
    %v8438 = vlaneseq
    %v8439 = vshrl.u32 %v8438, 7
    %v8440 = vsub.s32 %v7549, %v8439
    %v8441 = vrot.slane %v7050, %v8440
    %v8442 = vsel %vm7554, %v8441, %v8437
    %v8443 = vlaneseq
    %v8444 = vshrl.u32 %v8443, 7
    %v8445 = vsub.s32 %v7556, %v8444
    %v8446 = vrot.slane %v7051, %v8445
    %v8447 = vsel %vm7561, %v8446, %v8442
    %v8448 = vlaneseq
    %v8449 = vshrl.u32 %v8448, 7
    %v8450 = vsub.s32 %v7563, %v8449
    %v8451 = vrot.slane %v7052, %v8450
    %v8452 = vsel %vm7568, %v8451, %v8447
    %v8453 = vlaneseq
    %v8454 = vshrl.u32 %v8453, 7
    %v8455 = vsub.s32 %v7570, %v8454
    %v8456 = vrot.slane %v7053, %v8455
    %v8457 = vsel %vm7575, %v8456, %v8452
    %v8458 = vlaneseq
    %v8459 = vshrl.u32 %v8458, 7
    %v8460 = vsub.s32 %v7577, %v8459
    %v8461 = vrot.slane %v7054, %v8460
    %v8462 = vsel %vm7582, %v8461, %v8457
    %v8463 = vlaneseq
    %v8464 = vshrl.u32 %v8463, 7
    %v8465 = vsub.s32 %v7584, %v8464
    %v8466 = vrot.slane %v7055, %v8465
    %v8467 = vsel %vm7589, %v8466, %v8462
    %v8468 = vlaneseq
    %v8469 = vshrl.u32 %v8468, 7
    %v8470 = vsub.s32 %v7591, %v8469
    %v8471 = vrot.slane %v7056, %v8470
    %v8472 = vsel %vm7596, %v8471, %v8467
    %v8473 = vlaneseq
    %v8474 = vshrl.u32 %v8473, 7
    %v8475 = vsub.s32 %v7598, %v8474
    %v8476 = vrot.slane %v7057, %v8475
    %v8477 = vsel %vm7603, %v8476, %v8472
    %v8478 = vlaneseq
    %v8479 = vshrl.u32 %v8478, 7
    %v8480 = vsub.s32 %v7605, %v8479
    %v8481 = vrot.slane %v7058, %v8480
    %v8482 = vsel %vm7610, %v8481, %v8477
    %v8483 = vlaneseq
    %v8484 = vshrl.u32 %v8483, 7
    %v8485 = vsub.s32 %v7612, %v8484
    %v8486 = vrot.slane %v7059, %v8485
    %v8487 = vsel %vm7617, %v8486, %v8482
    %v8488 = vlaneseq
    %v8489 = vshrl.u32 %v8488, 7
    %v8490 = vsub.s32 %v7509, %v8489
    %v8491 = vrot.slane %v7060, %v8490
    %v8492 = vlaneseq
    %v8493 = vshrl.u32 %v8492, 7
    %v8494 = vsub.s32 %v7514, %v8493
    %v8495 = vrot.slane %v7061, %v8494
    %v8496 = vsel %vm7519, %v8495, %v8491
    %v8497 = vlaneseq
    %v8498 = vshrl.u32 %v8497, 7
    %v8499 = vsub.s32 %v7521, %v8498
    %v8500 = vrot.slane %v7062, %v8499
    %v8501 = vsel %vm7526, %v8500, %v8496
    %v8502 = vlaneseq
    %v8503 = vshrl.u32 %v8502, 7
    %v8504 = vsub.s32 %v7528, %v8503
    %v8505 = vrot.slane %v7063, %v8504
    %v8506 = vsel %vm7533, %v8505, %v8501
    %v8507 = vlaneseq
    %v8508 = vshrl.u32 %v8507, 7
    %v8509 = vsub.s32 %v7535, %v8508
    %v8510 = vrot.slane %v7064, %v8509
    %v8511 = vsel %vm7540, %v8510, %v8506
    %v8512 = vlaneseq
    %v8513 = vshrl.u32 %v8512, 7
    %v8514 = vsub.s32 %v7542, %v8513
    %v8515 = vrot.slane %v7065, %v8514
    %v8516 = vsel %vm7547, %v8515, %v8511
    %v8517 = vlaneseq
    %v8518 = vshrl.u32 %v8517, 7
    %v8519 = vsub.s32 %v7549, %v8518
    %v8520 = vrot.slane %v7066, %v8519
    %v8521 = vsel %vm7554, %v8520, %v8516
    %v8522 = vlaneseq
    %v8523 = vshrl.u32 %v8522, 7
    %v8524 = vsub.s32 %v7556, %v8523
    %v8525 = vrot.slane %v7067, %v8524
    %v8526 = vsel %vm7561, %v8525, %v8521
    %v8527 = vlaneseq
    %v8528 = vshrl.u32 %v8527, 7
    %v8529 = vsub.s32 %v7563, %v8528
    %v8530 = vrot.slane %v7068, %v8529
    %v8531 = vsel %vm7568, %v8530, %v8526
    %v8532 = vlaneseq
    %v8533 = vshrl.u32 %v8532, 7
    %v8534 = vsub.s32 %v7570, %v8533
    %v8535 = vrot.slane %v7069, %v8534
    %v8536 = vsel %vm7575, %v8535, %v8531
    %v8537 = vlaneseq
    %v8538 = vshrl.u32 %v8537, 7
    %v8539 = vsub.s32 %v7577, %v8538
    %v8540 = vrot.slane %v7070, %v8539
    %v8541 = vsel %vm7582, %v8540, %v8536
    %v8542 = vlaneseq
    %v8543 = vshrl.u32 %v8542, 7
    %v8544 = vsub.s32 %v7584, %v8543
    %v8545 = vrot.slane %v7071, %v8544
    %v8546 = vsel %vm7589, %v8545, %v8541
    %v8547 = vlaneseq
    %v8548 = vshrl.u32 %v8547, 7
    %v8549 = vsub.s32 %v7591, %v8548
    %v8550 = vrot.slane %v7072, %v8549
    %v8551 = vsel %vm7596, %v8550, %v8546
    %v8552 = vlaneseq
    %v8553 = vshrl.u32 %v8552, 7
    %v8554 = vsub.s32 %v7598, %v8553
    %v8555 = vrot.slane %v7073, %v8554
    %v8556 = vsel %vm7603, %v8555, %v8551
    %v8557 = vlaneseq
    %v8558 = vshrl.u32 %v8557, 7
    %v8559 = vsub.s32 %v7605, %v8558
    %v8560 = vrot.slane %v7074, %v8559
    %v8561 = vsel %vm7610, %v8560, %v8556
    %v8562 = vlaneseq
    %v8563 = vshrl.u32 %v8562, 7
    %v8564 = vsub.s32 %v7612, %v8563
    %v8565 = vrot.slane %v7075, %v8564
    %v8566 = vsel %vm7617, %v8565, %v8561
    %v8567 = vlaneseq
    %v8568 = vshrl.u32 %v8567, 7
    %v8569 = vsub.s32 %v7509, %v8568
    %v8570 = vrot.slane %v7076, %v8569
    %v8571 = vlaneseq
    %v8572 = vshrl.u32 %v8571, 7
    %v8573 = vsub.s32 %v7514, %v8572
    %v8574 = vrot.slane %v7077, %v8573
    %v8575 = vsel %vm7519, %v8574, %v8570
    %v8576 = vlaneseq
    %v8577 = vshrl.u32 %v8576, 7
    %v8578 = vsub.s32 %v7521, %v8577
    %v8579 = vrot.slane %v7078, %v8578
    %v8580 = vsel %vm7526, %v8579, %v8575
    %v8581 = vlaneseq
    %v8582 = vshrl.u32 %v8581, 7
    %v8583 = vsub.s32 %v7528, %v8582
    %v8584 = vrot.slane %v7079, %v8583
    %v8585 = vsel %vm7533, %v8584, %v8580
    %v8586 = vlaneseq
    %v8587 = vshrl.u32 %v8586, 7
    %v8588 = vsub.s32 %v7535, %v8587
    %v8589 = vrot.slane %v7080, %v8588
    %v8590 = vsel %vm7540, %v8589, %v8585
    %v8591 = vlaneseq
    %v8592 = vshrl.u32 %v8591, 7
    %v8593 = vsub.s32 %v7542, %v8592
    %v8594 = vrot.slane %v7081, %v8593
    %v8595 = vsel %vm7547, %v8594, %v8590
    %v8596 = vlaneseq
    %v8597 = vshrl.u32 %v8596, 7
    %v8598 = vsub.s32 %v7549, %v8597
    %v8599 = vrot.slane %v7082, %v8598
    %v8600 = vsel %vm7554, %v8599, %v8595
    %v8601 = vlaneseq
    %v8602 = vshrl.u32 %v8601, 7
    %v8603 = vsub.s32 %v7556, %v8602
    %v8604 = vrot.slane %v7083, %v8603
    %v8605 = vsel %vm7561, %v8604, %v8600
    %v8606 = vlaneseq
    %v8607 = vshrl.u32 %v8606, 7
    %v8608 = vsub.s32 %v7563, %v8607
    %v8609 = vrot.slane %v7084, %v8608
    %v8610 = vsel %vm7568, %v8609, %v8605
    %v8611 = vlaneseq
    %v8612 = vshrl.u32 %v8611, 7
    %v8613 = vsub.s32 %v7570, %v8612
    %v8614 = vrot.slane %v7085, %v8613
    %v8615 = vsel %vm7575, %v8614, %v8610
    %v8616 = vlaneseq
    %v8617 = vshrl.u32 %v8616, 7
    %v8618 = vsub.s32 %v7577, %v8617
    %v8619 = vrot.slane %v7086, %v8618
    %v8620 = vsel %vm7582, %v8619, %v8615
    %v8621 = vlaneseq
    %v8622 = vshrl.u32 %v8621, 7
    %v8623 = vsub.s32 %v7584, %v8622
    %v8624 = vrot.slane %v7087, %v8623
    %v8625 = vsel %vm7589, %v8624, %v8620
    %v8626 = vlaneseq
    %v8627 = vshrl.u32 %v8626, 7
    %v8628 = vsub.s32 %v7591, %v8627
    %v8629 = vrot.slane %v7088, %v8628
    %v8630 = vsel %vm7596, %v8629, %v8625
    %v8631 = vlaneseq
    %v8632 = vshrl.u32 %v8631, 7
    %v8633 = vsub.s32 %v7598, %v8632
    %v8634 = vrot.slane %v7089, %v8633
    %v8635 = vsel %vm7603, %v8634, %v8630
    %v8636 = vlaneseq
    %v8637 = vshrl.u32 %v8636, 7
    %v8638 = vsub.s32 %v7605, %v8637
    %v8639 = vrot.slane %v7090, %v8638
    %v8640 = vsel %vm7610, %v8639, %v8635
    %v8641 = vlaneseq
    %v8642 = vshrl.u32 %v8641, 7
    %v8643 = vsub.s32 %v7612, %v8642
    %v8644 = vrot.slane %v7091, %v8643
    %v8645 = vsel %vm7617, %v8644, %v8640
    %v8646 = vlaneseq
    %v8647 = vshrl.u32 %v8646, 7
    %v8648 = vsub.s32 %v7509, %v8647
    %v8649 = vrot.slane %v7092, %v8648
    %v8650 = vlaneseq
    %v8651 = vshrl.u32 %v8650, 7
    %v8652 = vsub.s32 %v7514, %v8651
    %v8653 = vrot.slane %v7093, %v8652
    %v8654 = vsel %vm7519, %v8653, %v8649
    %v8655 = vlaneseq
    %v8656 = vshrl.u32 %v8655, 7
    %v8657 = vsub.s32 %v7521, %v8656
    %v8658 = vrot.slane %v7094, %v8657
    %v8659 = vsel %vm7526, %v8658, %v8654
    %v8660 = vlaneseq
    %v8661 = vshrl.u32 %v8660, 7
    %v8662 = vsub.s32 %v7528, %v8661
    %v8663 = vrot.slane %v7095, %v8662
    %v8664 = vsel %vm7533, %v8663, %v8659
    %v8665 = vlaneseq
    %v8666 = vshrl.u32 %v8665, 7
    %v8667 = vsub.s32 %v7535, %v8666
    %v8668 = vrot.slane %v7096, %v8667
    %v8669 = vsel %vm7540, %v8668, %v8664
    %v8670 = vlaneseq
    %v8671 = vshrl.u32 %v8670, 7
    %v8672 = vsub.s32 %v7542, %v8671
    %v8673 = vrot.slane %v7097, %v8672
    %v8674 = vsel %vm7547, %v8673, %v8669
    %v8675 = vlaneseq
    %v8676 = vshrl.u32 %v8675, 7
    %v8677 = vsub.s32 %v7549, %v8676
    %v8678 = vrot.slane %v7098, %v8677
    %v8679 = vsel %vm7554, %v8678, %v8674
    %v8680 = vlaneseq
    %v8681 = vshrl.u32 %v8680, 7
    %v8682 = vsub.s32 %v7556, %v8681
    %v8683 = vrot.slane %v7099, %v8682
    %v8684 = vsel %vm7561, %v8683, %v8679
    %v8685 = vlaneseq
    %v8686 = vshrl.u32 %v8685, 7
    %v8687 = vsub.s32 %v7563, %v8686
    %v8688 = vrot.slane %v7100, %v8687
    %v8689 = vsel %vm7568, %v8688, %v8684
    %v8690 = vlaneseq
    %v8691 = vshrl.u32 %v8690, 7
    %v8692 = vsub.s32 %v7570, %v8691
    %v8693 = vrot.slane %v7101, %v8692
    %v8694 = vsel %vm7575, %v8693, %v8689
    %v8695 = vlaneseq
    %v8696 = vshrl.u32 %v8695, 7
    %v8697 = vsub.s32 %v7577, %v8696
    %v8698 = vrot.slane %v7102, %v8697
    %v8699 = vsel %vm7582, %v8698, %v8694
    %v8700 = vlaneseq
    %v8701 = vshrl.u32 %v8700, 7
    %v8702 = vsub.s32 %v7584, %v8701
    %v8703 = vrot.slane %v7103, %v8702
    %v8704 = vsel %vm7589, %v8703, %v8699
    %v8705 = vlaneseq
    %v8706 = vshrl.u32 %v8705, 7
    %v8707 = vsub.s32 %v7591, %v8706
    %v8708 = vrot.slane %v7104, %v8707
    %v8709 = vsel %vm7596, %v8708, %v8704
    %v8710 = vlaneseq
    %v8711 = vshrl.u32 %v8710, 7
    %v8712 = vsub.s32 %v7598, %v8711
    %v8713 = vrot.slane %v7105, %v8712
    %v8714 = vsel %vm7603, %v8713, %v8709
    %v8715 = vlaneseq
    %v8716 = vshrl.u32 %v8715, 7
    %v8717 = vsub.s32 %v7605, %v8716
    %v8718 = vrot.slane %v7106, %v8717
    %v8719 = vsel %vm7610, %v8718, %v8714
    %v8720 = vlaneseq
    %v8721 = vshrl.u32 %v8720, 7
    %v8722 = vsub.s32 %v7612, %v8721
    %v8723 = vrot.slane %v7107, %v8722
    %v8724 = vsel %vm7617, %v8723, %v8719
    %v8725 = vlaneseq
    %v8726 = vshrl.u32 %v8725, 7
    %v8727 = vsub.s32 %v7509, %v8726
    %v8728 = vrot.slane %v7108, %v8727
    %v8729 = vlaneseq
    %v8730 = vshrl.u32 %v8729, 7
    %v8731 = vsub.s32 %v7514, %v8730
    %v8732 = vrot.slane %v7109, %v8731
    %v8733 = vsel %vm7519, %v8732, %v8728
    %v8734 = vlaneseq
    %v8735 = vshrl.u32 %v8734, 7
    %v8736 = vsub.s32 %v7521, %v8735
    %v8737 = vrot.slane %v7110, %v8736
    %v8738 = vsel %vm7526, %v8737, %v8733
    %v8739 = vlaneseq
    %v8740 = vshrl.u32 %v8739, 7
    %v8741 = vsub.s32 %v7528, %v8740
    %v8742 = vrot.slane %v7111, %v8741
    %v8743 = vsel %vm7533, %v8742, %v8738
    %v8744 = vlaneseq
    %v8745 = vshrl.u32 %v8744, 7
    %v8746 = vsub.s32 %v7535, %v8745
    %v8747 = vrot.slane %v7112, %v8746
    %v8748 = vsel %vm7540, %v8747, %v8743
    %v8749 = vlaneseq
    %v8750 = vshrl.u32 %v8749, 7
    %v8751 = vsub.s32 %v7542, %v8750
    %v8752 = vrot.slane %v7113, %v8751
    %v8753 = vsel %vm7547, %v8752, %v8748
    %v8754 = vlaneseq
    %v8755 = vshrl.u32 %v8754, 7
    %v8756 = vsub.s32 %v7549, %v8755
    %v8757 = vrot.slane %v7114, %v8756
    %v8758 = vsel %vm7554, %v8757, %v8753
    %v8759 = vlaneseq
    %v8760 = vshrl.u32 %v8759, 7
    %v8761 = vsub.s32 %v7556, %v8760
    %v8762 = vrot.slane %v7115, %v8761
    %v8763 = vsel %vm7561, %v8762, %v8758
    %v8764 = vlaneseq
    %v8765 = vshrl.u32 %v8764, 7
    %v8766 = vsub.s32 %v7563, %v8765
    %v8767 = vrot.slane %v7116, %v8766
    %v8768 = vsel %vm7568, %v8767, %v8763
    %v8769 = vlaneseq
    %v8770 = vshrl.u32 %v8769, 7
    %v8771 = vsub.s32 %v7570, %v8770
    %v8772 = vrot.slane %v7117, %v8771
    %v8773 = vsel %vm7575, %v8772, %v8768
    %v8774 = vlaneseq
    %v8775 = vshrl.u32 %v8774, 7
    %v8776 = vsub.s32 %v7577, %v8775
    %v8777 = vrot.slane %v7118, %v8776
    %v8778 = vsel %vm7582, %v8777, %v8773
    %v8779 = vlaneseq
    %v8780 = vshrl.u32 %v8779, 7
    %v8781 = vsub.s32 %v7584, %v8780
    %v8782 = vrot.slane %v7119, %v8781
    %v8783 = vsel %vm7589, %v8782, %v8778
    %v8784 = vlaneseq
    %v8785 = vshrl.u32 %v8784, 7
    %v8786 = vsub.s32 %v7591, %v8785
    %v8787 = vrot.slane %v7120, %v8786
    %v8788 = vsel %vm7596, %v8787, %v8783
    %v8789 = vlaneseq
    %v8790 = vshrl.u32 %v8789, 7
    %v8791 = vsub.s32 %v7598, %v8790
    %v8792 = vrot.slane %v7121, %v8791
    %v8793 = vsel %vm7603, %v8792, %v8788
    %v8794 = vlaneseq
    %v8795 = vshrl.u32 %v8794, 7
    %v8796 = vsub.s32 %v7605, %v8795
    %v8797 = vrot.slane %v7122, %v8796
    %v8798 = vsel %vm7610, %v8797, %v8793
    %v8799 = vlaneseq
    %v8800 = vshrl.u32 %v8799, 7
    %v8801 = vsub.s32 %v7612, %v8800
    %v8802 = vrot.slane %v7123, %v8801
    %v8803 = vsel %vm7617, %v8802, %v8798
    %v8804 = vlaneseq
    %v8805 = vshrl.u32 %v8804, 7
    %v8806 = vsub.s32 %v7509, %v8805
    %v8807 = vrot.slane %v7124, %v8806
    %v8808 = vlaneseq
    %v8809 = vshrl.u32 %v8808, 7
    %v8810 = vsub.s32 %v7514, %v8809
    %v8811 = vrot.slane %v7125, %v8810
    %v8812 = vsel %vm7519, %v8811, %v8807
    %v8813 = vlaneseq
    %v8814 = vshrl.u32 %v8813, 7
    %v8815 = vsub.s32 %v7521, %v8814
    %v8816 = vrot.slane %v7126, %v8815
    %v8817 = vsel %vm7526, %v8816, %v8812
    %v8818 = vlaneseq
    %v8819 = vshrl.u32 %v8818, 7
    %v8820 = vsub.s32 %v7528, %v8819
    %v8821 = vrot.slane %v7127, %v8820
    %v8822 = vsel %vm7533, %v8821, %v8817
    %v8823 = vlaneseq
    %v8824 = vshrl.u32 %v8823, 7
    %v8825 = vsub.s32 %v7535, %v8824
    %v8826 = vrot.slane %v7128, %v8825
    %v8827 = vsel %vm7540, %v8826, %v8822
    %v8828 = vlaneseq
    %v8829 = vshrl.u32 %v8828, 7
    %v8830 = vsub.s32 %v7542, %v8829
    %v8831 = vrot.slane %v7129, %v8830
    %v8832 = vsel %vm7547, %v8831, %v8827
    %v8833 = vlaneseq
    %v8834 = vshrl.u32 %v8833, 7
    %v8835 = vsub.s32 %v7549, %v8834
    %v8836 = vrot.slane %v7130, %v8835
    %v8837 = vsel %vm7554, %v8836, %v8832
    %v8838 = vlaneseq
    %v8839 = vshrl.u32 %v8838, 7
    %v8840 = vsub.s32 %v7556, %v8839
    %v8841 = vrot.slane %v7131, %v8840
    %v8842 = vsel %vm7561, %v8841, %v8837
    %v8843 = vlaneseq
    %v8844 = vshrl.u32 %v8843, 7
    %v8845 = vsub.s32 %v7563, %v8844
    %v8846 = vrot.slane %v7132, %v8845
    %v8847 = vsel %vm7568, %v8846, %v8842
    %v8848 = vlaneseq
    %v8849 = vshrl.u32 %v8848, 7
    %v8850 = vsub.s32 %v7570, %v8849
    %v8851 = vrot.slane %v7133, %v8850
    %v8852 = vsel %vm7575, %v8851, %v8847
    %v8853 = vlaneseq
    %v8854 = vshrl.u32 %v8853, 7
    %v8855 = vsub.s32 %v7577, %v8854
    %v8856 = vrot.slane %v7134, %v8855
    %v8857 = vsel %vm7582, %v8856, %v8852
    %v8858 = vlaneseq
    %v8859 = vshrl.u32 %v8858, 7
    %v8860 = vsub.s32 %v7584, %v8859
    %v8861 = vrot.slane %v7135, %v8860
    %v8862 = vsel %vm7589, %v8861, %v8857
    %v8863 = vlaneseq
    %v8864 = vshrl.u32 %v8863, 7
    %v8865 = vsub.s32 %v7591, %v8864
    %v8866 = vrot.slane %v7136, %v8865
    %v8867 = vsel %vm7596, %v8866, %v8862
    %v8868 = vlaneseq
    %v8869 = vshrl.u32 %v8868, 7
    %v8870 = vsub.s32 %v7598, %v8869
    %v8871 = vrot.slane %v7137, %v8870
    %v8872 = vsel %vm7603, %v8871, %v8867
    %v8873 = vlaneseq
    %v8874 = vshrl.u32 %v8873, 7
    %v8875 = vsub.s32 %v7605, %v8874
    %v8876 = vrot.slane %v7138, %v8875
    %v8877 = vsel %vm7610, %v8876, %v8872
    %v8878 = vlaneseq
    %v8879 = vshrl.u32 %v8878, 7
    %v8880 = vsub.s32 %v7612, %v8879
    %v8881 = vrot.slane %v7139, %v8880
    %v8882 = vsel %vm7617, %v8881, %v8877
    %v8883 = vlaneseq
    %v8884 = vshrl.u32 %v8883, 7
    %v8885 = vsub.s32 %v7509, %v8884
    %v8886 = vrot.slane %v7140, %v8885
    %v8887 = vlaneseq
    %v8888 = vshrl.u32 %v8887, 7
    %v8889 = vsub.s32 %v7514, %v8888
    %v8890 = vrot.slane %v7141, %v8889
    %v8891 = vsel %vm7519, %v8890, %v8886
    %v8892 = vlaneseq
    %v8893 = vshrl.u32 %v8892, 7
    %v8894 = vsub.s32 %v7521, %v8893
    %v8895 = vrot.slane %v7142, %v8894
    %v8896 = vsel %vm7526, %v8895, %v8891
    %v8897 = vlaneseq
    %v8898 = vshrl.u32 %v8897, 7
    %v8899 = vsub.s32 %v7528, %v8898
    %v8900 = vrot.slane %v7143, %v8899
    %v8901 = vsel %vm7533, %v8900, %v8896
    %v8902 = vlaneseq
    %v8903 = vshrl.u32 %v8902, 7
    %v8904 = vsub.s32 %v7535, %v8903
    %v8905 = vrot.slane %v7144, %v8904
    %v8906 = vsel %vm7540, %v8905, %v8901
    %v8907 = vlaneseq
    %v8908 = vshrl.u32 %v8907, 7
    %v8909 = vsub.s32 %v7542, %v8908
    %v8910 = vrot.slane %v7145, %v8909
    %v8911 = vsel %vm7547, %v8910, %v8906
    %v8912 = vlaneseq
    %v8913 = vshrl.u32 %v8912, 7
    %v8914 = vsub.s32 %v7549, %v8913
    %v8915 = vrot.slane %v7146, %v8914
    %v8916 = vsel %vm7554, %v8915, %v8911
    %v8917 = vlaneseq
    %v8918 = vshrl.u32 %v8917, 7
    %v8919 = vsub.s32 %v7556, %v8918
    %v8920 = vrot.slane %v7147, %v8919
    %v8921 = vsel %vm7561, %v8920, %v8916
    %v8922 = vlaneseq
    %v8923 = vshrl.u32 %v8922, 7
    %v8924 = vsub.s32 %v7563, %v8923
    %v8925 = vrot.slane %v7148, %v8924
    %v8926 = vsel %vm7568, %v8925, %v8921
    %v8927 = vlaneseq
    %v8928 = vshrl.u32 %v8927, 7
    %v8929 = vsub.s32 %v7570, %v8928
    %v8930 = vrot.slane %v7149, %v8929
    %v8931 = vsel %vm7575, %v8930, %v8926
    %v8932 = vlaneseq
    %v8933 = vshrl.u32 %v8932, 7
    %v8934 = vsub.s32 %v7577, %v8933
    %v8935 = vrot.slane %v7150, %v8934
    %v8936 = vsel %vm7582, %v8935, %v8931
    %v8937 = vlaneseq
    %v8938 = vshrl.u32 %v8937, 7
    %v8939 = vsub.s32 %v7584, %v8938
    %v8940 = vrot.slane %v7151, %v8939
    %v8941 = vsel %vm7589, %v8940, %v8936
    %v8942 = vlaneseq
    %v8943 = vshrl.u32 %v8942, 7
    %v8944 = vsub.s32 %v7591, %v8943
    %v8945 = vrot.slane %v7152, %v8944
    %v8946 = vsel %vm7596, %v8945, %v8941
    %v8947 = vlaneseq
    %v8948 = vshrl.u32 %v8947, 7
    %v8949 = vsub.s32 %v7598, %v8948
    %v8950 = vrot.slane %v7153, %v8949
    %v8951 = vsel %vm7603, %v8950, %v8946
    %v8952 = vlaneseq
    %v8953 = vshrl.u32 %v8952, 7
    %v8954 = vsub.s32 %v7605, %v8953
    %v8955 = vrot.slane %v7154, %v8954
    %v8956 = vsel %vm7610, %v8955, %v8951
    %v8957 = vlaneseq
    %v8958 = vshrl.u32 %v8957, 7
    %v8959 = vsub.s32 %v7612, %v8958
    %v8960 = vrot.slane %v7155, %v8959
    %v8961 = vsel %vm7617, %v8960, %v8956
    %v8962 = vlaneseq
    %v8963 = vshrl.u32 %v8962, 7
    %v8964 = vsub.s32 %v7509, %v8963
    %v8965 = vrot.slane %v7156, %v8964
    %v8966 = vlaneseq
    %v8967 = vshrl.u32 %v8966, 7
    %v8968 = vsub.s32 %v7514, %v8967
    %v8969 = vrot.slane %v7157, %v8968
    %v8970 = vsel %vm7519, %v8969, %v8965
    %v8971 = vlaneseq
    %v8972 = vshrl.u32 %v8971, 7
    %v8973 = vsub.s32 %v7521, %v8972
    %v8974 = vrot.slane %v7158, %v8973
    %v8975 = vsel %vm7526, %v8974, %v8970
    %v8976 = vlaneseq
    %v8977 = vshrl.u32 %v8976, 7
    %v8978 = vsub.s32 %v7528, %v8977
    %v8979 = vrot.slane %v7159, %v8978
    %v8980 = vsel %vm7533, %v8979, %v8975
    %v8981 = vlaneseq
    %v8982 = vshrl.u32 %v8981, 7
    %v8983 = vsub.s32 %v7535, %v8982
    %v8984 = vrot.slane %v7160, %v8983
    %v8985 = vsel %vm7540, %v8984, %v8980
    %v8986 = vlaneseq
    %v8987 = vshrl.u32 %v8986, 7
    %v8988 = vsub.s32 %v7542, %v8987
    %v8989 = vrot.slane %v7161, %v8988
    %v8990 = vsel %vm7547, %v8989, %v8985
    %v8991 = vlaneseq
    %v8992 = vshrl.u32 %v8991, 7
    %v8993 = vsub.s32 %v7549, %v8992
    %v8994 = vrot.slane %v7162, %v8993
    %v8995 = vsel %vm7554, %v8994, %v8990
    %v8996 = vlaneseq
    %v8997 = vshrl.u32 %v8996, 7
    %v8998 = vsub.s32 %v7556, %v8997
    %v8999 = vrot.slane %v7163, %v8998
    %v9000 = vsel %vm7561, %v8999, %v8995
    %v9001 = vlaneseq
    %v9002 = vshrl.u32 %v9001, 7
    %v9003 = vsub.s32 %v7563, %v9002
    %v9004 = vrot.slane %v7164, %v9003
    %v9005 = vsel %vm7568, %v9004, %v9000
    %v9006 = vlaneseq
    %v9007 = vshrl.u32 %v9006, 7
    %v9008 = vsub.s32 %v7570, %v9007
    %v9009 = vrot.slane %v7165, %v9008
    %v9010 = vsel %vm7575, %v9009, %v9005
    %v9011 = vlaneseq
    %v9012 = vshrl.u32 %v9011, 7
    %v9013 = vsub.s32 %v7577, %v9012
    %v9014 = vrot.slane %v7166, %v9013
    %v9015 = vsel %vm7582, %v9014, %v9010
    %v9016 = vlaneseq
    %v9017 = vshrl.u32 %v9016, 7
    %v9018 = vsub.s32 %v7584, %v9017
    %v9019 = vrot.slane %v7167, %v9018
    %v9020 = vsel %vm7589, %v9019, %v9015
    %v9021 = vlaneseq
    %v9022 = vshrl.u32 %v9021, 7
    %v9023 = vsub.s32 %v7591, %v9022
    %v9024 = vrot.slane %v7168, %v9023
    %v9025 = vsel %vm7596, %v9024, %v9020
    %v9026 = vlaneseq
    %v9027 = vshrl.u32 %v9026, 7
    %v9028 = vsub.s32 %v7598, %v9027
    %v9029 = vrot.slane %v7169, %v9028
    %v9030 = vsel %vm7603, %v9029, %v9025
    %v9031 = vlaneseq
    %v9032 = vshrl.u32 %v9031, 7
    %v9033 = vsub.s32 %v7605, %v9032
    %v9034 = vrot.slane %v7170, %v9033
    %v9035 = vsel %vm7610, %v9034, %v9030
    %v9036 = vlaneseq
    %v9037 = vshrl.u32 %v9036, 7
    %v9038 = vsub.s32 %v7612, %v9037
    %v9039 = vrot.slane %v7171, %v9038
    %v9040 = vsel %vm7617, %v9039, %v9035
    %v9041 = vlaneseq
    %v9042 = vshrl.u32 %v9041, 7
    %v9043 = vsub.s32 %v7509, %v9042
    %v9044 = vrot.slane %v7172, %v9043
    %v9045 = vlaneseq
    %v9046 = vshrl.u32 %v9045, 7
    %v9047 = vsub.s32 %v7514, %v9046
    %v9048 = vrot.slane %v7173, %v9047
    %v9049 = vsel %vm7519, %v9048, %v9044
    %v9050 = vlaneseq
    %v9051 = vshrl.u32 %v9050, 7
    %v9052 = vsub.s32 %v7521, %v9051
    %v9053 = vrot.slane %v7174, %v9052
    %v9054 = vsel %vm7526, %v9053, %v9049
    %v9055 = vlaneseq
    %v9056 = vshrl.u32 %v9055, 7
    %v9057 = vsub.s32 %v7528, %v9056
    %v9058 = vrot.slane %v7175, %v9057
    %v9059 = vsel %vm7533, %v9058, %v9054
    %v9060 = vlaneseq
    %v9061 = vshrl.u32 %v9060, 7
    %v9062 = vsub.s32 %v7535, %v9061
    %v9063 = vrot.slane %v7176, %v9062
    %v9064 = vsel %vm7540, %v9063, %v9059
    %v9065 = vlaneseq
    %v9066 = vshrl.u32 %v9065, 7
    %v9067 = vsub.s32 %v7542, %v9066
    %v9068 = vrot.slane %v7177, %v9067
    %v9069 = vsel %vm7547, %v9068, %v9064
    %v9070 = vlaneseq
    %v9071 = vshrl.u32 %v9070, 7
    %v9072 = vsub.s32 %v7549, %v9071
    %v9073 = vrot.slane %v7178, %v9072
    %v9074 = vsel %vm7554, %v9073, %v9069
    %v9075 = vlaneseq
    %v9076 = vshrl.u32 %v9075, 7
    %v9077 = vsub.s32 %v7556, %v9076
    %v9078 = vrot.slane %v7179, %v9077
    %v9079 = vsel %vm7561, %v9078, %v9074
    %v9080 = vlaneseq
    %v9081 = vshrl.u32 %v9080, 7
    %v9082 = vsub.s32 %v7563, %v9081
    %v9083 = vrot.slane %v7180, %v9082
    %v9084 = vsel %vm7568, %v9083, %v9079
    %v9085 = vlaneseq
    %v9086 = vshrl.u32 %v9085, 7
    %v9087 = vsub.s32 %v7570, %v9086
    %v9088 = vrot.slane %v7181, %v9087
    %v9089 = vsel %vm7575, %v9088, %v9084
    %v9090 = vlaneseq
    %v9091 = vshrl.u32 %v9090, 7
    %v9092 = vsub.s32 %v7577, %v9091
    %v9093 = vrot.slane %v7182, %v9092
    %v9094 = vsel %vm7582, %v9093, %v9089
    %v9095 = vlaneseq
    %v9096 = vshrl.u32 %v9095, 7
    %v9097 = vsub.s32 %v7584, %v9096
    %v9098 = vrot.slane %v7183, %v9097
    %v9099 = vsel %vm7589, %v9098, %v9094
    %v9100 = vlaneseq
    %v9101 = vshrl.u32 %v9100, 7
    %v9102 = vsub.s32 %v7591, %v9101
    %v9103 = vrot.slane %v7184, %v9102
    %v9104 = vsel %vm7596, %v9103, %v9099
    %v9105 = vlaneseq
    %v9106 = vshrl.u32 %v9105, 7
    %v9107 = vsub.s32 %v7598, %v9106
    %v9108 = vrot.slane %v7185, %v9107
    %v9109 = vsel %vm7603, %v9108, %v9104
    %v9110 = vlaneseq
    %v9111 = vshrl.u32 %v9110, 7
    %v9112 = vsub.s32 %v7605, %v9111
    %v9113 = vrot.slane %v7186, %v9112
    %v9114 = vsel %vm7610, %v9113, %v9109
    %v9115 = vlaneseq
    %v9116 = vshrl.u32 %v9115, 7
    %v9117 = vsub.s32 %v7612, %v9116
    %v9118 = vrot.slane %v7187, %v9117
    %v9119 = vsel %vm7617, %v9118, %v9114
    %vm9120 = vcmask 1041409
    %v9121 = vsel %vm9120, %v7697, %v7618
    %vm9122 = vcmask 1042434
    %v9123 = vsel %vm9122, %v7776, %v9121
    %vm9124 = vcmask 1043459
    %v9125 = vsel %vm9124, %v7855, %v9123
    %vm9126 = vcmask 1044484
    %v9127 = vsel %vm9126, %v7934, %v9125
    %vm9128 = vcmask 1045509
    %v9129 = vsel %vm9128, %v8013, %v9127
    %vm9130 = vcmask 1046534
    %v9131 = vsel %vm9130, %v8092, %v9129
    %vm9132 = vcmask 1047559
    %v9133 = vsel %vm9132, %v8171, %v9131
    %v9134 = vsel %vm9120, %v8329, %v8250
    %v9135 = vsel %vm9122, %v8408, %v9134
    %v9136 = vsel %vm9124, %v8487, %v9135
    %v9137 = vsel %vm9126, %v8566, %v9136
    %v9138 = vsel %vm9128, %v8645, %v9137
    %v9139 = vsel %vm9130, %v8724, %v9138
    %v9140 = vsel %vm9132, %v8803, %v9139
    %v9141 = vsel %vm9120, %v8961, %v8882
    %v9142 = vsel %vm9122, %v9040, %v9141
    %v9143 = vsel %vm9124, %v9119, %v9142
    %9147 = vst [vmem:[#allocation3] sm:$0xff] %v9133
    %9148 = vst [vmem:[#allocation3 + $0x8] sm:$0xff] %v9140
    %9149 = vst [vmem:[#allocation3 + $0x10] sm:$0xf] %v9143
    // Predicated region
    $region34: #{tpu_custom_call.1} parent=1 // pred_check
      _
    $region35: #{tpu_custom_call.1} parent=1 // pred_check_branch
      %9151 = sbr.rel (0) target = $region37
    $region36: #{tpu_custom_call.1} parent=1 // pred_region
      %s9153 = ssub.s32 384, 384
      %9154 = vsyncadd [#allocation4], %s9153
      %s9155 = sshll.u32 [#allocation3], 4
      %s9156 = int_to_ptr.vmem [resolvable:$true] %s9155
      %9161 = dma.vmem_to_hbm [thread:$0]  %s9156, 384, %s8, [#allocation4], 128, 128, 8
    $region37: #{tpu_custom_call.1} parent=1 // pred_fallthru
      _
    // Predicated region
    $region38: #{tpu_custom_call.1} parent=1 // pred_check
      _
    $region39: #{tpu_custom_call.1} parent=1 // pred_check_branch
      %9163 = sbr.rel (0) target = $region41
    $region40: #{tpu_custom_call.1} parent=1 // pred_region
      %9164 = dma.done [#allocation4], 384
    $region41: #{tpu_custom_call.1} parent=1 // pred_fallthru
      _
    %9165 = vsyncpa [#allocation4], 1

</llo_original>
